<compile_context>
chip_gen: v6e
topology: v6e:2x2x1
jax: 0.10.0
libtpu: 0.0.40
codegen_flags: <defaults>
</compile_context>

<pallas_src>
import functools

import jax
import jax.numpy as jnp
from jax.experimental import pallas as pl
from jax.experimental.pallas import tpu as pltpu

_LN_EPS = 1e-5
_RANK_K_MAX = 8   # matmuls with K <= this run as VPU rank-k updates, not MXU


def _celu(z):
    # CELU(alpha=1): z if z > 0 else exp(z) - 1 (clamp arg so exp never infs)
    return jnp.where(z > 0, z, jnp.exp(jnp.minimum(z, 0.0)) - 1.0)


def _matmul(h, w_ref, use_bf16):
    """h (BB, K) f32 @ w_ref (K, N) -> (BB, N) f32."""
    K = w_ref.shape[0]
    if K <= _RANK_K_MAX:
        # Tiny contraction (latent dim): an MXU pass would be <4% utilized;
        # do a rank-K broadcast multiply-add on the VPU instead.
        w = w_ref[...].astype(jnp.float32)
        acc = h[:, 0:1] * w[0:1, :]
        for k in range(1, K):
            acc = acc + h[:, k:k + 1] * w[k:k + 1, :]
        return acc
    lhs = h.astype(jnp.bfloat16) if use_bf16 else h
    return jnp.dot(lhs, w_ref[...], preferred_element_type=jnp.float32)


def _fc_layer(h, w_ref, b, g, be, use_bf16):
    """Linear (pre-transposed (in,out) weight) -> LayerNorm(1e-5) -> CELU."""
    z = _matmul(h, w_ref, use_bf16) + b
    # One-pass LN statistics: two independent reductions (sum, sum-of-squares)
    # instead of the serialized mean -> centered-variance chain.
    mean = jnp.mean(z, axis=-1, keepdims=True)
    msq = jnp.mean(z * z, axis=-1, keepdims=True)
    var = msq - mean * mean
    zn = (z - mean) * jax.lax.rsqrt(var + _LN_EPS)
    return _celu(zn * g + be)


def _vae_kernel(n_enc, n_dec, D, L, beta, use_bf16,
                x_ref, eps_ref, vec_ref, *refs):
    # refs layout: [enc weights]*n_enc, w_mu, w_logvar, [dec weights]*n_dec,
    #              w_dec_out, out_ref
    n_w = n_enc + 2 + n_dec + 1
    w_refs = refs[:n_w]
    out_ref = refs[n_w]

    def vrow(k, n):
        # Packed 1-row params: static row index + static lane slice -> (1, n)
        return vec_ref[k:k + 1, :n]

    x = x_ref[...].astype(jnp.float32)          # (BB, D)
    eps = eps_ref[...].astype(jnp.float32)      # (BB, L)

    # ---- encoder ----
    h = x
    wi = 0
    for j in range(n_enc):
        w = w_refs[wi]
        hj = w.shape[1]
        h = _fc_layer(h, w, vrow(3 * j + 0, hj), vrow(3 * j + 1, hj),
                      vrow(3 * j + 2, hj), use_bf16)
        wi += 1
    r_mu = 3 * n_enc
    mu = _matmul(h, w_refs[wi], use_bf16) + vrow(r_mu, L)
    log_var = _matmul(h, w_refs[wi + 1], use_bf16) + vrow(r_mu + 1, L)
    wi += 2

    # ---- reparameterization ----
    std = jnp.exp(0.5 * log_var)
    sample = mu + eps * std

    # ---- decoder ----
    base = r_mu + 2
    d = sample
    for j in range(n_dec):
        w = w_refs[wi]
        hj = w.shape[1]
        d = _fc_layer(d, w, vrow(base + 3 * j + 0, hj),
                      vrow(base + 3 * j + 1, hj),
                      vrow(base + 3 * j + 2, hj), use_bf16)
        wi += 1
    recon = _matmul(d, w_refs[wi], use_bf16) + vrow(base + 3 * n_dec, D)

    # ---- losses ----
    diff = recon - x
    loss = jnp.sqrt(jnp.sum(diff * diff, axis=-1, keepdims=True))
    # std*std == exp(log_var): reuse std, save a second EUP exp per element.
    kld = (-0.5 * beta) * (1.0 + log_var - mu * mu - std * std)

    # ---- single lane-dense output slab: [recon | loss | kld | 0-pad] ----
    bb = recon.shape[0]
    pad = out_ref.shape[-1] - (D + 1 + L)
    pieces = [recon, loss, kld]
    if pad:
        pieces.append(jnp.zeros((bb, pad), jnp.float32))
    out_ref[...] = jnp.concatenate(pieces, axis=-1).astype(out_ref.dtype)


def prepare_vae_params(params, *, use_bf16_matmul=False):
    """One-time layout prep (hoisted out of the per-forward path).

    params (torch convention):
        "enc_layers": [(W(out,in), b, ln_gamma, ln_beta), ...]
        "enc_out"   : (W(2L, hidden), b)
        "dec_layers": [(W, b, ln_gamma, ln_beta), ...]
        "dec_out"   : (W(in_features, hidden), b)
    """
    w_dtype = jnp.bfloat16 if use_bf16_matmul else jnp.float32

    enc_layers = params["enc_layers"]
    dec_layers = params["dec_layers"]
    w_eo, b_eo = params["enc_out"]
    w_do, b_do = params["dec_out"]

    D = enc_layers[0][0].shape[1]
    H = enc_layers[0][0].shape[0]
    L = w_eo.shape[0] // 2

    vec_w = max(H, D, L)

    def pad_row(v):
        v = jnp.asarray(v, jnp.float32).reshape(-1)
        return jnp.pad(v, (0, vec_w - v.shape[0]))

    weights = []
    vec_rows = []
    for (w, b, g, be) in enc_layers:
        weights.append(jnp.asarray(w.T, w_dtype))
        vec_rows += [pad_row(b), pad_row(g), pad_row(be)]
    w_eo_t = jnp.asarray(w_eo.T, w_dtype)            # (H, 2L)
    weights += [w_eo_t[:, :L], w_eo_t[:, L:]]        # mu / log_var heads
    vec_rows += [pad_row(b_eo[:L]), pad_row(b_eo[L:])]
    for (w, b, g, be) in dec_layers:
        weights.append(jnp.asarray(w.T, w_dtype))
        vec_rows += [pad_row(b), pad_row(g), pad_row(be)]
    weights.append(jnp.asarray(w_do.T, w_dtype))
    vec_rows.append(pad_row(b_do))

    vecs = jnp.stack(vec_rows)                       # (n_vec, vec_w) f32

    return {
        "weights": tuple(weights),
        "vecs": vecs,
        "meta": dict(n_enc=len(enc_layers), n_dec=len(dec_layers),
                     D=int(D), H=int(H), L=int(L),
                     use_bf16=bool(use_bf16_matmul)),
    }


def _num_tensorcores():
    try:
        kind = jax.devices()[0].device_kind.lower()
    except Exception:
        return 2
    # v5e / v6e ("lite") have a single TensorCore; v4 / v5p / v7x have two.
    if "lite" in kind or "v5e" in kind or "v6e" in kind:
        return 1
    return 2


def _choose_block_b(B):
    """Generation-aware batch tile: grid=1 on single-TC chips for small B,
    grid>=2 on dual-TC chips so both cores get work; tile capped at 512."""
    if B % 8 != 0:
        return B                           # full batch is always legal
    target = B if _num_tensorcores() == 1 else max(8, B // 2)
    target = min(target, 512)
    bb = (target // 8) * 8
    while bb > 8 and B % bb != 0:
        bb -= 8
    return bb if (bb >= 8 and B % bb == 0) else B


def vae_pallas(x, eps, prepped, *, beta=10.0, block_b=None):
    """Fused VAE forward. Returns (recon (B,D), recon_loss (B,), beta*kld (B,L))."""
    B, D = x.shape
    L = eps.shape[1]
    meta = prepped["meta"]
    assert meta["D"] == D and meta["L"] == L
    n_enc, n_dec, H = meta["n_enc"], meta["n_dec"], meta["H"]
    use_bf16 = meta["use_bf16"]
    weights, vecs = prepped["weights"], prepped["vecs"]

    if block_b is None:
        block_b = _choose_block_b(B)
    assert B % block_b == 0, "batch must be divisible by block_b"
    assert block_b == B or block_b % 8 == 0, \
        "block_b must be a multiple of 8 (or the full batch)"

    out_w = ((D + 1 + L + 127) // 128) * 128    # lane-dense output slab width

    kernel = functools.partial(_vae_kernel, n_enc, n_dec, D, L,
                               float(beta), use_bf16)

    in_specs = [
        pl.BlockSpec((block_b, D), lambda i: (i, 0)),    # x
        pl.BlockSpec((block_b, L), lambda i: (i, 0)),    # eps
        pl.BlockSpec(vecs.shape, lambda i: (0, 0)),      # packed 1-row params
    ]
    for w in weights:                                    # constant-index weights
        in_specs.append(pl.BlockSpec(w.shape, lambda i: (0, 0)))

    out_spec = pl.BlockSpec((block_b, out_w), lambda i: (i, 0))
    out_shape = jax.ShapeDtypeStruct((B, out_w), x.dtype)

    # Advisory cost estimate (matmul MACs*2, exp/rsqrt counts, HBM bytes).
    flops = 2 * B * (D * H + (n_enc - 1) * H * H + 2 * L * H
                     + L * H + (n_dec - 1) * H * H + H * D)
    transcendentals = B * (H * (n_enc + n_dec) + 2 * L)
    bytes_accessed = (x.size * x.dtype.itemsize + eps.size * eps.dtype.itemsize
                      + vecs.size * 4
                      + sum(w.size * w.dtype.itemsize for w in weights)
                      + B * out_w * x.dtype.itemsize)

    out = pl.pallas_call(
        kernel,
        out_shape=out_shape,
        grid_spec=pltpu.PrefetchScalarGridSpec(
            num_scalar_prefetch=0,
            grid=(B // block_b,),
            in_specs=in_specs,
            out_specs=out_spec,
        ),
        compiler_params=pltpu.CompilerParams(
            dimension_semantics=("parallel",)),
        cost_estimate=pl.CostEstimate(
            flops=int(flops),
            transcendentals=int(transcendentals),
            bytes_accessed=int(bytes_accessed)),
    )(x, eps, vecs, *weights)

    recon = out[:, :D]
    loss = out[:, D]
    kld = out[:, D + 1:D + 1 + L]
    return recon, loss, kld


def vae_ref(x, eps, params, *, beta=10.0):
    """Pure-JAX reference mirroring the PyTorch forward."""
    def fc(h, w, b, g, be):
        z = h @ w.T + b
        mean = jnp.mean(z, axis=-1, keepdims=True)
        zc = z - mean
        var = jnp.mean(zc * zc, axis=-1, keepdims=True)
        z = zc * jax.lax.rsqrt(var + _LN_EPS) * g + be
        return jnp.where(z > 0, z, jnp.exp(jnp.minimum(z, 0.0)) - 1.0)

    h = x
    for (w, b, g, be) in params["enc_layers"]:
        h = fc(h, w, b, g, be)
    w_eo, b_eo = params["enc_out"]
    enc = h @ w_eo.T + b_eo
    L = eps.shape[1]
    mu, log_var = enc[:, :L], enc[:, L:]
    sample = mu + eps * jnp.exp(0.5 * log_var)

    d = sample
    for (w, b, g, be) in params["dec_layers"]:
        d = fc(d, w, b, g, be)
    w_do, b_do = params["dec_out"]
    recon = d @ w_do.T + b_do

    recon_loss = jnp.sqrt(jnp.sum((recon - x) ** 2, axis=1))
    kld = -0.5 * (1.0 + log_var - mu ** 2 - jnp.exp(log_var))
    return recon, recon_loss, beta * kld


if __name__ == "__main__":
    # Full-f32 matmuls everywhere so the XLA reference matches the kernel's
    # f32 MXU accumulation bit-for-bit (the default TPU precision is looser).
    jax.config.update("jax_default_matmul_precision", "highest")

    # Shapes consistent with module defaults:
    #   hidden_ch=128, num_hidden_layers=2, latent_features=5, beta=10.
    B, D, H, L = 64, 32, 128, 5
    num_hidden_layers = 2
    beta = 10.0

    keys = iter(jax.random.split(jax.random.PRNGKey(0), 64))

    def linear(out_f, in_f, scale=0.1):
        w = jax.random.normal(next(keys), (out_f, in_f), jnp.float32) * scale
        b = jax.random.normal(next(keys), (out_f,), jnp.float32) * scale
        return w, b

    def fc_layer_params(out_f, in_f):
        w, b = linear(out_f, in_f)
        g = 1.0 + 0.05 * jax.random.normal(next(keys), (out_f,), jnp.float32)
        be = 0.05 * jax.random.normal(next(keys), (out_f,), jnp.float32)
        return (w, b, g, be)

    enc_layers = [fc_layer_params(H, D)] + [fc_layer_params(H, H)
                                            for _ in range(num_hidden_layers)]
    enc_out = linear(2 * L, H)
    dec_layers = [fc_layer_params(H, L)] + [fc_layer_params(H, H)
                                            for _ in range(num_hidden_layers)]
    dec_out = linear(D, H)
    params = {"enc_layers": enc_layers, "enc_out": enc_out,
              "dec_layers": dec_layers, "dec_out": dec_out}

    x = jax.random.normal(next(keys), (B, D), jnp.float32)
    # TODO(synk): torch.randn_like(std) — noise is sampled host-side and passed
    # in so kernel and reference share eps; pltpu.prng_* could sample in-kernel.
    eps = jax.random.normal(next(keys), (B, L), jnp.float32)

    r_ref, l_ref, k_ref = vae_ref(x, eps, params, beta=beta)

    # --- f32 path (default): strict check ---
    prepped = prepare_vae_params(params)
    recon, loss, kld = vae_pallas(x, eps, prepped, beta=beta)
    jax.block_until_ready((recon, loss, kld))

    ok = True
    ok &= bool(jnp.allclose(recon, r_ref, atol=1e-4, rtol=1e-4))
    ok &= bool(jnp.allclose(loss, l_ref, atol=1e-4, rtol=1e-4))
    ok &= bool(jnp.allclose(kld, k_ref, atol=1e-4, rtol=1e-4))

    # --- bf16-MXU perf path (opt-in): sanity check at reduced precision ---
    prepped_bf16 = prepare_vae_params(params, use_bf16_matmul=True)
    r2, l2, k2 = vae_pallas(x, eps, prepped_bf16, beta=beta)
    jax.block_until_ready((r2, l2, k2))
    ok &= bool(jnp.allclose(r2, r_ref, atol=0.1, rtol=0.05))
    ok &= bool(jnp.allclose(l2, l_ref, atol=0.3, rtol=0.05))
    ok &= bool(jnp.allclose(k2, k_ref, atol=0.5, rtol=0.2))

    print("KERNEL_OK" if ok else "MISMATCH")
</pallas_src>

<mosaic_0001>
module attributes {stable_mosaic.version = 11 : i64} {
  func.func @_vae_kernel(%arg0: i32, %arg1: memref<32x32xf32, #tpu.memory_space<vmem>>, %arg2: memref<32x5xf32, #tpu.memory_space<vmem>>, %arg3: memref<21x128xf32, #tpu.memory_space<vmem>>, %arg4: memref<32x128xf32, #tpu.memory_space<vmem>>, %arg5: memref<128x128xf32, #tpu.memory_space<vmem>>, %arg6: memref<128x128xf32, #tpu.memory_space<vmem>>, %arg7: memref<128x5xf32, #tpu.memory_space<vmem>>, %arg8: memref<128x5xf32, #tpu.memory_space<vmem>>, %arg9: memref<5x128xf32, #tpu.memory_space<vmem>>, %arg10: memref<128x128xf32, #tpu.memory_space<vmem>>, %arg11: memref<128x128xf32, #tpu.memory_space<vmem>>, %arg12: memref<128x32xf32, #tpu.memory_space<vmem>>, %arg13: memref<32x128xf32, #tpu.memory_space<vmem>>) attributes {dimension_semantics = [#tpu.dimension_semantics<parallel>], iteration_bounds = array<i64: 2>, scalar_prefetch = 0 : i64, scratch_operands = 0 : i64, tpu.core_type = #tpu.core_type<tc>, window_params = [{transform_indices = @transform_0, window_bounds = array<i64: 32, 32>}, {transform_indices = @transform_1, window_bounds = array<i64: 32, 5>}, {pipeline_mode = #tpu.pipeline_mode<synchronous>, transform_indices = @transform_2, window_bounds = array<i64: 21, 128>}, {pipeline_mode = #tpu.pipeline_mode<synchronous>, transform_indices = @transform_3, window_bounds = array<i64: 32, 128>}, {pipeline_mode = #tpu.pipeline_mode<synchronous>, transform_indices = @transform_4, window_bounds = array<i64: 128, 128>}, {pipeline_mode = #tpu.pipeline_mode<synchronous>, transform_indices = @transform_5, window_bounds = array<i64: 128, 128>}, {pipeline_mode = #tpu.pipeline_mode<synchronous>, transform_indices = @transform_6, window_bounds = array<i64: 128, 5>}, {pipeline_mode = #tpu.pipeline_mode<synchronous>, transform_indices = @transform_7, window_bounds = array<i64: 128, 5>}, {pipeline_mode = #tpu.pipeline_mode<synchronous>, transform_indices = @transform_8, window_bounds = array<i64: 5, 128>}, {pipeline_mode = #tpu.pipeline_mode<synchronous>, transform_indices = @transform_9, window_bounds = array<i64: 128, 128>}, {pipeline_mode = #tpu.pipeline_mode<synchronous>, transform_indices = @transform_10, window_bounds = array<i64: 128, 128>}, {pipeline_mode = #tpu.pipeline_mode<synchronous>, transform_indices = @transform_11, window_bounds = array<i64: 128, 32>}, {transform_indices = @transform_12, window_bounds = array<i64: 32, 128>}]} {
    %c0 = arith.constant 0 : index
    %c0_0 = arith.constant 0 : index
    %0 = vector.load %arg1[%c0, %c0_0] : memref<32x32xf32, #tpu.memory_space<vmem>>, vector<32x32xf32>
    %c0_1 = arith.constant 0 : index
    %c0_2 = arith.constant 0 : index
    %1 = vector.load %arg2[%c0_1, %c0_2] : memref<32x5xf32, #tpu.memory_space<vmem>>, vector<32x5xf32>
    %c0_3 = arith.constant 0 : index
    %c0_4 = arith.constant 0 : index
    %2 = vector.load %arg3[%c0_3, %c0_4] : memref<21x128xf32, #tpu.memory_space<vmem>>, vector<1x128xf32>
    %c1 = arith.constant 1 : index
    %c0_5 = arith.constant 0 : index
    %3 = vector.load %arg3[%c1, %c0_5] : memref<21x128xf32, #tpu.memory_space<vmem>>, vector<1x128xf32>
    %c2 = arith.constant 2 : index
    %c0_6 = arith.constant 0 : index
    %4 = vector.load %arg3[%c2, %c0_6] : memref<21x128xf32, #tpu.memory_space<vmem>>, vector<1x128xf32>
    %c0_7 = arith.constant 0 : index
    %c0_8 = arith.constant 0 : index
    %5 = vector.load %arg4[%c0_7, %c0_8] : memref<32x128xf32, #tpu.memory_space<vmem>>, vector<32x128xf32>
    %cst = arith.constant dense<0.000000e+00> : vector<32x128xf32>
    %6 = tpu.matmul %0, %5, %cst {dimension_numbers = #tpu.dot_dimension_numbers<[1], [0], [0], [1], [0, 0, 1, 1], [], []>, precision = #tpu.contract_precision<fp32>} : vector<32x32xf32>, vector<32x128xf32>, vector<32x128xf32> -> vector<32x128xf32>
    %7 = vector.broadcast %2 : vector<1x128xf32> to vector<32x128xf32>
    %8 = arith.addf %6, %7 : vector<32x128xf32>
    %cst_9 = arith.constant dense<0.000000e+00> : vector<32xf32>
    %9 = vector.multi_reduction <add>, %8, %cst_9 [1] : vector<32x128xf32> to vector<32xf32>
    %10 = vector.shape_cast %9 : vector<32xf32> to vector<32x1xf32>
    %cst_10 = arith.constant 1.280000e+02 : f32
    %11 = vector.broadcast %cst_10 : f32 to vector<32x1xf32>
    %12 = arith.divf %10, %11 : vector<32x1xf32>
    %13 = arith.mulf %8, %8 : vector<32x128xf32>
    %cst_11 = arith.constant dense<0.000000e+00> : vector<32xf32>
    %14 = vector.multi_reduction <add>, %13, %cst_11 [1] : vector<32x128xf32> to vector<32xf32>
    %15 = vector.shape_cast %14 : vector<32xf32> to vector<32x1xf32>
    %cst_12 = arith.constant 1.280000e+02 : f32
    %16 = vector.broadcast %cst_12 : f32 to vector<32x1xf32>
    %17 = arith.divf %15, %16 : vector<32x1xf32>
    %18 = arith.mulf %12, %12 : vector<32x1xf32>
    %19 = arith.subf %17, %18 : vector<32x1xf32>
    %20 = vector.broadcast %12 : vector<32x1xf32> to vector<32x128xf32>
    %21 = arith.subf %8, %20 : vector<32x128xf32>
    %cst_13 = arith.constant 9.99999974E-6 : f32
    %22 = vector.broadcast %cst_13 : f32 to vector<32x1xf32>
    %23 = arith.addf %19, %22 : vector<32x1xf32>
    %24 = math.rsqrt %23 : vector<32x1xf32>
    %25 = vector.broadcast %24 : vector<32x1xf32> to vector<32x128xf32>
    %26 = arith.mulf %21, %25 : vector<32x128xf32>
    %27 = vector.broadcast %3 : vector<1x128xf32> to vector<32x128xf32>
    %28 = arith.mulf %26, %27 : vector<32x128xf32>
    %29 = vector.broadcast %4 : vector<1x128xf32> to vector<32x128xf32>
    %30 = arith.addf %28, %29 : vector<32x128xf32>
    %cst_14 = arith.constant 0.000000e+00 : f32
    %31 = vector.broadcast %cst_14 : f32 to vector<32x128xf32>
    %32 = arith.cmpf ogt, %30, %31 : vector<32x128xf32>
    %cst_15 = arith.constant 0.000000e+00 : f32
    %33 = vector.broadcast %cst_15 : f32 to vector<32x128xf32>
    %34 = arith.minimumf %30, %33 : vector<32x128xf32>
    %35 = math.exp %34 : vector<32x128xf32>
    %cst_16 = arith.constant 1.000000e+00 : f32
    %36 = vector.broadcast %cst_16 : f32 to vector<32x128xf32>
    %37 = arith.subf %35, %36 : vector<32x128xf32>
    %38 = arith.select %32, %30, %37 : vector<32x128xi1>, vector<32x128xf32>
    %c3 = arith.constant 3 : index
    %c0_17 = arith.constant 0 : index
    %39 = vector.load %arg3[%c3, %c0_17] : memref<21x128xf32, #tpu.memory_space<vmem>>, vector<1x128xf32>
    %c4 = arith.constant 4 : index
    %c0_18 = arith.constant 0 : index
    %40 = vector.load %arg3[%c4, %c0_18] : memref<21x128xf32, #tpu.memory_space<vmem>>, vector<1x128xf32>
    %c5 = arith.constant 5 : index
    %c0_19 = arith.constant 0 : index
    %41 = vector.load %arg3[%c5, %c0_19] : memref<21x128xf32, #tpu.memory_space<vmem>>, vector<1x128xf32>
    %c0_20 = arith.constant 0 : index
    %c0_21 = arith.constant 0 : index
    %42 = vector.load %arg5[%c0_20, %c0_21] : memref<128x128xf32, #tpu.memory_space<vmem>>, vector<128x128xf32>
    %cst_22 = arith.constant dense<0.000000e+00> : vector<32x128xf32>
    %43 = tpu.matmul %38, %42, %cst_22 {dimension_numbers = #tpu.dot_dimension_numbers<[1], [0], [0], [1], [0, 0, 1, 1], [], []>, precision = #tpu.contract_precision<fp32>} : vector<32x128xf32>, vector<128x128xf32>, vector<32x128xf32> -> vector<32x128xf32>
    %44 = vector.broadcast %39 : vector<1x128xf32> to vector<32x128xf32>
    %45 = arith.addf %43, %44 : vector<32x128xf32>
    %cst_23 = arith.constant dense<0.000000e+00> : vector<32xf32>
    %46 = vector.multi_reduction <add>, %45, %cst_23 [1] : vector<32x128xf32> to vector<32xf32>
    %47 = vector.shape_cast %46 : vector<32xf32> to vector<32x1xf32>
    %cst_24 = arith.constant 1.280000e+02 : f32
    %48 = vector.broadcast %cst_24 : f32 to vector<32x1xf32>
    %49 = arith.divf %47, %48 : vector<32x1xf32>
    %50 = arith.mulf %45, %45 : vector<32x128xf32>
    %cst_25 = arith.constant dense<0.000000e+00> : vector<32xf32>
    %51 = vector.multi_reduction <add>, %50, %cst_25 [1] : vector<32x128xf32> to vector<32xf32>
    %52 = vector.shape_cast %51 : vector<32xf32> to vector<32x1xf32>
    %cst_26 = arith.constant 1.280000e+02 : f32
    %53 = vector.broadcast %cst_26 : f32 to vector<32x1xf32>
    %54 = arith.divf %52, %53 : vector<32x1xf32>
    %55 = arith.mulf %49, %49 : vector<32x1xf32>
    %56 = arith.subf %54, %55 : vector<32x1xf32>
    %57 = vector.broadcast %49 : vector<32x1xf32> to vector<32x128xf32>
    %58 = arith.subf %45, %57 : vector<32x128xf32>
    %cst_27 = arith.constant 9.99999974E-6 : f32
    %59 = vector.broadcast %cst_27 : f32 to vector<32x1xf32>
    %60 = arith.addf %56, %59 : vector<32x1xf32>
    %61 = math.rsqrt %60 : vector<32x1xf32>
    %62 = vector.broadcast %61 : vector<32x1xf32> to vector<32x128xf32>
    %63 = arith.mulf %58, %62 : vector<32x128xf32>
    %64 = vector.broadcast %40 : vector<1x128xf32> to vector<32x128xf32>
    %65 = arith.mulf %63, %64 : vector<32x128xf32>
    %66 = vector.broadcast %41 : vector<1x128xf32> to vector<32x128xf32>
    %67 = arith.addf %65, %66 : vector<32x128xf32>
    %cst_28 = arith.constant 0.000000e+00 : f32
    %68 = vector.broadcast %cst_28 : f32 to vector<32x128xf32>
    %69 = arith.cmpf ogt, %67, %68 : vector<32x128xf32>
    %cst_29 = arith.constant 0.000000e+00 : f32
    %70 = vector.broadcast %cst_29 : f32 to vector<32x128xf32>
    %71 = arith.minimumf %67, %70 : vector<32x128xf32>
    %72 = math.exp %71 : vector<32x128xf32>
    %cst_30 = arith.constant 1.000000e+00 : f32
    %73 = vector.broadcast %cst_30 : f32 to vector<32x128xf32>
    %74 = arith.subf %72, %73 : vector<32x128xf32>
    %75 = arith.select %69, %67, %74 : vector<32x128xi1>, vector<32x128xf32>
    %c6 = arith.constant 6 : index
    %c0_31 = arith.constant 0 : index
    %76 = vector.load %arg3[%c6, %c0_31] : memref<21x128xf32, #tpu.memory_space<vmem>>, vector<1x128xf32>
    %c7 = arith.constant 7 : index
    %c0_32 = arith.constant 0 : index
    %77 = vector.load %arg3[%c7, %c0_32] : memref<21x128xf32, #tpu.memory_space<vmem>>, vector<1x128xf32>
    %c8 = arith.constant 8 : index
    %c0_33 = arith.constant 0 : index
    %78 = vector.load %arg3[%c8, %c0_33] : memref<21x128xf32, #tpu.memory_space<vmem>>, vector<1x128xf32>
    %c0_34 = arith.constant 0 : index
    %c0_35 = arith.constant 0 : index
    %79 = vector.load %arg6[%c0_34, %c0_35] : memref<128x128xf32, #tpu.memory_space<vmem>>, vector<128x128xf32>
    %cst_36 = arith.constant dense<0.000000e+00> : vector<32x128xf32>
    %80 = tpu.matmul %75, %79, %cst_36 {dimension_numbers = #tpu.dot_dimension_numbers<[1], [0], [0], [1], [0, 0, 1, 1], [], []>, precision = #tpu.contract_precision<fp32>} : vector<32x128xf32>, vector<128x128xf32>, vector<32x128xf32> -> vector<32x128xf32>
    %81 = vector.broadcast %76 : vector<1x128xf32> to vector<32x128xf32>
    %82 = arith.addf %80, %81 : vector<32x128xf32>
    %cst_37 = arith.constant dense<0.000000e+00> : vector<32xf32>
    %83 = vector.multi_reduction <add>, %82, %cst_37 [1] : vector<32x128xf32> to vector<32xf32>
    %84 = vector.shape_cast %83 : vector<32xf32> to vector<32x1xf32>
    %cst_38 = arith.constant 1.280000e+02 : f32
    %85 = vector.broadcast %cst_38 : f32 to vector<32x1xf32>
    %86 = arith.divf %84, %85 : vector<32x1xf32>
    %87 = arith.mulf %82, %82 : vector<32x128xf32>
    %cst_39 = arith.constant dense<0.000000e+00> : vector<32xf32>
    %88 = vector.multi_reduction <add>, %87, %cst_39 [1] : vector<32x128xf32> to vector<32xf32>
    %89 = vector.shape_cast %88 : vector<32xf32> to vector<32x1xf32>
    %cst_40 = arith.constant 1.280000e+02 : f32
    %90 = vector.broadcast %cst_40 : f32 to vector<32x1xf32>
    %91 = arith.divf %89, %90 : vector<32x1xf32>
    %92 = arith.mulf %86, %86 : vector<32x1xf32>
    %93 = arith.subf %91, %92 : vector<32x1xf32>
    %94 = vector.broadcast %86 : vector<32x1xf32> to vector<32x128xf32>
    %95 = arith.subf %82, %94 : vector<32x128xf32>
    %cst_41 = arith.constant 9.99999974E-6 : f32
    %96 = vector.broadcast %cst_41 : f32 to vector<32x1xf32>
    %97 = arith.addf %93, %96 : vector<32x1xf32>
    %98 = math.rsqrt %97 : vector<32x1xf32>
    %99 = vector.broadcast %98 : vector<32x1xf32> to vector<32x128xf32>
    %100 = arith.mulf %95, %99 : vector<32x128xf32>
    %101 = vector.broadcast %77 : vector<1x128xf32> to vector<32x128xf32>
    %102 = arith.mulf %100, %101 : vector<32x128xf32>
    %103 = vector.broadcast %78 : vector<1x128xf32> to vector<32x128xf32>
    %104 = arith.addf %102, %103 : vector<32x128xf32>
    %cst_42 = arith.constant 0.000000e+00 : f32
    %105 = vector.broadcast %cst_42 : f32 to vector<32x128xf32>
    %106 = arith.cmpf ogt, %104, %105 : vector<32x128xf32>
    %cst_43 = arith.constant 0.000000e+00 : f32
    %107 = vector.broadcast %cst_43 : f32 to vector<32x128xf32>
    %108 = arith.minimumf %104, %107 : vector<32x128xf32>
    %109 = math.exp %108 : vector<32x128xf32>
    %cst_44 = arith.constant 1.000000e+00 : f32
    %110 = vector.broadcast %cst_44 : f32 to vector<32x128xf32>
    %111 = arith.subf %109, %110 : vector<32x128xf32>
    %112 = arith.select %106, %104, %111 : vector<32x128xi1>, vector<32x128xf32>
    %c0_45 = arith.constant 0 : index
    %c0_46 = arith.constant 0 : index
    %113 = vector.load %arg7[%c0_45, %c0_46] : memref<128x5xf32, #tpu.memory_space<vmem>>, vector<128x5xf32>
    %cst_47 = arith.constant dense<0.000000e+00> : vector<32x5xf32>
    %114 = tpu.matmul %112, %113, %cst_47 {dimension_numbers = #tpu.dot_dimension_numbers<[1], [0], [0], [1], [0, 0, 1, 1], [], []>, precision = #tpu.contract_precision<fp32>} : vector<32x128xf32>, vector<128x5xf32>, vector<32x5xf32> -> vector<32x5xf32>
    %c9 = arith.constant 9 : index
    %c0_48 = arith.constant 0 : index
    %115 = vector.load %arg3[%c9, %c0_48] : memref<21x128xf32, #tpu.memory_space<vmem>>, vector<1x5xf32>
    %116 = vector.broadcast %115 : vector<1x5xf32> to vector<32x5xf32>
    %117 = arith.addf %114, %116 : vector<32x5xf32>
    %c0_49 = arith.constant 0 : index
    %c0_50 = arith.constant 0 : index
    %118 = vector.load %arg8[%c0_49, %c0_50] : memref<128x5xf32, #tpu.memory_space<vmem>>, vector<128x5xf32>
    %cst_51 = arith.constant dense<0.000000e+00> : vector<32x5xf32>
    %119 = tpu.matmul %112, %118, %cst_51 {dimension_numbers = #tpu.dot_dimension_numbers<[1], [0], [0], [1], [0, 0, 1, 1], [], []>, precision = #tpu.contract_precision<fp32>} : vector<32x128xf32>, vector<128x5xf32>, vector<32x5xf32> -> vector<32x5xf32>
    %c10 = arith.constant 10 : index
    %c0_52 = arith.constant 0 : index
    %120 = vector.load %arg3[%c10, %c0_52] : memref<21x128xf32, #tpu.memory_space<vmem>>, vector<1x5xf32>
    %121 = vector.broadcast %120 : vector<1x5xf32> to vector<32x5xf32>
    %122 = arith.addf %119, %121 : vector<32x5xf32>
    %cst_53 = arith.constant 5.000000e-01 : f32
    %123 = vector.broadcast %cst_53 : f32 to vector<32x5xf32>
    %124 = arith.mulf %123, %122 : vector<32x5xf32>
    %125 = math.exp %124 : vector<32x5xf32>
    %126 = arith.mulf %1, %125 : vector<32x5xf32>
    %127 = arith.addf %117, %126 : vector<32x5xf32>
    %c11 = arith.constant 11 : index
    %c0_54 = arith.constant 0 : index
    %128 = vector.load %arg3[%c11, %c0_54] : memref<21x128xf32, #tpu.memory_space<vmem>>, vector<1x128xf32>
    %c12 = arith.constant 12 : index
    %c0_55 = arith.constant 0 : index
    %129 = vector.load %arg3[%c12, %c0_55] : memref<21x128xf32, #tpu.memory_space<vmem>>, vector<1x128xf32>
    %c13 = arith.constant 13 : index
    %c0_56 = arith.constant 0 : index
    %130 = vector.load %arg3[%c13, %c0_56] : memref<21x128xf32, #tpu.memory_space<vmem>>, vector<1x128xf32>
    %c0_57 = arith.constant 0 : index
    %c0_58 = arith.constant 0 : index
    %131 = vector.load %arg9[%c0_57, %c0_58] : memref<5x128xf32, #tpu.memory_space<vmem>>, vector<5x128xf32>
    %132 = vector.extract_strided_slice %127 {offsets = [0, 0], sizes = [32, 1], strides = [1, 1]} : vector<32x5xf32> to vector<32x1xf32>
    %133 = vector.extract_strided_slice %131 {offsets = [0, 0], sizes = [1, 128], strides = [1, 1]} : vector<5x128xf32> to vector<1x128xf32>
    %134 = vector.broadcast %132 : vector<32x1xf32> to vector<32x128xf32>
    %135 = vector.broadcast %133 : vector<1x128xf32> to vector<32x128xf32>
    %136 = arith.mulf %134, %135 : vector<32x128xf32>
    %137 = vector.extract_strided_slice %127 {offsets = [0, 1], sizes = [32, 1], strides = [1, 1]} : vector<32x5xf32> to vector<32x1xf32>
    %138 = vector.extract_strided_slice %131 {offsets = [1, 0], sizes = [1, 128], strides = [1, 1]} : vector<5x128xf32> to vector<1x128xf32>
    %139 = vector.broadcast %137 : vector<32x1xf32> to vector<32x128xf32>
    %140 = vector.broadcast %138 : vector<1x128xf32> to vector<32x128xf32>
    %141 = arith.mulf %139, %140 : vector<32x128xf32>
    %142 = arith.addf %136, %141 : vector<32x128xf32>
    %143 = vector.extract_strided_slice %127 {offsets = [0, 2], sizes = [32, 1], strides = [1, 1]} : vector<32x5xf32> to vector<32x1xf32>
    %144 = vector.extract_strided_slice %131 {offsets = [2, 0], sizes = [1, 128], strides = [1, 1]} : vector<5x128xf32> to vector<1x128xf32>
    %145 = vector.broadcast %143 : vector<32x1xf32> to vector<32x128xf32>
    %146 = vector.broadcast %144 : vector<1x128xf32> to vector<32x128xf32>
    %147 = arith.mulf %145, %146 : vector<32x128xf32>
    %148 = arith.addf %142, %147 : vector<32x128xf32>
    %149 = vector.extract_strided_slice %127 {offsets = [0, 3], sizes = [32, 1], strides = [1, 1]} : vector<32x5xf32> to vector<32x1xf32>
    %150 = vector.extract_strided_slice %131 {offsets = [3, 0], sizes = [1, 128], strides = [1, 1]} : vector<5x128xf32> to vector<1x128xf32>
    %151 = vector.broadcast %149 : vector<32x1xf32> to vector<32x128xf32>
    %152 = vector.broadcast %150 : vector<1x128xf32> to vector<32x128xf32>
    %153 = arith.mulf %151, %152 : vector<32x128xf32>
    %154 = arith.addf %148, %153 : vector<32x128xf32>
    %155 = vector.extract_strided_slice %127 {offsets = [0, 4], sizes = [32, 1], strides = [1, 1]} : vector<32x5xf32> to vector<32x1xf32>
    %156 = vector.extract_strided_slice %131 {offsets = [4, 0], sizes = [1, 128], strides = [1, 1]} : vector<5x128xf32> to vector<1x128xf32>
    %157 = vector.broadcast %155 : vector<32x1xf32> to vector<32x128xf32>
    %158 = vector.broadcast %156 : vector<1x128xf32> to vector<32x128xf32>
    %159 = arith.mulf %157, %158 : vector<32x128xf32>
    %160 = arith.addf %154, %159 : vector<32x128xf32>
    %161 = vector.broadcast %128 : vector<1x128xf32> to vector<32x128xf32>
    %162 = arith.addf %160, %161 : vector<32x128xf32>
    %cst_59 = arith.constant dense<0.000000e+00> : vector<32xf32>
    %163 = vector.multi_reduction <add>, %162, %cst_59 [1] : vector<32x128xf32> to vector<32xf32>
    %164 = vector.shape_cast %163 : vector<32xf32> to vector<32x1xf32>
    %cst_60 = arith.constant 1.280000e+02 : f32
    %165 = vector.broadcast %cst_60 : f32 to vector<32x1xf32>
    %166 = arith.divf %164, %165 : vector<32x1xf32>
    %167 = arith.mulf %162, %162 : vector<32x128xf32>
    %cst_61 = arith.constant dense<0.000000e+00> : vector<32xf32>
    %168 = vector.multi_reduction <add>, %167, %cst_61 [1] : vector<32x128xf32> to vector<32xf32>
    %169 = vector.shape_cast %168 : vector<32xf32> to vector<32x1xf32>
    %cst_62 = arith.constant 1.280000e+02 : f32
    %170 = vector.broadcast %cst_62 : f32 to vector<32x1xf32>
    %171 = arith.divf %169, %170 : vector<32x1xf32>
    %172 = arith.mulf %166, %166 : vector<32x1xf32>
    %173 = arith.subf %171, %172 : vector<32x1xf32>
    %174 = vector.broadcast %166 : vector<32x1xf32> to vector<32x128xf32>
    %175 = arith.subf %162, %174 : vector<32x128xf32>
    %cst_63 = arith.constant 9.99999974E-6 : f32
    %176 = vector.broadcast %cst_63 : f32 to vector<32x1xf32>
    %177 = arith.addf %173, %176 : vector<32x1xf32>
    %178 = math.rsqrt %177 : vector<32x1xf32>
    %179 = vector.broadcast %178 : vector<32x1xf32> to vector<32x128xf32>
    %180 = arith.mulf %175, %179 : vector<32x128xf32>
    %181 = vector.broadcast %129 : vector<1x128xf32> to vector<32x128xf32>
    %182 = arith.mulf %180, %181 : vector<32x128xf32>
    %183 = vector.broadcast %130 : vector<1x128xf32> to vector<32x128xf32>
    %184 = arith.addf %182, %183 : vector<32x128xf32>
    %cst_64 = arith.constant 0.000000e+00 : f32
    %185 = vector.broadcast %cst_64 : f32 to vector<32x128xf32>
    %186 = arith.cmpf ogt, %184, %185 : vector<32x128xf32>
    %cst_65 = arith.constant 0.000000e+00 : f32
    %187 = vector.broadcast %cst_65 : f32 to vector<32x128xf32>
    %188 = arith.minimumf %184, %187 : vector<32x128xf32>
    %189 = math.exp %188 : vector<32x128xf32>
    %cst_66 = arith.constant 1.000000e+00 : f32
    %190 = vector.broadcast %cst_66 : f32 to vector<32x128xf32>
    %191 = arith.subf %189, %190 : vector<32x128xf32>
    %192 = arith.select %186, %184, %191 : vector<32x128xi1>, vector<32x128xf32>
    %c14 = arith.constant 14 : index
    %c0_67 = arith.constant 0 : index
    %193 = vector.load %arg3[%c14, %c0_67] : memref<21x128xf32, #tpu.memory_space<vmem>>, vector<1x128xf32>
    %c15 = arith.constant 15 : index
    %c0_68 = arith.constant 0 : index
    %194 = vector.load %arg3[%c15, %c0_68] : memref<21x128xf32, #tpu.memory_space<vmem>>, vector<1x128xf32>
    %c16 = arith.constant 16 : index
    %c0_69 = arith.constant 0 : index
    %195 = vector.load %arg3[%c16, %c0_69] : memref<21x128xf32, #tpu.memory_space<vmem>>, vector<1x128xf32>
    %c0_70 = arith.constant 0 : index
    %c0_71 = arith.constant 0 : index
    %196 = vector.load %arg10[%c0_70, %c0_71] : memref<128x128xf32, #tpu.memory_space<vmem>>, vector<128x128xf32>
    %cst_72 = arith.constant dense<0.000000e+00> : vector<32x128xf32>
    %197 = tpu.matmul %192, %196, %cst_72 {dimension_numbers = #tpu.dot_dimension_numbers<[1], [0], [0], [1], [0, 0, 1, 1], [], []>, precision = #tpu.contract_precision<fp32>} : vector<32x128xf32>, vector<128x128xf32>, vector<32x128xf32> -> vector<32x128xf32>
    %198 = vector.broadcast %193 : vector<1x128xf32> to vector<32x128xf32>
    %199 = arith.addf %197, %198 : vector<32x128xf32>
    %cst_73 = arith.constant dense<0.000000e+00> : vector<32xf32>
    %200 = vector.multi_reduction <add>, %199, %cst_73 [1] : vector<32x128xf32> to vector<32xf32>
    %201 = vector.shape_cast %200 : vector<32xf32> to vector<32x1xf32>
    %cst_74 = arith.constant 1.280000e+02 : f32
    %202 = vector.broadcast %cst_74 : f32 to vector<32x1xf32>
    %203 = arith.divf %201, %202 : vector<32x1xf32>
    %204 = arith.mulf %199, %199 : vector<32x128xf32>
    %cst_75 = arith.constant dense<0.000000e+00> : vector<32xf32>
    %205 = vector.multi_reduction <add>, %204, %cst_75 [1] : vector<32x128xf32> to vector<32xf32>
    %206 = vector.shape_cast %205 : vector<32xf32> to vector<32x1xf32>
    %cst_76 = arith.constant 1.280000e+02 : f32
    %207 = vector.broadcast %cst_76 : f32 to vector<32x1xf32>
    %208 = arith.divf %206, %207 : vector<32x1xf32>
    %209 = arith.mulf %203, %203 : vector<32x1xf32>
    %210 = arith.subf %208, %209 : vector<32x1xf32>
    %211 = vector.broadcast %203 : vector<32x1xf32> to vector<32x128xf32>
    %212 = arith.subf %199, %211 : vector<32x128xf32>
    %cst_77 = arith.constant 9.99999974E-6 : f32
    %213 = vector.broadcast %cst_77 : f32 to vector<32x1xf32>
    %214 = arith.addf %210, %213 : vector<32x1xf32>
    %215 = math.rsqrt %214 : vector<32x1xf32>
    %216 = vector.broadcast %215 : vector<32x1xf32> to vector<32x128xf32>
    %217 = arith.mulf %212, %216 : vector<32x128xf32>
    %218 = vector.broadcast %194 : vector<1x128xf32> to vector<32x128xf32>
    %219 = arith.mulf %217, %218 : vector<32x128xf32>
    %220 = vector.broadcast %195 : vector<1x128xf32> to vector<32x128xf32>
    %221 = arith.addf %219, %220 : vector<32x128xf32>
    %cst_78 = arith.constant 0.000000e+00 : f32
    %222 = vector.broadcast %cst_78 : f32 to vector<32x128xf32>
    %223 = arith.cmpf ogt, %221, %222 : vector<32x128xf32>
    %cst_79 = arith.constant 0.000000e+00 : f32
    %224 = vector.broadcast %cst_79 : f32 to vector<32x128xf32>
    %225 = arith.minimumf %221, %224 : vector<32x128xf32>
    %226 = math.exp %225 : vector<32x128xf32>
    %cst_80 = arith.constant 1.000000e+00 : f32
    %227 = vector.broadcast %cst_80 : f32 to vector<32x128xf32>
    %228 = arith.subf %226, %227 : vector<32x128xf32>
    %229 = arith.select %223, %221, %228 : vector<32x128xi1>, vector<32x128xf32>
    %c17 = arith.constant 17 : index
    %c0_81 = arith.constant 0 : index
    %230 = vector.load %arg3[%c17, %c0_81] : memref<21x128xf32, #tpu.memory_space<vmem>>, vector<1x128xf32>
    %c18 = arith.constant 18 : index
    %c0_82 = arith.constant 0 : index
    %231 = vector.load %arg3[%c18, %c0_82] : memref<21x128xf32, #tpu.memory_space<vmem>>, vector<1x128xf32>
    %c19 = arith.constant 19 : index
    %c0_83 = arith.constant 0 : index
    %232 = vector.load %arg3[%c19, %c0_83] : memref<21x128xf32, #tpu.memory_space<vmem>>, vector<1x128xf32>
    %c0_84 = arith.constant 0 : index
    %c0_85 = arith.constant 0 : index
    %233 = vector.load %arg11[%c0_84, %c0_85] : memref<128x128xf32, #tpu.memory_space<vmem>>, vector<128x128xf32>
    %cst_86 = arith.constant dense<0.000000e+00> : vector<32x128xf32>
    %234 = tpu.matmul %229, %233, %cst_86 {dimension_numbers = #tpu.dot_dimension_numbers<[1], [0], [0], [1], [0, 0, 1, 1], [], []>, precision = #tpu.contract_precision<fp32>} : vector<32x128xf32>, vector<128x128xf32>, vector<32x128xf32> -> vector<32x128xf32>
    %235 = vector.broadcast %230 : vector<1x128xf32> to vector<32x128xf32>
    %236 = arith.addf %234, %235 : vector<32x128xf32>
    %cst_87 = arith.constant dense<0.000000e+00> : vector<32xf32>
    %237 = vector.multi_reduction <add>, %236, %cst_87 [1] : vector<32x128xf32> to vector<32xf32>
    %238 = vector.shape_cast %237 : vector<32xf32> to vector<32x1xf32>
    %cst_88 = arith.constant 1.280000e+02 : f32
    %239 = vector.broadcast %cst_88 : f32 to vector<32x1xf32>
    %240 = arith.divf %238, %239 : vector<32x1xf32>
    %241 = arith.mulf %236, %236 : vector<32x128xf32>
    %cst_89 = arith.constant dense<0.000000e+00> : vector<32xf32>
    %242 = vector.multi_reduction <add>, %241, %cst_89 [1] : vector<32x128xf32> to vector<32xf32>
    %243 = vector.shape_cast %242 : vector<32xf32> to vector<32x1xf32>
    %cst_90 = arith.constant 1.280000e+02 : f32
    %244 = vector.broadcast %cst_90 : f32 to vector<32x1xf32>
    %245 = arith.divf %243, %244 : vector<32x1xf32>
    %246 = arith.mulf %240, %240 : vector<32x1xf32>
    %247 = arith.subf %245, %246 : vector<32x1xf32>
    %248 = vector.broadcast %240 : vector<32x1xf32> to vector<32x128xf32>
    %249 = arith.subf %236, %248 : vector<32x128xf32>
    %cst_91 = arith.constant 9.99999974E-6 : f32
    %250 = vector.broadcast %cst_91 : f32 to vector<32x1xf32>
    %251 = arith.addf %247, %250 : vector<32x1xf32>
    %252 = math.rsqrt %251 : vector<32x1xf32>
    %253 = vector.broadcast %252 : vector<32x1xf32> to vector<32x128xf32>
    %254 = arith.mulf %249, %253 : vector<32x128xf32>
    %255 = vector.broadcast %231 : vector<1x128xf32> to vector<32x128xf32>
    %256 = arith.mulf %254, %255 : vector<32x128xf32>
    %257 = vector.broadcast %232 : vector<1x128xf32> to vector<32x128xf32>
    %258 = arith.addf %256, %257 : vector<32x128xf32>
    %cst_92 = arith.constant 0.000000e+00 : f32
    %259 = vector.broadcast %cst_92 : f32 to vector<32x128xf32>
    %260 = arith.cmpf ogt, %258, %259 : vector<32x128xf32>
    %cst_93 = arith.constant 0.000000e+00 : f32
    %261 = vector.broadcast %cst_93 : f32 to vector<32x128xf32>
    %262 = arith.minimumf %258, %261 : vector<32x128xf32>
    %263 = math.exp %262 : vector<32x128xf32>
    %cst_94 = arith.constant 1.000000e+00 : f32
    %264 = vector.broadcast %cst_94 : f32 to vector<32x128xf32>
    %265 = arith.subf %263, %264 : vector<32x128xf32>
    %266 = arith.select %260, %258, %265 : vector<32x128xi1>, vector<32x128xf32>
    %c0_95 = arith.constant 0 : index
    %c0_96 = arith.constant 0 : index
    %267 = vector.load %arg12[%c0_95, %c0_96] : memref<128x32xf32, #tpu.memory_space<vmem>>, vector<128x32xf32>
    %cst_97 = arith.constant dense<0.000000e+00> : vector<32x32xf32>
    %268 = tpu.matmul %266, %267, %cst_97 {dimension_numbers = #tpu.dot_dimension_numbers<[1], [0], [0], [1], [0, 0, 1, 1], [], []>, precision = #tpu.contract_precision<fp32>} : vector<32x128xf32>, vector<128x32xf32>, vector<32x32xf32> -> vector<32x32xf32>
    %c20 = arith.constant 20 : index
    %c0_98 = arith.constant 0 : index
    %269 = vector.load %arg3[%c20, %c0_98] : memref<21x128xf32, #tpu.memory_space<vmem>>, vector<1x32xf32>
    %270 = vector.broadcast %269 : vector<1x32xf32> to vector<32x32xf32>
    %271 = arith.addf %268, %270 : vector<32x32xf32>
    %272 = arith.subf %271, %0 : vector<32x32xf32>
    %273 = arith.mulf %272, %272 : vector<32x32xf32>
    %cst_99 = arith.constant dense<0.000000e+00> : vector<32xf32>
    %274 = vector.multi_reduction <add>, %273, %cst_99 [1] : vector<32x32xf32> to vector<32xf32>
    %275 = vector.shape_cast %274 : vector<32xf32> to vector<32x1xf32>
    %276 = math.sqrt %275 : vector<32x1xf32>
    %cst_100 = arith.constant 1.000000e+00 : f32
    %277 = vector.broadcast %cst_100 : f32 to vector<32x5xf32>
    %278 = arith.addf %277, %122 : vector<32x5xf32>
    %279 = arith.mulf %117, %117 : vector<32x5xf32>
    %280 = arith.subf %278, %279 : vector<32x5xf32>
    %281 = arith.mulf %125, %125 : vector<32x5xf32>
    %282 = arith.subf %280, %281 : vector<32x5xf32>
    %cst_101 = arith.constant -5.000000e+00 : f32
    %283 = vector.broadcast %cst_101 : f32 to vector<32x5xf32>
    %284 = arith.mulf %283, %282 : vector<32x5xf32>
    %cst_102 = arith.constant 0.000000e+00 : f32
    %285 = vector.broadcast %cst_102 : f32 to vector<32x90xf32>
    %286 = tpu.concatenate %271, %276, %284, %285 in 1 : vector<32x32xf32>, vector<32x1xf32>, vector<32x5xf32>, vector<32x90xf32> -> vector<32x128xf32>
    %c0_103 = arith.constant 0 : index
    %c0_104 = arith.constant 0 : index
    %287 = vector.load %arg13[%c0_103, %c0_104] : memref<32x128xf32, #tpu.memory_space<vmem>>, vector<32x128xf32>
    tpu.vector_store %arg13[%c0_103, %c0_104], %286 {strides = array<i32>} : memref<32x128xf32, #tpu.memory_space<vmem>>, vector<32x128xf32>,
    return
  }
  func.func @transform_0(%arg0: i32) -> (i32, i32) {
    %c0_i32 = arith.constant 0 : i32
    %c0_i32_0 = arith.constant 0 : i32
    return %arg0, %c0_i32 : i32, i32
  }
  func.func @transform_1(%arg0: i32) -> (i32, i32) {
    %c0_i32 = arith.constant 0 : i32
    %c0_i32_0 = arith.constant 0 : i32
    return %arg0, %c0_i32 : i32, i32
  }
  func.func @transform_2(%arg0: i32) -> (i32, i32) {
    %c0_i32 = arith.constant 0 : i32
    %c0_i32_0 = arith.constant 0 : i32
    %c0_i32_1 = arith.constant 0 : i32
    return %c0_i32, %c0_i32_0 : i32, i32
  }
  func.func @transform_3(%arg0: i32) -> (i32, i32) {
    %c0_i32 = arith.constant 0 : i32
    %c0_i32_0 = arith.constant 0 : i32
    %c0_i32_1 = arith.constant 0 : i32
    return %c0_i32, %c0_i32_0 : i32, i32
  }
  func.func @transform_4(%arg0: i32) -> (i32, i32) {
    %c0_i32 = arith.constant 0 : i32
    %c0_i32_0 = arith.constant 0 : i32
    %c0_i32_1 = arith.constant 0 : i32
    return %c0_i32, %c0_i32_0 : i32, i32
  }
  func.func @transform_5(%arg0: i32) -> (i32, i32) {
    %c0_i32 = arith.constant 0 : i32
    %c0_i32_0 = arith.constant 0 : i32
    %c0_i32_1 = arith.constant 0 : i32
    return %c0_i32, %c0_i32_0 : i32, i32
  }
  func.func @transform_6(%arg0: i32) -> (i32, i32) {
    %c0_i32 = arith.constant 0 : i32
    %c0_i32_0 = arith.constant 0 : i32
    %c0_i32_1 = arith.constant 0 : i32
    return %c0_i32, %c0_i32_0 : i32, i32
  }
  func.func @transform_7(%arg0: i32) -> (i32, i32) {
    %c0_i32 = arith.constant 0 : i32
    %c0_i32_0 = arith.constant 0 : i32
    %c0_i32_1 = arith.constant 0 : i32
    return %c0_i32, %c0_i32_0 : i32, i32
  }
  func.func @transform_8(%arg0: i32) -> (i32, i32) {
    %c0_i32 = arith.constant 0 : i32
    %c0_i32_0 = arith.constant 0 : i32
    %c0_i32_1 = arith.constant 0 : i32
    return %c0_i32, %c0_i32_0 : i32, i32
  }
  func.func @transform_9(%arg0: i32) -> (i32, i32) {
    %c0_i32 = arith.constant 0 : i32
    %c0_i32_0 = arith.constant 0 : i32
    %c0_i32_1 = arith.constant 0 : i32
    return %c0_i32, %c0_i32_0 : i32, i32
  }
  func.func @transform_10(%arg0: i32) -> (i32, i32) {
    %c0_i32 = arith.constant 0 : i32
    %c0_i32_0 = arith.constant 0 : i32
    %c0_i32_1 = arith.constant 0 : i32
    return %c0_i32, %c0_i32_0 : i32, i32
  }
  func.func @transform_11(%arg0: i32) -> (i32, i32) {
    %c0_i32 = arith.constant 0 : i32
    %c0_i32_0 = arith.constant 0 : i32
    %c0_i32_1 = arith.constant 0 : i32
    return %c0_i32, %c0_i32_0 : i32, i32
  }
  func.func @transform_12(%arg0: i32) -> (i32, i32) {
    %c0_i32 = arith.constant 0 : i32
    %c0_i32_0 = arith.constant 0 : i32
    return %arg0, %c0_i32 : i32, i32
  }
}

</mosaic_0001>

<llo_original>
// kernel: tpu_custom_call.1
$region0: #{tpu_custom_call.1}
  #allocation0 [shape = 'u32[]', space=smem, size = 0x4, offset = 0x4, fixed_abs, tag = 'smem constant byte address 0x4 - core index']
  #allocation1 [shape = 'u32[144,128]{1,0:T(1,128)}', space=vmem, size = 0x12000, scoped, tag = 'internal scratch']
  %s0 = inlined_call_operand.vmem [shape: f32[64,32], index: 0, kind: input, shape index: {}]
  %s1 = inlined_call_operand.vmem [shape: f32[64,5], index: 1, kind: input, shape index: {}]
  %s2 = inlined_call_operand.vmem [shape: f32[21,128], index: 2, kind: input, shape index: {}]
  %s3 = inlined_call_operand.vmem [shape: f32[32,128], index: 3, kind: input, shape index: {}]
  %s4 = inlined_call_operand.vmem [shape: f32[128,128], index: 4, kind: input, shape index: {}]
  %s5 = inlined_call_operand.vmem [shape: f32[128,128], index: 5, kind: input, shape index: {}]
  %s6 = inlined_call_operand.vmem [shape: f32[128,5], index: 6, kind: input, shape index: {}]
  %s7 = inlined_call_operand.vmem [shape: f32[128,5], index: 7, kind: input, shape index: {}]
  %s8 = inlined_call_operand.hbm [shape: f32[5,128], index: 8, kind: input, shape index: {}]
  %s9 = inlined_call_operand.vmem [shape: f32[128,128], index: 9, kind: input, shape index: {}]
  %s10 = inlined_call_operand.vmem [shape: f32[128,128], index: 10, kind: input, shape index: {}]
  %s11 = inlined_call_operand.vmem [shape: f32[128,32], index: 11, kind: input, shape index: {}]
  %s12 = inlined_call_operand.hbm [shape: f32[64,128], index: 12, kind: output, shape index: {}]
  %s13 = sld [smem:[#allocation0]]
  $region85: #{tpu_custom_call.1} parent=0
    _
  %s15 = ssub.s32 1, %s13
  %s16 = scalar_select 0, %s15, %s13
  $region1: #{tpu_custom_call.1} parent=0
    #allocation2 [shape = 'u8[4096]{0}', space=vmem, size = 0x1000, scoped, tag = 'input window, operand 8, single buffered']
    #allocation3 [shape = 's32[2]{0}', space=sflag, size = 0x8, scoped, tag = 'scoped memory for tpu_custom_call.1']
    #allocation4 [shape = 's32[2]{0}', space=sflag, size = 0x8, scoped, tag = 'scoped memory for tpu_custom_call.1']
    #allocation5 [shape = 'u8[32768]{0}', space=vmem, size = 0x8000, scoped, tag = 'output window, operand 0']
    %17 = vsyncpa [#allocation3], 0
    %18 = vsyncpa [#allocation4], 0
    %s19 = scalar_lea.sflag [#allocation4], 1
    %20 = vsyncpa %s19, 0
    loop: start=0, step=1, limit=4
    $region2: #{tpu_custom_call.1} parent=1 // loop_pre_header
      _
    $region3: #{tpu_custom_call.1} parent=1 // loop_header
      %s22 = sphi 0, %s26
      %p23 = scmp.ge.s32.totalorder %s22, 4
      %s32 = sphi 0, %s34
      %s35 = sphi 0, %s32
      %s36 = sphi 0, %s35
      %s52 = sphi 0, %s36
      %s58 = sphi 0, %s60
      %s61 = sphi 0, %s58
      %s62 = sphi 0, %s61
      %s78 = sphi 0, %s62
      %s82 = sphi 0, %s82
      %s84 = sphi 0, %s82
      %s85 = sphi 0, %s84
      %s99 = sphi 0, %s85
      %s103 = sphi 0, %s103
      %s105 = sphi 0, %s103
      %s106 = sphi 0, %s105
      %s120 = sphi 0, %s106
      %s124 = sphi 0, %s124
      %s126 = sphi 0, %s124
      %s127 = sphi 0, %s126
      %s141 = sphi 0, %s127
      %s145 = sphi 0, %s145
      %s147 = sphi 0, %s145
      %s148 = sphi 0, %s147
      %s162 = sphi 0, %s148
      %s166 = sphi 0, %s166
      %s168 = sphi 0, %s166
      %s169 = sphi 0, %s168
      %s183 = sphi 0, %s169
      %s187 = sphi 0, %s187
      %s189 = sphi 0, %s187
      %s190 = sphi 0, %s189
      %s204 = sphi 0, %s190
      %s208 = sphi 0, %s208
      %s210 = sphi 0, %s208
      %s211 = sphi 0, %s210
      %s225 = sphi 0, %s211
      %s229 = sphi 0, %s229
      %s231 = sphi 0, %s229
      %s232 = sphi 0, %s231
      %s246 = sphi 0, %s232
      %s250 = sphi 0, %s250
      %s252 = sphi 0, %s250
      %s253 = sphi 0, %s252
      %s267 = sphi 0, %s253
      %s271 = sphi 0, %s271
      %s273 = sphi 0, %s271
      %s274 = sphi 0, %s273
      %s288 = sphi 0, %s274
      %s294 = sphi 0, %s296
      %s297 = sphi 0, %s294
      %s298 = sphi 0, %s297
      %s314 = sphi 0, %s298
    $region4: #{tpu_custom_call.1} parent=1 // loop_header_branch
      %25 = sbr.rel (%p23) target = $region8
    $region5: #{tpu_custom_call.1} parent=1 // loop_body
      %s27 = ssub.s32 %s22, 1
      %s28 = ssub.s32 %s22, 2
      %s29 = sadd.s32 %s22, 1
      %s30 = ssub.s32 %s22, %s29
      %p31 = scmp.eq.s32.totalorder %s30, 0
      %s33 = sadd.s32 %s32, 1
      %s34 = scalar_select %p31, %s32, %s33
      %p37 = pneg %p31
      %p38 = scmp.eq.s32.totalorder %s22, 1
      %p39 = por %p37, %p38
      %p40 = scmp.ne.s32.totalorder %s32, %s35
      %p41 = scmp.eq.s32.totalorder %s22, 0
      %p42 = por %p40, %p41
      %p43 = scmp.ne.s32.totalorder %s32, %s35
      %p44 = scmp.eq.s32.totalorder %s27, 1
      %p45 = por %p43, %p44
      %p46 = scmp.ne.s32.totalorder %s35, %s36
      %p47 = scmp.eq.s32.totalorder %s27, 0
      %p48 = por %p46, %p47
      %p49 = scmp.ne.s32.totalorder %s35, %s36
      %p50 = scmp.eq.s32.totalorder %s28, 1
      %p51 = por %p49, %p50
      %p53 = scmp.ne.s32.totalorder %s36, %s52
      %p54 = scmp.eq.s32.totalorder %s28, 0
      %p55 = por %p53, %p54
      %s56 = ssub.s32 %s22, %s29
      %p57 = scmp.eq.s32.totalorder %s56, 0
      %s59 = sadd.s32 %s58, 1
      %s60 = scalar_select %p57, %s58, %s59
      %p63 = pneg %p57
      %p64 = scmp.eq.s32.totalorder %s22, 1
      %p65 = por %p63, %p64
      %p66 = scmp.ne.s32.totalorder %s58, %s61
      %p67 = scmp.eq.s32.totalorder %s22, 0
      %p68 = por %p66, %p67
      %p69 = scmp.ne.s32.totalorder %s58, %s61
      %p70 = scmp.eq.s32.totalorder %s27, 1
      %p71 = por %p69, %p70
      %p72 = scmp.ne.s32.totalorder %s61, %s62
      %p73 = scmp.eq.s32.totalorder %s27, 0
      %p74 = por %p72, %p73
      %p75 = scmp.ne.s32.totalorder %s61, %s62
      %p76 = scmp.eq.s32.totalorder %s28, 1
      %p77 = por %p75, %p76
      %p79 = scmp.ne.s32.totalorder %s62, %s78
      %p80 = scmp.eq.s32.totalorder %s28, 0
      %p81 = por %p79, %p80
      %s83 = sadd.s32 %s82, 1
      %p86 = scmp.eq.s32.totalorder %s22, 1
      %p87 = scmp.ne.s32.totalorder %s82, %s84
      %p88 = scmp.eq.s32.totalorder %s22, 0
      %p89 = por %p87, %p88
      %p90 = scmp.ne.s32.totalorder %s82, %s84
      %p91 = scmp.eq.s32.totalorder %s27, 1
      %p92 = por %p90, %p91
      %p93 = scmp.ne.s32.totalorder %s84, %s85
      %p94 = scmp.eq.s32.totalorder %s27, 0
      %p95 = por %p93, %p94
      %p96 = scmp.ne.s32.totalorder %s84, %s85
      %p97 = scmp.eq.s32.totalorder %s28, 1
      %p98 = por %p96, %p97
      %p100 = scmp.ne.s32.totalorder %s85, %s99
      %p101 = scmp.eq.s32.totalorder %s28, 0
      %p102 = por %p100, %p101
      %s104 = sadd.s32 %s103, 1
      %p107 = scmp.eq.s32.totalorder %s22, 1
      %p108 = scmp.ne.s32.totalorder %s103, %s105
      %p109 = scmp.eq.s32.totalorder %s22, 0
      %p110 = por %p108, %p109
      %p111 = scmp.ne.s32.totalorder %s103, %s105
      %p112 = scmp.eq.s32.totalorder %s27, 1
      %p113 = por %p111, %p112
      %p114 = scmp.ne.s32.totalorder %s105, %s106
      %p115 = scmp.eq.s32.totalorder %s27, 0
      %p116 = por %p114, %p115
      %p117 = scmp.ne.s32.totalorder %s105, %s106
      %p118 = scmp.eq.s32.totalorder %s28, 1
      %p119 = por %p117, %p118
      %p121 = scmp.ne.s32.totalorder %s106, %s120
      %p122 = scmp.eq.s32.totalorder %s28, 0
      %p123 = por %p121, %p122
      %s125 = sadd.s32 %s124, 1
      %p128 = scmp.eq.s32.totalorder %s22, 1
      %p129 = scmp.ne.s32.totalorder %s124, %s126
      %p130 = scmp.eq.s32.totalorder %s22, 0
      %p131 = por %p129, %p130
      %p132 = scmp.ne.s32.totalorder %s124, %s126
      %p133 = scmp.eq.s32.totalorder %s27, 1
      %p134 = por %p132, %p133
      %p135 = scmp.ne.s32.totalorder %s126, %s127
      %p136 = scmp.eq.s32.totalorder %s27, 0
      %p137 = por %p135, %p136
      %p138 = scmp.ne.s32.totalorder %s126, %s127
      %p139 = scmp.eq.s32.totalorder %s28, 1
      %p140 = por %p138, %p139
      %p142 = scmp.ne.s32.totalorder %s127, %s141
      %p143 = scmp.eq.s32.totalorder %s28, 0
      %p144 = por %p142, %p143
      %s146 = sadd.s32 %s145, 1
      %p149 = scmp.eq.s32.totalorder %s22, 1
      %p150 = scmp.ne.s32.totalorder %s145, %s147
      %p151 = scmp.eq.s32.totalorder %s22, 0
      %p152 = por %p150, %p151
      %p153 = scmp.ne.s32.totalorder %s145, %s147
      %p154 = scmp.eq.s32.totalorder %s27, 1
      %p155 = por %p153, %p154
      %p156 = scmp.ne.s32.totalorder %s147, %s148
      %p157 = scmp.eq.s32.totalorder %s27, 0
      %p158 = por %p156, %p157
      %p159 = scmp.ne.s32.totalorder %s147, %s148
      %p160 = scmp.eq.s32.totalorder %s28, 1
      %p161 = por %p159, %p160
      %p163 = scmp.ne.s32.totalorder %s148, %s162
      %p164 = scmp.eq.s32.totalorder %s28, 0
      %p165 = por %p163, %p164
      %s167 = sadd.s32 %s166, 1
      %p170 = scmp.eq.s32.totalorder %s22, 1
      %p171 = scmp.ne.s32.totalorder %s166, %s168
      %p172 = scmp.eq.s32.totalorder %s22, 0
      %p173 = por %p171, %p172
      %p174 = scmp.ne.s32.totalorder %s166, %s168
      %p175 = scmp.eq.s32.totalorder %s27, 1
      %p176 = por %p174, %p175
      %p177 = scmp.ne.s32.totalorder %s168, %s169
      %p178 = scmp.eq.s32.totalorder %s27, 0
      %p179 = por %p177, %p178
      %p180 = scmp.ne.s32.totalorder %s168, %s169
      %p181 = scmp.eq.s32.totalorder %s28, 1
      %p182 = por %p180, %p181
      %p184 = scmp.ne.s32.totalorder %s169, %s183
      %p185 = scmp.eq.s32.totalorder %s28, 0
      %p186 = por %p184, %p185
      %s188 = sadd.s32 %s187, 1
      %p191 = scmp.eq.s32.totalorder %s22, 1
      %p192 = scmp.ne.s32.totalorder %s187, %s189
      %p193 = scmp.eq.s32.totalorder %s22, 0
      %p194 = por %p192, %p193
      %p195 = scmp.ne.s32.totalorder %s187, %s189
      %p196 = scmp.eq.s32.totalorder %s27, 1
      %p197 = por %p195, %p196
      %p198 = scmp.ne.s32.totalorder %s189, %s190
      %p199 = scmp.eq.s32.totalorder %s27, 0
      %p200 = por %p198, %p199
      %p201 = scmp.ne.s32.totalorder %s189, %s190
      %p202 = scmp.eq.s32.totalorder %s28, 1
      %p203 = por %p201, %p202
      %p205 = scmp.ne.s32.totalorder %s190, %s204
      %p206 = scmp.eq.s32.totalorder %s28, 0
      %p207 = por %p205, %p206
      %s209 = sadd.s32 %s208, 1
      %p212 = scmp.eq.s32.totalorder %s22, 1
      %p213 = scmp.ne.s32.totalorder %s208, %s210
      %p214 = scmp.eq.s32.totalorder %s22, 0
      %p215 = por %p213, %p214
      %p216 = scmp.ne.s32.totalorder %s208, %s210
      %p217 = scmp.eq.s32.totalorder %s27, 1
      %p218 = por %p216, %p217
      %p219 = scmp.ne.s32.totalorder %s210, %s211
      %p220 = scmp.eq.s32.totalorder %s27, 0
      %p221 = por %p219, %p220
      %p222 = scmp.ne.s32.totalorder %s210, %s211
      %p223 = scmp.eq.s32.totalorder %s28, 1
      %p224 = por %p222, %p223
      %p226 = scmp.ne.s32.totalorder %s211, %s225
      %p227 = scmp.eq.s32.totalorder %s28, 0
      %p228 = por %p226, %p227
      %s230 = sadd.s32 %s229, 1
      %p233 = scmp.eq.s32.totalorder %s22, 1
      %p234 = scmp.ne.s32.totalorder %s229, %s231
      %p235 = scmp.eq.s32.totalorder %s22, 0
      %p236 = por %p234, %p235
      %p237 = scmp.ne.s32.totalorder %s229, %s231
      %p238 = scmp.eq.s32.totalorder %s27, 1
      %p239 = por %p237, %p238
      %p240 = scmp.ne.s32.totalorder %s231, %s232
      %p241 = scmp.eq.s32.totalorder %s27, 0
      %p242 = por %p240, %p241
      %p243 = scmp.ne.s32.totalorder %s231, %s232
      %p244 = scmp.eq.s32.totalorder %s28, 1
      %p245 = por %p243, %p244
      %p247 = scmp.ne.s32.totalorder %s232, %s246
      %p248 = scmp.eq.s32.totalorder %s28, 0
      %p249 = por %p247, %p248
      %s251 = sadd.s32 %s250, 1
      %p254 = scmp.eq.s32.totalorder %s22, 1
      %p255 = scmp.ne.s32.totalorder %s250, %s252
      %p256 = scmp.eq.s32.totalorder %s22, 0
      %p257 = por %p255, %p256
      %p258 = scmp.ne.s32.totalorder %s250, %s252
      %p259 = scmp.eq.s32.totalorder %s27, 1
      %p260 = por %p258, %p259
      %p261 = scmp.ne.s32.totalorder %s252, %s253
      %p262 = scmp.eq.s32.totalorder %s27, 0
      %p263 = por %p261, %p262
      %p264 = scmp.ne.s32.totalorder %s252, %s253
      %p265 = scmp.eq.s32.totalorder %s28, 1
      %p266 = por %p264, %p265
      %p268 = scmp.ne.s32.totalorder %s253, %s267
      %p269 = scmp.eq.s32.totalorder %s28, 0
      %p270 = por %p268, %p269
      %s272 = sadd.s32 %s271, 1
      %p275 = scmp.eq.s32.totalorder %s22, 1
      %p276 = scmp.ne.s32.totalorder %s271, %s273
      %p277 = scmp.eq.s32.totalorder %s22, 0
      %p278 = por %p276, %p277
      %p279 = scmp.ne.s32.totalorder %s271, %s273
      %p280 = scmp.eq.s32.totalorder %s27, 1
      %p281 = por %p279, %p280
      %p282 = scmp.ne.s32.totalorder %s273, %s274
      %p283 = scmp.eq.s32.totalorder %s27, 0
      %p284 = por %p282, %p283
      %p285 = scmp.ne.s32.totalorder %s273, %s274
      %p286 = scmp.eq.s32.totalorder %s28, 1
      %p287 = por %p285, %p286
      %p289 = scmp.ne.s32.totalorder %s274, %s288
      %p290 = scmp.eq.s32.totalorder %s28, 0
      %p291 = por %p289, %p290
      %s292 = ssub.s32 %s22, %s29
      %p293 = scmp.eq.s32.totalorder %s292, 0
      %s295 = sadd.s32 %s294, 1
      %s296 = scalar_select %p293, %s294, %s295
      %p299 = pneg %p293
      %p300 = scmp.eq.s32.totalorder %s22, 1
      %p301 = por %p299, %p300
      %p302 = scmp.ne.s32.totalorder %s294, %s297
      %p303 = scmp.eq.s32.totalorder %s22, 0
      %p304 = por %p302, %p303
      %p305 = scmp.ne.s32.totalorder %s294, %s297
      %p306 = scmp.eq.s32.totalorder %s27, 1
      %p307 = por %p305, %p306
      %p308 = scmp.ne.s32.totalorder %s297, %s298
      %p309 = scmp.eq.s32.totalorder %s27, 0
      %p310 = por %p308, %p309
      %p311 = scmp.ne.s32.totalorder %s297, %s298
      %p312 = scmp.eq.s32.totalorder %s28, 1
      %p313 = por %p311, %p312
      %p315 = scmp.ne.s32.totalorder %s298, %s314
      %p316 = scmp.eq.s32.totalorder %s28, 0
      %p317 = por %p315, %p316
      %p318 = scmp.le.s32.totalorder 1, %s22
      %p319 = scmp.lt.s32.totalorder %s22, 3
      %p320 = pnand %p318, %p319
      %p321 = pneg %p320
      // Predicated region
      $region9: #{tpu_custom_call.1} parent=5 // pred_check
        _
      $region10: #{tpu_custom_call.1} parent=5 // pred_check_branch
        %323 = sbr.rel (%p320) target = $region12
      $region11: #{tpu_custom_call.1} parent=5 // pred_region
        %s324 = ssub.s32 %s22, 1
        // Predicated region
        $region13: #{tpu_custom_call.1} parent=11 // pred_check
          %p325 = pneg %p95
        $region14: #{tpu_custom_call.1} parent=11 // pred_check_branch
          %327 = sbr.rel (%p325) target = $region16
        $region15: #{tpu_custom_call.1} parent=11 // pred_region
          _
        $region16: #{tpu_custom_call.1} parent=11 // pred_fallthru
          _
        // Predicated region
        $region17: #{tpu_custom_call.1} parent=11 // pred_check
          %p328 = pneg %p116
        $region18: #{tpu_custom_call.1} parent=11 // pred_check_branch
          %330 = sbr.rel (%p328) target = $region20
        $region19: #{tpu_custom_call.1} parent=11 // pred_region
          _
        $region20: #{tpu_custom_call.1} parent=11 // pred_fallthru
          _
        // Predicated region
        $region21: #{tpu_custom_call.1} parent=11 // pred_check
          %p331 = pneg %p137
        $region22: #{tpu_custom_call.1} parent=11 // pred_check_branch
          %333 = sbr.rel (%p331) target = $region24
        $region23: #{tpu_custom_call.1} parent=11 // pred_region
          _
        $region24: #{tpu_custom_call.1} parent=11 // pred_fallthru
          _
        // Predicated region
        $region25: #{tpu_custom_call.1} parent=11 // pred_check
          %p334 = pneg %p158
        $region26: #{tpu_custom_call.1} parent=11 // pred_check_branch
          %336 = sbr.rel (%p334) target = $region28
        $region27: #{tpu_custom_call.1} parent=11 // pred_region
          _
        $region28: #{tpu_custom_call.1} parent=11 // pred_fallthru
          _
        // Predicated region
        $region29: #{tpu_custom_call.1} parent=11 // pred_check
          %p337 = pneg %p179
        $region30: #{tpu_custom_call.1} parent=11 // pred_check_branch
          %339 = sbr.rel (%p337) target = $region32
        $region31: #{tpu_custom_call.1} parent=11 // pred_region
          _
        $region32: #{tpu_custom_call.1} parent=11 // pred_fallthru
          _
        // Predicated region
        $region33: #{tpu_custom_call.1} parent=11 // pred_check
          %p340 = pneg %p200
        $region34: #{tpu_custom_call.1} parent=11 // pred_check_branch
          %342 = sbr.rel (%p340) target = $region36
        $region35: #{tpu_custom_call.1} parent=11 // pred_region
          _
        $region36: #{tpu_custom_call.1} parent=11 // pred_fallthru
          _
        // Predicated region
        $region37: #{tpu_custom_call.1} parent=11 // pred_check
          %p343 = pneg %p221
        $region38: #{tpu_custom_call.1} parent=11 // pred_check_branch
          %345 = sbr.rel (%p343) target = $region40
        $region39: #{tpu_custom_call.1} parent=11 // pred_region
          %s347 = ssub.s32 128, 128
          %348 = vsyncadd [#allocation3], %s347
          %s350 = sshll.u32 [#allocation2], 4
          %s351 = int_to_ptr.vmem [resolvable:$true] %s350
          %353 = dma.hbm_to_vmem [thread:$0]  %s8, 128, %s351, [#allocation3]
        $region40: #{tpu_custom_call.1} parent=11 // pred_fallthru
          _
        // Predicated region
        $region41: #{tpu_custom_call.1} parent=11 // pred_check
          %p354 = pneg %p242
        $region42: #{tpu_custom_call.1} parent=11 // pred_check_branch
          %356 = sbr.rel (%p354) target = $region44
        $region43: #{tpu_custom_call.1} parent=11 // pred_region
          _
        $region44: #{tpu_custom_call.1} parent=11 // pred_fallthru
          _
        // Predicated region
        $region45: #{tpu_custom_call.1} parent=11 // pred_check
          %p357 = pneg %p263
        $region46: #{tpu_custom_call.1} parent=11 // pred_check_branch
          %359 = sbr.rel (%p357) target = $region48
        $region47: #{tpu_custom_call.1} parent=11 // pred_region
          _
        $region48: #{tpu_custom_call.1} parent=11 // pred_fallthru
          _
        // Predicated region
        $region49: #{tpu_custom_call.1} parent=11 // pred_check
          %p360 = pneg %p284
        $region50: #{tpu_custom_call.1} parent=11 // pred_check_branch
          %362 = sbr.rel (%p360) target = $region52
        $region51: #{tpu_custom_call.1} parent=11 // pred_region
          _
        $region52: #{tpu_custom_call.1} parent=11 // pred_fallthru
          _
      $region12: #{tpu_custom_call.1} parent=5 // pred_fallthru
        _
      %p363 = scmp.lt.s32.totalorder %s22, 2
      // Predicated region
      $region53: #{tpu_custom_call.1} parent=5 // pred_check
        %p364 = pneg %p363
      $region54: #{tpu_custom_call.1} parent=5 // pred_check_branch
        %366 = sbr.rel (%p364) target = $region56
      $region55: #{tpu_custom_call.1} parent=5 // pred_region
        // Predicated region
        $region57: #{tpu_custom_call.1} parent=55 // pred_check
          %p367 = pneg %p42
        $region58: #{tpu_custom_call.1} parent=55 // pred_check_branch
          %369 = sbr.rel (%p367) target = $region60
        $region59: #{tpu_custom_call.1} parent=55 // pred_region
          %s370 = smul.u32 4, %s22
          %p371 = scmp.lt.s32.totalorder %s370, 7
          %s372 = scalar_select %p371, %s370, 7
          %s373 = smul.addr %s372, 8
          %s374 = scalar_lea.vmem %s0, %s373
          %s375 = smul.u32 4, %s22
        $region60: #{tpu_custom_call.1} parent=55 // pred_fallthru
          _
        // Predicated region
        $region61: #{tpu_custom_call.1} parent=55 // pred_check
          %p376 = pneg %p68
        $region62: #{tpu_custom_call.1} parent=55 // pred_check_branch
          %378 = sbr.rel (%p376) target = $region64
        $region63: #{tpu_custom_call.1} parent=55 // pred_region
          %s379 = smul.u32 4, %s22
          %p380 = scmp.lt.s32.totalorder %s379, 7
          %s381 = scalar_select %p380, %s379, 7
          %s382 = smul.addr %s381, 8
          %s383 = scalar_lea.vmem %s1, %s382
          %s384 = smul.u32 4, %s22
        $region64: #{tpu_custom_call.1} parent=55 // pred_fallthru
          _
      $region56: #{tpu_custom_call.1} parent=5 // pred_fallthru
        _
      %p385 = scmp.le.s32.totalorder 1, %s22
      %p386 = scmp.lt.s32.totalorder %s22, 3
      %p387 = pnand %p385, %p386
      %p388 = pneg %p387
      // Predicated region
      $region65: #{tpu_custom_call.1} parent=5 // pred_check
        _
      $region66: #{tpu_custom_call.1} parent=5 // pred_check_branch
        %390 = sbr.rel (%p387) target = $region68
      $region67: #{tpu_custom_call.1} parent=5 // pred_region
        %s391 = ssub.s32 %s22, 1
        // Predicated region
        $region69: #{tpu_custom_call.1} parent=67 // pred_check
          %p392 = pneg %p221
        $region70: #{tpu_custom_call.1} parent=67 // pred_check_branch
          %394 = sbr.rel (%p392) target = $region72
        $region71: #{tpu_custom_call.1} parent=67 // pred_region
          %395 = dma.done [#allocation3], 128
        $region72: #{tpu_custom_call.1} parent=67 // pred_fallthru
          _
        %s396 = smul.u32 4, %s27
        %p397 = scmp.lt.s32.totalorder %s396, 7
        %s398 = scalar_select %p397, %s396, 7
        %s399 = smul.addr %s398, 8
        %s400 = scalar_lea.vmem %s0, %s399
        %p401 = pneg %p48
        %p402 = pneg %p45
        %s403 = smul.u32 4, %s27
        %p404 = scmp.lt.s32.totalorder %s403, 7
        %s405 = scalar_select %p404, %s403, 7
        %s406 = smul.addr %s405, 8
        %s407 = scalar_lea.vmem %s1, %s406
        %p408 = pneg %p74
        %p409 = pneg %p71
        %p410 = pneg %p95
        %p411 = pneg %p92
        %p412 = pneg %p116
        %p413 = pneg %p113
        %p414 = pneg %p137
        %p415 = pneg %p134
        %p416 = pneg %p158
        %p417 = pneg %p155
        %p418 = pneg %p179
        %p419 = pneg %p176
        %p420 = pneg %p200
        %p421 = pneg %p197
        %p422 = pneg %p221
        %p423 = pneg %p218
        %p424 = pneg %p242
        %p425 = pneg %p239
        %p426 = pneg %p263
        %p427 = pneg %p260
        %p428 = pneg %p284
        %p429 = pneg %p281
        %p430 = pneg %p310
        %p431 = pneg %p307
        %s432 = sand.u32 %s297, 1
        %s433 = scalar_lea.sflag [#allocation4], %s432
        %s434 = sand.u32 %s297, 1
        %s435 = smul.addr %s434, 32
        %s436 = scalar_lea.vmem [#allocation5], %s435
        %s437 = smul.u32 4, %s27
        %p438 = scmp.lt.s32.totalorder %s437, 7
        %s439 = scalar_select %p438, %s437, 7
        %s440 = smul.addr %s439, 8
        %s441 = scalar_lea.vmem %s0, %s440
        %s442 = smul.u32 4, %s27
        %s443 = smul.u32 4, %s27
        %p444 = scmp.lt.s32.totalorder %s443, 7
        %s445 = scalar_select %p444, %s443, 7
        %s446 = smul.addr %s445, 8
        %s447 = scalar_lea.vmem %s1, %s446
        %s448 = smul.u32 4, %s27
        %s449 = smul.u32 4, %s27
        %v450 = vld [vmem:[%s441] sm:$0xff]
        %v451 = vld [vmem:[%s441 + $0x8] sm:$0xff]
        %v452 = vld [vmem:[%s441 + $0x10] sm:$0xff]
        %v453 = vld [vmem:[%s441 + $0x18] sm:$0xff]
        %v454 = vld [vmem:[%s447] sm:$0xff]
        %v455 = vld [vmem:[%s447 + $0x8] sm:$0xff]
        %v456 = vld [vmem:[%s447 + $0x10] sm:$0xff]
        %v457 = vld [vmem:[%s447 + $0x18] sm:$0xff]
        %v458 = vld [vmem:[%s2] sm:$0x1]
        %v459 = vld [vmem:[%s2 + $0x1] sm:$0x1]
        %v460 = vld [vmem:[%s2 + $0x2] sm:$0x1]
        %v461 = vld [vmem:[%s3] sm:$0xff]
        %v462 = vld [vmem:[%s3 + $0x8] sm:$0xff]
        %v463 = vld [vmem:[%s3 + $0x10] sm:$0xff]
        %v464 = vld [vmem:[%s3 + $0x18] sm:$0xff]
        %v465 = vlaneseq
        %v466 = vshrl.u32 %v465, 7
        %v467 = vsub.s32 0, %v466
        %v468 = vrot.slane %v458, %v467
        %vm469 = vcmask 261120
        %v471 = vsel %vm469, %v450, 0
        %v474 = vsel %vm469, %v451, 0
        %v477 = vsel %vm469, %v452, 0
        %v480 = vsel %vm469, %v453, 0
        %482 = vmatprep.subr.mxu0 0.0
        %483 = vmatpush1.msra.mxu0 0.0
        %484 = vmatprep.subr.mxu0 0.0
        %485 = vmatpush1.msra.mxu0 0.0
        %486 = vmatprep.subr.mxu0 0.0
        %487 = vmatpush1.msra.mxu0 0.0
        %488 = vmatprep.subr.mxu0 0.0
        %489 = vmatpush1.msra.mxu0 0.0
        %490 = vmatprep.subr.mxu0 0.0
        %491 = vmatpush1.msra.mxu0 0.0
        %492 = vmatprep.subr.mxu0 0.0
        %493 = vmatpush1.msra.mxu0 0.0
        %494 = vmatprep.subr.mxu0 0.0
        %495 = vmatpush1.msra.mxu0 0.0
        %496 = vmatprep.subr.mxu0 0.0
        %497 = vmatpush1.msra.mxu0 0.0
        %498 = vmatprep.subr.mxu0 0.0
        %499 = vmatpush1.msra.mxu0 0.0
        %500 = vmatprep.subr.mxu0 0.0
        %501 = vmatpush1.msra.mxu0 0.0
        %502 = vmatprep.subr.mxu0 0.0
        %503 = vmatpush1.msra.mxu0 0.0
        %504 = vmatprep.subr.mxu0 0.0
        %505 = vmatpush1.msra.mxu0 0.0
        %506 = vmatprep.subr.mxu0 0.0
        %v507 = vand.u32 %v464, 4294901760
        %508 = vmatpush1.msra.mxu0 %v507
        %509 = vmatprep.subr.mxu0 0.0
        %v510 = vand.u32 %v463, 4294901760
        %511 = vmatpush1.msra.mxu0 %v510
        %512 = vmatprep.subr.mxu0 0.0
        %v513 = vand.u32 %v462, 4294901760
        %514 = vmatpush1.msra.mxu0 %v513
        %515 = vmatprep.subr.mxu0 0.0
        %v516 = vand.u32 %v461, 4294901760
        %517 = vmatpush1.msra.mxu0 %v516
        %518 = vmatprep.subr.mxu0 0.0
        %519 = vmatpush2.msra.mxu0 0.0
        %520 = vmatprep.subr.mxu0 0.0
        %521 = vmatpush2.msra.mxu0 0.0
        %522 = vmatprep.subr.mxu0 0.0
        %523 = vmatpush2.msra.mxu0 0.0
        %524 = vmatprep.subr.mxu0 0.0
        %525 = vmatpush2.msra.mxu0 0.0
        %526 = vmatprep.subr.mxu0 0.0
        %527 = vmatpush2.msra.mxu0 0.0
        %528 = vmatprep.subr.mxu0 0.0
        %529 = vmatpush2.msra.mxu0 0.0
        %530 = vmatprep.subr.mxu0 0.0
        %531 = vmatpush2.msra.mxu0 0.0
        %532 = vmatprep.subr.mxu0 0.0
        %533 = vmatpush2.msra.mxu0 0.0
        %534 = vmatprep.subr.mxu0 0.0
        %535 = vmatpush2.msra.mxu0 0.0
        %536 = vmatprep.subr.mxu0 0.0
        %537 = vmatpush2.msra.mxu0 0.0
        %538 = vmatprep.subr.mxu0 0.0
        %539 = vmatpush2.msra.mxu0 0.0
        %540 = vmatprep.subr.mxu0 0.0
        %541 = vmatpush2.msra.mxu0 0.0
        %542 = vmatprep.subr.mxu0 0.0
        %543 = vmatpush2.msra.mxu0 0.0
        %544 = vmatprep.subr.mxu0 0.0
        %545 = vmatpush2.msra.mxu0 0.0
        %546 = vmatprep.subr.mxu0 0.0
        %547 = vmatpush2.msra.mxu0 0.0
        %548 = vmatprep.subr.mxu0 0.0
        %549 = vmatpush2.msra.mxu0 0.0
        %550 = vmatprep.mubr.f32.mxu0 0.0
        %v551 = vand.u32 %v471, 4294901760
        %v552 = vsub.f32 %v471, %v551
        %v553 = vand.u32 %v552, 4294901760
        %v554 = vsub.f32 %v552, %v553
        %v555 = vand.u32 %v554, 4294901760
        %556 = vmatmul.mubr.f32.gmra.mxu0 %v555
        %v557 = vpop.f32.mrf.mxu0
        %v558 = vadd.f32 %v468, %v557
        %v559 = vpop.f32.mrf.mxu0
        %560 = vmatprep.mubr.f32.mxu0 0.0
        %v561 = vand.u32 %v474, 4294901760
        %v562 = vsub.f32 %v474, %v561
        %v563 = vand.u32 %v562, 4294901760
        %v564 = vsub.f32 %v562, %v563
        %v565 = vand.u32 %v564, 4294901760
        %566 = vmatmul.mubr.f32.gmra.mxu0 %v565
        %v567 = vpop.f32.mrf.mxu0
        %v568 = vadd.f32 %v468, %v567
        %v569 = vpop.f32.mrf.mxu0
        %570 = vmatprep.mubr.f32.mxu0 0.0
        %v571 = vand.u32 %v477, 4294901760
        %v572 = vsub.f32 %v477, %v571
        %v573 = vand.u32 %v572, 4294901760
        %v574 = vsub.f32 %v572, %v573
        %v575 = vand.u32 %v574, 4294901760
        %576 = vmatmul.mubr.f32.gmra.mxu0 %v575
        %v577 = vpop.f32.mrf.mxu0
        %v578 = vadd.f32 %v468, %v577
        %v579 = vpop.f32.mrf.mxu0
        %580 = vmatprep.mubr.f32.mxu0 0.0
        %v581 = vand.u32 %v480, 4294901760
        %v582 = vsub.f32 %v480, %v581
        %v583 = vand.u32 %v582, 4294901760
        %v584 = vsub.f32 %v582, %v583
        %v585 = vand.u32 %v584, 4294901760
        %586 = vmatmul.mubr.f32.gmra.mxu0 %v585
        %v587 = vpop.f32.mrf.mxu0
        %v588 = vadd.f32 %v468, %v587
        %v589 = vpop.f32.mrf.mxu0
        %590 = vdwg.mxu0
        %591 = vmatprep.subr.mxu0 0.0
        %592 = vmatpush1.msra.mxu0 0.0
        %593 = vmatprep.subr.mxu0 0.0
        %594 = vmatpush1.msra.mxu0 0.0
        %595 = vmatprep.subr.mxu0 0.0
        %596 = vmatpush1.msra.mxu0 0.0
        %597 = vmatprep.subr.mxu0 0.0
        %598 = vmatpush1.msra.mxu0 0.0
        %599 = vmatprep.subr.mxu0 0.0
        %600 = vmatpush1.msra.mxu0 0.0
        %601 = vmatprep.subr.mxu0 0.0
        %602 = vmatpush1.msra.mxu0 0.0
        %603 = vmatprep.subr.mxu0 0.0
        %604 = vmatpush1.msra.mxu0 0.0
        %605 = vmatprep.subr.mxu0 0.0
        %606 = vmatpush1.msra.mxu0 0.0
        %607 = vmatprep.subr.mxu0 0.0
        %608 = vmatpush1.msra.mxu0 0.0
        %609 = vmatprep.subr.mxu0 0.0
        %610 = vmatpush1.msra.mxu0 0.0
        %611 = vmatprep.subr.mxu0 0.0
        %612 = vmatpush1.msra.mxu0 0.0
        %613 = vmatprep.subr.mxu0 0.0
        %614 = vmatpush1.msra.mxu0 0.0
        %615 = vmatprep.subr.mxu0 0.0
        %v616 = vand.u32 %v464, 4294901760
        %v617 = vsub.f32 %v464, %v616
        %v618 = vand.u32 %v617, 4294901760
        %v619 = vsub.f32 %v617, %v618
        %v620 = vand.u32 %v619, 4294901760
        %621 = vmatpush1.msra.mxu0 %v620
        %622 = vmatprep.subr.mxu0 0.0
        %v623 = vand.u32 %v463, 4294901760
        %v624 = vsub.f32 %v463, %v623
        %v625 = vand.u32 %v624, 4294901760
        %v626 = vsub.f32 %v624, %v625
        %v627 = vand.u32 %v626, 4294901760
        %628 = vmatpush1.msra.mxu0 %v627
        %629 = vmatprep.subr.mxu0 0.0
        %v630 = vand.u32 %v462, 4294901760
        %v631 = vsub.f32 %v462, %v630
        %v632 = vand.u32 %v631, 4294901760
        %v633 = vsub.f32 %v631, %v632
        %v634 = vand.u32 %v633, 4294901760
        %635 = vmatpush1.msra.mxu0 %v634
        %636 = vmatprep.subr.mxu0 0.0
        %v637 = vand.u32 %v461, 4294901760
        %v638 = vsub.f32 %v461, %v637
        %v639 = vand.u32 %v638, 4294901760
        %v640 = vsub.f32 %v638, %v639
        %v641 = vand.u32 %v640, 4294901760
        %642 = vmatpush1.msra.mxu0 %v641
        %643 = vmatprep.subr.mxu0 0.0
        %644 = vmatpush2.msra.mxu0 0.0
        %645 = vmatprep.subr.mxu0 0.0
        %646 = vmatpush2.msra.mxu0 0.0
        %647 = vmatprep.subr.mxu0 0.0
        %648 = vmatpush2.msra.mxu0 0.0
        %649 = vmatprep.subr.mxu0 0.0
        %650 = vmatpush2.msra.mxu0 0.0
        %651 = vmatprep.subr.mxu0 0.0
        %652 = vmatpush2.msra.mxu0 0.0
        %653 = vmatprep.subr.mxu0 0.0
        %654 = vmatpush2.msra.mxu0 0.0
        %655 = vmatprep.subr.mxu0 0.0
        %656 = vmatpush2.msra.mxu0 0.0
        %657 = vmatprep.subr.mxu0 0.0
        %658 = vmatpush2.msra.mxu0 0.0
        %659 = vmatprep.subr.mxu0 0.0
        %660 = vmatpush2.msra.mxu0 0.0
        %661 = vmatprep.subr.mxu0 0.0
        %662 = vmatpush2.msra.mxu0 0.0
        %663 = vmatprep.subr.mxu0 0.0
        %664 = vmatpush2.msra.mxu0 0.0
        %665 = vmatprep.subr.mxu0 0.0
        %666 = vmatpush2.msra.mxu0 0.0
        %667 = vmatprep.subr.mxu0 0.0
        %668 = vmatpush2.msra.mxu0 0.0
        %669 = vmatprep.subr.mxu0 0.0
        %670 = vmatpush2.msra.mxu0 0.0
        %671 = vmatprep.subr.mxu0 0.0
        %672 = vmatpush2.msra.mxu0 0.0
        %673 = vmatprep.subr.mxu0 0.0
        %674 = vmatpush2.msra.mxu0 0.0
        %675 = vmatprep.mubr.f32.mxu0 0.0
        %v676 = vand.u32 %v471, 4294901760
        %677 = vmatmul.mubr.f32.gmra.mxu0 %v676
        %v678 = vpop.f32.mrf.mxu0
        %v679 = vadd.f32 %v558, %v678
        %v680 = vpop.f32.mrf.mxu0
        %681 = vmatprep.mubr.f32.mxu0 0.0
        %v682 = vand.u32 %v474, 4294901760
        %683 = vmatmul.mubr.f32.gmra.mxu0 %v682
        %v684 = vpop.f32.mrf.mxu0
        %v685 = vadd.f32 %v568, %v684
        %v686 = vpop.f32.mrf.mxu0
        %687 = vmatprep.mubr.f32.mxu0 0.0
        %v688 = vand.u32 %v477, 4294901760
        %689 = vmatmul.mubr.f32.gmra.mxu0 %v688
        %v690 = vpop.f32.mrf.mxu0
        %v691 = vadd.f32 %v578, %v690
        %v692 = vpop.f32.mrf.mxu0
        %693 = vmatprep.mubr.f32.mxu0 0.0
        %v694 = vand.u32 %v480, 4294901760
        %695 = vmatmul.mubr.f32.gmra.mxu0 %v694
        %v696 = vpop.f32.mrf.mxu0
        %v697 = vadd.f32 %v588, %v696
        %v698 = vpop.f32.mrf.mxu0
        %699 = vdwg.mxu0
        %700 = vmatprep.subr.mxu0 0.0
        %701 = vmatpush1.msra.mxu0 0.0
        %702 = vmatprep.subr.mxu0 0.0
        %703 = vmatpush1.msra.mxu0 0.0
        %704 = vmatprep.subr.mxu0 0.0
        %705 = vmatpush1.msra.mxu0 0.0
        %706 = vmatprep.subr.mxu0 0.0
        %707 = vmatpush1.msra.mxu0 0.0
        %708 = vmatprep.subr.mxu0 0.0
        %709 = vmatpush1.msra.mxu0 0.0
        %710 = vmatprep.subr.mxu0 0.0
        %711 = vmatpush1.msra.mxu0 0.0
        %712 = vmatprep.subr.mxu0 0.0
        %713 = vmatpush1.msra.mxu0 0.0
        %714 = vmatprep.subr.mxu0 0.0
        %715 = vmatpush1.msra.mxu0 0.0
        %716 = vmatprep.subr.mxu0 0.0
        %717 = vmatpush1.msra.mxu0 0.0
        %718 = vmatprep.subr.mxu0 0.0
        %719 = vmatpush1.msra.mxu0 0.0
        %720 = vmatprep.subr.mxu0 0.0
        %721 = vmatpush1.msra.mxu0 0.0
        %722 = vmatprep.subr.mxu0 0.0
        %723 = vmatpush1.msra.mxu0 0.0
        %724 = vmatprep.subr.mxu0 0.0
        %v725 = vand.u32 %v464, 4294901760
        %v726 = vsub.f32 %v464, %v725
        %727 = vmatpush1.msra.mxu0 %v726
        %728 = vmatprep.subr.mxu0 0.0
        %v729 = vand.u32 %v463, 4294901760
        %v730 = vsub.f32 %v463, %v729
        %731 = vmatpush1.msra.mxu0 %v730
        %732 = vmatprep.subr.mxu0 0.0
        %v733 = vand.u32 %v462, 4294901760
        %v734 = vsub.f32 %v462, %v733
        %735 = vmatpush1.msra.mxu0 %v734
        %736 = vmatprep.subr.mxu0 0.0
        %v737 = vand.u32 %v461, 4294901760
        %v738 = vsub.f32 %v461, %v737
        %739 = vmatpush1.msra.mxu0 %v738
        %740 = vmatprep.subr.mxu0 0.0
        %741 = vmatpush2.msra.mxu0 0.0
        %742 = vmatprep.subr.mxu0 0.0
        %743 = vmatpush2.msra.mxu0 0.0
        %744 = vmatprep.subr.mxu0 0.0
        %745 = vmatpush2.msra.mxu0 0.0
        %746 = vmatprep.subr.mxu0 0.0
        %747 = vmatpush2.msra.mxu0 0.0
        %748 = vmatprep.subr.mxu0 0.0
        %749 = vmatpush2.msra.mxu0 0.0
        %750 = vmatprep.subr.mxu0 0.0
        %751 = vmatpush2.msra.mxu0 0.0
        %752 = vmatprep.subr.mxu0 0.0
        %753 = vmatpush2.msra.mxu0 0.0
        %754 = vmatprep.subr.mxu0 0.0
        %755 = vmatpush2.msra.mxu0 0.0
        %756 = vmatprep.subr.mxu0 0.0
        %757 = vmatpush2.msra.mxu0 0.0
        %758 = vmatprep.subr.mxu0 0.0
        %759 = vmatpush2.msra.mxu0 0.0
        %760 = vmatprep.subr.mxu0 0.0
        %761 = vmatpush2.msra.mxu0 0.0
        %762 = vmatprep.subr.mxu0 0.0
        %763 = vmatpush2.msra.mxu0 0.0
        %764 = vmatprep.subr.mxu0 0.0
        %765 = vmatpush2.msra.mxu0 0.0
        %766 = vmatprep.subr.mxu0 0.0
        %767 = vmatpush2.msra.mxu0 0.0
        %768 = vmatprep.subr.mxu0 0.0
        %769 = vmatpush2.msra.mxu0 0.0
        %770 = vmatprep.subr.mxu0 0.0
        %771 = vmatpush2.msra.mxu0 0.0
        %772 = vmatprep.mubr.f32.mxu0 0.0
        %v773 = vand.u32 %v471, 4294901760
        %v774 = vsub.f32 %v471, %v773
        %775 = vmatmul.mubr.f32.gmra.mxu0 %v774
        %v776 = vpop.f32.mrf.mxu0
        %v777 = vadd.f32 %v679, %v776
        %v778 = vpop.f32.mrf.mxu0
        %779 = vmatprep.mubr.f32.mxu0 0.0
        %v780 = vand.u32 %v474, 4294901760
        %v781 = vsub.f32 %v474, %v780
        %782 = vmatmul.mubr.f32.gmra.mxu0 %v781
        %v783 = vpop.f32.mrf.mxu0
        %v784 = vadd.f32 %v685, %v783
        %v785 = vpop.f32.mrf.mxu0
        %786 = vmatprep.mubr.f32.mxu0 0.0
        %v787 = vand.u32 %v477, 4294901760
        %v788 = vsub.f32 %v477, %v787
        %789 = vmatmul.mubr.f32.gmra.mxu0 %v788
        %v790 = vpop.f32.mrf.mxu0
        %v791 = vadd.f32 %v691, %v790
        %v792 = vpop.f32.mrf.mxu0
        %793 = vmatprep.mubr.f32.mxu0 0.0
        %v794 = vand.u32 %v480, 4294901760
        %v795 = vsub.f32 %v480, %v794
        %796 = vmatmul.mubr.f32.gmra.mxu0 %v795
        %v797 = vpop.f32.mrf.mxu0
        %v798 = vadd.f32 %v697, %v797
        %v799 = vpop.f32.mrf.mxu0
        %800 = vdwg.mxu0
        %801 = vmatprep.subr.mxu0 0.0
        %802 = vmatpush1.msra.mxu0 0.0
        %803 = vmatprep.subr.mxu0 0.0
        %804 = vmatpush1.msra.mxu0 0.0
        %805 = vmatprep.subr.mxu0 0.0
        %806 = vmatpush1.msra.mxu0 0.0
        %807 = vmatprep.subr.mxu0 0.0
        %808 = vmatpush1.msra.mxu0 0.0
        %809 = vmatprep.subr.mxu0 0.0
        %810 = vmatpush1.msra.mxu0 0.0
        %811 = vmatprep.subr.mxu0 0.0
        %812 = vmatpush1.msra.mxu0 0.0
        %813 = vmatprep.subr.mxu0 0.0
        %814 = vmatpush1.msra.mxu0 0.0
        %815 = vmatprep.subr.mxu0 0.0
        %816 = vmatpush1.msra.mxu0 0.0
        %817 = vmatprep.subr.mxu0 0.0
        %818 = vmatpush1.msra.mxu0 0.0
        %819 = vmatprep.subr.mxu0 0.0
        %820 = vmatpush1.msra.mxu0 0.0
        %821 = vmatprep.subr.mxu0 0.0
        %822 = vmatpush1.msra.mxu0 0.0
        %823 = vmatprep.subr.mxu0 0.0
        %824 = vmatpush1.msra.mxu0 0.0
        %825 = vmatprep.subr.mxu0 0.0
        %v826 = vand.u32 %v464, 4294901760
        %827 = vmatpush1.msra.mxu0 %v826
        %828 = vmatprep.subr.mxu0 0.0
        %v829 = vand.u32 %v463, 4294901760
        %830 = vmatpush1.msra.mxu0 %v829
        %831 = vmatprep.subr.mxu0 0.0
        %v832 = vand.u32 %v462, 4294901760
        %833 = vmatpush1.msra.mxu0 %v832
        %834 = vmatprep.subr.mxu0 0.0
        %v835 = vand.u32 %v461, 4294901760
        %836 = vmatpush1.msra.mxu0 %v835
        %837 = vmatprep.subr.mxu0 0.0
        %838 = vmatpush2.msra.mxu0 0.0
        %839 = vmatprep.subr.mxu0 0.0
        %840 = vmatpush2.msra.mxu0 0.0
        %841 = vmatprep.subr.mxu0 0.0
        %842 = vmatpush2.msra.mxu0 0.0
        %843 = vmatprep.subr.mxu0 0.0
        %844 = vmatpush2.msra.mxu0 0.0
        %845 = vmatprep.subr.mxu0 0.0
        %846 = vmatpush2.msra.mxu0 0.0
        %847 = vmatprep.subr.mxu0 0.0
        %848 = vmatpush2.msra.mxu0 0.0
        %849 = vmatprep.subr.mxu0 0.0
        %850 = vmatpush2.msra.mxu0 0.0
        %851 = vmatprep.subr.mxu0 0.0
        %852 = vmatpush2.msra.mxu0 0.0
        %853 = vmatprep.subr.mxu0 0.0
        %854 = vmatpush2.msra.mxu0 0.0
        %855 = vmatprep.subr.mxu0 0.0
        %856 = vmatpush2.msra.mxu0 0.0
        %857 = vmatprep.subr.mxu0 0.0
        %858 = vmatpush2.msra.mxu0 0.0
        %859 = vmatprep.subr.mxu0 0.0
        %860 = vmatpush2.msra.mxu0 0.0
        %861 = vmatprep.subr.mxu0 0.0
        %862 = vmatpush2.msra.mxu0 0.0
        %863 = vmatprep.subr.mxu0 0.0
        %864 = vmatpush2.msra.mxu0 0.0
        %865 = vmatprep.subr.mxu0 0.0
        %866 = vmatpush2.msra.mxu0 0.0
        %867 = vmatprep.subr.mxu0 0.0
        %868 = vmatpush2.msra.mxu0 0.0
        %869 = vmatprep.mubr.f32.mxu0 0.0
        %v870 = vand.u32 %v471, 4294901760
        %v871 = vsub.f32 %v471, %v870
        %v872 = vand.u32 %v871, 4294901760
        %873 = vmatmul.mubr.f32.gmra.mxu0 %v872
        %v874 = vpop.f32.mrf.mxu0
        %v875 = vadd.f32 %v777, %v874
        %v876 = vpop.f32.mrf.mxu0
        %877 = vmatprep.mubr.f32.mxu0 0.0
        %v878 = vand.u32 %v474, 4294901760
        %v879 = vsub.f32 %v474, %v878
        %v880 = vand.u32 %v879, 4294901760
        %881 = vmatmul.mubr.f32.gmra.mxu0 %v880
        %v882 = vpop.f32.mrf.mxu0
        %v883 = vadd.f32 %v784, %v882
        %v884 = vpop.f32.mrf.mxu0
        %885 = vmatprep.mubr.f32.mxu0 0.0
        %v886 = vand.u32 %v477, 4294901760
        %v887 = vsub.f32 %v477, %v886
        %v888 = vand.u32 %v887, 4294901760
        %889 = vmatmul.mubr.f32.gmra.mxu0 %v888
        %v890 = vpop.f32.mrf.mxu0
        %v891 = vadd.f32 %v791, %v890
        %v892 = vpop.f32.mrf.mxu0
        %893 = vmatprep.mubr.f32.mxu0 0.0
        %v894 = vand.u32 %v480, 4294901760
        %v895 = vsub.f32 %v480, %v894
        %v896 = vand.u32 %v895, 4294901760
        %897 = vmatmul.mubr.f32.gmra.mxu0 %v896
        %v898 = vpop.f32.mrf.mxu0
        %v899 = vadd.f32 %v798, %v898
        %v900 = vpop.f32.mrf.mxu0
        %901 = vdwg.mxu0
        %902 = vmatprep.subr.mxu0 0.0
        %903 = vmatpush1.msra.mxu0 0.0
        %904 = vmatprep.subr.mxu0 0.0
        %905 = vmatpush1.msra.mxu0 0.0
        %906 = vmatprep.subr.mxu0 0.0
        %907 = vmatpush1.msra.mxu0 0.0
        %908 = vmatprep.subr.mxu0 0.0
        %909 = vmatpush1.msra.mxu0 0.0
        %910 = vmatprep.subr.mxu0 0.0
        %911 = vmatpush1.msra.mxu0 0.0
        %912 = vmatprep.subr.mxu0 0.0
        %913 = vmatpush1.msra.mxu0 0.0
        %914 = vmatprep.subr.mxu0 0.0
        %915 = vmatpush1.msra.mxu0 0.0
        %916 = vmatprep.subr.mxu0 0.0
        %917 = vmatpush1.msra.mxu0 0.0
        %918 = vmatprep.subr.mxu0 0.0
        %919 = vmatpush1.msra.mxu0 0.0
        %920 = vmatprep.subr.mxu0 0.0
        %921 = vmatpush1.msra.mxu0 0.0
        %922 = vmatprep.subr.mxu0 0.0
        %923 = vmatpush1.msra.mxu0 0.0
        %924 = vmatprep.subr.mxu0 0.0
        %925 = vmatpush1.msra.mxu0 0.0
        %926 = vmatprep.subr.mxu0 0.0
        %v927 = vand.u32 %v464, 4294901760
        %v928 = vsub.f32 %v464, %v927
        %v929 = vand.u32 %v928, 4294901760
        %930 = vmatpush1.msra.mxu0 %v929
        %931 = vmatprep.subr.mxu0 0.0
        %v932 = vand.u32 %v463, 4294901760
        %v933 = vsub.f32 %v463, %v932
        %v934 = vand.u32 %v933, 4294901760
        %935 = vmatpush1.msra.mxu0 %v934
        %936 = vmatprep.subr.mxu0 0.0
        %v937 = vand.u32 %v462, 4294901760
        %v938 = vsub.f32 %v462, %v937
        %v939 = vand.u32 %v938, 4294901760
        %940 = vmatpush1.msra.mxu0 %v939
        %941 = vmatprep.subr.mxu0 0.0
        %v942 = vand.u32 %v461, 4294901760
        %v943 = vsub.f32 %v461, %v942
        %v944 = vand.u32 %v943, 4294901760
        %945 = vmatpush1.msra.mxu0 %v944
        %946 = vmatprep.subr.mxu0 0.0
        %947 = vmatpush2.msra.mxu0 0.0
        %948 = vmatprep.subr.mxu0 0.0
        %949 = vmatpush2.msra.mxu0 0.0
        %950 = vmatprep.subr.mxu0 0.0
        %951 = vmatpush2.msra.mxu0 0.0
        %952 = vmatprep.subr.mxu0 0.0
        %953 = vmatpush2.msra.mxu0 0.0
        %954 = vmatprep.subr.mxu0 0.0
        %955 = vmatpush2.msra.mxu0 0.0
        %956 = vmatprep.subr.mxu0 0.0
        %957 = vmatpush2.msra.mxu0 0.0
        %958 = vmatprep.subr.mxu0 0.0
        %959 = vmatpush2.msra.mxu0 0.0
        %960 = vmatprep.subr.mxu0 0.0
        %961 = vmatpush2.msra.mxu0 0.0
        %962 = vmatprep.subr.mxu0 0.0
        %963 = vmatpush2.msra.mxu0 0.0
        %964 = vmatprep.subr.mxu0 0.0
        %965 = vmatpush2.msra.mxu0 0.0
        %966 = vmatprep.subr.mxu0 0.0
        %967 = vmatpush2.msra.mxu0 0.0
        %968 = vmatprep.subr.mxu0 0.0
        %969 = vmatpush2.msra.mxu0 0.0
        %970 = vmatprep.subr.mxu0 0.0
        %971 = vmatpush2.msra.mxu0 0.0
        %972 = vmatprep.subr.mxu0 0.0
        %973 = vmatpush2.msra.mxu0 0.0
        %974 = vmatprep.subr.mxu0 0.0
        %975 = vmatpush2.msra.mxu0 0.0
        %976 = vmatprep.subr.mxu0 0.0
        %977 = vmatpush2.msra.mxu0 0.0
        %978 = vmatprep.mubr.f32.mxu0 0.0
        %v979 = vand.u32 %v471, 4294901760
        %980 = vmatmul.mubr.f32.gmra.mxu0 %v979
        %v981 = vpop.f32.mrf.mxu0
        %v982 = vadd.f32 %v875, %v981
        %v983 = vpop.f32.mrf.mxu0
        %984 = vmatprep.mubr.f32.mxu0 0.0
        %v985 = vand.u32 %v474, 4294901760
        %986 = vmatmul.mubr.f32.gmra.mxu0 %v985
        %v987 = vpop.f32.mrf.mxu0
        %v988 = vadd.f32 %v883, %v987
        %v989 = vpop.f32.mrf.mxu0
        %990 = vmatprep.mubr.f32.mxu0 0.0
        %v991 = vand.u32 %v477, 4294901760
        %992 = vmatmul.mubr.f32.gmra.mxu0 %v991
        %v993 = vpop.f32.mrf.mxu0
        %v994 = vadd.f32 %v891, %v993
        %v995 = vpop.f32.mrf.mxu0
        %996 = vmatprep.mubr.f32.mxu0 0.0
        %v997 = vand.u32 %v480, 4294901760
        %998 = vmatmul.mubr.f32.gmra.mxu0 %v997
        %v999 = vpop.f32.mrf.mxu0
        %v1000 = vadd.f32 %v899, %v999
        %v1001 = vpop.f32.mrf.mxu0
        %1002 = vdwg.mxu0
        %1003 = vmatprep.subr.mxu0 0.0
        %1004 = vmatpush1.msra.mxu0 0.0
        %1005 = vmatprep.subr.mxu0 0.0
        %1006 = vmatpush1.msra.mxu0 0.0
        %1007 = vmatprep.subr.mxu0 0.0
        %1008 = vmatpush1.msra.mxu0 0.0
        %1009 = vmatprep.subr.mxu0 0.0
        %1010 = vmatpush1.msra.mxu0 0.0
        %1011 = vmatprep.subr.mxu0 0.0
        %1012 = vmatpush1.msra.mxu0 0.0
        %1013 = vmatprep.subr.mxu0 0.0
        %1014 = vmatpush1.msra.mxu0 0.0
        %1015 = vmatprep.subr.mxu0 0.0
        %1016 = vmatpush1.msra.mxu0 0.0
        %1017 = vmatprep.subr.mxu0 0.0
        %1018 = vmatpush1.msra.mxu0 0.0
        %1019 = vmatprep.subr.mxu0 0.0
        %1020 = vmatpush1.msra.mxu0 0.0
        %1021 = vmatprep.subr.mxu0 0.0
        %1022 = vmatpush1.msra.mxu0 0.0
        %1023 = vmatprep.subr.mxu0 0.0
        %1024 = vmatpush1.msra.mxu0 0.0
        %1025 = vmatprep.subr.mxu0 0.0
        %1026 = vmatpush1.msra.mxu0 0.0
        %1027 = vmatprep.subr.mxu0 0.0
        %v1028 = vand.u32 %v464, 4294901760
        %1029 = vmatpush1.msra.mxu0 %v1028
        %1030 = vmatprep.subr.mxu0 0.0
        %v1031 = vand.u32 %v463, 4294901760
        %1032 = vmatpush1.msra.mxu0 %v1031
        %1033 = vmatprep.subr.mxu0 0.0
        %v1034 = vand.u32 %v462, 4294901760
        %1035 = vmatpush1.msra.mxu0 %v1034
        %1036 = vmatprep.subr.mxu0 0.0
        %v1037 = vand.u32 %v461, 4294901760
        %1038 = vmatpush1.msra.mxu0 %v1037
        %1039 = vmatprep.subr.mxu0 0.0
        %1040 = vmatpush2.msra.mxu0 0.0
        %1041 = vmatprep.subr.mxu0 0.0
        %1042 = vmatpush2.msra.mxu0 0.0
        %1043 = vmatprep.subr.mxu0 0.0
        %1044 = vmatpush2.msra.mxu0 0.0
        %1045 = vmatprep.subr.mxu0 0.0
        %1046 = vmatpush2.msra.mxu0 0.0
        %1047 = vmatprep.subr.mxu0 0.0
        %1048 = vmatpush2.msra.mxu0 0.0
        %1049 = vmatprep.subr.mxu0 0.0
        %1050 = vmatpush2.msra.mxu0 0.0
        %1051 = vmatprep.subr.mxu0 0.0
        %1052 = vmatpush2.msra.mxu0 0.0
        %1053 = vmatprep.subr.mxu0 0.0
        %1054 = vmatpush2.msra.mxu0 0.0
        %1055 = vmatprep.subr.mxu0 0.0
        %1056 = vmatpush2.msra.mxu0 0.0
        %1057 = vmatprep.subr.mxu0 0.0
        %1058 = vmatpush2.msra.mxu0 0.0
        %1059 = vmatprep.subr.mxu0 0.0
        %1060 = vmatpush2.msra.mxu0 0.0
        %1061 = vmatprep.subr.mxu0 0.0
        %1062 = vmatpush2.msra.mxu0 0.0
        %1063 = vmatprep.subr.mxu0 0.0
        %1064 = vmatpush2.msra.mxu0 0.0
        %1065 = vmatprep.subr.mxu0 0.0
        %1066 = vmatpush2.msra.mxu0 0.0
        %1067 = vmatprep.subr.mxu0 0.0
        %1068 = vmatpush2.msra.mxu0 0.0
        %1069 = vmatprep.subr.mxu0 0.0
        %1070 = vmatpush2.msra.mxu0 0.0
        %1071 = vmatprep.mubr.f32.mxu0 0.0
        %v1072 = vand.u32 %v471, 4294901760
        %1073 = vmatmul.mubr.f32.gmra.mxu0 %v1072
        %v1074 = vpop.f32.mrf.mxu0
        %v1075 = vadd.f32 %v982, %v1074
        %v1076 = vpop.f32.mrf.mxu0
        %1077 = vmatprep.mubr.f32.mxu0 0.0
        %v1078 = vand.u32 %v474, 4294901760
        %1079 = vmatmul.mubr.f32.gmra.mxu0 %v1078
        %v1080 = vpop.f32.mrf.mxu0
        %v1081 = vadd.f32 %v988, %v1080
        %v1082 = vpop.f32.mrf.mxu0
        %1083 = vmatprep.mubr.f32.mxu0 0.0
        %v1084 = vand.u32 %v477, 4294901760
        %1085 = vmatmul.mubr.f32.gmra.mxu0 %v1084
        %v1086 = vpop.f32.mrf.mxu0
        %v1087 = vadd.f32 %v994, %v1086
        %v1088 = vpop.f32.mrf.mxu0
        %1089 = vmatprep.mubr.f32.mxu0 0.0
        %v1090 = vand.u32 %v480, 4294901760
        %1091 = vmatmul.mubr.f32.gmra.mxu0 %v1090
        %v1092 = vpop.f32.mrf.mxu0
        %v1093 = vadd.f32 %v1000, %v1092
        %v1094 = vpop.f32.mrf.mxu0
        %1095 = vdwg.mxu0
        %1096 = vadd.xlane.f32.xlu0 %v1075
        %v1097 = vpop.xlane.xlu0 %1096
        %1098 = vadd.xlane.f32.xlu0 %v1081
        %v1099 = vpop.xlane.xlu0 %1098
        %1100 = vadd.xlane.f32.xlu0 %v1087
        %v1101 = vpop.xlane.xlu0 %1100
        %1102 = vadd.xlane.f32.xlu0 %v1093
        %v1103 = vpop.xlane.xlu0 %1102
        %v1104 = vrcp.pop 128.0
        %v1105 = vmul.f32 %v1097, %v1104
        %v1106 = vmul.f32 %v1099, %v1104
        %v1107 = vmul.f32 %v1101, %v1104
        %v1108 = vmul.f32 %v1103, %v1104
        %v1109 = vmul.f32 %v1075, %v1075
        %v1110 = vmul.f32 %v1081, %v1081
        %v1111 = vmul.f32 %v1087, %v1087
        %v1112 = vmul.f32 %v1093, %v1093
        %1113 = vadd.xlane.f32.xlu0 %v1109
        %v1114 = vpop.xlane.xlu0 %1113
        %1115 = vadd.xlane.f32.xlu0 %v1110
        %v1116 = vpop.xlane.xlu0 %1115
        %1117 = vadd.xlane.f32.xlu0 %v1111
        %v1118 = vpop.xlane.xlu0 %1117
        %1119 = vadd.xlane.f32.xlu0 %v1112
        %v1120 = vpop.xlane.xlu0 %1119
        %v1121 = vmul.f32 %v1114, %v1104
        %v1122 = vmul.f32 %v1116, %v1104
        %v1123 = vmul.f32 %v1118, %v1104
        %v1124 = vmul.f32 %v1120, %v1104
        %v1125 = vmul.f32 %v1105, %v1105
        %v1126 = vmul.f32 %v1106, %v1106
        %v1127 = vmul.f32 %v1107, %v1107
        %v1128 = vmul.f32 %v1108, %v1108
        %v1129 = vsub.f32 %v1121, %v1125
        %v1130 = vsub.f32 %v1122, %v1126
        %v1131 = vsub.f32 %v1123, %v1127
        %v1132 = vsub.f32 %v1124, %v1128
        %v1133 = vsub.f32 %v1075, %v1105
        %v1134 = vsub.f32 %v1081, %v1106
        %v1135 = vsub.f32 %v1087, %v1107
        %v1136 = vsub.f32 %v1093, %v1108
        %v1137 = vadd.f32 %v1129, 1e-05
        %v1138 = vadd.f32 %v1130, 1e-05
        %v1139 = vadd.f32 %v1131, 1e-05
        %v1140 = vadd.f32 %v1132, 1e-05
        %v1141 = vrsqrt.pop %v1137
        %v1142 = vrsqrt.pop %v1138
        %v1143 = vrsqrt.pop %v1139
        %v1144 = vrsqrt.pop %v1140
        %v1145 = vmul.f32 %v1133, %v1141
        %v1146 = vmul.f32 %v1134, %v1142
        %v1147 = vmul.f32 %v1135, %v1143
        %v1148 = vmul.f32 %v1136, %v1144
        %v1149 = vlaneseq
        %v1150 = vshrl.u32 %v1149, 7
        %v1151 = vsub.s32 0, %v1150
        %v1152 = vrot.slane %v459, %v1151
        %v1153 = vmul.f32 %v1145, %v1152
        %v1154 = vmul.f32 %v1146, %v1152
        %v1155 = vmul.f32 %v1147, %v1152
        %v1156 = vmul.f32 %v1148, %v1152
        %v1157 = vlaneseq
        %v1158 = vshrl.u32 %v1157, 7
        %v1159 = vsub.s32 0, %v1158
        %v1160 = vrot.slane %v460, %v1159
        %v1161 = vadd.f32 %v1153, %v1160
        %v1162 = vadd.f32 %v1154, %v1160
        %v1163 = vadd.f32 %v1155, %v1160
        %v1164 = vadd.f32 %v1156, %v1160
        %vm1165 = vcmp.gt.f32.partialorder %v1161, 0.0
        %vm1166 = vcmp.gt.f32.partialorder %v1162, 0.0
        %vm1167 = vcmp.gt.f32.partialorder %v1163, 0.0
        %vm1168 = vcmp.gt.f32.partialorder %v1164, 0.0
        %v1169 = vmin.f32 %v1161, 0.0
        %v1170 = vmin.f32 %v1162, 0.0
        %v1171 = vmin.f32 %v1163, 0.0
        %v1172 = vmin.f32 %v1164, 0.0
        %v1173 = vmul.f32 %v1169, 1.442695
        %v1174 = vpow.pop %v1173
        %v1175 = vmul.f32 %v1170, 1.442695
        %v1176 = vpow.pop %v1175
        %v1177 = vmul.f32 %v1171, 1.442695
        %v1178 = vpow.pop %v1177
        %v1179 = vmul.f32 %v1172, 1.442695
        %v1180 = vpow.pop %v1179
        %v1181 = vsub.f32 %v1174, 1.0
        %v1182 = vsub.f32 %v1176, 1.0
        %v1183 = vsub.f32 %v1178, 1.0
        %v1184 = vsub.f32 %v1180, 1.0
        %v1185 = vsel %vm1165, %v1161, %v1181
        %v1186 = vsel %vm1166, %v1162, %v1182
        %v1187 = vsel %vm1167, %v1163, %v1183
        %v1188 = vsel %vm1168, %v1164, %v1184
        %v1189 = vld [vmem:[%s2 + $0x3] sm:$0x1]
        %v1190 = vld [vmem:[%s2 + $0x4] sm:$0x1]
        %v1191 = vld [vmem:[%s2 + $0x5] sm:$0x1]
        %v1192 = vld [vmem:[%s4] sm:$0xff]
        %v1193 = vld [vmem:[%s4 + $0x8] sm:$0xff]
        %v1194 = vld [vmem:[%s4 + $0x10] sm:$0xff]
        %v1195 = vld [vmem:[%s4 + $0x18] sm:$0xff]
        %v1196 = vld [vmem:[%s4 + $0x20] sm:$0xff]
        %v1197 = vld [vmem:[%s4 + $0x28] sm:$0xff]
        %v1198 = vld [vmem:[%s4 + $0x30] sm:$0xff]
        %v1199 = vld [vmem:[%s4 + $0x38] sm:$0xff]
        %v1200 = vld [vmem:[%s4 + $0x40] sm:$0xff]
        %v1201 = vld [vmem:[%s4 + $0x48] sm:$0xff]
        %v1202 = vld [vmem:[%s4 + $0x50] sm:$0xff]
        %v1203 = vld [vmem:[%s4 + $0x58] sm:$0xff]
        %v1204 = vld [vmem:[%s4 + $0x60] sm:$0xff]
        %v1205 = vld [vmem:[%s4 + $0x68] sm:$0xff]
        %v1206 = vld [vmem:[%s4 + $0x70] sm:$0xff]
        %v1207 = vld [vmem:[%s4 + $0x78] sm:$0xff]
        %v1208 = vlaneseq
        %v1209 = vshrl.u32 %v1208, 7
        %v1210 = vsub.s32 0, %v1209
        %v1211 = vrot.slane %v1189, %v1210
        %1212 = vmatprep.subr.mxu0 0.0
        %v1213 = vand.u32 %v1207, 4294901760
        %1214 = vmatpush1.msra.mxu0 %v1213
        %1215 = vmatprep.subr.mxu0 0.0
        %v1216 = vand.u32 %v1206, 4294901760
        %1217 = vmatpush1.msra.mxu0 %v1216
        %1218 = vmatprep.subr.mxu0 0.0
        %v1219 = vand.u32 %v1205, 4294901760
        %1220 = vmatpush1.msra.mxu0 %v1219
        %1221 = vmatprep.subr.mxu0 0.0
        %v1222 = vand.u32 %v1204, 4294901760
        %1223 = vmatpush1.msra.mxu0 %v1222
        %1224 = vmatprep.subr.mxu0 0.0
        %v1225 = vand.u32 %v1203, 4294901760
        %1226 = vmatpush1.msra.mxu0 %v1225
        %1227 = vmatprep.subr.mxu0 0.0
        %v1228 = vand.u32 %v1202, 4294901760
        %1229 = vmatpush1.msra.mxu0 %v1228
        %1230 = vmatprep.subr.mxu0 0.0
        %v1231 = vand.u32 %v1201, 4294901760
        %1232 = vmatpush1.msra.mxu0 %v1231
        %1233 = vmatprep.subr.mxu0 0.0
        %v1234 = vand.u32 %v1200, 4294901760
        %1235 = vmatpush1.msra.mxu0 %v1234
        %1236 = vmatprep.subr.mxu0 0.0
        %v1237 = vand.u32 %v1199, 4294901760
        %1238 = vmatpush1.msra.mxu0 %v1237
        %1239 = vmatprep.subr.mxu0 0.0
        %v1240 = vand.u32 %v1198, 4294901760
        %1241 = vmatpush1.msra.mxu0 %v1240
        %1242 = vmatprep.subr.mxu0 0.0
        %v1243 = vand.u32 %v1197, 4294901760
        %1244 = vmatpush1.msra.mxu0 %v1243
        %1245 = vmatprep.subr.mxu0 0.0
        %v1246 = vand.u32 %v1196, 4294901760
        %1247 = vmatpush1.msra.mxu0 %v1246
        %1248 = vmatprep.subr.mxu0 0.0
        %v1249 = vand.u32 %v1195, 4294901760
        %1250 = vmatpush1.msra.mxu0 %v1249
        %1251 = vmatprep.subr.mxu0 0.0
        %v1252 = vand.u32 %v1194, 4294901760
        %1253 = vmatpush1.msra.mxu0 %v1252
        %1254 = vmatprep.subr.mxu0 0.0
        %v1255 = vand.u32 %v1193, 4294901760
        %1256 = vmatpush1.msra.mxu0 %v1255
        %1257 = vmatprep.subr.mxu0 0.0
        %v1258 = vand.u32 %v1192, 4294901760
        %1259 = vmatpush1.msra.mxu0 %v1258
        %1260 = vmatprep.subr.mxu0 0.0
        %1261 = vmatpush2.msra.mxu0 0.0
        %1262 = vmatprep.subr.mxu0 0.0
        %1263 = vmatpush2.msra.mxu0 0.0
        %1264 = vmatprep.subr.mxu0 0.0
        %1265 = vmatpush2.msra.mxu0 0.0
        %1266 = vmatprep.subr.mxu0 0.0
        %1267 = vmatpush2.msra.mxu0 0.0
        %1268 = vmatprep.subr.mxu0 0.0
        %1269 = vmatpush2.msra.mxu0 0.0
        %1270 = vmatprep.subr.mxu0 0.0
        %1271 = vmatpush2.msra.mxu0 0.0
        %1272 = vmatprep.subr.mxu0 0.0
        %1273 = vmatpush2.msra.mxu0 0.0
        %1274 = vmatprep.subr.mxu0 0.0
        %1275 = vmatpush2.msra.mxu0 0.0
        %1276 = vmatprep.subr.mxu0 0.0
        %1277 = vmatpush2.msra.mxu0 0.0
        %1278 = vmatprep.subr.mxu0 0.0
        %1279 = vmatpush2.msra.mxu0 0.0
        %1280 = vmatprep.subr.mxu0 0.0
        %1281 = vmatpush2.msra.mxu0 0.0
        %1282 = vmatprep.subr.mxu0 0.0
        %1283 = vmatpush2.msra.mxu0 0.0
        %1284 = vmatprep.subr.mxu0 0.0
        %1285 = vmatpush2.msra.mxu0 0.0
        %1286 = vmatprep.subr.mxu0 0.0
        %1287 = vmatpush2.msra.mxu0 0.0
        %1288 = vmatprep.subr.mxu0 0.0
        %1289 = vmatpush2.msra.mxu0 0.0
        %1290 = vmatprep.subr.mxu0 0.0
        %1291 = vmatpush2.msra.mxu0 0.0
        %1292 = vmatprep.mubr.f32.mxu0 0.0
        %v1293 = vand.u32 %v1185, 4294901760
        %v1294 = vsub.f32 %v1185, %v1293
        %v1295 = vand.u32 %v1294, 4294901760
        %v1296 = vsub.f32 %v1294, %v1295
        %v1297 = vand.u32 %v1296, 4294901760
        %1298 = vmatmul.mubr.f32.gmra.mxu0 %v1297
        %v1299 = vpop.f32.mrf.mxu0
        %v1300 = vadd.f32 %v1211, %v1299
        %v1301 = vpop.f32.mrf.mxu0
        %1302 = vmatprep.mubr.f32.mxu0 0.0
        %v1303 = vand.u32 %v1186, 4294901760
        %v1304 = vsub.f32 %v1186, %v1303
        %v1305 = vand.u32 %v1304, 4294901760
        %v1306 = vsub.f32 %v1304, %v1305
        %v1307 = vand.u32 %v1306, 4294901760
        %1308 = vmatmul.mubr.f32.gmra.mxu0 %v1307
        %v1309 = vpop.f32.mrf.mxu0
        %v1310 = vadd.f32 %v1211, %v1309
        %v1311 = vpop.f32.mrf.mxu0
        %1312 = vmatprep.mubr.f32.mxu0 0.0
        %v1313 = vand.u32 %v1187, 4294901760
        %v1314 = vsub.f32 %v1187, %v1313
        %v1315 = vand.u32 %v1314, 4294901760
        %v1316 = vsub.f32 %v1314, %v1315
        %v1317 = vand.u32 %v1316, 4294901760
        %1318 = vmatmul.mubr.f32.gmra.mxu0 %v1317
        %v1319 = vpop.f32.mrf.mxu0
        %v1320 = vadd.f32 %v1211, %v1319
        %v1321 = vpop.f32.mrf.mxu0
        %1322 = vmatprep.mubr.f32.mxu0 0.0
        %v1323 = vand.u32 %v1188, 4294901760
        %v1324 = vsub.f32 %v1188, %v1323
        %v1325 = vand.u32 %v1324, 4294901760
        %v1326 = vsub.f32 %v1324, %v1325
        %v1327 = vand.u32 %v1326, 4294901760
        %1328 = vmatmul.mubr.f32.gmra.mxu0 %v1327
        %v1329 = vpop.f32.mrf.mxu0
        %v1330 = vadd.f32 %v1211, %v1329
        %v1331 = vpop.f32.mrf.mxu0
        %1332 = vdwg.mxu0
        %1333 = vmatprep.subr.mxu0 0.0
        %v1334 = vand.u32 %v1207, 4294901760
        %v1335 = vsub.f32 %v1207, %v1334
        %v1336 = vand.u32 %v1335, 4294901760
        %v1337 = vsub.f32 %v1335, %v1336
        %v1338 = vand.u32 %v1337, 4294901760
        %1339 = vmatpush1.msra.mxu0 %v1338
        %1340 = vmatprep.subr.mxu0 0.0
        %v1341 = vand.u32 %v1206, 4294901760
        %v1342 = vsub.f32 %v1206, %v1341
        %v1343 = vand.u32 %v1342, 4294901760
        %v1344 = vsub.f32 %v1342, %v1343
        %v1345 = vand.u32 %v1344, 4294901760
        %1346 = vmatpush1.msra.mxu0 %v1345
        %1347 = vmatprep.subr.mxu0 0.0
        %v1348 = vand.u32 %v1205, 4294901760
        %v1349 = vsub.f32 %v1205, %v1348
        %v1350 = vand.u32 %v1349, 4294901760
        %v1351 = vsub.f32 %v1349, %v1350
        %v1352 = vand.u32 %v1351, 4294901760
        %1353 = vmatpush1.msra.mxu0 %v1352
        %1354 = vmatprep.subr.mxu0 0.0
        %v1355 = vand.u32 %v1204, 4294901760
        %v1356 = vsub.f32 %v1204, %v1355
        %v1357 = vand.u32 %v1356, 4294901760
        %v1358 = vsub.f32 %v1356, %v1357
        %v1359 = vand.u32 %v1358, 4294901760
        %1360 = vmatpush1.msra.mxu0 %v1359
        %1361 = vmatprep.subr.mxu0 0.0
        %v1362 = vand.u32 %v1203, 4294901760
        %v1363 = vsub.f32 %v1203, %v1362
        %v1364 = vand.u32 %v1363, 4294901760
        %v1365 = vsub.f32 %v1363, %v1364
        %v1366 = vand.u32 %v1365, 4294901760
        %1367 = vmatpush1.msra.mxu0 %v1366
        %1368 = vmatprep.subr.mxu0 0.0
        %v1369 = vand.u32 %v1202, 4294901760
        %v1370 = vsub.f32 %v1202, %v1369
        %v1371 = vand.u32 %v1370, 4294901760
        %v1372 = vsub.f32 %v1370, %v1371
        %v1373 = vand.u32 %v1372, 4294901760
        %1374 = vmatpush1.msra.mxu0 %v1373
        %1375 = vmatprep.subr.mxu0 0.0
        %v1376 = vand.u32 %v1201, 4294901760
        %v1377 = vsub.f32 %v1201, %v1376
        %v1378 = vand.u32 %v1377, 4294901760
        %v1379 = vsub.f32 %v1377, %v1378
        %v1380 = vand.u32 %v1379, 4294901760
        %1381 = vmatpush1.msra.mxu0 %v1380
        %1382 = vmatprep.subr.mxu0 0.0
        %v1383 = vand.u32 %v1200, 4294901760
        %v1384 = vsub.f32 %v1200, %v1383
        %v1385 = vand.u32 %v1384, 4294901760
        %v1386 = vsub.f32 %v1384, %v1385
        %v1387 = vand.u32 %v1386, 4294901760
        %1388 = vmatpush1.msra.mxu0 %v1387
        %1389 = vmatprep.subr.mxu0 0.0
        %v1390 = vand.u32 %v1199, 4294901760
        %v1391 = vsub.f32 %v1199, %v1390
        %v1392 = vand.u32 %v1391, 4294901760
        %v1393 = vsub.f32 %v1391, %v1392
        %v1394 = vand.u32 %v1393, 4294901760
        %1395 = vmatpush1.msra.mxu0 %v1394
        %1396 = vmatprep.subr.mxu0 0.0
        %v1397 = vand.u32 %v1198, 4294901760
        %v1398 = vsub.f32 %v1198, %v1397
        %v1399 = vand.u32 %v1398, 4294901760
        %v1400 = vsub.f32 %v1398, %v1399
        %v1401 = vand.u32 %v1400, 4294901760
        %1402 = vmatpush1.msra.mxu0 %v1401
        %1403 = vmatprep.subr.mxu0 0.0
        %v1404 = vand.u32 %v1197, 4294901760
        %v1405 = vsub.f32 %v1197, %v1404
        %v1406 = vand.u32 %v1405, 4294901760
        %v1407 = vsub.f32 %v1405, %v1406
        %v1408 = vand.u32 %v1407, 4294901760
        %1409 = vmatpush1.msra.mxu0 %v1408
        %1410 = vmatprep.subr.mxu0 0.0
        %v1411 = vand.u32 %v1196, 4294901760
        %v1412 = vsub.f32 %v1196, %v1411
        %v1413 = vand.u32 %v1412, 4294901760
        %v1414 = vsub.f32 %v1412, %v1413
        %v1415 = vand.u32 %v1414, 4294901760
        %1416 = vmatpush1.msra.mxu0 %v1415
        %1417 = vmatprep.subr.mxu0 0.0
        %v1418 = vand.u32 %v1195, 4294901760
        %v1419 = vsub.f32 %v1195, %v1418
        %v1420 = vand.u32 %v1419, 4294901760
        %v1421 = vsub.f32 %v1419, %v1420
        %v1422 = vand.u32 %v1421, 4294901760
        %1423 = vmatpush1.msra.mxu0 %v1422
        %1424 = vmatprep.subr.mxu0 0.0
        %v1425 = vand.u32 %v1194, 4294901760
        %v1426 = vsub.f32 %v1194, %v1425
        %v1427 = vand.u32 %v1426, 4294901760
        %v1428 = vsub.f32 %v1426, %v1427
        %v1429 = vand.u32 %v1428, 4294901760
        %1430 = vmatpush1.msra.mxu0 %v1429
        %1431 = vmatprep.subr.mxu0 0.0
        %v1432 = vand.u32 %v1193, 4294901760
        %v1433 = vsub.f32 %v1193, %v1432
        %v1434 = vand.u32 %v1433, 4294901760
        %v1435 = vsub.f32 %v1433, %v1434
        %v1436 = vand.u32 %v1435, 4294901760
        %1437 = vmatpush1.msra.mxu0 %v1436
        %1438 = vmatprep.subr.mxu0 0.0
        %v1439 = vand.u32 %v1192, 4294901760
        %v1440 = vsub.f32 %v1192, %v1439
        %v1441 = vand.u32 %v1440, 4294901760
        %v1442 = vsub.f32 %v1440, %v1441
        %v1443 = vand.u32 %v1442, 4294901760
        %1444 = vmatpush1.msra.mxu0 %v1443
        %1445 = vmatprep.subr.mxu0 0.0
        %1446 = vmatpush2.msra.mxu0 0.0
        %1447 = vmatprep.subr.mxu0 0.0
        %1448 = vmatpush2.msra.mxu0 0.0
        %1449 = vmatprep.subr.mxu0 0.0
        %1450 = vmatpush2.msra.mxu0 0.0
        %1451 = vmatprep.subr.mxu0 0.0
        %1452 = vmatpush2.msra.mxu0 0.0
        %1453 = vmatprep.subr.mxu0 0.0
        %1454 = vmatpush2.msra.mxu0 0.0
        %1455 = vmatprep.subr.mxu0 0.0
        %1456 = vmatpush2.msra.mxu0 0.0
        %1457 = vmatprep.subr.mxu0 0.0
        %1458 = vmatpush2.msra.mxu0 0.0
        %1459 = vmatprep.subr.mxu0 0.0
        %1460 = vmatpush2.msra.mxu0 0.0
        %1461 = vmatprep.subr.mxu0 0.0
        %1462 = vmatpush2.msra.mxu0 0.0
        %1463 = vmatprep.subr.mxu0 0.0
        %1464 = vmatpush2.msra.mxu0 0.0
        %1465 = vmatprep.subr.mxu0 0.0
        %1466 = vmatpush2.msra.mxu0 0.0
        %1467 = vmatprep.subr.mxu0 0.0
        %1468 = vmatpush2.msra.mxu0 0.0
        %1469 = vmatprep.subr.mxu0 0.0
        %1470 = vmatpush2.msra.mxu0 0.0
        %1471 = vmatprep.subr.mxu0 0.0
        %1472 = vmatpush2.msra.mxu0 0.0
        %1473 = vmatprep.subr.mxu0 0.0
        %1474 = vmatpush2.msra.mxu0 0.0
        %1475 = vmatprep.subr.mxu0 0.0
        %1476 = vmatpush2.msra.mxu0 0.0
        %1477 = vmatprep.mubr.f32.mxu0 0.0
        %v1478 = vand.u32 %v1185, 4294901760
        %1479 = vmatmul.mubr.f32.gmra.mxu0 %v1478
        %v1480 = vpop.f32.mrf.mxu0
        %v1481 = vadd.f32 %v1300, %v1480
        %v1482 = vpop.f32.mrf.mxu0
        %1483 = vmatprep.mubr.f32.mxu0 0.0
        %v1484 = vand.u32 %v1186, 4294901760
        %1485 = vmatmul.mubr.f32.gmra.mxu0 %v1484
        %v1486 = vpop.f32.mrf.mxu0
        %v1487 = vadd.f32 %v1310, %v1486
        %v1488 = vpop.f32.mrf.mxu0
        %1489 = vmatprep.mubr.f32.mxu0 0.0
        %v1490 = vand.u32 %v1187, 4294901760
        %1491 = vmatmul.mubr.f32.gmra.mxu0 %v1490
        %v1492 = vpop.f32.mrf.mxu0
        %v1493 = vadd.f32 %v1320, %v1492
        %v1494 = vpop.f32.mrf.mxu0
        %1495 = vmatprep.mubr.f32.mxu0 0.0
        %v1496 = vand.u32 %v1188, 4294901760
        %1497 = vmatmul.mubr.f32.gmra.mxu0 %v1496
        %v1498 = vpop.f32.mrf.mxu0
        %v1499 = vadd.f32 %v1330, %v1498
        %v1500 = vpop.f32.mrf.mxu0
        %1501 = vdwg.mxu0
        %1502 = vmatprep.subr.mxu0 0.0
        %v1503 = vand.u32 %v1207, 4294901760
        %v1504 = vsub.f32 %v1207, %v1503
        %1505 = vmatpush1.msra.mxu0 %v1504
        %1506 = vmatprep.subr.mxu0 0.0
        %v1507 = vand.u32 %v1206, 4294901760
        %v1508 = vsub.f32 %v1206, %v1507
        %1509 = vmatpush1.msra.mxu0 %v1508
        %1510 = vmatprep.subr.mxu0 0.0
        %v1511 = vand.u32 %v1205, 4294901760
        %v1512 = vsub.f32 %v1205, %v1511
        %1513 = vmatpush1.msra.mxu0 %v1512
        %1514 = vmatprep.subr.mxu0 0.0
        %v1515 = vand.u32 %v1204, 4294901760
        %v1516 = vsub.f32 %v1204, %v1515
        %1517 = vmatpush1.msra.mxu0 %v1516
        %1518 = vmatprep.subr.mxu0 0.0
        %v1519 = vand.u32 %v1203, 4294901760
        %v1520 = vsub.f32 %v1203, %v1519
        %1521 = vmatpush1.msra.mxu0 %v1520
        %1522 = vmatprep.subr.mxu0 0.0
        %v1523 = vand.u32 %v1202, 4294901760
        %v1524 = vsub.f32 %v1202, %v1523
        %1525 = vmatpush1.msra.mxu0 %v1524
        %1526 = vmatprep.subr.mxu0 0.0
        %v1527 = vand.u32 %v1201, 4294901760
        %v1528 = vsub.f32 %v1201, %v1527
        %1529 = vmatpush1.msra.mxu0 %v1528
        %1530 = vmatprep.subr.mxu0 0.0
        %v1531 = vand.u32 %v1200, 4294901760
        %v1532 = vsub.f32 %v1200, %v1531
        %1533 = vmatpush1.msra.mxu0 %v1532
        %1534 = vmatprep.subr.mxu0 0.0
        %v1535 = vand.u32 %v1199, 4294901760
        %v1536 = vsub.f32 %v1199, %v1535
        %1537 = vmatpush1.msra.mxu0 %v1536
        %1538 = vmatprep.subr.mxu0 0.0
        %v1539 = vand.u32 %v1198, 4294901760
        %v1540 = vsub.f32 %v1198, %v1539
        %1541 = vmatpush1.msra.mxu0 %v1540
        %1542 = vmatprep.subr.mxu0 0.0
        %v1543 = vand.u32 %v1197, 4294901760
        %v1544 = vsub.f32 %v1197, %v1543
        %1545 = vmatpush1.msra.mxu0 %v1544
        %1546 = vmatprep.subr.mxu0 0.0
        %v1547 = vand.u32 %v1196, 4294901760
        %v1548 = vsub.f32 %v1196, %v1547
        %1549 = vmatpush1.msra.mxu0 %v1548
        %1550 = vmatprep.subr.mxu0 0.0
        %v1551 = vand.u32 %v1195, 4294901760
        %v1552 = vsub.f32 %v1195, %v1551
        %1553 = vmatpush1.msra.mxu0 %v1552
        %1554 = vmatprep.subr.mxu0 0.0
        %v1555 = vand.u32 %v1194, 4294901760
        %v1556 = vsub.f32 %v1194, %v1555
        %1557 = vmatpush1.msra.mxu0 %v1556
        %1558 = vmatprep.subr.mxu0 0.0
        %v1559 = vand.u32 %v1193, 4294901760
        %v1560 = vsub.f32 %v1193, %v1559
        %1561 = vmatpush1.msra.mxu0 %v1560
        %1562 = vmatprep.subr.mxu0 0.0
        %v1563 = vand.u32 %v1192, 4294901760
        %v1564 = vsub.f32 %v1192, %v1563
        %1565 = vmatpush1.msra.mxu0 %v1564
        %1566 = vmatprep.subr.mxu0 0.0
        %1567 = vmatpush2.msra.mxu0 0.0
        %1568 = vmatprep.subr.mxu0 0.0
        %1569 = vmatpush2.msra.mxu0 0.0
        %1570 = vmatprep.subr.mxu0 0.0
        %1571 = vmatpush2.msra.mxu0 0.0
        %1572 = vmatprep.subr.mxu0 0.0
        %1573 = vmatpush2.msra.mxu0 0.0
        %1574 = vmatprep.subr.mxu0 0.0
        %1575 = vmatpush2.msra.mxu0 0.0
        %1576 = vmatprep.subr.mxu0 0.0
        %1577 = vmatpush2.msra.mxu0 0.0
        %1578 = vmatprep.subr.mxu0 0.0
        %1579 = vmatpush2.msra.mxu0 0.0
        %1580 = vmatprep.subr.mxu0 0.0
        %1581 = vmatpush2.msra.mxu0 0.0
        %1582 = vmatprep.subr.mxu0 0.0
        %1583 = vmatpush2.msra.mxu0 0.0
        %1584 = vmatprep.subr.mxu0 0.0
        %1585 = vmatpush2.msra.mxu0 0.0
        %1586 = vmatprep.subr.mxu0 0.0
        %1587 = vmatpush2.msra.mxu0 0.0
        %1588 = vmatprep.subr.mxu0 0.0
        %1589 = vmatpush2.msra.mxu0 0.0
        %1590 = vmatprep.subr.mxu0 0.0
        %1591 = vmatpush2.msra.mxu0 0.0
        %1592 = vmatprep.subr.mxu0 0.0
        %1593 = vmatpush2.msra.mxu0 0.0
        %1594 = vmatprep.subr.mxu0 0.0
        %1595 = vmatpush2.msra.mxu0 0.0
        %1596 = vmatprep.subr.mxu0 0.0
        %1597 = vmatpush2.msra.mxu0 0.0
        %1598 = vmatprep.mubr.f32.mxu0 0.0
        %v1599 = vand.u32 %v1185, 4294901760
        %v1600 = vsub.f32 %v1185, %v1599
        %1601 = vmatmul.mubr.f32.gmra.mxu0 %v1600
        %v1602 = vpop.f32.mrf.mxu0
        %v1603 = vadd.f32 %v1481, %v1602
        %v1604 = vpop.f32.mrf.mxu0
        %1605 = vmatprep.mubr.f32.mxu0 0.0
        %v1606 = vand.u32 %v1186, 4294901760
        %v1607 = vsub.f32 %v1186, %v1606
        %1608 = vmatmul.mubr.f32.gmra.mxu0 %v1607
        %v1609 = vpop.f32.mrf.mxu0
        %v1610 = vadd.f32 %v1487, %v1609
        %v1611 = vpop.f32.mrf.mxu0
        %1612 = vmatprep.mubr.f32.mxu0 0.0
        %v1613 = vand.u32 %v1187, 4294901760
        %v1614 = vsub.f32 %v1187, %v1613
        %1615 = vmatmul.mubr.f32.gmra.mxu0 %v1614
        %v1616 = vpop.f32.mrf.mxu0
        %v1617 = vadd.f32 %v1493, %v1616
        %v1618 = vpop.f32.mrf.mxu0
        %1619 = vmatprep.mubr.f32.mxu0 0.0
        %v1620 = vand.u32 %v1188, 4294901760
        %v1621 = vsub.f32 %v1188, %v1620
        %1622 = vmatmul.mubr.f32.gmra.mxu0 %v1621
        %v1623 = vpop.f32.mrf.mxu0
        %v1624 = vadd.f32 %v1499, %v1623
        %v1625 = vpop.f32.mrf.mxu0
        %1626 = vdwg.mxu0
        %1627 = vmatprep.subr.mxu0 0.0
        %v1628 = vand.u32 %v1207, 4294901760
        %1629 = vmatpush1.msra.mxu0 %v1628
        %1630 = vmatprep.subr.mxu0 0.0
        %v1631 = vand.u32 %v1206, 4294901760
        %1632 = vmatpush1.msra.mxu0 %v1631
        %1633 = vmatprep.subr.mxu0 0.0
        %v1634 = vand.u32 %v1205, 4294901760
        %1635 = vmatpush1.msra.mxu0 %v1634
        %1636 = vmatprep.subr.mxu0 0.0
        %v1637 = vand.u32 %v1204, 4294901760
        %1638 = vmatpush1.msra.mxu0 %v1637
        %1639 = vmatprep.subr.mxu0 0.0
        %v1640 = vand.u32 %v1203, 4294901760
        %1641 = vmatpush1.msra.mxu0 %v1640
        %1642 = vmatprep.subr.mxu0 0.0
        %v1643 = vand.u32 %v1202, 4294901760
        %1644 = vmatpush1.msra.mxu0 %v1643
        %1645 = vmatprep.subr.mxu0 0.0
        %v1646 = vand.u32 %v1201, 4294901760
        %1647 = vmatpush1.msra.mxu0 %v1646
        %1648 = vmatprep.subr.mxu0 0.0
        %v1649 = vand.u32 %v1200, 4294901760
        %1650 = vmatpush1.msra.mxu0 %v1649
        %1651 = vmatprep.subr.mxu0 0.0
        %v1652 = vand.u32 %v1199, 4294901760
        %1653 = vmatpush1.msra.mxu0 %v1652
        %1654 = vmatprep.subr.mxu0 0.0
        %v1655 = vand.u32 %v1198, 4294901760
        %1656 = vmatpush1.msra.mxu0 %v1655
        %1657 = vmatprep.subr.mxu0 0.0
        %v1658 = vand.u32 %v1197, 4294901760
        %1659 = vmatpush1.msra.mxu0 %v1658
        %1660 = vmatprep.subr.mxu0 0.0
        %v1661 = vand.u32 %v1196, 4294901760
        %1662 = vmatpush1.msra.mxu0 %v1661
        %1663 = vmatprep.subr.mxu0 0.0
        %v1664 = vand.u32 %v1195, 4294901760
        %1665 = vmatpush1.msra.mxu0 %v1664
        %1666 = vmatprep.subr.mxu0 0.0
        %v1667 = vand.u32 %v1194, 4294901760
        %1668 = vmatpush1.msra.mxu0 %v1667
        %1669 = vmatprep.subr.mxu0 0.0
        %v1670 = vand.u32 %v1193, 4294901760
        %1671 = vmatpush1.msra.mxu0 %v1670
        %1672 = vmatprep.subr.mxu0 0.0
        %v1673 = vand.u32 %v1192, 4294901760
        %1674 = vmatpush1.msra.mxu0 %v1673
        %1675 = vmatprep.subr.mxu0 0.0
        %1676 = vmatpush2.msra.mxu0 0.0
        %1677 = vmatprep.subr.mxu0 0.0
        %1678 = vmatpush2.msra.mxu0 0.0
        %1679 = vmatprep.subr.mxu0 0.0
        %1680 = vmatpush2.msra.mxu0 0.0
        %1681 = vmatprep.subr.mxu0 0.0
        %1682 = vmatpush2.msra.mxu0 0.0
        %1683 = vmatprep.subr.mxu0 0.0
        %1684 = vmatpush2.msra.mxu0 0.0
        %1685 = vmatprep.subr.mxu0 0.0
        %1686 = vmatpush2.msra.mxu0 0.0
        %1687 = vmatprep.subr.mxu0 0.0
        %1688 = vmatpush2.msra.mxu0 0.0
        %1689 = vmatprep.subr.mxu0 0.0
        %1690 = vmatpush2.msra.mxu0 0.0
        %1691 = vmatprep.subr.mxu0 0.0
        %1692 = vmatpush2.msra.mxu0 0.0
        %1693 = vmatprep.subr.mxu0 0.0
        %1694 = vmatpush2.msra.mxu0 0.0
        %1695 = vmatprep.subr.mxu0 0.0
        %1696 = vmatpush2.msra.mxu0 0.0
        %1697 = vmatprep.subr.mxu0 0.0
        %1698 = vmatpush2.msra.mxu0 0.0
        %1699 = vmatprep.subr.mxu0 0.0
        %1700 = vmatpush2.msra.mxu0 0.0
        %1701 = vmatprep.subr.mxu0 0.0
        %1702 = vmatpush2.msra.mxu0 0.0
        %1703 = vmatprep.subr.mxu0 0.0
        %1704 = vmatpush2.msra.mxu0 0.0
        %1705 = vmatprep.subr.mxu0 0.0
        %1706 = vmatpush2.msra.mxu0 0.0
        %1707 = vmatprep.mubr.f32.mxu0 0.0
        %v1708 = vand.u32 %v1185, 4294901760
        %v1709 = vsub.f32 %v1185, %v1708
        %v1710 = vand.u32 %v1709, 4294901760
        %1711 = vmatmul.mubr.f32.gmra.mxu0 %v1710
        %v1712 = vpop.f32.mrf.mxu0
        %v1713 = vadd.f32 %v1603, %v1712
        %v1714 = vpop.f32.mrf.mxu0
        %1715 = vmatprep.mubr.f32.mxu0 0.0
        %v1716 = vand.u32 %v1186, 4294901760
        %v1717 = vsub.f32 %v1186, %v1716
        %v1718 = vand.u32 %v1717, 4294901760
        %1719 = vmatmul.mubr.f32.gmra.mxu0 %v1718
        %v1720 = vpop.f32.mrf.mxu0
        %v1721 = vadd.f32 %v1610, %v1720
        %v1722 = vpop.f32.mrf.mxu0
        %1723 = vmatprep.mubr.f32.mxu0 0.0
        %v1724 = vand.u32 %v1187, 4294901760
        %v1725 = vsub.f32 %v1187, %v1724
        %v1726 = vand.u32 %v1725, 4294901760
        %1727 = vmatmul.mubr.f32.gmra.mxu0 %v1726
        %v1728 = vpop.f32.mrf.mxu0
        %v1729 = vadd.f32 %v1617, %v1728
        %v1730 = vpop.f32.mrf.mxu0
        %1731 = vmatprep.mubr.f32.mxu0 0.0
        %v1732 = vand.u32 %v1188, 4294901760
        %v1733 = vsub.f32 %v1188, %v1732
        %v1734 = vand.u32 %v1733, 4294901760
        %1735 = vmatmul.mubr.f32.gmra.mxu0 %v1734
        %v1736 = vpop.f32.mrf.mxu0
        %v1737 = vadd.f32 %v1624, %v1736
        %v1738 = vpop.f32.mrf.mxu0
        %1739 = vdwg.mxu0
        %1740 = vmatprep.subr.mxu0 0.0
        %v1741 = vand.u32 %v1207, 4294901760
        %v1742 = vsub.f32 %v1207, %v1741
        %v1743 = vand.u32 %v1742, 4294901760
        %1744 = vmatpush1.msra.mxu0 %v1743
        %1745 = vmatprep.subr.mxu0 0.0
        %v1746 = vand.u32 %v1206, 4294901760
        %v1747 = vsub.f32 %v1206, %v1746
        %v1748 = vand.u32 %v1747, 4294901760
        %1749 = vmatpush1.msra.mxu0 %v1748
        %1750 = vmatprep.subr.mxu0 0.0
        %v1751 = vand.u32 %v1205, 4294901760
        %v1752 = vsub.f32 %v1205, %v1751
        %v1753 = vand.u32 %v1752, 4294901760
        %1754 = vmatpush1.msra.mxu0 %v1753
        %1755 = vmatprep.subr.mxu0 0.0
        %v1756 = vand.u32 %v1204, 4294901760
        %v1757 = vsub.f32 %v1204, %v1756
        %v1758 = vand.u32 %v1757, 4294901760
        %1759 = vmatpush1.msra.mxu0 %v1758
        %1760 = vmatprep.subr.mxu0 0.0
        %v1761 = vand.u32 %v1203, 4294901760
        %v1762 = vsub.f32 %v1203, %v1761
        %v1763 = vand.u32 %v1762, 4294901760
        %1764 = vmatpush1.msra.mxu0 %v1763
        %1765 = vmatprep.subr.mxu0 0.0
        %v1766 = vand.u32 %v1202, 4294901760
        %v1767 = vsub.f32 %v1202, %v1766
        %v1768 = vand.u32 %v1767, 4294901760
        %1769 = vmatpush1.msra.mxu0 %v1768
        %1770 = vmatprep.subr.mxu0 0.0
        %v1771 = vand.u32 %v1201, 4294901760
        %v1772 = vsub.f32 %v1201, %v1771
        %v1773 = vand.u32 %v1772, 4294901760
        %1774 = vmatpush1.msra.mxu0 %v1773
        %1775 = vmatprep.subr.mxu0 0.0
        %v1776 = vand.u32 %v1200, 4294901760
        %v1777 = vsub.f32 %v1200, %v1776
        %v1778 = vand.u32 %v1777, 4294901760
        %1779 = vmatpush1.msra.mxu0 %v1778
        %1780 = vmatprep.subr.mxu0 0.0
        %v1781 = vand.u32 %v1199, 4294901760
        %v1782 = vsub.f32 %v1199, %v1781
        %v1783 = vand.u32 %v1782, 4294901760
        %1784 = vmatpush1.msra.mxu0 %v1783
        %1785 = vmatprep.subr.mxu0 0.0
        %v1786 = vand.u32 %v1198, 4294901760
        %v1787 = vsub.f32 %v1198, %v1786
        %v1788 = vand.u32 %v1787, 4294901760
        %1789 = vmatpush1.msra.mxu0 %v1788
        %1790 = vmatprep.subr.mxu0 0.0
        %v1791 = vand.u32 %v1197, 4294901760
        %v1792 = vsub.f32 %v1197, %v1791
        %v1793 = vand.u32 %v1792, 4294901760
        %1794 = vmatpush1.msra.mxu0 %v1793
        %1795 = vmatprep.subr.mxu0 0.0
        %v1796 = vand.u32 %v1196, 4294901760
        %v1797 = vsub.f32 %v1196, %v1796
        %v1798 = vand.u32 %v1797, 4294901760
        %1799 = vmatpush1.msra.mxu0 %v1798
        %1800 = vmatprep.subr.mxu0 0.0
        %v1801 = vand.u32 %v1195, 4294901760
        %v1802 = vsub.f32 %v1195, %v1801
        %v1803 = vand.u32 %v1802, 4294901760
        %1804 = vmatpush1.msra.mxu0 %v1803
        %1805 = vmatprep.subr.mxu0 0.0
        %v1806 = vand.u32 %v1194, 4294901760
        %v1807 = vsub.f32 %v1194, %v1806
        %v1808 = vand.u32 %v1807, 4294901760
        %1809 = vmatpush1.msra.mxu0 %v1808
        %1810 = vmatprep.subr.mxu0 0.0
        %v1811 = vand.u32 %v1193, 4294901760
        %v1812 = vsub.f32 %v1193, %v1811
        %v1813 = vand.u32 %v1812, 4294901760
        %1814 = vmatpush1.msra.mxu0 %v1813
        %1815 = vmatprep.subr.mxu0 0.0
        %v1816 = vand.u32 %v1192, 4294901760
        %v1817 = vsub.f32 %v1192, %v1816
        %v1818 = vand.u32 %v1817, 4294901760
        %1819 = vmatpush1.msra.mxu0 %v1818
        %1820 = vmatprep.subr.mxu0 0.0
        %1821 = vmatpush2.msra.mxu0 0.0
        %1822 = vmatprep.subr.mxu0 0.0
        %1823 = vmatpush2.msra.mxu0 0.0
        %1824 = vmatprep.subr.mxu0 0.0
        %1825 = vmatpush2.msra.mxu0 0.0
        %1826 = vmatprep.subr.mxu0 0.0
        %1827 = vmatpush2.msra.mxu0 0.0
        %1828 = vmatprep.subr.mxu0 0.0
        %1829 = vmatpush2.msra.mxu0 0.0
        %1830 = vmatprep.subr.mxu0 0.0
        %1831 = vmatpush2.msra.mxu0 0.0
        %1832 = vmatprep.subr.mxu0 0.0
        %1833 = vmatpush2.msra.mxu0 0.0
        %1834 = vmatprep.subr.mxu0 0.0
        %1835 = vmatpush2.msra.mxu0 0.0
        %1836 = vmatprep.subr.mxu0 0.0
        %1837 = vmatpush2.msra.mxu0 0.0
        %1838 = vmatprep.subr.mxu0 0.0
        %1839 = vmatpush2.msra.mxu0 0.0
        %1840 = vmatprep.subr.mxu0 0.0
        %1841 = vmatpush2.msra.mxu0 0.0
        %1842 = vmatprep.subr.mxu0 0.0
        %1843 = vmatpush2.msra.mxu0 0.0
        %1844 = vmatprep.subr.mxu0 0.0
        %1845 = vmatpush2.msra.mxu0 0.0
        %1846 = vmatprep.subr.mxu0 0.0
        %1847 = vmatpush2.msra.mxu0 0.0
        %1848 = vmatprep.subr.mxu0 0.0
        %1849 = vmatpush2.msra.mxu0 0.0
        %1850 = vmatprep.subr.mxu0 0.0
        %1851 = vmatpush2.msra.mxu0 0.0
        %1852 = vmatprep.mubr.f32.mxu0 0.0
        %v1853 = vand.u32 %v1185, 4294901760
        %1854 = vmatmul.mubr.f32.gmra.mxu0 %v1853
        %v1855 = vpop.f32.mrf.mxu0
        %v1856 = vadd.f32 %v1713, %v1855
        %v1857 = vpop.f32.mrf.mxu0
        %1858 = vmatprep.mubr.f32.mxu0 0.0
        %v1859 = vand.u32 %v1186, 4294901760
        %1860 = vmatmul.mubr.f32.gmra.mxu0 %v1859
        %v1861 = vpop.f32.mrf.mxu0
        %v1862 = vadd.f32 %v1721, %v1861
        %v1863 = vpop.f32.mrf.mxu0
        %1864 = vmatprep.mubr.f32.mxu0 0.0
        %v1865 = vand.u32 %v1187, 4294901760
        %1866 = vmatmul.mubr.f32.gmra.mxu0 %v1865
        %v1867 = vpop.f32.mrf.mxu0
        %v1868 = vadd.f32 %v1729, %v1867
        %v1869 = vpop.f32.mrf.mxu0
        %1870 = vmatprep.mubr.f32.mxu0 0.0
        %v1871 = vand.u32 %v1188, 4294901760
        %1872 = vmatmul.mubr.f32.gmra.mxu0 %v1871
        %v1873 = vpop.f32.mrf.mxu0
        %v1874 = vadd.f32 %v1737, %v1873
        %v1875 = vpop.f32.mrf.mxu0
        %1876 = vdwg.mxu0
        %1877 = vmatprep.subr.mxu0 0.0
        %v1878 = vand.u32 %v1207, 4294901760
        %1879 = vmatpush1.msra.mxu0 %v1878
        %1880 = vmatprep.subr.mxu0 0.0
        %v1881 = vand.u32 %v1206, 4294901760
        %1882 = vmatpush1.msra.mxu0 %v1881
        %1883 = vmatprep.subr.mxu0 0.0
        %v1884 = vand.u32 %v1205, 4294901760
        %1885 = vmatpush1.msra.mxu0 %v1884
        %1886 = vmatprep.subr.mxu0 0.0
        %v1887 = vand.u32 %v1204, 4294901760
        %1888 = vmatpush1.msra.mxu0 %v1887
        %1889 = vmatprep.subr.mxu0 0.0
        %v1890 = vand.u32 %v1203, 4294901760
        %1891 = vmatpush1.msra.mxu0 %v1890
        %1892 = vmatprep.subr.mxu0 0.0
        %v1893 = vand.u32 %v1202, 4294901760
        %1894 = vmatpush1.msra.mxu0 %v1893
        %1895 = vmatprep.subr.mxu0 0.0
        %v1896 = vand.u32 %v1201, 4294901760
        %1897 = vmatpush1.msra.mxu0 %v1896
        %1898 = vmatprep.subr.mxu0 0.0
        %v1899 = vand.u32 %v1200, 4294901760
        %1900 = vmatpush1.msra.mxu0 %v1899
        %1901 = vmatprep.subr.mxu0 0.0
        %v1902 = vand.u32 %v1199, 4294901760
        %1903 = vmatpush1.msra.mxu0 %v1902
        %1904 = vmatprep.subr.mxu0 0.0
        %v1905 = vand.u32 %v1198, 4294901760
        %1906 = vmatpush1.msra.mxu0 %v1905
        %1907 = vmatprep.subr.mxu0 0.0
        %v1908 = vand.u32 %v1197, 4294901760
        %1909 = vmatpush1.msra.mxu0 %v1908
        %1910 = vmatprep.subr.mxu0 0.0
        %v1911 = vand.u32 %v1196, 4294901760
        %1912 = vmatpush1.msra.mxu0 %v1911
        %1913 = vmatprep.subr.mxu0 0.0
        %v1914 = vand.u32 %v1195, 4294901760
        %1915 = vmatpush1.msra.mxu0 %v1914
        %1916 = vmatprep.subr.mxu0 0.0
        %v1917 = vand.u32 %v1194, 4294901760
        %1918 = vmatpush1.msra.mxu0 %v1917
        %1919 = vmatprep.subr.mxu0 0.0
        %v1920 = vand.u32 %v1193, 4294901760
        %1921 = vmatpush1.msra.mxu0 %v1920
        %1922 = vmatprep.subr.mxu0 0.0
        %v1923 = vand.u32 %v1192, 4294901760
        %1924 = vmatpush1.msra.mxu0 %v1923
        %1925 = vmatprep.subr.mxu0 0.0
        %1926 = vmatpush2.msra.mxu0 0.0
        %1927 = vmatprep.subr.mxu0 0.0
        %1928 = vmatpush2.msra.mxu0 0.0
        %1929 = vmatprep.subr.mxu0 0.0
        %1930 = vmatpush2.msra.mxu0 0.0
        %1931 = vmatprep.subr.mxu0 0.0
        %1932 = vmatpush2.msra.mxu0 0.0
        %1933 = vmatprep.subr.mxu0 0.0
        %1934 = vmatpush2.msra.mxu0 0.0
        %1935 = vmatprep.subr.mxu0 0.0
        %1936 = vmatpush2.msra.mxu0 0.0
        %1937 = vmatprep.subr.mxu0 0.0
        %1938 = vmatpush2.msra.mxu0 0.0
        %1939 = vmatprep.subr.mxu0 0.0
        %1940 = vmatpush2.msra.mxu0 0.0
        %1941 = vmatprep.subr.mxu0 0.0
        %1942 = vmatpush2.msra.mxu0 0.0
        %1943 = vmatprep.subr.mxu0 0.0
        %1944 = vmatpush2.msra.mxu0 0.0
        %1945 = vmatprep.subr.mxu0 0.0
        %1946 = vmatpush2.msra.mxu0 0.0
        %1947 = vmatprep.subr.mxu0 0.0
        %1948 = vmatpush2.msra.mxu0 0.0
        %1949 = vmatprep.subr.mxu0 0.0
        %1950 = vmatpush2.msra.mxu0 0.0
        %1951 = vmatprep.subr.mxu0 0.0
        %1952 = vmatpush2.msra.mxu0 0.0
        %1953 = vmatprep.subr.mxu0 0.0
        %1954 = vmatpush2.msra.mxu0 0.0
        %1955 = vmatprep.subr.mxu0 0.0
        %1956 = vmatpush2.msra.mxu0 0.0
        %1957 = vmatprep.mubr.f32.mxu0 0.0
        %v1958 = vand.u32 %v1185, 4294901760
        %1959 = vmatmul.mubr.f32.gmra.mxu0 %v1958
        %v1960 = vpop.f32.mrf.mxu0
        %v1961 = vadd.f32 %v1856, %v1960
        %v1962 = vpop.f32.mrf.mxu0
        %1963 = vmatprep.mubr.f32.mxu0 0.0
        %v1964 = vand.u32 %v1186, 4294901760
        %1965 = vmatmul.mubr.f32.gmra.mxu0 %v1964
        %v1966 = vpop.f32.mrf.mxu0
        %v1967 = vadd.f32 %v1862, %v1966
        %v1968 = vpop.f32.mrf.mxu0
        %1969 = vmatprep.mubr.f32.mxu0 0.0
        %v1970 = vand.u32 %v1187, 4294901760
        %1971 = vmatmul.mubr.f32.gmra.mxu0 %v1970
        %v1972 = vpop.f32.mrf.mxu0
        %v1973 = vadd.f32 %v1868, %v1972
        %v1974 = vpop.f32.mrf.mxu0
        %1975 = vmatprep.mubr.f32.mxu0 0.0
        %v1976 = vand.u32 %v1188, 4294901760
        %1977 = vmatmul.mubr.f32.gmra.mxu0 %v1976
        %v1978 = vpop.f32.mrf.mxu0
        %v1979 = vadd.f32 %v1874, %v1978
        %v1980 = vpop.f32.mrf.mxu0
        %1981 = vdwg.mxu0
        %1982 = vadd.xlane.f32.xlu0 %v1961
        %v1983 = vpop.xlane.xlu0 %1982
        %1984 = vadd.xlane.f32.xlu0 %v1967
        %v1985 = vpop.xlane.xlu0 %1984
        %1986 = vadd.xlane.f32.xlu0 %v1973
        %v1987 = vpop.xlane.xlu0 %1986
        %1988 = vadd.xlane.f32.xlu0 %v1979
        %v1989 = vpop.xlane.xlu0 %1988
        %v1990 = vmul.f32 %v1983, %v1104
        %v1991 = vmul.f32 %v1985, %v1104
        %v1992 = vmul.f32 %v1987, %v1104
        %v1993 = vmul.f32 %v1989, %v1104
        %v1994 = vmul.f32 %v1961, %v1961
        %v1995 = vmul.f32 %v1967, %v1967
        %v1996 = vmul.f32 %v1973, %v1973
        %v1997 = vmul.f32 %v1979, %v1979
        %1998 = vadd.xlane.f32.xlu0 %v1994
        %v1999 = vpop.xlane.xlu0 %1998
        %2000 = vadd.xlane.f32.xlu0 %v1995
        %v2001 = vpop.xlane.xlu0 %2000
        %2002 = vadd.xlane.f32.xlu0 %v1996
        %v2003 = vpop.xlane.xlu0 %2002
        %2004 = vadd.xlane.f32.xlu0 %v1997
        %v2005 = vpop.xlane.xlu0 %2004
        %v2006 = vmul.f32 %v1999, %v1104
        %v2007 = vmul.f32 %v2001, %v1104
        %v2008 = vmul.f32 %v2003, %v1104
        %v2009 = vmul.f32 %v2005, %v1104
        %v2010 = vmul.f32 %v1990, %v1990
        %v2011 = vmul.f32 %v1991, %v1991
        %v2012 = vmul.f32 %v1992, %v1992
        %v2013 = vmul.f32 %v1993, %v1993
        %v2014 = vsub.f32 %v2006, %v2010
        %v2015 = vsub.f32 %v2007, %v2011
        %v2016 = vsub.f32 %v2008, %v2012
        %v2017 = vsub.f32 %v2009, %v2013
        %v2018 = vsub.f32 %v1961, %v1990
        %v2019 = vsub.f32 %v1967, %v1991
        %v2020 = vsub.f32 %v1973, %v1992
        %v2021 = vsub.f32 %v1979, %v1993
        %v2022 = vadd.f32 %v2014, 1e-05
        %v2023 = vadd.f32 %v2015, 1e-05
        %v2024 = vadd.f32 %v2016, 1e-05
        %v2025 = vadd.f32 %v2017, 1e-05
        %v2026 = vrsqrt.pop %v2022
        %v2027 = vrsqrt.pop %v2023
        %v2028 = vrsqrt.pop %v2024
        %v2029 = vrsqrt.pop %v2025
        %v2030 = vmul.f32 %v2018, %v2026
        %v2031 = vmul.f32 %v2019, %v2027
        %v2032 = vmul.f32 %v2020, %v2028
        %v2033 = vmul.f32 %v2021, %v2029
        %v2034 = vlaneseq
        %v2035 = vshrl.u32 %v2034, 7
        %v2036 = vsub.s32 0, %v2035
        %v2037 = vrot.slane %v1190, %v2036
        %v2038 = vmul.f32 %v2030, %v2037
        %v2039 = vmul.f32 %v2031, %v2037
        %v2040 = vmul.f32 %v2032, %v2037
        %v2041 = vmul.f32 %v2033, %v2037
        %v2042 = vlaneseq
        %v2043 = vshrl.u32 %v2042, 7
        %v2044 = vsub.s32 0, %v2043
        %v2045 = vrot.slane %v1191, %v2044
        %v2046 = vadd.f32 %v2038, %v2045
        %v2047 = vadd.f32 %v2039, %v2045
        %v2048 = vadd.f32 %v2040, %v2045
        %v2049 = vadd.f32 %v2041, %v2045
        %vm2050 = vcmp.gt.f32.partialorder %v2046, 0.0
        %vm2051 = vcmp.gt.f32.partialorder %v2047, 0.0
        %vm2052 = vcmp.gt.f32.partialorder %v2048, 0.0
        %vm2053 = vcmp.gt.f32.partialorder %v2049, 0.0
        %v2054 = vmin.f32 %v2046, 0.0
        %v2055 = vmin.f32 %v2047, 0.0
        %v2056 = vmin.f32 %v2048, 0.0
        %v2057 = vmin.f32 %v2049, 0.0
        %v2058 = vmul.f32 %v2054, 1.442695
        %v2059 = vpow.pop %v2058
        %v2060 = vmul.f32 %v2055, 1.442695
        %v2061 = vpow.pop %v2060
        %v2062 = vmul.f32 %v2056, 1.442695
        %v2063 = vpow.pop %v2062
        %v2064 = vmul.f32 %v2057, 1.442695
        %v2065 = vpow.pop %v2064
        %v2066 = vsub.f32 %v2059, 1.0
        %v2067 = vsub.f32 %v2061, 1.0
        %v2068 = vsub.f32 %v2063, 1.0
        %v2069 = vsub.f32 %v2065, 1.0
        %v2070 = vsel %vm2050, %v2046, %v2066
        %v2071 = vsel %vm2051, %v2047, %v2067
        %v2072 = vsel %vm2052, %v2048, %v2068
        %v2073 = vsel %vm2053, %v2049, %v2069
        %v2074 = vld [vmem:[%s2 + $0x6] sm:$0x1]
        %v2075 = vld [vmem:[%s2 + $0x7] sm:$0x1]
        %v2076 = vld [vmem:[%s2 + $0x8] sm:$0x1]
        %v2077 = vld [vmem:[%s5] sm:$0xff]
        %v2078 = vld [vmem:[%s5 + $0x8] sm:$0xff]
        %v2079 = vld [vmem:[%s5 + $0x10] sm:$0xff]
        %v2080 = vld [vmem:[%s5 + $0x18] sm:$0xff]
        %v2081 = vld [vmem:[%s5 + $0x20] sm:$0xff]
        %v2082 = vld [vmem:[%s5 + $0x28] sm:$0xff]
        %v2083 = vld [vmem:[%s5 + $0x30] sm:$0xff]
        %v2084 = vld [vmem:[%s5 + $0x38] sm:$0xff]
        %v2085 = vld [vmem:[%s5 + $0x40] sm:$0xff]
        %v2086 = vld [vmem:[%s5 + $0x48] sm:$0xff]
        %v2087 = vld [vmem:[%s5 + $0x50] sm:$0xff]
        %v2088 = vld [vmem:[%s5 + $0x58] sm:$0xff]
        %v2089 = vld [vmem:[%s5 + $0x60] sm:$0xff]
        %v2090 = vld [vmem:[%s5 + $0x68] sm:$0xff]
        %v2091 = vld [vmem:[%s5 + $0x70] sm:$0xff]
        %v2092 = vld [vmem:[%s5 + $0x78] sm:$0xff]
        %v2093 = vlaneseq
        %v2094 = vshrl.u32 %v2093, 7
        %v2095 = vsub.s32 0, %v2094
        %v2096 = vrot.slane %v2074, %v2095
        %2097 = vmatprep.subr.mxu0 0.0
        %v2098 = vand.u32 %v2092, 4294901760
        %2099 = vmatpush1.msra.mxu0 %v2098
        %2100 = vmatprep.subr.mxu0 0.0
        %v2101 = vand.u32 %v2091, 4294901760
        %2102 = vmatpush1.msra.mxu0 %v2101
        %2103 = vmatprep.subr.mxu0 0.0
        %v2104 = vand.u32 %v2090, 4294901760
        %2105 = vmatpush1.msra.mxu0 %v2104
        %2106 = vmatprep.subr.mxu0 0.0
        %v2107 = vand.u32 %v2089, 4294901760
        %2108 = vmatpush1.msra.mxu0 %v2107
        %2109 = vmatprep.subr.mxu0 0.0
        %v2110 = vand.u32 %v2088, 4294901760
        %2111 = vmatpush1.msra.mxu0 %v2110
        %2112 = vmatprep.subr.mxu0 0.0
        %v2113 = vand.u32 %v2087, 4294901760
        %2114 = vmatpush1.msra.mxu0 %v2113
        %2115 = vmatprep.subr.mxu0 0.0
        %v2116 = vand.u32 %v2086, 4294901760
        %2117 = vmatpush1.msra.mxu0 %v2116
        %2118 = vmatprep.subr.mxu0 0.0
        %v2119 = vand.u32 %v2085, 4294901760
        %2120 = vmatpush1.msra.mxu0 %v2119
        %2121 = vmatprep.subr.mxu0 0.0
        %v2122 = vand.u32 %v2084, 4294901760
        %2123 = vmatpush1.msra.mxu0 %v2122
        %2124 = vmatprep.subr.mxu0 0.0
        %v2125 = vand.u32 %v2083, 4294901760
        %2126 = vmatpush1.msra.mxu0 %v2125
        %2127 = vmatprep.subr.mxu0 0.0
        %v2128 = vand.u32 %v2082, 4294901760
        %2129 = vmatpush1.msra.mxu0 %v2128
        %2130 = vmatprep.subr.mxu0 0.0
        %v2131 = vand.u32 %v2081, 4294901760
        %2132 = vmatpush1.msra.mxu0 %v2131
        %2133 = vmatprep.subr.mxu0 0.0
        %v2134 = vand.u32 %v2080, 4294901760
        %2135 = vmatpush1.msra.mxu0 %v2134
        %2136 = vmatprep.subr.mxu0 0.0
        %v2137 = vand.u32 %v2079, 4294901760
        %2138 = vmatpush1.msra.mxu0 %v2137
        %2139 = vmatprep.subr.mxu0 0.0
        %v2140 = vand.u32 %v2078, 4294901760
        %2141 = vmatpush1.msra.mxu0 %v2140
        %2142 = vmatprep.subr.mxu0 0.0
        %v2143 = vand.u32 %v2077, 4294901760
        %2144 = vmatpush1.msra.mxu0 %v2143
        %2145 = vmatprep.subr.mxu0 0.0
        %2146 = vmatpush2.msra.mxu0 0.0
        %2147 = vmatprep.subr.mxu0 0.0
        %2148 = vmatpush2.msra.mxu0 0.0
        %2149 = vmatprep.subr.mxu0 0.0
        %2150 = vmatpush2.msra.mxu0 0.0
        %2151 = vmatprep.subr.mxu0 0.0
        %2152 = vmatpush2.msra.mxu0 0.0
        %2153 = vmatprep.subr.mxu0 0.0
        %2154 = vmatpush2.msra.mxu0 0.0
        %2155 = vmatprep.subr.mxu0 0.0
        %2156 = vmatpush2.msra.mxu0 0.0
        %2157 = vmatprep.subr.mxu0 0.0
        %2158 = vmatpush2.msra.mxu0 0.0
        %2159 = vmatprep.subr.mxu0 0.0
        %2160 = vmatpush2.msra.mxu0 0.0
        %2161 = vmatprep.subr.mxu0 0.0
        %2162 = vmatpush2.msra.mxu0 0.0
        %2163 = vmatprep.subr.mxu0 0.0
        %2164 = vmatpush2.msra.mxu0 0.0
        %2165 = vmatprep.subr.mxu0 0.0
        %2166 = vmatpush2.msra.mxu0 0.0
        %2167 = vmatprep.subr.mxu0 0.0
        %2168 = vmatpush2.msra.mxu0 0.0
        %2169 = vmatprep.subr.mxu0 0.0
        %2170 = vmatpush2.msra.mxu0 0.0
        %2171 = vmatprep.subr.mxu0 0.0
        %2172 = vmatpush2.msra.mxu0 0.0
        %2173 = vmatprep.subr.mxu0 0.0
        %2174 = vmatpush2.msra.mxu0 0.0
        %2175 = vmatprep.subr.mxu0 0.0
        %2176 = vmatpush2.msra.mxu0 0.0
        %2177 = vmatprep.mubr.f32.mxu0 0.0
        %v2178 = vand.u32 %v2070, 4294901760
        %v2179 = vsub.f32 %v2070, %v2178
        %v2180 = vand.u32 %v2179, 4294901760
        %v2181 = vsub.f32 %v2179, %v2180
        %v2182 = vand.u32 %v2181, 4294901760
        %2183 = vmatmul.mubr.f32.gmra.mxu0 %v2182
        %v2184 = vpop.f32.mrf.mxu0
        %v2185 = vadd.f32 %v2096, %v2184
        %v2186 = vpop.f32.mrf.mxu0
        %2187 = vmatprep.mubr.f32.mxu0 0.0
        %v2188 = vand.u32 %v2071, 4294901760
        %v2189 = vsub.f32 %v2071, %v2188
        %v2190 = vand.u32 %v2189, 4294901760
        %v2191 = vsub.f32 %v2189, %v2190
        %v2192 = vand.u32 %v2191, 4294901760
        %2193 = vmatmul.mubr.f32.gmra.mxu0 %v2192
        %v2194 = vpop.f32.mrf.mxu0
        %v2195 = vadd.f32 %v2096, %v2194
        %v2196 = vpop.f32.mrf.mxu0
        %2197 = vmatprep.mubr.f32.mxu0 0.0
        %v2198 = vand.u32 %v2072, 4294901760
        %v2199 = vsub.f32 %v2072, %v2198
        %v2200 = vand.u32 %v2199, 4294901760
        %v2201 = vsub.f32 %v2199, %v2200
        %v2202 = vand.u32 %v2201, 4294901760
        %2203 = vmatmul.mubr.f32.gmra.mxu0 %v2202
        %v2204 = vpop.f32.mrf.mxu0
        %v2205 = vadd.f32 %v2096, %v2204
        %v2206 = vpop.f32.mrf.mxu0
        %2207 = vmatprep.mubr.f32.mxu0 0.0
        %v2208 = vand.u32 %v2073, 4294901760
        %v2209 = vsub.f32 %v2073, %v2208
        %v2210 = vand.u32 %v2209, 4294901760
        %v2211 = vsub.f32 %v2209, %v2210
        %v2212 = vand.u32 %v2211, 4294901760
        %2213 = vmatmul.mubr.f32.gmra.mxu0 %v2212
        %v2214 = vpop.f32.mrf.mxu0
        %v2215 = vadd.f32 %v2096, %v2214
        %v2216 = vpop.f32.mrf.mxu0
        %2217 = vdwg.mxu0
        %2218 = vmatprep.subr.mxu0 0.0
        %v2219 = vand.u32 %v2092, 4294901760
        %v2220 = vsub.f32 %v2092, %v2219
        %v2221 = vand.u32 %v2220, 4294901760
        %v2222 = vsub.f32 %v2220, %v2221
        %v2223 = vand.u32 %v2222, 4294901760
        %2224 = vmatpush1.msra.mxu0 %v2223
        %2225 = vmatprep.subr.mxu0 0.0
        %v2226 = vand.u32 %v2091, 4294901760
        %v2227 = vsub.f32 %v2091, %v2226
        %v2228 = vand.u32 %v2227, 4294901760
        %v2229 = vsub.f32 %v2227, %v2228
        %v2230 = vand.u32 %v2229, 4294901760
        %2231 = vmatpush1.msra.mxu0 %v2230
        %2232 = vmatprep.subr.mxu0 0.0
        %v2233 = vand.u32 %v2090, 4294901760
        %v2234 = vsub.f32 %v2090, %v2233
        %v2235 = vand.u32 %v2234, 4294901760
        %v2236 = vsub.f32 %v2234, %v2235
        %v2237 = vand.u32 %v2236, 4294901760
        %2238 = vmatpush1.msra.mxu0 %v2237
        %2239 = vmatprep.subr.mxu0 0.0
        %v2240 = vand.u32 %v2089, 4294901760
        %v2241 = vsub.f32 %v2089, %v2240
        %v2242 = vand.u32 %v2241, 4294901760
        %v2243 = vsub.f32 %v2241, %v2242
        %v2244 = vand.u32 %v2243, 4294901760
        %2245 = vmatpush1.msra.mxu0 %v2244
        %2246 = vmatprep.subr.mxu0 0.0
        %v2247 = vand.u32 %v2088, 4294901760
        %v2248 = vsub.f32 %v2088, %v2247
        %v2249 = vand.u32 %v2248, 4294901760
        %v2250 = vsub.f32 %v2248, %v2249
        %v2251 = vand.u32 %v2250, 4294901760
        %2252 = vmatpush1.msra.mxu0 %v2251
        %2253 = vmatprep.subr.mxu0 0.0
        %v2254 = vand.u32 %v2087, 4294901760
        %v2255 = vsub.f32 %v2087, %v2254
        %v2256 = vand.u32 %v2255, 4294901760
        %v2257 = vsub.f32 %v2255, %v2256
        %v2258 = vand.u32 %v2257, 4294901760
        %2259 = vmatpush1.msra.mxu0 %v2258
        %2260 = vmatprep.subr.mxu0 0.0
        %v2261 = vand.u32 %v2086, 4294901760
        %v2262 = vsub.f32 %v2086, %v2261
        %v2263 = vand.u32 %v2262, 4294901760
        %v2264 = vsub.f32 %v2262, %v2263
        %v2265 = vand.u32 %v2264, 4294901760
        %2266 = vmatpush1.msra.mxu0 %v2265
        %2267 = vmatprep.subr.mxu0 0.0
        %v2268 = vand.u32 %v2085, 4294901760
        %v2269 = vsub.f32 %v2085, %v2268
        %v2270 = vand.u32 %v2269, 4294901760
        %v2271 = vsub.f32 %v2269, %v2270
        %v2272 = vand.u32 %v2271, 4294901760
        %2273 = vmatpush1.msra.mxu0 %v2272
        %2274 = vmatprep.subr.mxu0 0.0
        %v2275 = vand.u32 %v2084, 4294901760
        %v2276 = vsub.f32 %v2084, %v2275
        %v2277 = vand.u32 %v2276, 4294901760
        %v2278 = vsub.f32 %v2276, %v2277
        %v2279 = vand.u32 %v2278, 4294901760
        %2280 = vmatpush1.msra.mxu0 %v2279
        %2281 = vmatprep.subr.mxu0 0.0
        %v2282 = vand.u32 %v2083, 4294901760
        %v2283 = vsub.f32 %v2083, %v2282
        %v2284 = vand.u32 %v2283, 4294901760
        %v2285 = vsub.f32 %v2283, %v2284
        %v2286 = vand.u32 %v2285, 4294901760
        %2287 = vmatpush1.msra.mxu0 %v2286
        %2288 = vmatprep.subr.mxu0 0.0
        %v2289 = vand.u32 %v2082, 4294901760
        %v2290 = vsub.f32 %v2082, %v2289
        %v2291 = vand.u32 %v2290, 4294901760
        %v2292 = vsub.f32 %v2290, %v2291
        %v2293 = vand.u32 %v2292, 4294901760
        %2294 = vmatpush1.msra.mxu0 %v2293
        %2295 = vmatprep.subr.mxu0 0.0
        %v2296 = vand.u32 %v2081, 4294901760
        %v2297 = vsub.f32 %v2081, %v2296
        %v2298 = vand.u32 %v2297, 4294901760
        %v2299 = vsub.f32 %v2297, %v2298
        %v2300 = vand.u32 %v2299, 4294901760
        %2301 = vmatpush1.msra.mxu0 %v2300
        %2302 = vmatprep.subr.mxu0 0.0
        %v2303 = vand.u32 %v2080, 4294901760
        %v2304 = vsub.f32 %v2080, %v2303
        %v2305 = vand.u32 %v2304, 4294901760
        %v2306 = vsub.f32 %v2304, %v2305
        %v2307 = vand.u32 %v2306, 4294901760
        %2308 = vmatpush1.msra.mxu0 %v2307
        %2309 = vmatprep.subr.mxu0 0.0
        %v2310 = vand.u32 %v2079, 4294901760
        %v2311 = vsub.f32 %v2079, %v2310
        %v2312 = vand.u32 %v2311, 4294901760
        %v2313 = vsub.f32 %v2311, %v2312
        %v2314 = vand.u32 %v2313, 4294901760
        %2315 = vmatpush1.msra.mxu0 %v2314
        %2316 = vmatprep.subr.mxu0 0.0
        %v2317 = vand.u32 %v2078, 4294901760
        %v2318 = vsub.f32 %v2078, %v2317
        %v2319 = vand.u32 %v2318, 4294901760
        %v2320 = vsub.f32 %v2318, %v2319
        %v2321 = vand.u32 %v2320, 4294901760
        %2322 = vmatpush1.msra.mxu0 %v2321
        %2323 = vmatprep.subr.mxu0 0.0
        %v2324 = vand.u32 %v2077, 4294901760
        %v2325 = vsub.f32 %v2077, %v2324
        %v2326 = vand.u32 %v2325, 4294901760
        %v2327 = vsub.f32 %v2325, %v2326
        %v2328 = vand.u32 %v2327, 4294901760
        %2329 = vmatpush1.msra.mxu0 %v2328
        %2330 = vmatprep.subr.mxu0 0.0
        %2331 = vmatpush2.msra.mxu0 0.0
        %2332 = vmatprep.subr.mxu0 0.0
        %2333 = vmatpush2.msra.mxu0 0.0
        %2334 = vmatprep.subr.mxu0 0.0
        %2335 = vmatpush2.msra.mxu0 0.0
        %2336 = vmatprep.subr.mxu0 0.0
        %2337 = vmatpush2.msra.mxu0 0.0
        %2338 = vmatprep.subr.mxu0 0.0
        %2339 = vmatpush2.msra.mxu0 0.0
        %2340 = vmatprep.subr.mxu0 0.0
        %2341 = vmatpush2.msra.mxu0 0.0
        %2342 = vmatprep.subr.mxu0 0.0
        %2343 = vmatpush2.msra.mxu0 0.0
        %2344 = vmatprep.subr.mxu0 0.0
        %2345 = vmatpush2.msra.mxu0 0.0
        %2346 = vmatprep.subr.mxu0 0.0
        %2347 = vmatpush2.msra.mxu0 0.0
        %2348 = vmatprep.subr.mxu0 0.0
        %2349 = vmatpush2.msra.mxu0 0.0
        %2350 = vmatprep.subr.mxu0 0.0
        %2351 = vmatpush2.msra.mxu0 0.0
        %2352 = vmatprep.subr.mxu0 0.0
        %2353 = vmatpush2.msra.mxu0 0.0
        %2354 = vmatprep.subr.mxu0 0.0
        %2355 = vmatpush2.msra.mxu0 0.0
        %2356 = vmatprep.subr.mxu0 0.0
        %2357 = vmatpush2.msra.mxu0 0.0
        %2358 = vmatprep.subr.mxu0 0.0
        %2359 = vmatpush2.msra.mxu0 0.0
        %2360 = vmatprep.subr.mxu0 0.0
        %2361 = vmatpush2.msra.mxu0 0.0
        %2362 = vmatprep.mubr.f32.mxu0 0.0
        %v2363 = vand.u32 %v2070, 4294901760
        %2364 = vmatmul.mubr.f32.gmra.mxu0 %v2363
        %v2365 = vpop.f32.mrf.mxu0
        %v2366 = vadd.f32 %v2185, %v2365
        %v2367 = vpop.f32.mrf.mxu0
        %2368 = vmatprep.mubr.f32.mxu0 0.0
        %v2369 = vand.u32 %v2071, 4294901760
        %2370 = vmatmul.mubr.f32.gmra.mxu0 %v2369
        %v2371 = vpop.f32.mrf.mxu0
        %v2372 = vadd.f32 %v2195, %v2371
        %v2373 = vpop.f32.mrf.mxu0
        %2374 = vmatprep.mubr.f32.mxu0 0.0
        %v2375 = vand.u32 %v2072, 4294901760
        %2376 = vmatmul.mubr.f32.gmra.mxu0 %v2375
        %v2377 = vpop.f32.mrf.mxu0
        %v2378 = vadd.f32 %v2205, %v2377
        %v2379 = vpop.f32.mrf.mxu0
        %2380 = vmatprep.mubr.f32.mxu0 0.0
        %v2381 = vand.u32 %v2073, 4294901760
        %2382 = vmatmul.mubr.f32.gmra.mxu0 %v2381
        %v2383 = vpop.f32.mrf.mxu0
        %v2384 = vadd.f32 %v2215, %v2383
        %v2385 = vpop.f32.mrf.mxu0
        %2386 = vdwg.mxu0
        %2387 = vmatprep.subr.mxu0 0.0
        %v2388 = vand.u32 %v2092, 4294901760
        %v2389 = vsub.f32 %v2092, %v2388
        %2390 = vmatpush1.msra.mxu0 %v2389
        %2391 = vmatprep.subr.mxu0 0.0
        %v2392 = vand.u32 %v2091, 4294901760
        %v2393 = vsub.f32 %v2091, %v2392
        %2394 = vmatpush1.msra.mxu0 %v2393
        %2395 = vmatprep.subr.mxu0 0.0
        %v2396 = vand.u32 %v2090, 4294901760
        %v2397 = vsub.f32 %v2090, %v2396
        %2398 = vmatpush1.msra.mxu0 %v2397
        %2399 = vmatprep.subr.mxu0 0.0
        %v2400 = vand.u32 %v2089, 4294901760
        %v2401 = vsub.f32 %v2089, %v2400
        %2402 = vmatpush1.msra.mxu0 %v2401
        %2403 = vmatprep.subr.mxu0 0.0
        %v2404 = vand.u32 %v2088, 4294901760
        %v2405 = vsub.f32 %v2088, %v2404
        %2406 = vmatpush1.msra.mxu0 %v2405
        %2407 = vmatprep.subr.mxu0 0.0
        %v2408 = vand.u32 %v2087, 4294901760
        %v2409 = vsub.f32 %v2087, %v2408
        %2410 = vmatpush1.msra.mxu0 %v2409
        %2411 = vmatprep.subr.mxu0 0.0
        %v2412 = vand.u32 %v2086, 4294901760
        %v2413 = vsub.f32 %v2086, %v2412
        %2414 = vmatpush1.msra.mxu0 %v2413
        %2415 = vmatprep.subr.mxu0 0.0
        %v2416 = vand.u32 %v2085, 4294901760
        %v2417 = vsub.f32 %v2085, %v2416
        %2418 = vmatpush1.msra.mxu0 %v2417
        %2419 = vmatprep.subr.mxu0 0.0
        %v2420 = vand.u32 %v2084, 4294901760
        %v2421 = vsub.f32 %v2084, %v2420
        %2422 = vmatpush1.msra.mxu0 %v2421
        %2423 = vmatprep.subr.mxu0 0.0
        %v2424 = vand.u32 %v2083, 4294901760
        %v2425 = vsub.f32 %v2083, %v2424
        %2426 = vmatpush1.msra.mxu0 %v2425
        %2427 = vmatprep.subr.mxu0 0.0
        %v2428 = vand.u32 %v2082, 4294901760
        %v2429 = vsub.f32 %v2082, %v2428
        %2430 = vmatpush1.msra.mxu0 %v2429
        %2431 = vmatprep.subr.mxu0 0.0
        %v2432 = vand.u32 %v2081, 4294901760
        %v2433 = vsub.f32 %v2081, %v2432
        %2434 = vmatpush1.msra.mxu0 %v2433
        %2435 = vmatprep.subr.mxu0 0.0
        %v2436 = vand.u32 %v2080, 4294901760
        %v2437 = vsub.f32 %v2080, %v2436
        %2438 = vmatpush1.msra.mxu0 %v2437
        %2439 = vmatprep.subr.mxu0 0.0
        %v2440 = vand.u32 %v2079, 4294901760
        %v2441 = vsub.f32 %v2079, %v2440
        %2442 = vmatpush1.msra.mxu0 %v2441
        %2443 = vmatprep.subr.mxu0 0.0
        %v2444 = vand.u32 %v2078, 4294901760
        %v2445 = vsub.f32 %v2078, %v2444
        %2446 = vmatpush1.msra.mxu0 %v2445
        %2447 = vmatprep.subr.mxu0 0.0
        %v2448 = vand.u32 %v2077, 4294901760
        %v2449 = vsub.f32 %v2077, %v2448
        %2450 = vmatpush1.msra.mxu0 %v2449
        %2451 = vmatprep.subr.mxu0 0.0
        %2452 = vmatpush2.msra.mxu0 0.0
        %2453 = vmatprep.subr.mxu0 0.0
        %2454 = vmatpush2.msra.mxu0 0.0
        %2455 = vmatprep.subr.mxu0 0.0
        %2456 = vmatpush2.msra.mxu0 0.0
        %2457 = vmatprep.subr.mxu0 0.0
        %2458 = vmatpush2.msra.mxu0 0.0
        %2459 = vmatprep.subr.mxu0 0.0
        %2460 = vmatpush2.msra.mxu0 0.0
        %2461 = vmatprep.subr.mxu0 0.0
        %2462 = vmatpush2.msra.mxu0 0.0
        %2463 = vmatprep.subr.mxu0 0.0
        %2464 = vmatpush2.msra.mxu0 0.0
        %2465 = vmatprep.subr.mxu0 0.0
        %2466 = vmatpush2.msra.mxu0 0.0
        %2467 = vmatprep.subr.mxu0 0.0
        %2468 = vmatpush2.msra.mxu0 0.0
        %2469 = vmatprep.subr.mxu0 0.0
        %2470 = vmatpush2.msra.mxu0 0.0
        %2471 = vmatprep.subr.mxu0 0.0
        %2472 = vmatpush2.msra.mxu0 0.0
        %2473 = vmatprep.subr.mxu0 0.0
        %2474 = vmatpush2.msra.mxu0 0.0
        %2475 = vmatprep.subr.mxu0 0.0
        %2476 = vmatpush2.msra.mxu0 0.0
        %2477 = vmatprep.subr.mxu0 0.0
        %2478 = vmatpush2.msra.mxu0 0.0
        %2479 = vmatprep.subr.mxu0 0.0
        %2480 = vmatpush2.msra.mxu0 0.0
        %2481 = vmatprep.subr.mxu0 0.0
        %2482 = vmatpush2.msra.mxu0 0.0
        %2483 = vmatprep.mubr.f32.mxu0 0.0
        %v2484 = vand.u32 %v2070, 4294901760
        %v2485 = vsub.f32 %v2070, %v2484
        %2486 = vmatmul.mubr.f32.gmra.mxu0 %v2485
        %v2487 = vpop.f32.mrf.mxu0
        %v2488 = vadd.f32 %v2366, %v2487
        %v2489 = vpop.f32.mrf.mxu0
        %2490 = vmatprep.mubr.f32.mxu0 0.0
        %v2491 = vand.u32 %v2071, 4294901760
        %v2492 = vsub.f32 %v2071, %v2491
        %2493 = vmatmul.mubr.f32.gmra.mxu0 %v2492
        %v2494 = vpop.f32.mrf.mxu0
        %v2495 = vadd.f32 %v2372, %v2494
        %v2496 = vpop.f32.mrf.mxu0
        %2497 = vmatprep.mubr.f32.mxu0 0.0
        %v2498 = vand.u32 %v2072, 4294901760
        %v2499 = vsub.f32 %v2072, %v2498
        %2500 = vmatmul.mubr.f32.gmra.mxu0 %v2499
        %v2501 = vpop.f32.mrf.mxu0
        %v2502 = vadd.f32 %v2378, %v2501
        %v2503 = vpop.f32.mrf.mxu0
        %2504 = vmatprep.mubr.f32.mxu0 0.0
        %v2505 = vand.u32 %v2073, 4294901760
        %v2506 = vsub.f32 %v2073, %v2505
        %2507 = vmatmul.mubr.f32.gmra.mxu0 %v2506
        %v2508 = vpop.f32.mrf.mxu0
        %v2509 = vadd.f32 %v2384, %v2508
        %v2510 = vpop.f32.mrf.mxu0
        %2511 = vdwg.mxu0
        %2512 = vmatprep.subr.mxu0 0.0
        %v2513 = vand.u32 %v2092, 4294901760
        %2514 = vmatpush1.msra.mxu0 %v2513
        %2515 = vmatprep.subr.mxu0 0.0
        %v2516 = vand.u32 %v2091, 4294901760
        %2517 = vmatpush1.msra.mxu0 %v2516
        %2518 = vmatprep.subr.mxu0 0.0
        %v2519 = vand.u32 %v2090, 4294901760
        %2520 = vmatpush1.msra.mxu0 %v2519
        %2521 = vmatprep.subr.mxu0 0.0
        %v2522 = vand.u32 %v2089, 4294901760
        %2523 = vmatpush1.msra.mxu0 %v2522
        %2524 = vmatprep.subr.mxu0 0.0
        %v2525 = vand.u32 %v2088, 4294901760
        %2526 = vmatpush1.msra.mxu0 %v2525
        %2527 = vmatprep.subr.mxu0 0.0
        %v2528 = vand.u32 %v2087, 4294901760
        %2529 = vmatpush1.msra.mxu0 %v2528
        %2530 = vmatprep.subr.mxu0 0.0
        %v2531 = vand.u32 %v2086, 4294901760
        %2532 = vmatpush1.msra.mxu0 %v2531
        %2533 = vmatprep.subr.mxu0 0.0
        %v2534 = vand.u32 %v2085, 4294901760
        %2535 = vmatpush1.msra.mxu0 %v2534
        %2536 = vmatprep.subr.mxu0 0.0
        %v2537 = vand.u32 %v2084, 4294901760
        %2538 = vmatpush1.msra.mxu0 %v2537
        %2539 = vmatprep.subr.mxu0 0.0
        %v2540 = vand.u32 %v2083, 4294901760
        %2541 = vmatpush1.msra.mxu0 %v2540
        %2542 = vmatprep.subr.mxu0 0.0
        %v2543 = vand.u32 %v2082, 4294901760
        %2544 = vmatpush1.msra.mxu0 %v2543
        %2545 = vmatprep.subr.mxu0 0.0
        %v2546 = vand.u32 %v2081, 4294901760
        %2547 = vmatpush1.msra.mxu0 %v2546
        %2548 = vmatprep.subr.mxu0 0.0
        %v2549 = vand.u32 %v2080, 4294901760
        %2550 = vmatpush1.msra.mxu0 %v2549
        %2551 = vmatprep.subr.mxu0 0.0
        %v2552 = vand.u32 %v2079, 4294901760
        %2553 = vmatpush1.msra.mxu0 %v2552
        %2554 = vmatprep.subr.mxu0 0.0
        %v2555 = vand.u32 %v2078, 4294901760
        %2556 = vmatpush1.msra.mxu0 %v2555
        %2557 = vmatprep.subr.mxu0 0.0
        %v2558 = vand.u32 %v2077, 4294901760
        %2559 = vmatpush1.msra.mxu0 %v2558
        %2560 = vmatprep.subr.mxu0 0.0
        %2561 = vmatpush2.msra.mxu0 0.0
        %2562 = vmatprep.subr.mxu0 0.0
        %2563 = vmatpush2.msra.mxu0 0.0
        %2564 = vmatprep.subr.mxu0 0.0
        %2565 = vmatpush2.msra.mxu0 0.0
        %2566 = vmatprep.subr.mxu0 0.0
        %2567 = vmatpush2.msra.mxu0 0.0
        %2568 = vmatprep.subr.mxu0 0.0
        %2569 = vmatpush2.msra.mxu0 0.0
        %2570 = vmatprep.subr.mxu0 0.0
        %2571 = vmatpush2.msra.mxu0 0.0
        %2572 = vmatprep.subr.mxu0 0.0
        %2573 = vmatpush2.msra.mxu0 0.0
        %2574 = vmatprep.subr.mxu0 0.0
        %2575 = vmatpush2.msra.mxu0 0.0
        %2576 = vmatprep.subr.mxu0 0.0
        %2577 = vmatpush2.msra.mxu0 0.0
        %2578 = vmatprep.subr.mxu0 0.0
        %2579 = vmatpush2.msra.mxu0 0.0
        %2580 = vmatprep.subr.mxu0 0.0
        %2581 = vmatpush2.msra.mxu0 0.0
        %2582 = vmatprep.subr.mxu0 0.0
        %2583 = vmatpush2.msra.mxu0 0.0
        %2584 = vmatprep.subr.mxu0 0.0
        %2585 = vmatpush2.msra.mxu0 0.0
        %2586 = vmatprep.subr.mxu0 0.0
        %2587 = vmatpush2.msra.mxu0 0.0
        %2588 = vmatprep.subr.mxu0 0.0
        %2589 = vmatpush2.msra.mxu0 0.0
        %2590 = vmatprep.subr.mxu0 0.0
        %2591 = vmatpush2.msra.mxu0 0.0
        %2592 = vmatprep.mubr.f32.mxu0 0.0
        %v2593 = vand.u32 %v2070, 4294901760
        %v2594 = vsub.f32 %v2070, %v2593
        %v2595 = vand.u32 %v2594, 4294901760
        %2596 = vmatmul.mubr.f32.gmra.mxu0 %v2595
        %v2597 = vpop.f32.mrf.mxu0
        %v2598 = vadd.f32 %v2488, %v2597
        %v2599 = vpop.f32.mrf.mxu0
        %2600 = vmatprep.mubr.f32.mxu0 0.0
        %v2601 = vand.u32 %v2071, 4294901760
        %v2602 = vsub.f32 %v2071, %v2601
        %v2603 = vand.u32 %v2602, 4294901760
        %2604 = vmatmul.mubr.f32.gmra.mxu0 %v2603
        %v2605 = vpop.f32.mrf.mxu0
        %v2606 = vadd.f32 %v2495, %v2605
        %v2607 = vpop.f32.mrf.mxu0
        %2608 = vmatprep.mubr.f32.mxu0 0.0
        %v2609 = vand.u32 %v2072, 4294901760
        %v2610 = vsub.f32 %v2072, %v2609
        %v2611 = vand.u32 %v2610, 4294901760
        %2612 = vmatmul.mubr.f32.gmra.mxu0 %v2611
        %v2613 = vpop.f32.mrf.mxu0
        %v2614 = vadd.f32 %v2502, %v2613
        %v2615 = vpop.f32.mrf.mxu0
        %2616 = vmatprep.mubr.f32.mxu0 0.0
        %v2617 = vand.u32 %v2073, 4294901760
        %v2618 = vsub.f32 %v2073, %v2617
        %v2619 = vand.u32 %v2618, 4294901760
        %2620 = vmatmul.mubr.f32.gmra.mxu0 %v2619
        %v2621 = vpop.f32.mrf.mxu0
        %v2622 = vadd.f32 %v2509, %v2621
        %v2623 = vpop.f32.mrf.mxu0
        %2624 = vdwg.mxu0
        %2625 = vmatprep.subr.mxu0 0.0
        %v2626 = vand.u32 %v2092, 4294901760
        %v2627 = vsub.f32 %v2092, %v2626
        %v2628 = vand.u32 %v2627, 4294901760
        %2629 = vmatpush1.msra.mxu0 %v2628
        %2630 = vmatprep.subr.mxu0 0.0
        %v2631 = vand.u32 %v2091, 4294901760
        %v2632 = vsub.f32 %v2091, %v2631
        %v2633 = vand.u32 %v2632, 4294901760
        %2634 = vmatpush1.msra.mxu0 %v2633
        %2635 = vmatprep.subr.mxu0 0.0
        %v2636 = vand.u32 %v2090, 4294901760
        %v2637 = vsub.f32 %v2090, %v2636
        %v2638 = vand.u32 %v2637, 4294901760
        %2639 = vmatpush1.msra.mxu0 %v2638
        %2640 = vmatprep.subr.mxu0 0.0
        %v2641 = vand.u32 %v2089, 4294901760
        %v2642 = vsub.f32 %v2089, %v2641
        %v2643 = vand.u32 %v2642, 4294901760
        %2644 = vmatpush1.msra.mxu0 %v2643
        %2645 = vmatprep.subr.mxu0 0.0
        %v2646 = vand.u32 %v2088, 4294901760
        %v2647 = vsub.f32 %v2088, %v2646
        %v2648 = vand.u32 %v2647, 4294901760
        %2649 = vmatpush1.msra.mxu0 %v2648
        %2650 = vmatprep.subr.mxu0 0.0
        %v2651 = vand.u32 %v2087, 4294901760
        %v2652 = vsub.f32 %v2087, %v2651
        %v2653 = vand.u32 %v2652, 4294901760
        %2654 = vmatpush1.msra.mxu0 %v2653
        %2655 = vmatprep.subr.mxu0 0.0
        %v2656 = vand.u32 %v2086, 4294901760
        %v2657 = vsub.f32 %v2086, %v2656
        %v2658 = vand.u32 %v2657, 4294901760
        %2659 = vmatpush1.msra.mxu0 %v2658
        %2660 = vmatprep.subr.mxu0 0.0
        %v2661 = vand.u32 %v2085, 4294901760
        %v2662 = vsub.f32 %v2085, %v2661
        %v2663 = vand.u32 %v2662, 4294901760
        %2664 = vmatpush1.msra.mxu0 %v2663
        %2665 = vmatprep.subr.mxu0 0.0
        %v2666 = vand.u32 %v2084, 4294901760
        %v2667 = vsub.f32 %v2084, %v2666
        %v2668 = vand.u32 %v2667, 4294901760
        %2669 = vmatpush1.msra.mxu0 %v2668
        %2670 = vmatprep.subr.mxu0 0.0
        %v2671 = vand.u32 %v2083, 4294901760
        %v2672 = vsub.f32 %v2083, %v2671
        %v2673 = vand.u32 %v2672, 4294901760
        %2674 = vmatpush1.msra.mxu0 %v2673
        %2675 = vmatprep.subr.mxu0 0.0
        %v2676 = vand.u32 %v2082, 4294901760
        %v2677 = vsub.f32 %v2082, %v2676
        %v2678 = vand.u32 %v2677, 4294901760
        %2679 = vmatpush1.msra.mxu0 %v2678
        %2680 = vmatprep.subr.mxu0 0.0
        %v2681 = vand.u32 %v2081, 4294901760
        %v2682 = vsub.f32 %v2081, %v2681
        %v2683 = vand.u32 %v2682, 4294901760
        %2684 = vmatpush1.msra.mxu0 %v2683
        %2685 = vmatprep.subr.mxu0 0.0
        %v2686 = vand.u32 %v2080, 4294901760
        %v2687 = vsub.f32 %v2080, %v2686
        %v2688 = vand.u32 %v2687, 4294901760
        %2689 = vmatpush1.msra.mxu0 %v2688
        %2690 = vmatprep.subr.mxu0 0.0
        %v2691 = vand.u32 %v2079, 4294901760
        %v2692 = vsub.f32 %v2079, %v2691
        %v2693 = vand.u32 %v2692, 4294901760
        %2694 = vmatpush1.msra.mxu0 %v2693
        %2695 = vmatprep.subr.mxu0 0.0
        %v2696 = vand.u32 %v2078, 4294901760
        %v2697 = vsub.f32 %v2078, %v2696
        %v2698 = vand.u32 %v2697, 4294901760
        %2699 = vmatpush1.msra.mxu0 %v2698
        %2700 = vmatprep.subr.mxu0 0.0
        %v2701 = vand.u32 %v2077, 4294901760
        %v2702 = vsub.f32 %v2077, %v2701
        %v2703 = vand.u32 %v2702, 4294901760
        %2704 = vmatpush1.msra.mxu0 %v2703
        %2705 = vmatprep.subr.mxu0 0.0
        %2706 = vmatpush2.msra.mxu0 0.0
        %2707 = vmatprep.subr.mxu0 0.0
        %2708 = vmatpush2.msra.mxu0 0.0
        %2709 = vmatprep.subr.mxu0 0.0
        %2710 = vmatpush2.msra.mxu0 0.0
        %2711 = vmatprep.subr.mxu0 0.0
        %2712 = vmatpush2.msra.mxu0 0.0
        %2713 = vmatprep.subr.mxu0 0.0
        %2714 = vmatpush2.msra.mxu0 0.0
        %2715 = vmatprep.subr.mxu0 0.0
        %2716 = vmatpush2.msra.mxu0 0.0
        %2717 = vmatprep.subr.mxu0 0.0
        %2718 = vmatpush2.msra.mxu0 0.0
        %2719 = vmatprep.subr.mxu0 0.0
        %2720 = vmatpush2.msra.mxu0 0.0
        %2721 = vmatprep.subr.mxu0 0.0
        %2722 = vmatpush2.msra.mxu0 0.0
        %2723 = vmatprep.subr.mxu0 0.0
        %2724 = vmatpush2.msra.mxu0 0.0
        %2725 = vmatprep.subr.mxu0 0.0
        %2726 = vmatpush2.msra.mxu0 0.0
        %2727 = vmatprep.subr.mxu0 0.0
        %2728 = vmatpush2.msra.mxu0 0.0
        %2729 = vmatprep.subr.mxu0 0.0
        %2730 = vmatpush2.msra.mxu0 0.0
        %2731 = vmatprep.subr.mxu0 0.0
        %2732 = vmatpush2.msra.mxu0 0.0
        %2733 = vmatprep.subr.mxu0 0.0
        %2734 = vmatpush2.msra.mxu0 0.0
        %2735 = vmatprep.subr.mxu0 0.0
        %2736 = vmatpush2.msra.mxu0 0.0
        %2737 = vmatprep.mubr.f32.mxu0 0.0
        %v2738 = vand.u32 %v2070, 4294901760
        %2739 = vmatmul.mubr.f32.gmra.mxu0 %v2738
        %v2740 = vpop.f32.mrf.mxu0
        %v2741 = vadd.f32 %v2598, %v2740
        %v2742 = vpop.f32.mrf.mxu0
        %2743 = vmatprep.mubr.f32.mxu0 0.0
        %v2744 = vand.u32 %v2071, 4294901760
        %2745 = vmatmul.mubr.f32.gmra.mxu0 %v2744
        %v2746 = vpop.f32.mrf.mxu0
        %v2747 = vadd.f32 %v2606, %v2746
        %v2748 = vpop.f32.mrf.mxu0
        %2749 = vmatprep.mubr.f32.mxu0 0.0
        %v2750 = vand.u32 %v2072, 4294901760
        %2751 = vmatmul.mubr.f32.gmra.mxu0 %v2750
        %v2752 = vpop.f32.mrf.mxu0
        %v2753 = vadd.f32 %v2614, %v2752
        %v2754 = vpop.f32.mrf.mxu0
        %2755 = vmatprep.mubr.f32.mxu0 0.0
        %v2756 = vand.u32 %v2073, 4294901760
        %2757 = vmatmul.mubr.f32.gmra.mxu0 %v2756
        %v2758 = vpop.f32.mrf.mxu0
        %v2759 = vadd.f32 %v2622, %v2758
        %v2760 = vpop.f32.mrf.mxu0
        %2761 = vdwg.mxu0
        %2762 = vmatprep.subr.mxu0 0.0
        %v2763 = vand.u32 %v2092, 4294901760
        %2764 = vmatpush1.msra.mxu0 %v2763
        %2765 = vmatprep.subr.mxu0 0.0
        %v2766 = vand.u32 %v2091, 4294901760
        %2767 = vmatpush1.msra.mxu0 %v2766
        %2768 = vmatprep.subr.mxu0 0.0
        %v2769 = vand.u32 %v2090, 4294901760
        %2770 = vmatpush1.msra.mxu0 %v2769
        %2771 = vmatprep.subr.mxu0 0.0
        %v2772 = vand.u32 %v2089, 4294901760
        %2773 = vmatpush1.msra.mxu0 %v2772
        %2774 = vmatprep.subr.mxu0 0.0
        %v2775 = vand.u32 %v2088, 4294901760
        %2776 = vmatpush1.msra.mxu0 %v2775
        %2777 = vmatprep.subr.mxu0 0.0
        %v2778 = vand.u32 %v2087, 4294901760
        %2779 = vmatpush1.msra.mxu0 %v2778
        %2780 = vmatprep.subr.mxu0 0.0
        %v2781 = vand.u32 %v2086, 4294901760
        %2782 = vmatpush1.msra.mxu0 %v2781
        %2783 = vmatprep.subr.mxu0 0.0
        %v2784 = vand.u32 %v2085, 4294901760
        %2785 = vmatpush1.msra.mxu0 %v2784
        %2786 = vmatprep.subr.mxu0 0.0
        %v2787 = vand.u32 %v2084, 4294901760
        %2788 = vmatpush1.msra.mxu0 %v2787
        %2789 = vmatprep.subr.mxu0 0.0
        %v2790 = vand.u32 %v2083, 4294901760
        %2791 = vmatpush1.msra.mxu0 %v2790
        %2792 = vmatprep.subr.mxu0 0.0
        %v2793 = vand.u32 %v2082, 4294901760
        %2794 = vmatpush1.msra.mxu0 %v2793
        %2795 = vmatprep.subr.mxu0 0.0
        %v2796 = vand.u32 %v2081, 4294901760
        %2797 = vmatpush1.msra.mxu0 %v2796
        %2798 = vmatprep.subr.mxu0 0.0
        %v2799 = vand.u32 %v2080, 4294901760
        %2800 = vmatpush1.msra.mxu0 %v2799
        %2801 = vmatprep.subr.mxu0 0.0
        %v2802 = vand.u32 %v2079, 4294901760
        %2803 = vmatpush1.msra.mxu0 %v2802
        %2804 = vmatprep.subr.mxu0 0.0
        %v2805 = vand.u32 %v2078, 4294901760
        %2806 = vmatpush1.msra.mxu0 %v2805
        %2807 = vmatprep.subr.mxu0 0.0
        %v2808 = vand.u32 %v2077, 4294901760
        %2809 = vmatpush1.msra.mxu0 %v2808
        %2810 = vmatprep.subr.mxu0 0.0
        %2811 = vmatpush2.msra.mxu0 0.0
        %2812 = vmatprep.subr.mxu0 0.0
        %2813 = vmatpush2.msra.mxu0 0.0
        %2814 = vmatprep.subr.mxu0 0.0
        %2815 = vmatpush2.msra.mxu0 0.0
        %2816 = vmatprep.subr.mxu0 0.0
        %2817 = vmatpush2.msra.mxu0 0.0
        %2818 = vmatprep.subr.mxu0 0.0
        %2819 = vmatpush2.msra.mxu0 0.0
        %2820 = vmatprep.subr.mxu0 0.0
        %2821 = vmatpush2.msra.mxu0 0.0
        %2822 = vmatprep.subr.mxu0 0.0
        %2823 = vmatpush2.msra.mxu0 0.0
        %2824 = vmatprep.subr.mxu0 0.0
        %2825 = vmatpush2.msra.mxu0 0.0
        %2826 = vmatprep.subr.mxu0 0.0
        %2827 = vmatpush2.msra.mxu0 0.0
        %2828 = vmatprep.subr.mxu0 0.0
        %2829 = vmatpush2.msra.mxu0 0.0
        %2830 = vmatprep.subr.mxu0 0.0
        %2831 = vmatpush2.msra.mxu0 0.0
        %2832 = vmatprep.subr.mxu0 0.0
        %2833 = vmatpush2.msra.mxu0 0.0
        %2834 = vmatprep.subr.mxu0 0.0
        %2835 = vmatpush2.msra.mxu0 0.0
        %2836 = vmatprep.subr.mxu0 0.0
        %2837 = vmatpush2.msra.mxu0 0.0
        %2838 = vmatprep.subr.mxu0 0.0
        %2839 = vmatpush2.msra.mxu0 0.0
        %2840 = vmatprep.subr.mxu0 0.0
        %2841 = vmatpush2.msra.mxu0 0.0
        %2842 = vmatprep.mubr.f32.mxu0 0.0
        %v2843 = vand.u32 %v2070, 4294901760
        %2844 = vmatmul.mubr.f32.gmra.mxu0 %v2843
        %v2845 = vpop.f32.mrf.mxu0
        %v2846 = vadd.f32 %v2741, %v2845
        %v2847 = vpop.f32.mrf.mxu0
        %2848 = vmatprep.mubr.f32.mxu0 0.0
        %v2849 = vand.u32 %v2071, 4294901760
        %2850 = vmatmul.mubr.f32.gmra.mxu0 %v2849
        %v2851 = vpop.f32.mrf.mxu0
        %v2852 = vadd.f32 %v2747, %v2851
        %v2853 = vpop.f32.mrf.mxu0
        %2854 = vmatprep.mubr.f32.mxu0 0.0
        %v2855 = vand.u32 %v2072, 4294901760
        %2856 = vmatmul.mubr.f32.gmra.mxu0 %v2855
        %v2857 = vpop.f32.mrf.mxu0
        %v2858 = vadd.f32 %v2753, %v2857
        %v2859 = vpop.f32.mrf.mxu0
        %2860 = vmatprep.mubr.f32.mxu0 0.0
        %v2861 = vand.u32 %v2073, 4294901760
        %2862 = vmatmul.mubr.f32.gmra.mxu0 %v2861
        %v2863 = vpop.f32.mrf.mxu0
        %v2864 = vadd.f32 %v2759, %v2863
        %v2865 = vpop.f32.mrf.mxu0
        %2866 = vdwg.mxu0
        %2867 = vadd.xlane.f32.xlu0 %v2846
        %v2868 = vpop.xlane.xlu0 %2867
        %2869 = vadd.xlane.f32.xlu0 %v2852
        %v2870 = vpop.xlane.xlu0 %2869
        %2871 = vadd.xlane.f32.xlu0 %v2858
        %v2872 = vpop.xlane.xlu0 %2871
        %2873 = vadd.xlane.f32.xlu0 %v2864
        %v2874 = vpop.xlane.xlu0 %2873
        %v2875 = vmul.f32 %v2868, %v1104
        %v2876 = vmul.f32 %v2870, %v1104
        %v2877 = vmul.f32 %v2872, %v1104
        %v2878 = vmul.f32 %v2874, %v1104
        %v2879 = vmul.f32 %v2846, %v2846
        %v2880 = vmul.f32 %v2852, %v2852
        %v2881 = vmul.f32 %v2858, %v2858
        %v2882 = vmul.f32 %v2864, %v2864
        %2883 = vadd.xlane.f32.xlu0 %v2879
        %v2884 = vpop.xlane.xlu0 %2883
        %2885 = vadd.xlane.f32.xlu0 %v2880
        %v2886 = vpop.xlane.xlu0 %2885
        %2887 = vadd.xlane.f32.xlu0 %v2881
        %v2888 = vpop.xlane.xlu0 %2887
        %2889 = vadd.xlane.f32.xlu0 %v2882
        %v2890 = vpop.xlane.xlu0 %2889
        %v2891 = vmul.f32 %v2884, %v1104
        %v2892 = vmul.f32 %v2886, %v1104
        %v2893 = vmul.f32 %v2888, %v1104
        %v2894 = vmul.f32 %v2890, %v1104
        %v2895 = vmul.f32 %v2875, %v2875
        %v2896 = vmul.f32 %v2876, %v2876
        %v2897 = vmul.f32 %v2877, %v2877
        %v2898 = vmul.f32 %v2878, %v2878
        %v2899 = vsub.f32 %v2891, %v2895
        %v2900 = vsub.f32 %v2892, %v2896
        %v2901 = vsub.f32 %v2893, %v2897
        %v2902 = vsub.f32 %v2894, %v2898
        %v2903 = vsub.f32 %v2846, %v2875
        %v2904 = vsub.f32 %v2852, %v2876
        %v2905 = vsub.f32 %v2858, %v2877
        %v2906 = vsub.f32 %v2864, %v2878
        %v2907 = vadd.f32 %v2899, 1e-05
        %v2908 = vadd.f32 %v2900, 1e-05
        %v2909 = vadd.f32 %v2901, 1e-05
        %v2910 = vadd.f32 %v2902, 1e-05
        %v2911 = vrsqrt.pop %v2907
        %v2912 = vrsqrt.pop %v2908
        %v2913 = vrsqrt.pop %v2909
        %v2914 = vrsqrt.pop %v2910
        %v2915 = vmul.f32 %v2903, %v2911
        %v2916 = vmul.f32 %v2904, %v2912
        %v2917 = vmul.f32 %v2905, %v2913
        %v2918 = vmul.f32 %v2906, %v2914
        %v2919 = vlaneseq
        %v2920 = vshrl.u32 %v2919, 7
        %v2921 = vsub.s32 0, %v2920
        %v2922 = vrot.slane %v2075, %v2921
        %v2923 = vmul.f32 %v2915, %v2922
        %v2924 = vmul.f32 %v2916, %v2922
        %v2925 = vmul.f32 %v2917, %v2922
        %v2926 = vmul.f32 %v2918, %v2922
        %v2927 = vlaneseq
        %v2928 = vshrl.u32 %v2927, 7
        %v2929 = vsub.s32 0, %v2928
        %v2930 = vrot.slane %v2076, %v2929
        %v2931 = vadd.f32 %v2923, %v2930
        %v2932 = vadd.f32 %v2924, %v2930
        %v2933 = vadd.f32 %v2925, %v2930
        %v2934 = vadd.f32 %v2926, %v2930
        %vm2935 = vcmp.gt.f32.partialorder %v2931, 0.0
        %vm2936 = vcmp.gt.f32.partialorder %v2932, 0.0
        %vm2937 = vcmp.gt.f32.partialorder %v2933, 0.0
        %vm2938 = vcmp.gt.f32.partialorder %v2934, 0.0
        %v2939 = vmin.f32 %v2931, 0.0
        %v2940 = vmin.f32 %v2932, 0.0
        %v2941 = vmin.f32 %v2933, 0.0
        %v2942 = vmin.f32 %v2934, 0.0
        %v2943 = vmul.f32 %v2939, 1.442695
        %v2944 = vpow.pop %v2943
        %v2945 = vmul.f32 %v2940, 1.442695
        %v2946 = vpow.pop %v2945
        %v2947 = vmul.f32 %v2941, 1.442695
        %v2948 = vpow.pop %v2947
        %v2949 = vmul.f32 %v2942, 1.442695
        %v2950 = vpow.pop %v2949
        %v2951 = vsub.f32 %v2944, 1.0
        %v2952 = vsub.f32 %v2946, 1.0
        %v2953 = vsub.f32 %v2948, 1.0
        %v2954 = vsub.f32 %v2950, 1.0
        %v2955 = vsel %vm2935, %v2931, %v2951
        %v2956 = vsel %vm2936, %v2932, %v2952
        %v2957 = vsel %vm2937, %v2933, %v2953
        %v2958 = vsel %vm2938, %v2934, %v2954
        %v2959 = vld [vmem:[%s6] sm:$0xff]
        %v2960 = vld [vmem:[%s6 + $0x8] sm:$0xff]
        %v2961 = vld [vmem:[%s6 + $0x10] sm:$0xff]
        %v2962 = vld [vmem:[%s6 + $0x18] sm:$0xff]
        %v2963 = vld [vmem:[%s6 + $0x20] sm:$0xff]
        %v2964 = vld [vmem:[%s6 + $0x28] sm:$0xff]
        %v2965 = vld [vmem:[%s6 + $0x30] sm:$0xff]
        %v2966 = vld [vmem:[%s6 + $0x38] sm:$0xff]
        %v2967 = vld [vmem:[%s6 + $0x40] sm:$0xff]
        %v2968 = vld [vmem:[%s6 + $0x48] sm:$0xff]
        %v2969 = vld [vmem:[%s6 + $0x50] sm:$0xff]
        %v2970 = vld [vmem:[%s6 + $0x58] sm:$0xff]
        %v2971 = vld [vmem:[%s6 + $0x60] sm:$0xff]
        %v2972 = vld [vmem:[%s6 + $0x68] sm:$0xff]
        %v2973 = vld [vmem:[%s6 + $0x70] sm:$0xff]
        %v2974 = vld [vmem:[%s6 + $0x78] sm:$0xff]
        %v2975 = vld [vmem:[%s2 + $0x9] sm:$0x1]
        %v2976 = vlaneseq
        %v2977 = vshrl.u32 %v2976, 7
        %v2978 = vsub.s32 0, %v2977
        %v2979 = vrot.slane %v2975, %v2978
        %2980 = vmatprep.subr.mxu0 0.0
        %v2981 = vand.u32 %v2974, 4294901760
        %2982 = vmatpush1.msra.mxu0 %v2981
        %2983 = vmatprep.subr.mxu0 0.0
        %v2984 = vand.u32 %v2973, 4294901760
        %2985 = vmatpush1.msra.mxu0 %v2984
        %2986 = vmatprep.subr.mxu0 0.0
        %v2987 = vand.u32 %v2972, 4294901760
        %2988 = vmatpush1.msra.mxu0 %v2987
        %2989 = vmatprep.subr.mxu0 0.0
        %v2990 = vand.u32 %v2971, 4294901760
        %2991 = vmatpush1.msra.mxu0 %v2990
        %2992 = vmatprep.subr.mxu0 0.0
        %v2993 = vand.u32 %v2970, 4294901760
        %2994 = vmatpush1.msra.mxu0 %v2993
        %2995 = vmatprep.subr.mxu0 0.0
        %v2996 = vand.u32 %v2969, 4294901760
        %2997 = vmatpush1.msra.mxu0 %v2996
        %2998 = vmatprep.subr.mxu0 0.0
        %v2999 = vand.u32 %v2968, 4294901760
        %3000 = vmatpush1.msra.mxu0 %v2999
        %3001 = vmatprep.subr.mxu0 0.0
        %v3002 = vand.u32 %v2967, 4294901760
        %3003 = vmatpush1.msra.mxu0 %v3002
        %3004 = vmatprep.subr.mxu0 0.0
        %v3005 = vand.u32 %v2966, 4294901760
        %3006 = vmatpush1.msra.mxu0 %v3005
        %3007 = vmatprep.subr.mxu0 0.0
        %v3008 = vand.u32 %v2965, 4294901760
        %3009 = vmatpush1.msra.mxu0 %v3008
        %3010 = vmatprep.subr.mxu0 0.0
        %v3011 = vand.u32 %v2964, 4294901760
        %3012 = vmatpush1.msra.mxu0 %v3011
        %3013 = vmatprep.subr.mxu0 0.0
        %v3014 = vand.u32 %v2963, 4294901760
        %3015 = vmatpush1.msra.mxu0 %v3014
        %3016 = vmatprep.subr.mxu0 0.0
        %v3017 = vand.u32 %v2962, 4294901760
        %3018 = vmatpush1.msra.mxu0 %v3017
        %3019 = vmatprep.subr.mxu0 0.0
        %v3020 = vand.u32 %v2961, 4294901760
        %3021 = vmatpush1.msra.mxu0 %v3020
        %3022 = vmatprep.subr.mxu0 0.0
        %v3023 = vand.u32 %v2960, 4294901760
        %3024 = vmatpush1.msra.mxu0 %v3023
        %3025 = vmatprep.subr.mxu0 0.0
        %v3026 = vand.u32 %v2959, 4294901760
        %3027 = vmatpush1.msra.mxu0 %v3026
        %3028 = vmatprep.subr.mxu0 0.0
        %3029 = vmatpush2.msra.mxu0 0.0
        %3030 = vmatprep.subr.mxu0 0.0
        %3031 = vmatpush2.msra.mxu0 0.0
        %3032 = vmatprep.subr.mxu0 0.0
        %3033 = vmatpush2.msra.mxu0 0.0
        %3034 = vmatprep.subr.mxu0 0.0
        %3035 = vmatpush2.msra.mxu0 0.0
        %3036 = vmatprep.subr.mxu0 0.0
        %3037 = vmatpush2.msra.mxu0 0.0
        %3038 = vmatprep.subr.mxu0 0.0
        %3039 = vmatpush2.msra.mxu0 0.0
        %3040 = vmatprep.subr.mxu0 0.0
        %3041 = vmatpush2.msra.mxu0 0.0
        %3042 = vmatprep.subr.mxu0 0.0
        %3043 = vmatpush2.msra.mxu0 0.0
        %3044 = vmatprep.subr.mxu0 0.0
        %3045 = vmatpush2.msra.mxu0 0.0
        %3046 = vmatprep.subr.mxu0 0.0
        %3047 = vmatpush2.msra.mxu0 0.0
        %3048 = vmatprep.subr.mxu0 0.0
        %3049 = vmatpush2.msra.mxu0 0.0
        %3050 = vmatprep.subr.mxu0 0.0
        %3051 = vmatpush2.msra.mxu0 0.0
        %3052 = vmatprep.subr.mxu0 0.0
        %3053 = vmatpush2.msra.mxu0 0.0
        %3054 = vmatprep.subr.mxu0 0.0
        %3055 = vmatpush2.msra.mxu0 0.0
        %3056 = vmatprep.subr.mxu0 0.0
        %3057 = vmatpush2.msra.mxu0 0.0
        %3058 = vmatprep.subr.mxu0 0.0
        %3059 = vmatpush2.msra.mxu0 0.0
        %3060 = vmatprep.mubr.f32.mxu0 0.0
        %v3061 = vand.u32 %v2955, 4294901760
        %v3062 = vsub.f32 %v2955, %v3061
        %v3063 = vand.u32 %v3062, 4294901760
        %v3064 = vsub.f32 %v3062, %v3063
        %v3065 = vand.u32 %v3064, 4294901760
        %3066 = vmatmul.mubr.f32.gmra.mxu0 %v3065
        %v3067 = vpop.f32.mrf.mxu0
        %v3068 = vadd.f32 %v2979, %v3067
        %v3069 = vpop.f32.mrf.mxu0
        %3070 = vmatprep.mubr.f32.mxu0 0.0
        %v3071 = vand.u32 %v2956, 4294901760
        %v3072 = vsub.f32 %v2956, %v3071
        %v3073 = vand.u32 %v3072, 4294901760
        %v3074 = vsub.f32 %v3072, %v3073
        %v3075 = vand.u32 %v3074, 4294901760
        %3076 = vmatmul.mubr.f32.gmra.mxu0 %v3075
        %v3077 = vpop.f32.mrf.mxu0
        %v3078 = vadd.f32 %v2979, %v3077
        %v3079 = vpop.f32.mrf.mxu0
        %3080 = vmatprep.mubr.f32.mxu0 0.0
        %v3081 = vand.u32 %v2957, 4294901760
        %v3082 = vsub.f32 %v2957, %v3081
        %v3083 = vand.u32 %v3082, 4294901760
        %v3084 = vsub.f32 %v3082, %v3083
        %v3085 = vand.u32 %v3084, 4294901760
        %3086 = vmatmul.mubr.f32.gmra.mxu0 %v3085
        %v3087 = vpop.f32.mrf.mxu0
        %v3088 = vadd.f32 %v2979, %v3087
        %v3089 = vpop.f32.mrf.mxu0
        %3090 = vmatprep.mubr.f32.mxu0 0.0
        %v3091 = vand.u32 %v2958, 4294901760
        %v3092 = vsub.f32 %v2958, %v3091
        %v3093 = vand.u32 %v3092, 4294901760
        %v3094 = vsub.f32 %v3092, %v3093
        %v3095 = vand.u32 %v3094, 4294901760
        %3096 = vmatmul.mubr.f32.gmra.mxu0 %v3095
        %v3097 = vpop.f32.mrf.mxu0
        %v3098 = vadd.f32 %v2979, %v3097
        %v3099 = vpop.f32.mrf.mxu0
        %3100 = vdwg.mxu0
        %3101 = vmatprep.subr.mxu0 0.0
        %v3102 = vand.u32 %v2974, 4294901760
        %v3103 = vsub.f32 %v2974, %v3102
        %v3104 = vand.u32 %v3103, 4294901760
        %v3105 = vsub.f32 %v3103, %v3104
        %v3106 = vand.u32 %v3105, 4294901760
        %3107 = vmatpush1.msra.mxu0 %v3106
        %3108 = vmatprep.subr.mxu0 0.0
        %v3109 = vand.u32 %v2973, 4294901760
        %v3110 = vsub.f32 %v2973, %v3109
        %v3111 = vand.u32 %v3110, 4294901760
        %v3112 = vsub.f32 %v3110, %v3111
        %v3113 = vand.u32 %v3112, 4294901760
        %3114 = vmatpush1.msra.mxu0 %v3113
        %3115 = vmatprep.subr.mxu0 0.0
        %v3116 = vand.u32 %v2972, 4294901760
        %v3117 = vsub.f32 %v2972, %v3116
        %v3118 = vand.u32 %v3117, 4294901760
        %v3119 = vsub.f32 %v3117, %v3118
        %v3120 = vand.u32 %v3119, 4294901760
        %3121 = vmatpush1.msra.mxu0 %v3120
        %3122 = vmatprep.subr.mxu0 0.0
        %v3123 = vand.u32 %v2971, 4294901760
        %v3124 = vsub.f32 %v2971, %v3123
        %v3125 = vand.u32 %v3124, 4294901760
        %v3126 = vsub.f32 %v3124, %v3125
        %v3127 = vand.u32 %v3126, 4294901760
        %3128 = vmatpush1.msra.mxu0 %v3127
        %3129 = vmatprep.subr.mxu0 0.0
        %v3130 = vand.u32 %v2970, 4294901760
        %v3131 = vsub.f32 %v2970, %v3130
        %v3132 = vand.u32 %v3131, 4294901760
        %v3133 = vsub.f32 %v3131, %v3132
        %v3134 = vand.u32 %v3133, 4294901760
        %3135 = vmatpush1.msra.mxu0 %v3134
        %3136 = vmatprep.subr.mxu0 0.0
        %v3137 = vand.u32 %v2969, 4294901760
        %v3138 = vsub.f32 %v2969, %v3137
        %v3139 = vand.u32 %v3138, 4294901760
        %v3140 = vsub.f32 %v3138, %v3139
        %v3141 = vand.u32 %v3140, 4294901760
        %3142 = vmatpush1.msra.mxu0 %v3141
        %3143 = vmatprep.subr.mxu0 0.0
        %v3144 = vand.u32 %v2968, 4294901760
        %v3145 = vsub.f32 %v2968, %v3144
        %v3146 = vand.u32 %v3145, 4294901760
        %v3147 = vsub.f32 %v3145, %v3146
        %v3148 = vand.u32 %v3147, 4294901760
        %3149 = vmatpush1.msra.mxu0 %v3148
        %3150 = vmatprep.subr.mxu0 0.0
        %v3151 = vand.u32 %v2967, 4294901760
        %v3152 = vsub.f32 %v2967, %v3151
        %v3153 = vand.u32 %v3152, 4294901760
        %v3154 = vsub.f32 %v3152, %v3153
        %v3155 = vand.u32 %v3154, 4294901760
        %3156 = vmatpush1.msra.mxu0 %v3155
        %3157 = vmatprep.subr.mxu0 0.0
        %v3158 = vand.u32 %v2966, 4294901760
        %v3159 = vsub.f32 %v2966, %v3158
        %v3160 = vand.u32 %v3159, 4294901760
        %v3161 = vsub.f32 %v3159, %v3160
        %v3162 = vand.u32 %v3161, 4294901760
        %3163 = vmatpush1.msra.mxu0 %v3162
        %3164 = vmatprep.subr.mxu0 0.0
        %v3165 = vand.u32 %v2965, 4294901760
        %v3166 = vsub.f32 %v2965, %v3165
        %v3167 = vand.u32 %v3166, 4294901760
        %v3168 = vsub.f32 %v3166, %v3167
        %v3169 = vand.u32 %v3168, 4294901760
        %3170 = vmatpush1.msra.mxu0 %v3169
        %3171 = vmatprep.subr.mxu0 0.0
        %v3172 = vand.u32 %v2964, 4294901760
        %v3173 = vsub.f32 %v2964, %v3172
        %v3174 = vand.u32 %v3173, 4294901760
        %v3175 = vsub.f32 %v3173, %v3174
        %v3176 = vand.u32 %v3175, 4294901760
        %3177 = vmatpush1.msra.mxu0 %v3176
        %3178 = vmatprep.subr.mxu0 0.0
        %v3179 = vand.u32 %v2963, 4294901760
        %v3180 = vsub.f32 %v2963, %v3179
        %v3181 = vand.u32 %v3180, 4294901760
        %v3182 = vsub.f32 %v3180, %v3181
        %v3183 = vand.u32 %v3182, 4294901760
        %3184 = vmatpush1.msra.mxu0 %v3183
        %3185 = vmatprep.subr.mxu0 0.0
        %v3186 = vand.u32 %v2962, 4294901760
        %v3187 = vsub.f32 %v2962, %v3186
        %v3188 = vand.u32 %v3187, 4294901760
        %v3189 = vsub.f32 %v3187, %v3188
        %v3190 = vand.u32 %v3189, 4294901760
        %3191 = vmatpush1.msra.mxu0 %v3190
        %3192 = vmatprep.subr.mxu0 0.0
        %v3193 = vand.u32 %v2961, 4294901760
        %v3194 = vsub.f32 %v2961, %v3193
        %v3195 = vand.u32 %v3194, 4294901760
        %v3196 = vsub.f32 %v3194, %v3195
        %v3197 = vand.u32 %v3196, 4294901760
        %3198 = vmatpush1.msra.mxu0 %v3197
        %3199 = vmatprep.subr.mxu0 0.0
        %v3200 = vand.u32 %v2960, 4294901760
        %v3201 = vsub.f32 %v2960, %v3200
        %v3202 = vand.u32 %v3201, 4294901760
        %v3203 = vsub.f32 %v3201, %v3202
        %v3204 = vand.u32 %v3203, 4294901760
        %3205 = vmatpush1.msra.mxu0 %v3204
        %3206 = vmatprep.subr.mxu0 0.0
        %v3207 = vand.u32 %v2959, 4294901760
        %v3208 = vsub.f32 %v2959, %v3207
        %v3209 = vand.u32 %v3208, 4294901760
        %v3210 = vsub.f32 %v3208, %v3209
        %v3211 = vand.u32 %v3210, 4294901760
        %3212 = vmatpush1.msra.mxu0 %v3211
        %3213 = vmatprep.subr.mxu0 0.0
        %3214 = vmatpush2.msra.mxu0 0.0
        %3215 = vmatprep.subr.mxu0 0.0
        %3216 = vmatpush2.msra.mxu0 0.0
        %3217 = vmatprep.subr.mxu0 0.0
        %3218 = vmatpush2.msra.mxu0 0.0
        %3219 = vmatprep.subr.mxu0 0.0
        %3220 = vmatpush2.msra.mxu0 0.0
        %3221 = vmatprep.subr.mxu0 0.0
        %3222 = vmatpush2.msra.mxu0 0.0
        %3223 = vmatprep.subr.mxu0 0.0
        %3224 = vmatpush2.msra.mxu0 0.0
        %3225 = vmatprep.subr.mxu0 0.0
        %3226 = vmatpush2.msra.mxu0 0.0
        %3227 = vmatprep.subr.mxu0 0.0
        %3228 = vmatpush2.msra.mxu0 0.0
        %3229 = vmatprep.subr.mxu0 0.0
        %3230 = vmatpush2.msra.mxu0 0.0
        %3231 = vmatprep.subr.mxu0 0.0
        %3232 = vmatpush2.msra.mxu0 0.0
        %3233 = vmatprep.subr.mxu0 0.0
        %3234 = vmatpush2.msra.mxu0 0.0
        %3235 = vmatprep.subr.mxu0 0.0
        %3236 = vmatpush2.msra.mxu0 0.0
        %3237 = vmatprep.subr.mxu0 0.0
        %3238 = vmatpush2.msra.mxu0 0.0
        %3239 = vmatprep.subr.mxu0 0.0
        %3240 = vmatpush2.msra.mxu0 0.0
        %3241 = vmatprep.subr.mxu0 0.0
        %3242 = vmatpush2.msra.mxu0 0.0
        %3243 = vmatprep.subr.mxu0 0.0
        %3244 = vmatpush2.msra.mxu0 0.0
        %3245 = vmatprep.mubr.f32.mxu0 0.0
        %v3246 = vand.u32 %v2955, 4294901760
        %3247 = vmatmul.mubr.f32.gmra.mxu0 %v3246
        %v3248 = vpop.f32.mrf.mxu0
        %v3249 = vadd.f32 %v3068, %v3248
        %v3250 = vpop.f32.mrf.mxu0
        %3251 = vmatprep.mubr.f32.mxu0 0.0
        %v3252 = vand.u32 %v2956, 4294901760
        %3253 = vmatmul.mubr.f32.gmra.mxu0 %v3252
        %v3254 = vpop.f32.mrf.mxu0
        %v3255 = vadd.f32 %v3078, %v3254
        %v3256 = vpop.f32.mrf.mxu0
        %3257 = vmatprep.mubr.f32.mxu0 0.0
        %v3258 = vand.u32 %v2957, 4294901760
        %3259 = vmatmul.mubr.f32.gmra.mxu0 %v3258
        %v3260 = vpop.f32.mrf.mxu0
        %v3261 = vadd.f32 %v3088, %v3260
        %v3262 = vpop.f32.mrf.mxu0
        %3263 = vmatprep.mubr.f32.mxu0 0.0
        %v3264 = vand.u32 %v2958, 4294901760
        %3265 = vmatmul.mubr.f32.gmra.mxu0 %v3264
        %v3266 = vpop.f32.mrf.mxu0
        %v3267 = vadd.f32 %v3098, %v3266
        %v3268 = vpop.f32.mrf.mxu0
        %3269 = vdwg.mxu0
        %3270 = vmatprep.subr.mxu0 0.0
        %v3271 = vand.u32 %v2974, 4294901760
        %v3272 = vsub.f32 %v2974, %v3271
        %3273 = vmatpush1.msra.mxu0 %v3272
        %3274 = vmatprep.subr.mxu0 0.0
        %v3275 = vand.u32 %v2973, 4294901760
        %v3276 = vsub.f32 %v2973, %v3275
        %3277 = vmatpush1.msra.mxu0 %v3276
        %3278 = vmatprep.subr.mxu0 0.0
        %v3279 = vand.u32 %v2972, 4294901760
        %v3280 = vsub.f32 %v2972, %v3279
        %3281 = vmatpush1.msra.mxu0 %v3280
        %3282 = vmatprep.subr.mxu0 0.0
        %v3283 = vand.u32 %v2971, 4294901760
        %v3284 = vsub.f32 %v2971, %v3283
        %3285 = vmatpush1.msra.mxu0 %v3284
        %3286 = vmatprep.subr.mxu0 0.0
        %v3287 = vand.u32 %v2970, 4294901760
        %v3288 = vsub.f32 %v2970, %v3287
        %3289 = vmatpush1.msra.mxu0 %v3288
        %3290 = vmatprep.subr.mxu0 0.0
        %v3291 = vand.u32 %v2969, 4294901760
        %v3292 = vsub.f32 %v2969, %v3291
        %3293 = vmatpush1.msra.mxu0 %v3292
        %3294 = vmatprep.subr.mxu0 0.0
        %v3295 = vand.u32 %v2968, 4294901760
        %v3296 = vsub.f32 %v2968, %v3295
        %3297 = vmatpush1.msra.mxu0 %v3296
        %3298 = vmatprep.subr.mxu0 0.0
        %v3299 = vand.u32 %v2967, 4294901760
        %v3300 = vsub.f32 %v2967, %v3299
        %3301 = vmatpush1.msra.mxu0 %v3300
        %3302 = vmatprep.subr.mxu0 0.0
        %v3303 = vand.u32 %v2966, 4294901760
        %v3304 = vsub.f32 %v2966, %v3303
        %3305 = vmatpush1.msra.mxu0 %v3304
        %3306 = vmatprep.subr.mxu0 0.0
        %v3307 = vand.u32 %v2965, 4294901760
        %v3308 = vsub.f32 %v2965, %v3307
        %3309 = vmatpush1.msra.mxu0 %v3308
        %3310 = vmatprep.subr.mxu0 0.0
        %v3311 = vand.u32 %v2964, 4294901760
        %v3312 = vsub.f32 %v2964, %v3311
        %3313 = vmatpush1.msra.mxu0 %v3312
        %3314 = vmatprep.subr.mxu0 0.0
        %v3315 = vand.u32 %v2963, 4294901760
        %v3316 = vsub.f32 %v2963, %v3315
        %3317 = vmatpush1.msra.mxu0 %v3316
        %3318 = vmatprep.subr.mxu0 0.0
        %v3319 = vand.u32 %v2962, 4294901760
        %v3320 = vsub.f32 %v2962, %v3319
        %3321 = vmatpush1.msra.mxu0 %v3320
        %3322 = vmatprep.subr.mxu0 0.0
        %v3323 = vand.u32 %v2961, 4294901760
        %v3324 = vsub.f32 %v2961, %v3323
        %3325 = vmatpush1.msra.mxu0 %v3324
        %3326 = vmatprep.subr.mxu0 0.0
        %v3327 = vand.u32 %v2960, 4294901760
        %v3328 = vsub.f32 %v2960, %v3327
        %3329 = vmatpush1.msra.mxu0 %v3328
        %3330 = vmatprep.subr.mxu0 0.0
        %v3331 = vand.u32 %v2959, 4294901760
        %v3332 = vsub.f32 %v2959, %v3331
        %3333 = vmatpush1.msra.mxu0 %v3332
        %3334 = vmatprep.subr.mxu0 0.0
        %3335 = vmatpush2.msra.mxu0 0.0
        %3336 = vmatprep.subr.mxu0 0.0
        %3337 = vmatpush2.msra.mxu0 0.0
        %3338 = vmatprep.subr.mxu0 0.0
        %3339 = vmatpush2.msra.mxu0 0.0
        %3340 = vmatprep.subr.mxu0 0.0
        %3341 = vmatpush2.msra.mxu0 0.0
        %3342 = vmatprep.subr.mxu0 0.0
        %3343 = vmatpush2.msra.mxu0 0.0
        %3344 = vmatprep.subr.mxu0 0.0
        %3345 = vmatpush2.msra.mxu0 0.0
        %3346 = vmatprep.subr.mxu0 0.0
        %3347 = vmatpush2.msra.mxu0 0.0
        %3348 = vmatprep.subr.mxu0 0.0
        %3349 = vmatpush2.msra.mxu0 0.0
        %3350 = vmatprep.subr.mxu0 0.0
        %3351 = vmatpush2.msra.mxu0 0.0
        %3352 = vmatprep.subr.mxu0 0.0
        %3353 = vmatpush2.msra.mxu0 0.0
        %3354 = vmatprep.subr.mxu0 0.0
        %3355 = vmatpush2.msra.mxu0 0.0
        %3356 = vmatprep.subr.mxu0 0.0
        %3357 = vmatpush2.msra.mxu0 0.0
        %3358 = vmatprep.subr.mxu0 0.0
        %3359 = vmatpush2.msra.mxu0 0.0
        %3360 = vmatprep.subr.mxu0 0.0
        %3361 = vmatpush2.msra.mxu0 0.0
        %3362 = vmatprep.subr.mxu0 0.0
        %3363 = vmatpush2.msra.mxu0 0.0
        %3364 = vmatprep.subr.mxu0 0.0
        %3365 = vmatpush2.msra.mxu0 0.0
        %3366 = vmatprep.mubr.f32.mxu0 0.0
        %v3367 = vand.u32 %v2955, 4294901760
        %v3368 = vsub.f32 %v2955, %v3367
        %3369 = vmatmul.mubr.f32.gmra.mxu0 %v3368
        %v3370 = vpop.f32.mrf.mxu0
        %v3371 = vadd.f32 %v3249, %v3370
        %v3372 = vpop.f32.mrf.mxu0
        %3373 = vmatprep.mubr.f32.mxu0 0.0
        %v3374 = vand.u32 %v2956, 4294901760
        %v3375 = vsub.f32 %v2956, %v3374
        %3376 = vmatmul.mubr.f32.gmra.mxu0 %v3375
        %v3377 = vpop.f32.mrf.mxu0
        %v3378 = vadd.f32 %v3255, %v3377
        %v3379 = vpop.f32.mrf.mxu0
        %3380 = vmatprep.mubr.f32.mxu0 0.0
        %v3381 = vand.u32 %v2957, 4294901760
        %v3382 = vsub.f32 %v2957, %v3381
        %3383 = vmatmul.mubr.f32.gmra.mxu0 %v3382
        %v3384 = vpop.f32.mrf.mxu0
        %v3385 = vadd.f32 %v3261, %v3384
        %v3386 = vpop.f32.mrf.mxu0
        %3387 = vmatprep.mubr.f32.mxu0 0.0
        %v3388 = vand.u32 %v2958, 4294901760
        %v3389 = vsub.f32 %v2958, %v3388
        %3390 = vmatmul.mubr.f32.gmra.mxu0 %v3389
        %v3391 = vpop.f32.mrf.mxu0
        %v3392 = vadd.f32 %v3267, %v3391
        %v3393 = vpop.f32.mrf.mxu0
        %3394 = vdwg.mxu0
        %3395 = vmatprep.subr.mxu0 0.0
        %v3396 = vand.u32 %v2974, 4294901760
        %3397 = vmatpush1.msra.mxu0 %v3396
        %3398 = vmatprep.subr.mxu0 0.0
        %v3399 = vand.u32 %v2973, 4294901760
        %3400 = vmatpush1.msra.mxu0 %v3399
        %3401 = vmatprep.subr.mxu0 0.0
        %v3402 = vand.u32 %v2972, 4294901760
        %3403 = vmatpush1.msra.mxu0 %v3402
        %3404 = vmatprep.subr.mxu0 0.0
        %v3405 = vand.u32 %v2971, 4294901760
        %3406 = vmatpush1.msra.mxu0 %v3405
        %3407 = vmatprep.subr.mxu0 0.0
        %v3408 = vand.u32 %v2970, 4294901760
        %3409 = vmatpush1.msra.mxu0 %v3408
        %3410 = vmatprep.subr.mxu0 0.0
        %v3411 = vand.u32 %v2969, 4294901760
        %3412 = vmatpush1.msra.mxu0 %v3411
        %3413 = vmatprep.subr.mxu0 0.0
        %v3414 = vand.u32 %v2968, 4294901760
        %3415 = vmatpush1.msra.mxu0 %v3414
        %3416 = vmatprep.subr.mxu0 0.0
        %v3417 = vand.u32 %v2967, 4294901760
        %3418 = vmatpush1.msra.mxu0 %v3417
        %3419 = vmatprep.subr.mxu0 0.0
        %v3420 = vand.u32 %v2966, 4294901760
        %3421 = vmatpush1.msra.mxu0 %v3420
        %3422 = vmatprep.subr.mxu0 0.0
        %v3423 = vand.u32 %v2965, 4294901760
        %3424 = vmatpush1.msra.mxu0 %v3423
        %3425 = vmatprep.subr.mxu0 0.0
        %v3426 = vand.u32 %v2964, 4294901760
        %3427 = vmatpush1.msra.mxu0 %v3426
        %3428 = vmatprep.subr.mxu0 0.0
        %v3429 = vand.u32 %v2963, 4294901760
        %3430 = vmatpush1.msra.mxu0 %v3429
        %3431 = vmatprep.subr.mxu0 0.0
        %v3432 = vand.u32 %v2962, 4294901760
        %3433 = vmatpush1.msra.mxu0 %v3432
        %3434 = vmatprep.subr.mxu0 0.0
        %v3435 = vand.u32 %v2961, 4294901760
        %3436 = vmatpush1.msra.mxu0 %v3435
        %3437 = vmatprep.subr.mxu0 0.0
        %v3438 = vand.u32 %v2960, 4294901760
        %3439 = vmatpush1.msra.mxu0 %v3438
        %3440 = vmatprep.subr.mxu0 0.0
        %v3441 = vand.u32 %v2959, 4294901760
        %3442 = vmatpush1.msra.mxu0 %v3441
        %3443 = vmatprep.subr.mxu0 0.0
        %3444 = vmatpush2.msra.mxu0 0.0
        %3445 = vmatprep.subr.mxu0 0.0
        %3446 = vmatpush2.msra.mxu0 0.0
        %3447 = vmatprep.subr.mxu0 0.0
        %3448 = vmatpush2.msra.mxu0 0.0
        %3449 = vmatprep.subr.mxu0 0.0
        %3450 = vmatpush2.msra.mxu0 0.0
        %3451 = vmatprep.subr.mxu0 0.0
        %3452 = vmatpush2.msra.mxu0 0.0
        %3453 = vmatprep.subr.mxu0 0.0
        %3454 = vmatpush2.msra.mxu0 0.0
        %3455 = vmatprep.subr.mxu0 0.0
        %3456 = vmatpush2.msra.mxu0 0.0
        %3457 = vmatprep.subr.mxu0 0.0
        %3458 = vmatpush2.msra.mxu0 0.0
        %3459 = vmatprep.subr.mxu0 0.0
        %3460 = vmatpush2.msra.mxu0 0.0
        %3461 = vmatprep.subr.mxu0 0.0
        %3462 = vmatpush2.msra.mxu0 0.0
        %3463 = vmatprep.subr.mxu0 0.0
        %3464 = vmatpush2.msra.mxu0 0.0
        %3465 = vmatprep.subr.mxu0 0.0
        %3466 = vmatpush2.msra.mxu0 0.0
        %3467 = vmatprep.subr.mxu0 0.0
        %3468 = vmatpush2.msra.mxu0 0.0
        %3469 = vmatprep.subr.mxu0 0.0
        %3470 = vmatpush2.msra.mxu0 0.0
        %3471 = vmatprep.subr.mxu0 0.0
        %3472 = vmatpush2.msra.mxu0 0.0
        %3473 = vmatprep.subr.mxu0 0.0
        %3474 = vmatpush2.msra.mxu0 0.0
        %3475 = vmatprep.mubr.f32.mxu0 0.0
        %v3476 = vand.u32 %v2955, 4294901760
        %v3477 = vsub.f32 %v2955, %v3476
        %v3478 = vand.u32 %v3477, 4294901760
        %3479 = vmatmul.mubr.f32.gmra.mxu0 %v3478
        %v3480 = vpop.f32.mrf.mxu0
        %v3481 = vadd.f32 %v3371, %v3480
        %v3482 = vpop.f32.mrf.mxu0
        %3483 = vmatprep.mubr.f32.mxu0 0.0
        %v3484 = vand.u32 %v2956, 4294901760
        %v3485 = vsub.f32 %v2956, %v3484
        %v3486 = vand.u32 %v3485, 4294901760
        %3487 = vmatmul.mubr.f32.gmra.mxu0 %v3486
        %v3488 = vpop.f32.mrf.mxu0
        %v3489 = vadd.f32 %v3378, %v3488
        %v3490 = vpop.f32.mrf.mxu0
        %3491 = vmatprep.mubr.f32.mxu0 0.0
        %v3492 = vand.u32 %v2957, 4294901760
        %v3493 = vsub.f32 %v2957, %v3492
        %v3494 = vand.u32 %v3493, 4294901760
        %3495 = vmatmul.mubr.f32.gmra.mxu0 %v3494
        %v3496 = vpop.f32.mrf.mxu0
        %v3497 = vadd.f32 %v3385, %v3496
        %v3498 = vpop.f32.mrf.mxu0
        %3499 = vmatprep.mubr.f32.mxu0 0.0
        %v3500 = vand.u32 %v2958, 4294901760
        %v3501 = vsub.f32 %v2958, %v3500
        %v3502 = vand.u32 %v3501, 4294901760
        %3503 = vmatmul.mubr.f32.gmra.mxu0 %v3502
        %v3504 = vpop.f32.mrf.mxu0
        %v3505 = vadd.f32 %v3392, %v3504
        %v3506 = vpop.f32.mrf.mxu0
        %3507 = vdwg.mxu0
        %3508 = vmatprep.subr.mxu0 0.0
        %v3509 = vand.u32 %v2974, 4294901760
        %v3510 = vsub.f32 %v2974, %v3509
        %v3511 = vand.u32 %v3510, 4294901760
        %3512 = vmatpush1.msra.mxu0 %v3511
        %3513 = vmatprep.subr.mxu0 0.0
        %v3514 = vand.u32 %v2973, 4294901760
        %v3515 = vsub.f32 %v2973, %v3514
        %v3516 = vand.u32 %v3515, 4294901760
        %3517 = vmatpush1.msra.mxu0 %v3516
        %3518 = vmatprep.subr.mxu0 0.0
        %v3519 = vand.u32 %v2972, 4294901760
        %v3520 = vsub.f32 %v2972, %v3519
        %v3521 = vand.u32 %v3520, 4294901760
        %3522 = vmatpush1.msra.mxu0 %v3521
        %3523 = vmatprep.subr.mxu0 0.0
        %v3524 = vand.u32 %v2971, 4294901760
        %v3525 = vsub.f32 %v2971, %v3524
        %v3526 = vand.u32 %v3525, 4294901760
        %3527 = vmatpush1.msra.mxu0 %v3526
        %3528 = vmatprep.subr.mxu0 0.0
        %v3529 = vand.u32 %v2970, 4294901760
        %v3530 = vsub.f32 %v2970, %v3529
        %v3531 = vand.u32 %v3530, 4294901760
        %3532 = vmatpush1.msra.mxu0 %v3531
        %3533 = vmatprep.subr.mxu0 0.0
        %v3534 = vand.u32 %v2969, 4294901760
        %v3535 = vsub.f32 %v2969, %v3534
        %v3536 = vand.u32 %v3535, 4294901760
        %3537 = vmatpush1.msra.mxu0 %v3536
        %3538 = vmatprep.subr.mxu0 0.0
        %v3539 = vand.u32 %v2968, 4294901760
        %v3540 = vsub.f32 %v2968, %v3539
        %v3541 = vand.u32 %v3540, 4294901760
        %3542 = vmatpush1.msra.mxu0 %v3541
        %3543 = vmatprep.subr.mxu0 0.0
        %v3544 = vand.u32 %v2967, 4294901760
        %v3545 = vsub.f32 %v2967, %v3544
        %v3546 = vand.u32 %v3545, 4294901760
        %3547 = vmatpush1.msra.mxu0 %v3546
        %3548 = vmatprep.subr.mxu0 0.0
        %v3549 = vand.u32 %v2966, 4294901760
        %v3550 = vsub.f32 %v2966, %v3549
        %v3551 = vand.u32 %v3550, 4294901760
        %3552 = vmatpush1.msra.mxu0 %v3551
        %3553 = vmatprep.subr.mxu0 0.0
        %v3554 = vand.u32 %v2965, 4294901760
        %v3555 = vsub.f32 %v2965, %v3554
        %v3556 = vand.u32 %v3555, 4294901760
        %3557 = vmatpush1.msra.mxu0 %v3556
        %3558 = vmatprep.subr.mxu0 0.0
        %v3559 = vand.u32 %v2964, 4294901760
        %v3560 = vsub.f32 %v2964, %v3559
        %v3561 = vand.u32 %v3560, 4294901760
        %3562 = vmatpush1.msra.mxu0 %v3561
        %3563 = vmatprep.subr.mxu0 0.0
        %v3564 = vand.u32 %v2963, 4294901760
        %v3565 = vsub.f32 %v2963, %v3564
        %v3566 = vand.u32 %v3565, 4294901760
        %3567 = vmatpush1.msra.mxu0 %v3566
        %3568 = vmatprep.subr.mxu0 0.0
        %v3569 = vand.u32 %v2962, 4294901760
        %v3570 = vsub.f32 %v2962, %v3569
        %v3571 = vand.u32 %v3570, 4294901760
        %3572 = vmatpush1.msra.mxu0 %v3571
        %3573 = vmatprep.subr.mxu0 0.0
        %v3574 = vand.u32 %v2961, 4294901760
        %v3575 = vsub.f32 %v2961, %v3574
        %v3576 = vand.u32 %v3575, 4294901760
        %3577 = vmatpush1.msra.mxu0 %v3576
        %3578 = vmatprep.subr.mxu0 0.0
        %v3579 = vand.u32 %v2960, 4294901760
        %v3580 = vsub.f32 %v2960, %v3579
        %v3581 = vand.u32 %v3580, 4294901760
        %3582 = vmatpush1.msra.mxu0 %v3581
        %3583 = vmatprep.subr.mxu0 0.0
        %v3584 = vand.u32 %v2959, 4294901760
        %v3585 = vsub.f32 %v2959, %v3584
        %v3586 = vand.u32 %v3585, 4294901760
        %3587 = vmatpush1.msra.mxu0 %v3586
        %3588 = vmatprep.subr.mxu0 0.0
        %3589 = vmatpush2.msra.mxu0 0.0
        %3590 = vmatprep.subr.mxu0 0.0
        %3591 = vmatpush2.msra.mxu0 0.0
        %3592 = vmatprep.subr.mxu0 0.0
        %3593 = vmatpush2.msra.mxu0 0.0
        %3594 = vmatprep.subr.mxu0 0.0
        %3595 = vmatpush2.msra.mxu0 0.0
        %3596 = vmatprep.subr.mxu0 0.0
        %3597 = vmatpush2.msra.mxu0 0.0
        %3598 = vmatprep.subr.mxu0 0.0
        %3599 = vmatpush2.msra.mxu0 0.0
        %3600 = vmatprep.subr.mxu0 0.0
        %3601 = vmatpush2.msra.mxu0 0.0
        %3602 = vmatprep.subr.mxu0 0.0
        %3603 = vmatpush2.msra.mxu0 0.0
        %3604 = vmatprep.subr.mxu0 0.0
        %3605 = vmatpush2.msra.mxu0 0.0
        %3606 = vmatprep.subr.mxu0 0.0
        %3607 = vmatpush2.msra.mxu0 0.0
        %3608 = vmatprep.subr.mxu0 0.0
        %3609 = vmatpush2.msra.mxu0 0.0
        %3610 = vmatprep.subr.mxu0 0.0
        %3611 = vmatpush2.msra.mxu0 0.0
        %3612 = vmatprep.subr.mxu0 0.0
        %3613 = vmatpush2.msra.mxu0 0.0
        %3614 = vmatprep.subr.mxu0 0.0
        %3615 = vmatpush2.msra.mxu0 0.0
        %3616 = vmatprep.subr.mxu0 0.0
        %3617 = vmatpush2.msra.mxu0 0.0
        %3618 = vmatprep.subr.mxu0 0.0
        %3619 = vmatpush2.msra.mxu0 0.0
        %3620 = vmatprep.mubr.f32.mxu0 0.0
        %v3621 = vand.u32 %v2955, 4294901760
        %3622 = vmatmul.mubr.f32.gmra.mxu0 %v3621
        %v3623 = vpop.f32.mrf.mxu0
        %v3624 = vadd.f32 %v3481, %v3623
        %v3625 = vpop.f32.mrf.mxu0
        %3626 = vmatprep.mubr.f32.mxu0 0.0
        %v3627 = vand.u32 %v2956, 4294901760
        %3628 = vmatmul.mubr.f32.gmra.mxu0 %v3627
        %v3629 = vpop.f32.mrf.mxu0
        %v3630 = vadd.f32 %v3489, %v3629
        %v3631 = vpop.f32.mrf.mxu0
        %3632 = vmatprep.mubr.f32.mxu0 0.0
        %v3633 = vand.u32 %v2957, 4294901760
        %3634 = vmatmul.mubr.f32.gmra.mxu0 %v3633
        %v3635 = vpop.f32.mrf.mxu0
        %v3636 = vadd.f32 %v3497, %v3635
        %v3637 = vpop.f32.mrf.mxu0
        %3638 = vmatprep.mubr.f32.mxu0 0.0
        %v3639 = vand.u32 %v2958, 4294901760
        %3640 = vmatmul.mubr.f32.gmra.mxu0 %v3639
        %v3641 = vpop.f32.mrf.mxu0
        %v3642 = vadd.f32 %v3505, %v3641
        %v3643 = vpop.f32.mrf.mxu0
        %3644 = vdwg.mxu0
        %3645 = vmatprep.subr.mxu0 0.0
        %v3646 = vand.u32 %v2974, 4294901760
        %3647 = vmatpush1.msra.mxu0 %v3646
        %3648 = vmatprep.subr.mxu0 0.0
        %v3649 = vand.u32 %v2973, 4294901760
        %3650 = vmatpush1.msra.mxu0 %v3649
        %3651 = vmatprep.subr.mxu0 0.0
        %v3652 = vand.u32 %v2972, 4294901760
        %3653 = vmatpush1.msra.mxu0 %v3652
        %3654 = vmatprep.subr.mxu0 0.0
        %v3655 = vand.u32 %v2971, 4294901760
        %3656 = vmatpush1.msra.mxu0 %v3655
        %3657 = vmatprep.subr.mxu0 0.0
        %v3658 = vand.u32 %v2970, 4294901760
        %3659 = vmatpush1.msra.mxu0 %v3658
        %3660 = vmatprep.subr.mxu0 0.0
        %v3661 = vand.u32 %v2969, 4294901760
        %3662 = vmatpush1.msra.mxu0 %v3661
        %3663 = vmatprep.subr.mxu0 0.0
        %v3664 = vand.u32 %v2968, 4294901760
        %3665 = vmatpush1.msra.mxu0 %v3664
        %3666 = vmatprep.subr.mxu0 0.0
        %v3667 = vand.u32 %v2967, 4294901760
        %3668 = vmatpush1.msra.mxu0 %v3667
        %3669 = vmatprep.subr.mxu0 0.0
        %v3670 = vand.u32 %v2966, 4294901760
        %3671 = vmatpush1.msra.mxu0 %v3670
        %3672 = vmatprep.subr.mxu0 0.0
        %v3673 = vand.u32 %v2965, 4294901760
        %3674 = vmatpush1.msra.mxu0 %v3673
        %3675 = vmatprep.subr.mxu0 0.0
        %v3676 = vand.u32 %v2964, 4294901760
        %3677 = vmatpush1.msra.mxu0 %v3676
        %3678 = vmatprep.subr.mxu0 0.0
        %v3679 = vand.u32 %v2963, 4294901760
        %3680 = vmatpush1.msra.mxu0 %v3679
        %3681 = vmatprep.subr.mxu0 0.0
        %v3682 = vand.u32 %v2962, 4294901760
        %3683 = vmatpush1.msra.mxu0 %v3682
        %3684 = vmatprep.subr.mxu0 0.0
        %v3685 = vand.u32 %v2961, 4294901760
        %3686 = vmatpush1.msra.mxu0 %v3685
        %3687 = vmatprep.subr.mxu0 0.0
        %v3688 = vand.u32 %v2960, 4294901760
        %3689 = vmatpush1.msra.mxu0 %v3688
        %3690 = vmatprep.subr.mxu0 0.0
        %v3691 = vand.u32 %v2959, 4294901760
        %3692 = vmatpush1.msra.mxu0 %v3691
        %3693 = vmatprep.subr.mxu0 0.0
        %3694 = vmatpush2.msra.mxu0 0.0
        %3695 = vmatprep.subr.mxu0 0.0
        %3696 = vmatpush2.msra.mxu0 0.0
        %3697 = vmatprep.subr.mxu0 0.0
        %3698 = vmatpush2.msra.mxu0 0.0
        %3699 = vmatprep.subr.mxu0 0.0
        %3700 = vmatpush2.msra.mxu0 0.0
        %3701 = vmatprep.subr.mxu0 0.0
        %3702 = vmatpush2.msra.mxu0 0.0
        %3703 = vmatprep.subr.mxu0 0.0
        %3704 = vmatpush2.msra.mxu0 0.0
        %3705 = vmatprep.subr.mxu0 0.0
        %3706 = vmatpush2.msra.mxu0 0.0
        %3707 = vmatprep.subr.mxu0 0.0
        %3708 = vmatpush2.msra.mxu0 0.0
        %3709 = vmatprep.subr.mxu0 0.0
        %3710 = vmatpush2.msra.mxu0 0.0
        %3711 = vmatprep.subr.mxu0 0.0
        %3712 = vmatpush2.msra.mxu0 0.0
        %3713 = vmatprep.subr.mxu0 0.0
        %3714 = vmatpush2.msra.mxu0 0.0
        %3715 = vmatprep.subr.mxu0 0.0
        %3716 = vmatpush2.msra.mxu0 0.0
        %3717 = vmatprep.subr.mxu0 0.0
        %3718 = vmatpush2.msra.mxu0 0.0
        %3719 = vmatprep.subr.mxu0 0.0
        %3720 = vmatpush2.msra.mxu0 0.0
        %3721 = vmatprep.subr.mxu0 0.0
        %3722 = vmatpush2.msra.mxu0 0.0
        %3723 = vmatprep.subr.mxu0 0.0
        %3724 = vmatpush2.msra.mxu0 0.0
        %3725 = vmatprep.mubr.f32.mxu0 0.0
        %v3726 = vand.u32 %v2955, 4294901760
        %3727 = vmatmul.mubr.f32.gmra.mxu0 %v3726
        %v3728 = vpop.f32.mrf.mxu0
        %v3729 = vadd.f32 %v3624, %v3728
        %v3730 = vpop.f32.mrf.mxu0
        %3731 = vmatprep.mubr.f32.mxu0 0.0
        %v3732 = vand.u32 %v2956, 4294901760
        %3733 = vmatmul.mubr.f32.gmra.mxu0 %v3732
        %v3734 = vpop.f32.mrf.mxu0
        %v3735 = vadd.f32 %v3630, %v3734
        %v3736 = vpop.f32.mrf.mxu0
        %3737 = vmatprep.mubr.f32.mxu0 0.0
        %v3738 = vand.u32 %v2957, 4294901760
        %3739 = vmatmul.mubr.f32.gmra.mxu0 %v3738
        %v3740 = vpop.f32.mrf.mxu0
        %v3741 = vadd.f32 %v3636, %v3740
        %v3742 = vpop.f32.mrf.mxu0
        %3743 = vmatprep.mubr.f32.mxu0 0.0
        %v3744 = vand.u32 %v2958, 4294901760
        %3745 = vmatmul.mubr.f32.gmra.mxu0 %v3744
        %v3746 = vpop.f32.mrf.mxu0
        %v3747 = vadd.f32 %v3642, %v3746
        %v3748 = vpop.f32.mrf.mxu0
        %3749 = vdwg.mxu0
        %v3750 = vld [vmem:[%s7] sm:$0xff]
        %v3751 = vld [vmem:[%s7 + $0x8] sm:$0xff]
        %v3752 = vld [vmem:[%s7 + $0x10] sm:$0xff]
        %v3753 = vld [vmem:[%s7 + $0x18] sm:$0xff]
        %v3754 = vld [vmem:[%s7 + $0x20] sm:$0xff]
        %v3755 = vld [vmem:[%s7 + $0x28] sm:$0xff]
        %v3756 = vld [vmem:[%s7 + $0x30] sm:$0xff]
        %v3757 = vld [vmem:[%s7 + $0x38] sm:$0xff]
        %v3758 = vld [vmem:[%s7 + $0x40] sm:$0xff]
        %v3759 = vld [vmem:[%s7 + $0x48] sm:$0xff]
        %v3760 = vld [vmem:[%s7 + $0x50] sm:$0xff]
        %v3761 = vld [vmem:[%s7 + $0x58] sm:$0xff]
        %v3762 = vld [vmem:[%s7 + $0x60] sm:$0xff]
        %v3763 = vld [vmem:[%s7 + $0x68] sm:$0xff]
        %v3764 = vld [vmem:[%s7 + $0x70] sm:$0xff]
        %v3765 = vld [vmem:[%s7 + $0x78] sm:$0xff]
        %v3766 = vld [vmem:[%s2 + $0xa] sm:$0x1]
        %v3767 = vlaneseq
        %v3768 = vshrl.u32 %v3767, 7
        %v3769 = vsub.s32 0, %v3768
        %v3770 = vrot.slane %v3766, %v3769
        %3771 = vmatprep.subr.mxu0 0.0
        %v3772 = vand.u32 %v3765, 4294901760
        %3773 = vmatpush1.msra.mxu0 %v3772
        %3774 = vmatprep.subr.mxu0 0.0
        %v3775 = vand.u32 %v3764, 4294901760
        %3776 = vmatpush1.msra.mxu0 %v3775
        %3777 = vmatprep.subr.mxu0 0.0
        %v3778 = vand.u32 %v3763, 4294901760
        %3779 = vmatpush1.msra.mxu0 %v3778
        %3780 = vmatprep.subr.mxu0 0.0
        %v3781 = vand.u32 %v3762, 4294901760
        %3782 = vmatpush1.msra.mxu0 %v3781
        %3783 = vmatprep.subr.mxu0 0.0
        %v3784 = vand.u32 %v3761, 4294901760
        %3785 = vmatpush1.msra.mxu0 %v3784
        %3786 = vmatprep.subr.mxu0 0.0
        %v3787 = vand.u32 %v3760, 4294901760
        %3788 = vmatpush1.msra.mxu0 %v3787
        %3789 = vmatprep.subr.mxu0 0.0
        %v3790 = vand.u32 %v3759, 4294901760
        %3791 = vmatpush1.msra.mxu0 %v3790
        %3792 = vmatprep.subr.mxu0 0.0
        %v3793 = vand.u32 %v3758, 4294901760
        %3794 = vmatpush1.msra.mxu0 %v3793
        %3795 = vmatprep.subr.mxu0 0.0
        %v3796 = vand.u32 %v3757, 4294901760
        %3797 = vmatpush1.msra.mxu0 %v3796
        %3798 = vmatprep.subr.mxu0 0.0
        %v3799 = vand.u32 %v3756, 4294901760
        %3800 = vmatpush1.msra.mxu0 %v3799
        %3801 = vmatprep.subr.mxu0 0.0
        %v3802 = vand.u32 %v3755, 4294901760
        %3803 = vmatpush1.msra.mxu0 %v3802
        %3804 = vmatprep.subr.mxu0 0.0
        %v3805 = vand.u32 %v3754, 4294901760
        %3806 = vmatpush1.msra.mxu0 %v3805
        %3807 = vmatprep.subr.mxu0 0.0
        %v3808 = vand.u32 %v3753, 4294901760
        %3809 = vmatpush1.msra.mxu0 %v3808
        %3810 = vmatprep.subr.mxu0 0.0
        %v3811 = vand.u32 %v3752, 4294901760
        %3812 = vmatpush1.msra.mxu0 %v3811
        %3813 = vmatprep.subr.mxu0 0.0
        %v3814 = vand.u32 %v3751, 4294901760
        %3815 = vmatpush1.msra.mxu0 %v3814
        %3816 = vmatprep.subr.mxu0 0.0
        %v3817 = vand.u32 %v3750, 4294901760
        %3818 = vmatpush1.msra.mxu0 %v3817
        %3819 = vmatprep.subr.mxu0 0.0
        %3820 = vmatpush2.msra.mxu0 0.0
        %3821 = vmatprep.subr.mxu0 0.0
        %3822 = vmatpush2.msra.mxu0 0.0
        %3823 = vmatprep.subr.mxu0 0.0
        %3824 = vmatpush2.msra.mxu0 0.0
        %3825 = vmatprep.subr.mxu0 0.0
        %3826 = vmatpush2.msra.mxu0 0.0
        %3827 = vmatprep.subr.mxu0 0.0
        %3828 = vmatpush2.msra.mxu0 0.0
        %3829 = vmatprep.subr.mxu0 0.0
        %3830 = vmatpush2.msra.mxu0 0.0
        %3831 = vmatprep.subr.mxu0 0.0
        %3832 = vmatpush2.msra.mxu0 0.0
        %3833 = vmatprep.subr.mxu0 0.0
        %3834 = vmatpush2.msra.mxu0 0.0
        %3835 = vmatprep.subr.mxu0 0.0
        %3836 = vmatpush2.msra.mxu0 0.0
        %3837 = vmatprep.subr.mxu0 0.0
        %3838 = vmatpush2.msra.mxu0 0.0
        %3839 = vmatprep.subr.mxu0 0.0
        %3840 = vmatpush2.msra.mxu0 0.0
        %3841 = vmatprep.subr.mxu0 0.0
        %3842 = vmatpush2.msra.mxu0 0.0
        %3843 = vmatprep.subr.mxu0 0.0
        %3844 = vmatpush2.msra.mxu0 0.0
        %3845 = vmatprep.subr.mxu0 0.0
        %3846 = vmatpush2.msra.mxu0 0.0
        %3847 = vmatprep.subr.mxu0 0.0
        %3848 = vmatpush2.msra.mxu0 0.0
        %3849 = vmatprep.subr.mxu0 0.0
        %3850 = vmatpush2.msra.mxu0 0.0
        %3851 = vmatprep.mubr.f32.mxu0 0.0
        %v3852 = vand.u32 %v2955, 4294901760
        %v3853 = vsub.f32 %v2955, %v3852
        %v3854 = vand.u32 %v3853, 4294901760
        %v3855 = vsub.f32 %v3853, %v3854
        %v3856 = vand.u32 %v3855, 4294901760
        %3857 = vmatmul.mubr.f32.gmra.mxu0 %v3856
        %v3858 = vpop.f32.mrf.mxu0
        %v3859 = vadd.f32 %v3770, %v3858
        %v3860 = vpop.f32.mrf.mxu0
        %3861 = vmatprep.mubr.f32.mxu0 0.0
        %v3862 = vand.u32 %v2956, 4294901760
        %v3863 = vsub.f32 %v2956, %v3862
        %v3864 = vand.u32 %v3863, 4294901760
        %v3865 = vsub.f32 %v3863, %v3864
        %v3866 = vand.u32 %v3865, 4294901760
        %3867 = vmatmul.mubr.f32.gmra.mxu0 %v3866
        %v3868 = vpop.f32.mrf.mxu0
        %v3869 = vadd.f32 %v3770, %v3868
        %v3870 = vpop.f32.mrf.mxu0
        %3871 = vmatprep.mubr.f32.mxu0 0.0
        %v3872 = vand.u32 %v2957, 4294901760
        %v3873 = vsub.f32 %v2957, %v3872
        %v3874 = vand.u32 %v3873, 4294901760
        %v3875 = vsub.f32 %v3873, %v3874
        %v3876 = vand.u32 %v3875, 4294901760
        %3877 = vmatmul.mubr.f32.gmra.mxu0 %v3876
        %v3878 = vpop.f32.mrf.mxu0
        %v3879 = vadd.f32 %v3770, %v3878
        %v3880 = vpop.f32.mrf.mxu0
        %3881 = vmatprep.mubr.f32.mxu0 0.0
        %v3882 = vand.u32 %v2958, 4294901760
        %v3883 = vsub.f32 %v2958, %v3882
        %v3884 = vand.u32 %v3883, 4294901760
        %v3885 = vsub.f32 %v3883, %v3884
        %v3886 = vand.u32 %v3885, 4294901760
        %3887 = vmatmul.mubr.f32.gmra.mxu0 %v3886
        %v3888 = vpop.f32.mrf.mxu0
        %v3889 = vadd.f32 %v3770, %v3888
        %v3890 = vpop.f32.mrf.mxu0
        %3891 = vdwg.mxu0
        %3892 = vmatprep.subr.mxu0 0.0
        %v3893 = vand.u32 %v3765, 4294901760
        %v3894 = vsub.f32 %v3765, %v3893
        %v3895 = vand.u32 %v3894, 4294901760
        %v3896 = vsub.f32 %v3894, %v3895
        %v3897 = vand.u32 %v3896, 4294901760
        %3898 = vmatpush1.msra.mxu0 %v3897
        %3899 = vmatprep.subr.mxu0 0.0
        %v3900 = vand.u32 %v3764, 4294901760
        %v3901 = vsub.f32 %v3764, %v3900
        %v3902 = vand.u32 %v3901, 4294901760
        %v3903 = vsub.f32 %v3901, %v3902
        %v3904 = vand.u32 %v3903, 4294901760
        %3905 = vmatpush1.msra.mxu0 %v3904
        %3906 = vmatprep.subr.mxu0 0.0
        %v3907 = vand.u32 %v3763, 4294901760
        %v3908 = vsub.f32 %v3763, %v3907
        %v3909 = vand.u32 %v3908, 4294901760
        %v3910 = vsub.f32 %v3908, %v3909
        %v3911 = vand.u32 %v3910, 4294901760
        %3912 = vmatpush1.msra.mxu0 %v3911
        %3913 = vmatprep.subr.mxu0 0.0
        %v3914 = vand.u32 %v3762, 4294901760
        %v3915 = vsub.f32 %v3762, %v3914
        %v3916 = vand.u32 %v3915, 4294901760
        %v3917 = vsub.f32 %v3915, %v3916
        %v3918 = vand.u32 %v3917, 4294901760
        %3919 = vmatpush1.msra.mxu0 %v3918
        %3920 = vmatprep.subr.mxu0 0.0
        %v3921 = vand.u32 %v3761, 4294901760
        %v3922 = vsub.f32 %v3761, %v3921
        %v3923 = vand.u32 %v3922, 4294901760
        %v3924 = vsub.f32 %v3922, %v3923
        %v3925 = vand.u32 %v3924, 4294901760
        %3926 = vmatpush1.msra.mxu0 %v3925
        %3927 = vmatprep.subr.mxu0 0.0
        %v3928 = vand.u32 %v3760, 4294901760
        %v3929 = vsub.f32 %v3760, %v3928
        %v3930 = vand.u32 %v3929, 4294901760
        %v3931 = vsub.f32 %v3929, %v3930
        %v3932 = vand.u32 %v3931, 4294901760
        %3933 = vmatpush1.msra.mxu0 %v3932
        %3934 = vmatprep.subr.mxu0 0.0
        %v3935 = vand.u32 %v3759, 4294901760
        %v3936 = vsub.f32 %v3759, %v3935
        %v3937 = vand.u32 %v3936, 4294901760
        %v3938 = vsub.f32 %v3936, %v3937
        %v3939 = vand.u32 %v3938, 4294901760
        %3940 = vmatpush1.msra.mxu0 %v3939
        %3941 = vmatprep.subr.mxu0 0.0
        %v3942 = vand.u32 %v3758, 4294901760
        %v3943 = vsub.f32 %v3758, %v3942
        %v3944 = vand.u32 %v3943, 4294901760
        %v3945 = vsub.f32 %v3943, %v3944
        %v3946 = vand.u32 %v3945, 4294901760
        %3947 = vmatpush1.msra.mxu0 %v3946
        %3948 = vmatprep.subr.mxu0 0.0
        %v3949 = vand.u32 %v3757, 4294901760
        %v3950 = vsub.f32 %v3757, %v3949
        %v3951 = vand.u32 %v3950, 4294901760
        %v3952 = vsub.f32 %v3950, %v3951
        %v3953 = vand.u32 %v3952, 4294901760
        %3954 = vmatpush1.msra.mxu0 %v3953
        %3955 = vmatprep.subr.mxu0 0.0
        %v3956 = vand.u32 %v3756, 4294901760
        %v3957 = vsub.f32 %v3756, %v3956
        %v3958 = vand.u32 %v3957, 4294901760
        %v3959 = vsub.f32 %v3957, %v3958
        %v3960 = vand.u32 %v3959, 4294901760
        %3961 = vmatpush1.msra.mxu0 %v3960
        %3962 = vmatprep.subr.mxu0 0.0
        %v3963 = vand.u32 %v3755, 4294901760
        %v3964 = vsub.f32 %v3755, %v3963
        %v3965 = vand.u32 %v3964, 4294901760
        %v3966 = vsub.f32 %v3964, %v3965
        %v3967 = vand.u32 %v3966, 4294901760
        %3968 = vmatpush1.msra.mxu0 %v3967
        %3969 = vmatprep.subr.mxu0 0.0
        %v3970 = vand.u32 %v3754, 4294901760
        %v3971 = vsub.f32 %v3754, %v3970
        %v3972 = vand.u32 %v3971, 4294901760
        %v3973 = vsub.f32 %v3971, %v3972
        %v3974 = vand.u32 %v3973, 4294901760
        %3975 = vmatpush1.msra.mxu0 %v3974
        %3976 = vmatprep.subr.mxu0 0.0
        %v3977 = vand.u32 %v3753, 4294901760
        %v3978 = vsub.f32 %v3753, %v3977
        %v3979 = vand.u32 %v3978, 4294901760
        %v3980 = vsub.f32 %v3978, %v3979
        %v3981 = vand.u32 %v3980, 4294901760
        %3982 = vmatpush1.msra.mxu0 %v3981
        %3983 = vmatprep.subr.mxu0 0.0
        %v3984 = vand.u32 %v3752, 4294901760
        %v3985 = vsub.f32 %v3752, %v3984
        %v3986 = vand.u32 %v3985, 4294901760
        %v3987 = vsub.f32 %v3985, %v3986
        %v3988 = vand.u32 %v3987, 4294901760
        %3989 = vmatpush1.msra.mxu0 %v3988
        %3990 = vmatprep.subr.mxu0 0.0
        %v3991 = vand.u32 %v3751, 4294901760
        %v3992 = vsub.f32 %v3751, %v3991
        %v3993 = vand.u32 %v3992, 4294901760
        %v3994 = vsub.f32 %v3992, %v3993
        %v3995 = vand.u32 %v3994, 4294901760
        %3996 = vmatpush1.msra.mxu0 %v3995
        %3997 = vmatprep.subr.mxu0 0.0
        %v3998 = vand.u32 %v3750, 4294901760
        %v3999 = vsub.f32 %v3750, %v3998
        %v4000 = vand.u32 %v3999, 4294901760
        %v4001 = vsub.f32 %v3999, %v4000
        %v4002 = vand.u32 %v4001, 4294901760
        %4003 = vmatpush1.msra.mxu0 %v4002
        %4004 = vmatprep.subr.mxu0 0.0
        %4005 = vmatpush2.msra.mxu0 0.0
        %4006 = vmatprep.subr.mxu0 0.0
        %4007 = vmatpush2.msra.mxu0 0.0
        %4008 = vmatprep.subr.mxu0 0.0
        %4009 = vmatpush2.msra.mxu0 0.0
        %4010 = vmatprep.subr.mxu0 0.0
        %4011 = vmatpush2.msra.mxu0 0.0
        %4012 = vmatprep.subr.mxu0 0.0
        %4013 = vmatpush2.msra.mxu0 0.0
        %4014 = vmatprep.subr.mxu0 0.0
        %4015 = vmatpush2.msra.mxu0 0.0
        %4016 = vmatprep.subr.mxu0 0.0
        %4017 = vmatpush2.msra.mxu0 0.0
        %4018 = vmatprep.subr.mxu0 0.0
        %4019 = vmatpush2.msra.mxu0 0.0
        %4020 = vmatprep.subr.mxu0 0.0
        %4021 = vmatpush2.msra.mxu0 0.0
        %4022 = vmatprep.subr.mxu0 0.0
        %4023 = vmatpush2.msra.mxu0 0.0
        %4024 = vmatprep.subr.mxu0 0.0
        %4025 = vmatpush2.msra.mxu0 0.0
        %4026 = vmatprep.subr.mxu0 0.0
        %4027 = vmatpush2.msra.mxu0 0.0
        %4028 = vmatprep.subr.mxu0 0.0
        %4029 = vmatpush2.msra.mxu0 0.0
        %4030 = vmatprep.subr.mxu0 0.0
        %4031 = vmatpush2.msra.mxu0 0.0
        %4032 = vmatprep.subr.mxu0 0.0
        %4033 = vmatpush2.msra.mxu0 0.0
        %4034 = vmatprep.subr.mxu0 0.0
        %4035 = vmatpush2.msra.mxu0 0.0
        %4036 = vmatprep.mubr.f32.mxu0 0.0
        %v4037 = vand.u32 %v2955, 4294901760
        %4038 = vmatmul.mubr.f32.gmra.mxu0 %v4037
        %v4039 = vpop.f32.mrf.mxu0
        %v4040 = vadd.f32 %v3859, %v4039
        %v4041 = vpop.f32.mrf.mxu0
        %4042 = vmatprep.mubr.f32.mxu0 0.0
        %v4043 = vand.u32 %v2956, 4294901760
        %4044 = vmatmul.mubr.f32.gmra.mxu0 %v4043
        %v4045 = vpop.f32.mrf.mxu0
        %v4046 = vadd.f32 %v3869, %v4045
        %v4047 = vpop.f32.mrf.mxu0
        %4048 = vmatprep.mubr.f32.mxu0 0.0
        %v4049 = vand.u32 %v2957, 4294901760
        %4050 = vmatmul.mubr.f32.gmra.mxu0 %v4049
        %v4051 = vpop.f32.mrf.mxu0
        %v4052 = vadd.f32 %v3879, %v4051
        %v4053 = vpop.f32.mrf.mxu0
        %4054 = vmatprep.mubr.f32.mxu0 0.0
        %v4055 = vand.u32 %v2958, 4294901760
        %4056 = vmatmul.mubr.f32.gmra.mxu0 %v4055
        %v4057 = vpop.f32.mrf.mxu0
        %v4058 = vadd.f32 %v3889, %v4057
        %v4059 = vpop.f32.mrf.mxu0
        %4060 = vdwg.mxu0
        %4061 = vmatprep.subr.mxu0 0.0
        %v4062 = vand.u32 %v3765, 4294901760
        %v4063 = vsub.f32 %v3765, %v4062
        %4064 = vmatpush1.msra.mxu0 %v4063
        %4065 = vmatprep.subr.mxu0 0.0
        %v4066 = vand.u32 %v3764, 4294901760
        %v4067 = vsub.f32 %v3764, %v4066
        %4068 = vmatpush1.msra.mxu0 %v4067
        %4069 = vmatprep.subr.mxu0 0.0
        %v4070 = vand.u32 %v3763, 4294901760
        %v4071 = vsub.f32 %v3763, %v4070
        %4072 = vmatpush1.msra.mxu0 %v4071
        %4073 = vmatprep.subr.mxu0 0.0
        %v4074 = vand.u32 %v3762, 4294901760
        %v4075 = vsub.f32 %v3762, %v4074
        %4076 = vmatpush1.msra.mxu0 %v4075
        %4077 = vmatprep.subr.mxu0 0.0
        %v4078 = vand.u32 %v3761, 4294901760
        %v4079 = vsub.f32 %v3761, %v4078
        %4080 = vmatpush1.msra.mxu0 %v4079
        %4081 = vmatprep.subr.mxu0 0.0
        %v4082 = vand.u32 %v3760, 4294901760
        %v4083 = vsub.f32 %v3760, %v4082
        %4084 = vmatpush1.msra.mxu0 %v4083
        %4085 = vmatprep.subr.mxu0 0.0
        %v4086 = vand.u32 %v3759, 4294901760
        %v4087 = vsub.f32 %v3759, %v4086
        %4088 = vmatpush1.msra.mxu0 %v4087
        %4089 = vmatprep.subr.mxu0 0.0
        %v4090 = vand.u32 %v3758, 4294901760
        %v4091 = vsub.f32 %v3758, %v4090
        %4092 = vmatpush1.msra.mxu0 %v4091
        %4093 = vmatprep.subr.mxu0 0.0
        %v4094 = vand.u32 %v3757, 4294901760
        %v4095 = vsub.f32 %v3757, %v4094
        %4096 = vmatpush1.msra.mxu0 %v4095
        %4097 = vmatprep.subr.mxu0 0.0
        %v4098 = vand.u32 %v3756, 4294901760
        %v4099 = vsub.f32 %v3756, %v4098
        %4100 = vmatpush1.msra.mxu0 %v4099
        %4101 = vmatprep.subr.mxu0 0.0
        %v4102 = vand.u32 %v3755, 4294901760
        %v4103 = vsub.f32 %v3755, %v4102
        %4104 = vmatpush1.msra.mxu0 %v4103
        %4105 = vmatprep.subr.mxu0 0.0
        %v4106 = vand.u32 %v3754, 4294901760
        %v4107 = vsub.f32 %v3754, %v4106
        %4108 = vmatpush1.msra.mxu0 %v4107
        %4109 = vmatprep.subr.mxu0 0.0
        %v4110 = vand.u32 %v3753, 4294901760
        %v4111 = vsub.f32 %v3753, %v4110
        %4112 = vmatpush1.msra.mxu0 %v4111
        %4113 = vmatprep.subr.mxu0 0.0
        %v4114 = vand.u32 %v3752, 4294901760
        %v4115 = vsub.f32 %v3752, %v4114
        %4116 = vmatpush1.msra.mxu0 %v4115
        %4117 = vmatprep.subr.mxu0 0.0
        %v4118 = vand.u32 %v3751, 4294901760
        %v4119 = vsub.f32 %v3751, %v4118
        %4120 = vmatpush1.msra.mxu0 %v4119
        %4121 = vmatprep.subr.mxu0 0.0
        %v4122 = vand.u32 %v3750, 4294901760
        %v4123 = vsub.f32 %v3750, %v4122
        %4124 = vmatpush1.msra.mxu0 %v4123
        %4125 = vmatprep.subr.mxu0 0.0
        %4126 = vmatpush2.msra.mxu0 0.0
        %4127 = vmatprep.subr.mxu0 0.0
        %4128 = vmatpush2.msra.mxu0 0.0
        %4129 = vmatprep.subr.mxu0 0.0
        %4130 = vmatpush2.msra.mxu0 0.0
        %4131 = vmatprep.subr.mxu0 0.0
        %4132 = vmatpush2.msra.mxu0 0.0
        %4133 = vmatprep.subr.mxu0 0.0
        %4134 = vmatpush2.msra.mxu0 0.0
        %4135 = vmatprep.subr.mxu0 0.0
        %4136 = vmatpush2.msra.mxu0 0.0
        %4137 = vmatprep.subr.mxu0 0.0
        %4138 = vmatpush2.msra.mxu0 0.0
        %4139 = vmatprep.subr.mxu0 0.0
        %4140 = vmatpush2.msra.mxu0 0.0
        %4141 = vmatprep.subr.mxu0 0.0
        %4142 = vmatpush2.msra.mxu0 0.0
        %4143 = vmatprep.subr.mxu0 0.0
        %4144 = vmatpush2.msra.mxu0 0.0
        %4145 = vmatprep.subr.mxu0 0.0
        %4146 = vmatpush2.msra.mxu0 0.0
        %4147 = vmatprep.subr.mxu0 0.0
        %4148 = vmatpush2.msra.mxu0 0.0
        %4149 = vmatprep.subr.mxu0 0.0
        %4150 = vmatpush2.msra.mxu0 0.0
        %4151 = vmatprep.subr.mxu0 0.0
        %4152 = vmatpush2.msra.mxu0 0.0
        %4153 = vmatprep.subr.mxu0 0.0
        %4154 = vmatpush2.msra.mxu0 0.0
        %4155 = vmatprep.subr.mxu0 0.0
        %4156 = vmatpush2.msra.mxu0 0.0
        %4157 = vmatprep.mubr.f32.mxu0 0.0
        %v4158 = vand.u32 %v2955, 4294901760
        %v4159 = vsub.f32 %v2955, %v4158
        %4160 = vmatmul.mubr.f32.gmra.mxu0 %v4159
        %v4161 = vpop.f32.mrf.mxu0
        %v4162 = vadd.f32 %v4040, %v4161
        %v4163 = vpop.f32.mrf.mxu0
        %4164 = vmatprep.mubr.f32.mxu0 0.0
        %v4165 = vand.u32 %v2956, 4294901760
        %v4166 = vsub.f32 %v2956, %v4165
        %4167 = vmatmul.mubr.f32.gmra.mxu0 %v4166
        %v4168 = vpop.f32.mrf.mxu0
        %v4169 = vadd.f32 %v4046, %v4168
        %v4170 = vpop.f32.mrf.mxu0
        %4171 = vmatprep.mubr.f32.mxu0 0.0
        %v4172 = vand.u32 %v2957, 4294901760
        %v4173 = vsub.f32 %v2957, %v4172
        %4174 = vmatmul.mubr.f32.gmra.mxu0 %v4173
        %v4175 = vpop.f32.mrf.mxu0
        %v4176 = vadd.f32 %v4052, %v4175
        %v4177 = vpop.f32.mrf.mxu0
        %4178 = vmatprep.mubr.f32.mxu0 0.0
        %v4179 = vand.u32 %v2958, 4294901760
        %v4180 = vsub.f32 %v2958, %v4179
        %4181 = vmatmul.mubr.f32.gmra.mxu0 %v4180
        %v4182 = vpop.f32.mrf.mxu0
        %v4183 = vadd.f32 %v4058, %v4182
        %v4184 = vpop.f32.mrf.mxu0
        %4185 = vdwg.mxu0
        %4186 = vmatprep.subr.mxu0 0.0
        %v4187 = vand.u32 %v3765, 4294901760
        %4188 = vmatpush1.msra.mxu0 %v4187
        %4189 = vmatprep.subr.mxu0 0.0
        %v4190 = vand.u32 %v3764, 4294901760
        %4191 = vmatpush1.msra.mxu0 %v4190
        %4192 = vmatprep.subr.mxu0 0.0
        %v4193 = vand.u32 %v3763, 4294901760
        %4194 = vmatpush1.msra.mxu0 %v4193
        %4195 = vmatprep.subr.mxu0 0.0
        %v4196 = vand.u32 %v3762, 4294901760
        %4197 = vmatpush1.msra.mxu0 %v4196
        %4198 = vmatprep.subr.mxu0 0.0
        %v4199 = vand.u32 %v3761, 4294901760
        %4200 = vmatpush1.msra.mxu0 %v4199
        %4201 = vmatprep.subr.mxu0 0.0
        %v4202 = vand.u32 %v3760, 4294901760
        %4203 = vmatpush1.msra.mxu0 %v4202
        %4204 = vmatprep.subr.mxu0 0.0
        %v4205 = vand.u32 %v3759, 4294901760
        %4206 = vmatpush1.msra.mxu0 %v4205
        %4207 = vmatprep.subr.mxu0 0.0
        %v4208 = vand.u32 %v3758, 4294901760
        %4209 = vmatpush1.msra.mxu0 %v4208
        %4210 = vmatprep.subr.mxu0 0.0
        %v4211 = vand.u32 %v3757, 4294901760
        %4212 = vmatpush1.msra.mxu0 %v4211
        %4213 = vmatprep.subr.mxu0 0.0
        %v4214 = vand.u32 %v3756, 4294901760
        %4215 = vmatpush1.msra.mxu0 %v4214
        %4216 = vmatprep.subr.mxu0 0.0
        %v4217 = vand.u32 %v3755, 4294901760
        %4218 = vmatpush1.msra.mxu0 %v4217
        %4219 = vmatprep.subr.mxu0 0.0
        %v4220 = vand.u32 %v3754, 4294901760
        %4221 = vmatpush1.msra.mxu0 %v4220
        %4222 = vmatprep.subr.mxu0 0.0
        %v4223 = vand.u32 %v3753, 4294901760
        %4224 = vmatpush1.msra.mxu0 %v4223
        %4225 = vmatprep.subr.mxu0 0.0
        %v4226 = vand.u32 %v3752, 4294901760
        %4227 = vmatpush1.msra.mxu0 %v4226
        %4228 = vmatprep.subr.mxu0 0.0
        %v4229 = vand.u32 %v3751, 4294901760
        %4230 = vmatpush1.msra.mxu0 %v4229
        %4231 = vmatprep.subr.mxu0 0.0
        %v4232 = vand.u32 %v3750, 4294901760
        %4233 = vmatpush1.msra.mxu0 %v4232
        %4234 = vmatprep.subr.mxu0 0.0
        %4235 = vmatpush2.msra.mxu0 0.0
        %4236 = vmatprep.subr.mxu0 0.0
        %4237 = vmatpush2.msra.mxu0 0.0
        %4238 = vmatprep.subr.mxu0 0.0
        %4239 = vmatpush2.msra.mxu0 0.0
        %4240 = vmatprep.subr.mxu0 0.0
        %4241 = vmatpush2.msra.mxu0 0.0
        %4242 = vmatprep.subr.mxu0 0.0
        %4243 = vmatpush2.msra.mxu0 0.0
        %4244 = vmatprep.subr.mxu0 0.0
        %4245 = vmatpush2.msra.mxu0 0.0
        %4246 = vmatprep.subr.mxu0 0.0
        %4247 = vmatpush2.msra.mxu0 0.0
        %4248 = vmatprep.subr.mxu0 0.0
        %4249 = vmatpush2.msra.mxu0 0.0
        %4250 = vmatprep.subr.mxu0 0.0
        %4251 = vmatpush2.msra.mxu0 0.0
        %4252 = vmatprep.subr.mxu0 0.0
        %4253 = vmatpush2.msra.mxu0 0.0
        %4254 = vmatprep.subr.mxu0 0.0
        %4255 = vmatpush2.msra.mxu0 0.0
        %4256 = vmatprep.subr.mxu0 0.0
        %4257 = vmatpush2.msra.mxu0 0.0
        %4258 = vmatprep.subr.mxu0 0.0
        %4259 = vmatpush2.msra.mxu0 0.0
        %4260 = vmatprep.subr.mxu0 0.0
        %4261 = vmatpush2.msra.mxu0 0.0
        %4262 = vmatprep.subr.mxu0 0.0
        %4263 = vmatpush2.msra.mxu0 0.0
        %4264 = vmatprep.subr.mxu0 0.0
        %4265 = vmatpush2.msra.mxu0 0.0
        %4266 = vmatprep.mubr.f32.mxu0 0.0
        %v4267 = vand.u32 %v2955, 4294901760
        %v4268 = vsub.f32 %v2955, %v4267
        %v4269 = vand.u32 %v4268, 4294901760
        %4270 = vmatmul.mubr.f32.gmra.mxu0 %v4269
        %v4271 = vpop.f32.mrf.mxu0
        %v4272 = vadd.f32 %v4162, %v4271
        %v4273 = vpop.f32.mrf.mxu0
        %4274 = vmatprep.mubr.f32.mxu0 0.0
        %v4275 = vand.u32 %v2956, 4294901760
        %v4276 = vsub.f32 %v2956, %v4275
        %v4277 = vand.u32 %v4276, 4294901760
        %4278 = vmatmul.mubr.f32.gmra.mxu0 %v4277
        %v4279 = vpop.f32.mrf.mxu0
        %v4280 = vadd.f32 %v4169, %v4279
        %v4281 = vpop.f32.mrf.mxu0
        %4282 = vmatprep.mubr.f32.mxu0 0.0
        %v4283 = vand.u32 %v2957, 4294901760
        %v4284 = vsub.f32 %v2957, %v4283
        %v4285 = vand.u32 %v4284, 4294901760
        %4286 = vmatmul.mubr.f32.gmra.mxu0 %v4285
        %v4287 = vpop.f32.mrf.mxu0
        %v4288 = vadd.f32 %v4176, %v4287
        %v4289 = vpop.f32.mrf.mxu0
        %4290 = vmatprep.mubr.f32.mxu0 0.0
        %v4291 = vand.u32 %v2958, 4294901760
        %v4292 = vsub.f32 %v2958, %v4291
        %v4293 = vand.u32 %v4292, 4294901760
        %4294 = vmatmul.mubr.f32.gmra.mxu0 %v4293
        %v4295 = vpop.f32.mrf.mxu0
        %v4296 = vadd.f32 %v4183, %v4295
        %v4297 = vpop.f32.mrf.mxu0
        %4298 = vdwg.mxu0
        %4299 = vmatprep.subr.mxu0 0.0
        %v4300 = vand.u32 %v3765, 4294901760
        %v4301 = vsub.f32 %v3765, %v4300
        %v4302 = vand.u32 %v4301, 4294901760
        %4303 = vmatpush1.msra.mxu0 %v4302
        %4304 = vmatprep.subr.mxu0 0.0
        %v4305 = vand.u32 %v3764, 4294901760
        %v4306 = vsub.f32 %v3764, %v4305
        %v4307 = vand.u32 %v4306, 4294901760
        %4308 = vmatpush1.msra.mxu0 %v4307
        %4309 = vmatprep.subr.mxu0 0.0
        %v4310 = vand.u32 %v3763, 4294901760
        %v4311 = vsub.f32 %v3763, %v4310
        %v4312 = vand.u32 %v4311, 4294901760
        %4313 = vmatpush1.msra.mxu0 %v4312
        %4314 = vmatprep.subr.mxu0 0.0
        %v4315 = vand.u32 %v3762, 4294901760
        %v4316 = vsub.f32 %v3762, %v4315
        %v4317 = vand.u32 %v4316, 4294901760
        %4318 = vmatpush1.msra.mxu0 %v4317
        %4319 = vmatprep.subr.mxu0 0.0
        %v4320 = vand.u32 %v3761, 4294901760
        %v4321 = vsub.f32 %v3761, %v4320
        %v4322 = vand.u32 %v4321, 4294901760
        %4323 = vmatpush1.msra.mxu0 %v4322
        %4324 = vmatprep.subr.mxu0 0.0
        %v4325 = vand.u32 %v3760, 4294901760
        %v4326 = vsub.f32 %v3760, %v4325
        %v4327 = vand.u32 %v4326, 4294901760
        %4328 = vmatpush1.msra.mxu0 %v4327
        %4329 = vmatprep.subr.mxu0 0.0
        %v4330 = vand.u32 %v3759, 4294901760
        %v4331 = vsub.f32 %v3759, %v4330
        %v4332 = vand.u32 %v4331, 4294901760
        %4333 = vmatpush1.msra.mxu0 %v4332
        %4334 = vmatprep.subr.mxu0 0.0
        %v4335 = vand.u32 %v3758, 4294901760
        %v4336 = vsub.f32 %v3758, %v4335
        %v4337 = vand.u32 %v4336, 4294901760
        %4338 = vmatpush1.msra.mxu0 %v4337
        %4339 = vmatprep.subr.mxu0 0.0
        %v4340 = vand.u32 %v3757, 4294901760
        %v4341 = vsub.f32 %v3757, %v4340
        %v4342 = vand.u32 %v4341, 4294901760
        %4343 = vmatpush1.msra.mxu0 %v4342
        %4344 = vmatprep.subr.mxu0 0.0
        %v4345 = vand.u32 %v3756, 4294901760
        %v4346 = vsub.f32 %v3756, %v4345
        %v4347 = vand.u32 %v4346, 4294901760
        %4348 = vmatpush1.msra.mxu0 %v4347
        %4349 = vmatprep.subr.mxu0 0.0
        %v4350 = vand.u32 %v3755, 4294901760
        %v4351 = vsub.f32 %v3755, %v4350
        %v4352 = vand.u32 %v4351, 4294901760
        %4353 = vmatpush1.msra.mxu0 %v4352
        %4354 = vmatprep.subr.mxu0 0.0
        %v4355 = vand.u32 %v3754, 4294901760
        %v4356 = vsub.f32 %v3754, %v4355
        %v4357 = vand.u32 %v4356, 4294901760
        %4358 = vmatpush1.msra.mxu0 %v4357
        %4359 = vmatprep.subr.mxu0 0.0
        %v4360 = vand.u32 %v3753, 4294901760
        %v4361 = vsub.f32 %v3753, %v4360
        %v4362 = vand.u32 %v4361, 4294901760
        %4363 = vmatpush1.msra.mxu0 %v4362
        %4364 = vmatprep.subr.mxu0 0.0
        %v4365 = vand.u32 %v3752, 4294901760
        %v4366 = vsub.f32 %v3752, %v4365
        %v4367 = vand.u32 %v4366, 4294901760
        %4368 = vmatpush1.msra.mxu0 %v4367
        %4369 = vmatprep.subr.mxu0 0.0
        %v4370 = vand.u32 %v3751, 4294901760
        %v4371 = vsub.f32 %v3751, %v4370
        %v4372 = vand.u32 %v4371, 4294901760
        %4373 = vmatpush1.msra.mxu0 %v4372
        %4374 = vmatprep.subr.mxu0 0.0
        %v4375 = vand.u32 %v3750, 4294901760
        %v4376 = vsub.f32 %v3750, %v4375
        %v4377 = vand.u32 %v4376, 4294901760
        %4378 = vmatpush1.msra.mxu0 %v4377
        %4379 = vmatprep.subr.mxu0 0.0
        %4380 = vmatpush2.msra.mxu0 0.0
        %4381 = vmatprep.subr.mxu0 0.0
        %4382 = vmatpush2.msra.mxu0 0.0
        %4383 = vmatprep.subr.mxu0 0.0
        %4384 = vmatpush2.msra.mxu0 0.0
        %4385 = vmatprep.subr.mxu0 0.0
        %4386 = vmatpush2.msra.mxu0 0.0
        %4387 = vmatprep.subr.mxu0 0.0
        %4388 = vmatpush2.msra.mxu0 0.0
        %4389 = vmatprep.subr.mxu0 0.0
        %4390 = vmatpush2.msra.mxu0 0.0
        %4391 = vmatprep.subr.mxu0 0.0
        %4392 = vmatpush2.msra.mxu0 0.0
        %4393 = vmatprep.subr.mxu0 0.0
        %4394 = vmatpush2.msra.mxu0 0.0
        %4395 = vmatprep.subr.mxu0 0.0
        %4396 = vmatpush2.msra.mxu0 0.0
        %4397 = vmatprep.subr.mxu0 0.0
        %4398 = vmatpush2.msra.mxu0 0.0
        %4399 = vmatprep.subr.mxu0 0.0
        %4400 = vmatpush2.msra.mxu0 0.0
        %4401 = vmatprep.subr.mxu0 0.0
        %4402 = vmatpush2.msra.mxu0 0.0
        %4403 = vmatprep.subr.mxu0 0.0
        %4404 = vmatpush2.msra.mxu0 0.0
        %4405 = vmatprep.subr.mxu0 0.0
        %4406 = vmatpush2.msra.mxu0 0.0
        %4407 = vmatprep.subr.mxu0 0.0
        %4408 = vmatpush2.msra.mxu0 0.0
        %4409 = vmatprep.subr.mxu0 0.0
        %4410 = vmatpush2.msra.mxu0 0.0
        %4411 = vmatprep.mubr.f32.mxu0 0.0
        %v4412 = vand.u32 %v2955, 4294901760
        %4413 = vmatmul.mubr.f32.gmra.mxu0 %v4412
        %v4414 = vpop.f32.mrf.mxu0
        %v4415 = vadd.f32 %v4272, %v4414
        %v4416 = vpop.f32.mrf.mxu0
        %4417 = vmatprep.mubr.f32.mxu0 0.0
        %v4418 = vand.u32 %v2956, 4294901760
        %4419 = vmatmul.mubr.f32.gmra.mxu0 %v4418
        %v4420 = vpop.f32.mrf.mxu0
        %v4421 = vadd.f32 %v4280, %v4420
        %v4422 = vpop.f32.mrf.mxu0
        %4423 = vmatprep.mubr.f32.mxu0 0.0
        %v4424 = vand.u32 %v2957, 4294901760
        %4425 = vmatmul.mubr.f32.gmra.mxu0 %v4424
        %v4426 = vpop.f32.mrf.mxu0
        %v4427 = vadd.f32 %v4288, %v4426
        %v4428 = vpop.f32.mrf.mxu0
        %4429 = vmatprep.mubr.f32.mxu0 0.0
        %v4430 = vand.u32 %v2958, 4294901760
        %4431 = vmatmul.mubr.f32.gmra.mxu0 %v4430
        %v4432 = vpop.f32.mrf.mxu0
        %v4433 = vadd.f32 %v4296, %v4432
        %v4434 = vpop.f32.mrf.mxu0
        %4435 = vdwg.mxu0
        %4436 = vmatprep.subr.mxu0 0.0
        %v4437 = vand.u32 %v3765, 4294901760
        %4438 = vmatpush1.msra.mxu0 %v4437
        %4439 = vmatprep.subr.mxu0 0.0
        %v4440 = vand.u32 %v3764, 4294901760
        %4441 = vmatpush1.msra.mxu0 %v4440
        %4442 = vmatprep.subr.mxu0 0.0
        %v4443 = vand.u32 %v3763, 4294901760
        %4444 = vmatpush1.msra.mxu0 %v4443
        %4445 = vmatprep.subr.mxu0 0.0
        %v4446 = vand.u32 %v3762, 4294901760
        %4447 = vmatpush1.msra.mxu0 %v4446
        %4448 = vmatprep.subr.mxu0 0.0
        %v4449 = vand.u32 %v3761, 4294901760
        %4450 = vmatpush1.msra.mxu0 %v4449
        %4451 = vmatprep.subr.mxu0 0.0
        %v4452 = vand.u32 %v3760, 4294901760
        %4453 = vmatpush1.msra.mxu0 %v4452
        %4454 = vmatprep.subr.mxu0 0.0
        %v4455 = vand.u32 %v3759, 4294901760
        %4456 = vmatpush1.msra.mxu0 %v4455
        %4457 = vmatprep.subr.mxu0 0.0
        %v4458 = vand.u32 %v3758, 4294901760
        %4459 = vmatpush1.msra.mxu0 %v4458
        %4460 = vmatprep.subr.mxu0 0.0
        %v4461 = vand.u32 %v3757, 4294901760
        %4462 = vmatpush1.msra.mxu0 %v4461
        %4463 = vmatprep.subr.mxu0 0.0
        %v4464 = vand.u32 %v3756, 4294901760
        %4465 = vmatpush1.msra.mxu0 %v4464
        %4466 = vmatprep.subr.mxu0 0.0
        %v4467 = vand.u32 %v3755, 4294901760
        %4468 = vmatpush1.msra.mxu0 %v4467
        %4469 = vmatprep.subr.mxu0 0.0
        %v4470 = vand.u32 %v3754, 4294901760
        %4471 = vmatpush1.msra.mxu0 %v4470
        %4472 = vmatprep.subr.mxu0 0.0
        %v4473 = vand.u32 %v3753, 4294901760
        %4474 = vmatpush1.msra.mxu0 %v4473
        %4475 = vmatprep.subr.mxu0 0.0
        %v4476 = vand.u32 %v3752, 4294901760
        %4477 = vmatpush1.msra.mxu0 %v4476
        %4478 = vmatprep.subr.mxu0 0.0
        %v4479 = vand.u32 %v3751, 4294901760
        %4480 = vmatpush1.msra.mxu0 %v4479
        %4481 = vmatprep.subr.mxu0 0.0
        %v4482 = vand.u32 %v3750, 4294901760
        %4483 = vmatpush1.msra.mxu0 %v4482
        %4484 = vmatprep.subr.mxu0 0.0
        %4485 = vmatpush2.msra.mxu0 0.0
        %4486 = vmatprep.subr.mxu0 0.0
        %4487 = vmatpush2.msra.mxu0 0.0
        %4488 = vmatprep.subr.mxu0 0.0
        %4489 = vmatpush2.msra.mxu0 0.0
        %4490 = vmatprep.subr.mxu0 0.0
        %4491 = vmatpush2.msra.mxu0 0.0
        %4492 = vmatprep.subr.mxu0 0.0
        %4493 = vmatpush2.msra.mxu0 0.0
        %4494 = vmatprep.subr.mxu0 0.0
        %4495 = vmatpush2.msra.mxu0 0.0
        %4496 = vmatprep.subr.mxu0 0.0
        %4497 = vmatpush2.msra.mxu0 0.0
        %4498 = vmatprep.subr.mxu0 0.0
        %4499 = vmatpush2.msra.mxu0 0.0
        %4500 = vmatprep.subr.mxu0 0.0
        %4501 = vmatpush2.msra.mxu0 0.0
        %4502 = vmatprep.subr.mxu0 0.0
        %4503 = vmatpush2.msra.mxu0 0.0
        %4504 = vmatprep.subr.mxu0 0.0
        %4505 = vmatpush2.msra.mxu0 0.0
        %4506 = vmatprep.subr.mxu0 0.0
        %4507 = vmatpush2.msra.mxu0 0.0
        %4508 = vmatprep.subr.mxu0 0.0
        %4509 = vmatpush2.msra.mxu0 0.0
        %4510 = vmatprep.subr.mxu0 0.0
        %4511 = vmatpush2.msra.mxu0 0.0
        %4512 = vmatprep.subr.mxu0 0.0
        %4513 = vmatpush2.msra.mxu0 0.0
        %4514 = vmatprep.subr.mxu0 0.0
        %4515 = vmatpush2.msra.mxu0 0.0
        %4516 = vmatprep.mubr.f32.mxu0 0.0
        %v4517 = vand.u32 %v2955, 4294901760
        %4518 = vmatmul.mubr.f32.gmra.mxu0 %v4517
        %v4519 = vpop.f32.mrf.mxu0
        %v4520 = vadd.f32 %v4415, %v4519
        %v4521 = vpop.f32.mrf.mxu0
        %4522 = vmatprep.mubr.f32.mxu0 0.0
        %v4523 = vand.u32 %v2956, 4294901760
        %4524 = vmatmul.mubr.f32.gmra.mxu0 %v4523
        %v4525 = vpop.f32.mrf.mxu0
        %v4526 = vadd.f32 %v4421, %v4525
        %v4527 = vpop.f32.mrf.mxu0
        %4528 = vmatprep.mubr.f32.mxu0 0.0
        %v4529 = vand.u32 %v2957, 4294901760
        %4530 = vmatmul.mubr.f32.gmra.mxu0 %v4529
        %v4531 = vpop.f32.mrf.mxu0
        %v4532 = vadd.f32 %v4427, %v4531
        %v4533 = vpop.f32.mrf.mxu0
        %4534 = vmatprep.mubr.f32.mxu0 0.0
        %v4535 = vand.u32 %v2958, 4294901760
        %4536 = vmatmul.mubr.f32.gmra.mxu0 %v4535
        %v4537 = vpop.f32.mrf.mxu0
        %v4538 = vadd.f32 %v4433, %v4537
        %v4539 = vpop.f32.mrf.mxu0
        %4540 = vdwg.mxu0
        %v4541 = vmul.f32 %v4520, 0.5
        %v4542 = vmul.f32 %v4526, 0.5
        %v4543 = vmul.f32 %v4532, 0.5
        %v4544 = vmul.f32 %v4538, 0.5
        %v4545 = vmul.f32 %v4541, 1.442695
        %v4546 = vpow.pop %v4545
        %v4547 = vmul.f32 %v4542, 1.442695
        %v4548 = vpow.pop %v4547
        %v4549 = vmul.f32 %v4543, 1.442695
        %v4550 = vpow.pop %v4549
        %v4551 = vmul.f32 %v4544, 1.442695
        %v4552 = vpow.pop %v4551
        %v4553 = vmul.f32 %v454, %v4546
        %v4554 = vmul.f32 %v455, %v4548
        %v4555 = vmul.f32 %v456, %v4550
        %v4556 = vmul.f32 %v457, %v4552
        %v4557 = vadd.f32 %v3729, %v4553
        %v4558 = vadd.f32 %v3735, %v4554
        %v4559 = vadd.f32 %v3741, %v4555
        %v4560 = vadd.f32 %v3747, %v4556
        %v4561 = vld [vmem:[%s2 + $0xb] sm:$0x1]
        %v4562 = vld [vmem:[%s2 + $0xc] sm:$0x1]
        %v4563 = vld [vmem:[%s2 + $0xd] sm:$0x1]
        %v4564 = vld [vmem:[#allocation2] sm:$0x1f]
        %4566 = vset.pattern.permute.xlu0 0
        %4567 = vperm.xlu0 %4566, %v4557
        %v4568 = vpop.permute.xlu0 %4567
        %4571 = vset.pattern.permute.xlu0 0
        %4572 = vperm.xlu0 %4571, %v4558
        %v4573 = vpop.permute.xlu0 %4572
        %4576 = vset.pattern.permute.xlu0 0
        %4577 = vperm.xlu0 %4576, %v4559
        %v4578 = vpop.permute.xlu0 %4577
        %4581 = vset.pattern.permute.xlu0 0
        %4582 = vperm.xlu0 %4581, %v4560
        %v4583 = vpop.permute.xlu0 %4582
        %v4585 = vlaneseq
        %v4586 = vshrl.u32 %v4585, 7
        %v4587 = vsub.s32 0, %v4586
        %v4588 = vrot.slane %v4564, %v4587
        %v4589 = vmul.f32 %v4568, %v4588
        %v4590 = vmul.f32 %v4573, %v4588
        %v4591 = vmul.f32 %v4578, %v4588
        %v4592 = vmul.f32 %v4583, %v4588
        %4593 = vset.pattern.permute.xlu0 1
        %4594 = vperm.xlu0 %4593, %v4557
        %v4595 = vpop.permute.xlu0 %4594
        %4597 = vset.pattern.permute.xlu0 1
        %4598 = vperm.xlu0 %4597, %v4558
        %v4599 = vpop.permute.xlu0 %4598
        %4601 = vset.pattern.permute.xlu0 1
        %4602 = vperm.xlu0 %4601, %v4559
        %v4603 = vpop.permute.xlu0 %4602
        %4605 = vset.pattern.permute.xlu0 1
        %4606 = vperm.xlu0 %4605, %v4560
        %v4607 = vpop.permute.xlu0 %4606
        %v4609 = vlaneseq
        %v4610 = vshrl.u32 %v4609, 7
        %v4611 = vsub.s32 1, %v4610
        %v4612 = vrot.slane %v4564, %v4611
        %v4613 = vmul.f32 %v4595, %v4612
        %v4614 = vmul.f32 %v4599, %v4612
        %v4615 = vmul.f32 %v4603, %v4612
        %v4616 = vmul.f32 %v4607, %v4612
        %v4617 = vadd.f32 %v4589, %v4613
        %v4618 = vadd.f32 %v4590, %v4614
        %v4619 = vadd.f32 %v4591, %v4615
        %v4620 = vadd.f32 %v4592, %v4616
        %4621 = vset.pattern.permute.xlu0 2
        %4622 = vperm.xlu0 %4621, %v4557
        %v4623 = vpop.permute.xlu0 %4622
        %4625 = vset.pattern.permute.xlu0 2
        %4626 = vperm.xlu0 %4625, %v4558
        %v4627 = vpop.permute.xlu0 %4626
        %4629 = vset.pattern.permute.xlu0 2
        %4630 = vperm.xlu0 %4629, %v4559
        %v4631 = vpop.permute.xlu0 %4630
        %4633 = vset.pattern.permute.xlu0 2
        %4634 = vperm.xlu0 %4633, %v4560
        %v4635 = vpop.permute.xlu0 %4634
        %v4637 = vlaneseq
        %v4638 = vshrl.u32 %v4637, 7
        %v4639 = vsub.s32 2, %v4638
        %v4640 = vrot.slane %v4564, %v4639
        %v4641 = vmul.f32 %v4623, %v4640
        %v4642 = vmul.f32 %v4627, %v4640
        %v4643 = vmul.f32 %v4631, %v4640
        %v4644 = vmul.f32 %v4635, %v4640
        %v4645 = vadd.f32 %v4617, %v4641
        %v4646 = vadd.f32 %v4618, %v4642
        %v4647 = vadd.f32 %v4619, %v4643
        %v4648 = vadd.f32 %v4620, %v4644
        %4649 = vset.pattern.permute.xlu0 3
        %4650 = vperm.xlu0 %4649, %v4557
        %v4651 = vpop.permute.xlu0 %4650
        %4653 = vset.pattern.permute.xlu0 3
        %4654 = vperm.xlu0 %4653, %v4558
        %v4655 = vpop.permute.xlu0 %4654
        %4657 = vset.pattern.permute.xlu0 3
        %4658 = vperm.xlu0 %4657, %v4559
        %v4659 = vpop.permute.xlu0 %4658
        %4661 = vset.pattern.permute.xlu0 3
        %4662 = vperm.xlu0 %4661, %v4560
        %v4663 = vpop.permute.xlu0 %4662
        %v4665 = vlaneseq
        %v4666 = vshrl.u32 %v4665, 7
        %v4667 = vsub.s32 3, %v4666
        %v4668 = vrot.slane %v4564, %v4667
        %v4669 = vmul.f32 %v4651, %v4668
        %v4670 = vmul.f32 %v4655, %v4668
        %v4671 = vmul.f32 %v4659, %v4668
        %v4672 = vmul.f32 %v4663, %v4668
        %v4673 = vadd.f32 %v4645, %v4669
        %v4674 = vadd.f32 %v4646, %v4670
        %v4675 = vadd.f32 %v4647, %v4671
        %v4676 = vadd.f32 %v4648, %v4672
        %4677 = vset.pattern.permute.xlu0 4
        %4678 = vperm.xlu0 %4677, %v4557
        %v4679 = vpop.permute.xlu0 %4678
        %4681 = vset.pattern.permute.xlu0 4
        %4682 = vperm.xlu0 %4681, %v4558
        %v4683 = vpop.permute.xlu0 %4682
        %4685 = vset.pattern.permute.xlu0 4
        %4686 = vperm.xlu0 %4685, %v4559
        %v4687 = vpop.permute.xlu0 %4686
        %4689 = vset.pattern.permute.xlu0 4
        %4690 = vperm.xlu0 %4689, %v4560
        %v4691 = vpop.permute.xlu0 %4690
        %v4693 = vlaneseq
        %v4694 = vshrl.u32 %v4693, 7
        %v4695 = vsub.s32 4, %v4694
        %v4696 = vrot.slane %v4564, %v4695
        %v4697 = vmul.f32 %v4679, %v4696
        %v4698 = vmul.f32 %v4683, %v4696
        %v4699 = vmul.f32 %v4687, %v4696
        %v4700 = vmul.f32 %v4691, %v4696
        %v4701 = vadd.f32 %v4673, %v4697
        %v4702 = vadd.f32 %v4674, %v4698
        %v4703 = vadd.f32 %v4675, %v4699
        %v4704 = vadd.f32 %v4676, %v4700
        %v4705 = vlaneseq
        %v4706 = vshrl.u32 %v4705, 7
        %v4707 = vsub.s32 0, %v4706
        %v4708 = vrot.slane %v4561, %v4707
        %v4709 = vadd.f32 %v4701, %v4708
        %v4710 = vadd.f32 %v4702, %v4708
        %v4711 = vadd.f32 %v4703, %v4708
        %v4712 = vadd.f32 %v4704, %v4708
        %4713 = vadd.xlane.f32.xlu0 %v4709
        %v4714 = vpop.xlane.xlu0 %4713
        %4715 = vadd.xlane.f32.xlu0 %v4710
        %v4716 = vpop.xlane.xlu0 %4715
        %4717 = vadd.xlane.f32.xlu0 %v4711
        %v4718 = vpop.xlane.xlu0 %4717
        %4719 = vadd.xlane.f32.xlu0 %v4712
        %v4720 = vpop.xlane.xlu0 %4719
        %v4721 = vmul.f32 %v4714, %v1104
        %v4722 = vmul.f32 %v4716, %v1104
        %v4723 = vmul.f32 %v4718, %v1104
        %v4724 = vmul.f32 %v4720, %v1104
        %v4725 = vmul.f32 %v4709, %v4709
        %v4726 = vmul.f32 %v4710, %v4710
        %v4727 = vmul.f32 %v4711, %v4711
        %v4728 = vmul.f32 %v4712, %v4712
        %4729 = vadd.xlane.f32.xlu0 %v4725
        %v4730 = vpop.xlane.xlu0 %4729
        %4731 = vadd.xlane.f32.xlu0 %v4726
        %v4732 = vpop.xlane.xlu0 %4731
        %4733 = vadd.xlane.f32.xlu0 %v4727
        %v4734 = vpop.xlane.xlu0 %4733
        %4735 = vadd.xlane.f32.xlu0 %v4728
        %v4736 = vpop.xlane.xlu0 %4735
        %v4737 = vmul.f32 %v4730, %v1104
        %v4738 = vmul.f32 %v4732, %v1104
        %v4739 = vmul.f32 %v4734, %v1104
        %v4740 = vmul.f32 %v4736, %v1104
        %v4741 = vmul.f32 %v4721, %v4721
        %v4742 = vmul.f32 %v4722, %v4722
        %v4743 = vmul.f32 %v4723, %v4723
        %v4744 = vmul.f32 %v4724, %v4724
        %v4745 = vsub.f32 %v4737, %v4741
        %v4746 = vsub.f32 %v4738, %v4742
        %v4747 = vsub.f32 %v4739, %v4743
        %v4748 = vsub.f32 %v4740, %v4744
        %v4749 = vsub.f32 %v4709, %v4721
        %v4750 = vsub.f32 %v4710, %v4722
        %v4751 = vsub.f32 %v4711, %v4723
        %v4752 = vsub.f32 %v4712, %v4724
        %v4753 = vadd.f32 %v4745, 1e-05
        %v4754 = vadd.f32 %v4746, 1e-05
        %v4755 = vadd.f32 %v4747, 1e-05
        %v4756 = vadd.f32 %v4748, 1e-05
        %v4757 = vrsqrt.pop %v4753
        %v4758 = vrsqrt.pop %v4754
        %v4759 = vrsqrt.pop %v4755
        %v4760 = vrsqrt.pop %v4756
        %v4761 = vmul.f32 %v4749, %v4757
        %v4762 = vmul.f32 %v4750, %v4758
        %v4763 = vmul.f32 %v4751, %v4759
        %v4764 = vmul.f32 %v4752, %v4760
        %v4765 = vlaneseq
        %v4766 = vshrl.u32 %v4765, 7
        %v4767 = vsub.s32 0, %v4766
        %v4768 = vrot.slane %v4562, %v4767
        %v4769 = vmul.f32 %v4761, %v4768
        %v4770 = vmul.f32 %v4762, %v4768
        %v4771 = vmul.f32 %v4763, %v4768
        %v4772 = vmul.f32 %v4764, %v4768
        %v4773 = vlaneseq
        %v4774 = vshrl.u32 %v4773, 7
        %v4775 = vsub.s32 0, %v4774
        %v4776 = vrot.slane %v4563, %v4775
        %v4777 = vadd.f32 %v4769, %v4776
        %v4778 = vadd.f32 %v4770, %v4776
        %v4779 = vadd.f32 %v4771, %v4776
        %v4780 = vadd.f32 %v4772, %v4776
        %vm4781 = vcmp.gt.f32.partialorder %v4777, 0.0
        %vm4782 = vcmp.gt.f32.partialorder %v4778, 0.0
        %vm4783 = vcmp.gt.f32.partialorder %v4779, 0.0
        %vm4784 = vcmp.gt.f32.partialorder %v4780, 0.0
        %v4785 = vmin.f32 %v4777, 0.0
        %v4786 = vmin.f32 %v4778, 0.0
        %v4787 = vmin.f32 %v4779, 0.0
        %v4788 = vmin.f32 %v4780, 0.0
        %v4789 = vmul.f32 %v4785, 1.442695
        %v4790 = vpow.pop %v4789
        %v4791 = vmul.f32 %v4786, 1.442695
        %v4792 = vpow.pop %v4791
        %v4793 = vmul.f32 %v4787, 1.442695
        %v4794 = vpow.pop %v4793
        %v4795 = vmul.f32 %v4788, 1.442695
        %v4796 = vpow.pop %v4795
        %v4797 = vsub.f32 %v4790, 1.0
        %v4798 = vsub.f32 %v4792, 1.0
        %v4799 = vsub.f32 %v4794, 1.0
        %v4800 = vsub.f32 %v4796, 1.0
        %v4801 = vsel %vm4781, %v4777, %v4797
        %v4802 = vsel %vm4782, %v4778, %v4798
        %v4803 = vsel %vm4783, %v4779, %v4799
        %v4804 = vsel %vm4784, %v4780, %v4800
        %v4805 = vld [vmem:[%s2 + $0xe] sm:$0x1]
        %v4806 = vld [vmem:[%s2 + $0xf] sm:$0x1]
        %v4807 = vld [vmem:[%s2 + $0x10] sm:$0x1]
        %v4808 = vld [vmem:[%s9] sm:$0xff]
        %v4809 = vld [vmem:[%s9 + $0x8] sm:$0xff]
        %v4810 = vld [vmem:[%s9 + $0x10] sm:$0xff]
        %v4811 = vld [vmem:[%s9 + $0x18] sm:$0xff]
        %v4812 = vld [vmem:[%s9 + $0x20] sm:$0xff]
        %v4813 = vld [vmem:[%s9 + $0x28] sm:$0xff]
        %v4814 = vld [vmem:[%s9 + $0x30] sm:$0xff]
        %v4815 = vld [vmem:[%s9 + $0x38] sm:$0xff]
        %v4816 = vld [vmem:[%s9 + $0x40] sm:$0xff]
        %v4817 = vld [vmem:[%s9 + $0x48] sm:$0xff]
        %v4818 = vld [vmem:[%s9 + $0x50] sm:$0xff]
        %v4819 = vld [vmem:[%s9 + $0x58] sm:$0xff]
        %v4820 = vld [vmem:[%s9 + $0x60] sm:$0xff]
        %v4821 = vld [vmem:[%s9 + $0x68] sm:$0xff]
        %v4822 = vld [vmem:[%s9 + $0x70] sm:$0xff]
        %v4823 = vld [vmem:[%s9 + $0x78] sm:$0xff]
        %v4824 = vlaneseq
        %v4825 = vshrl.u32 %v4824, 7
        %v4826 = vsub.s32 0, %v4825
        %v4827 = vrot.slane %v4805, %v4826
        %4828 = vmatprep.subr.mxu0 0.0
        %v4829 = vand.u32 %v4823, 4294901760
        %4830 = vmatpush1.msra.mxu0 %v4829
        %4831 = vmatprep.subr.mxu0 0.0
        %v4832 = vand.u32 %v4822, 4294901760
        %4833 = vmatpush1.msra.mxu0 %v4832
        %4834 = vmatprep.subr.mxu0 0.0
        %v4835 = vand.u32 %v4821, 4294901760
        %4836 = vmatpush1.msra.mxu0 %v4835
        %4837 = vmatprep.subr.mxu0 0.0
        %v4838 = vand.u32 %v4820, 4294901760
        %4839 = vmatpush1.msra.mxu0 %v4838
        %4840 = vmatprep.subr.mxu0 0.0
        %v4841 = vand.u32 %v4819, 4294901760
        %4842 = vmatpush1.msra.mxu0 %v4841
        %4843 = vmatprep.subr.mxu0 0.0
        %v4844 = vand.u32 %v4818, 4294901760
        %4845 = vmatpush1.msra.mxu0 %v4844
        %4846 = vmatprep.subr.mxu0 0.0
        %v4847 = vand.u32 %v4817, 4294901760
        %4848 = vmatpush1.msra.mxu0 %v4847
        %4849 = vmatprep.subr.mxu0 0.0
        %v4850 = vand.u32 %v4816, 4294901760
        %4851 = vmatpush1.msra.mxu0 %v4850
        %4852 = vmatprep.subr.mxu0 0.0
        %v4853 = vand.u32 %v4815, 4294901760
        %4854 = vmatpush1.msra.mxu0 %v4853
        %4855 = vmatprep.subr.mxu0 0.0
        %v4856 = vand.u32 %v4814, 4294901760
        %4857 = vmatpush1.msra.mxu0 %v4856
        %4858 = vmatprep.subr.mxu0 0.0
        %v4859 = vand.u32 %v4813, 4294901760
        %4860 = vmatpush1.msra.mxu0 %v4859
        %4861 = vmatprep.subr.mxu0 0.0
        %v4862 = vand.u32 %v4812, 4294901760
        %4863 = vmatpush1.msra.mxu0 %v4862
        %4864 = vmatprep.subr.mxu0 0.0
        %v4865 = vand.u32 %v4811, 4294901760
        %4866 = vmatpush1.msra.mxu0 %v4865
        %4867 = vmatprep.subr.mxu0 0.0
        %v4868 = vand.u32 %v4810, 4294901760
        %4869 = vmatpush1.msra.mxu0 %v4868
        %4870 = vmatprep.subr.mxu0 0.0
        %v4871 = vand.u32 %v4809, 4294901760
        %4872 = vmatpush1.msra.mxu0 %v4871
        %4873 = vmatprep.subr.mxu0 0.0
        %v4874 = vand.u32 %v4808, 4294901760
        %4875 = vmatpush1.msra.mxu0 %v4874
        %4876 = vmatprep.subr.mxu0 0.0
        %4877 = vmatpush2.msra.mxu0 0.0
        %4878 = vmatprep.subr.mxu0 0.0
        %4879 = vmatpush2.msra.mxu0 0.0
        %4880 = vmatprep.subr.mxu0 0.0
        %4881 = vmatpush2.msra.mxu0 0.0
        %4882 = vmatprep.subr.mxu0 0.0
        %4883 = vmatpush2.msra.mxu0 0.0
        %4884 = vmatprep.subr.mxu0 0.0
        %4885 = vmatpush2.msra.mxu0 0.0
        %4886 = vmatprep.subr.mxu0 0.0
        %4887 = vmatpush2.msra.mxu0 0.0
        %4888 = vmatprep.subr.mxu0 0.0
        %4889 = vmatpush2.msra.mxu0 0.0
        %4890 = vmatprep.subr.mxu0 0.0
        %4891 = vmatpush2.msra.mxu0 0.0
        %4892 = vmatprep.subr.mxu0 0.0
        %4893 = vmatpush2.msra.mxu0 0.0
        %4894 = vmatprep.subr.mxu0 0.0
        %4895 = vmatpush2.msra.mxu0 0.0
        %4896 = vmatprep.subr.mxu0 0.0
        %4897 = vmatpush2.msra.mxu0 0.0
        %4898 = vmatprep.subr.mxu0 0.0
        %4899 = vmatpush2.msra.mxu0 0.0
        %4900 = vmatprep.subr.mxu0 0.0
        %4901 = vmatpush2.msra.mxu0 0.0
        %4902 = vmatprep.subr.mxu0 0.0
        %4903 = vmatpush2.msra.mxu0 0.0
        %4904 = vmatprep.subr.mxu0 0.0
        %4905 = vmatpush2.msra.mxu0 0.0
        %4906 = vmatprep.subr.mxu0 0.0
        %4907 = vmatpush2.msra.mxu0 0.0
        %4908 = vmatprep.mubr.f32.mxu0 0.0
        %v4909 = vand.u32 %v4801, 4294901760
        %v4910 = vsub.f32 %v4801, %v4909
        %v4911 = vand.u32 %v4910, 4294901760
        %v4912 = vsub.f32 %v4910, %v4911
        %v4913 = vand.u32 %v4912, 4294901760
        %4914 = vmatmul.mubr.f32.gmra.mxu0 %v4913
        %v4915 = vpop.f32.mrf.mxu0
        %v4916 = vadd.f32 %v4827, %v4915
        %v4917 = vpop.f32.mrf.mxu0
        %4918 = vmatprep.mubr.f32.mxu0 0.0
        %v4919 = vand.u32 %v4802, 4294901760
        %v4920 = vsub.f32 %v4802, %v4919
        %v4921 = vand.u32 %v4920, 4294901760
        %v4922 = vsub.f32 %v4920, %v4921
        %v4923 = vand.u32 %v4922, 4294901760
        %4924 = vmatmul.mubr.f32.gmra.mxu0 %v4923
        %v4925 = vpop.f32.mrf.mxu0
        %v4926 = vadd.f32 %v4827, %v4925
        %v4927 = vpop.f32.mrf.mxu0
        %4928 = vmatprep.mubr.f32.mxu0 0.0
        %v4929 = vand.u32 %v4803, 4294901760
        %v4930 = vsub.f32 %v4803, %v4929
        %v4931 = vand.u32 %v4930, 4294901760
        %v4932 = vsub.f32 %v4930, %v4931
        %v4933 = vand.u32 %v4932, 4294901760
        %4934 = vmatmul.mubr.f32.gmra.mxu0 %v4933
        %v4935 = vpop.f32.mrf.mxu0
        %v4936 = vadd.f32 %v4827, %v4935
        %v4937 = vpop.f32.mrf.mxu0
        %4938 = vmatprep.mubr.f32.mxu0 0.0
        %v4939 = vand.u32 %v4804, 4294901760
        %v4940 = vsub.f32 %v4804, %v4939
        %v4941 = vand.u32 %v4940, 4294901760
        %v4942 = vsub.f32 %v4940, %v4941
        %v4943 = vand.u32 %v4942, 4294901760
        %4944 = vmatmul.mubr.f32.gmra.mxu0 %v4943
        %v4945 = vpop.f32.mrf.mxu0
        %v4946 = vadd.f32 %v4827, %v4945
        %v4947 = vpop.f32.mrf.mxu0
        %4948 = vdwg.mxu0
        %4949 = vmatprep.subr.mxu0 0.0
        %v4950 = vand.u32 %v4823, 4294901760
        %v4951 = vsub.f32 %v4823, %v4950
        %v4952 = vand.u32 %v4951, 4294901760
        %v4953 = vsub.f32 %v4951, %v4952
        %v4954 = vand.u32 %v4953, 4294901760
        %4955 = vmatpush1.msra.mxu0 %v4954
        %4956 = vmatprep.subr.mxu0 0.0
        %v4957 = vand.u32 %v4822, 4294901760
        %v4958 = vsub.f32 %v4822, %v4957
        %v4959 = vand.u32 %v4958, 4294901760
        %v4960 = vsub.f32 %v4958, %v4959
        %v4961 = vand.u32 %v4960, 4294901760
        %4962 = vmatpush1.msra.mxu0 %v4961
        %4963 = vmatprep.subr.mxu0 0.0
        %v4964 = vand.u32 %v4821, 4294901760
        %v4965 = vsub.f32 %v4821, %v4964
        %v4966 = vand.u32 %v4965, 4294901760
        %v4967 = vsub.f32 %v4965, %v4966
        %v4968 = vand.u32 %v4967, 4294901760
        %4969 = vmatpush1.msra.mxu0 %v4968
        %4970 = vmatprep.subr.mxu0 0.0
        %v4971 = vand.u32 %v4820, 4294901760
        %v4972 = vsub.f32 %v4820, %v4971
        %v4973 = vand.u32 %v4972, 4294901760
        %v4974 = vsub.f32 %v4972, %v4973
        %v4975 = vand.u32 %v4974, 4294901760
        %4976 = vmatpush1.msra.mxu0 %v4975
        %4977 = vmatprep.subr.mxu0 0.0
        %v4978 = vand.u32 %v4819, 4294901760
        %v4979 = vsub.f32 %v4819, %v4978
        %v4980 = vand.u32 %v4979, 4294901760
        %v4981 = vsub.f32 %v4979, %v4980
        %v4982 = vand.u32 %v4981, 4294901760
        %4983 = vmatpush1.msra.mxu0 %v4982
        %4984 = vmatprep.subr.mxu0 0.0
        %v4985 = vand.u32 %v4818, 4294901760
        %v4986 = vsub.f32 %v4818, %v4985
        %v4987 = vand.u32 %v4986, 4294901760
        %v4988 = vsub.f32 %v4986, %v4987
        %v4989 = vand.u32 %v4988, 4294901760
        %4990 = vmatpush1.msra.mxu0 %v4989
        %4991 = vmatprep.subr.mxu0 0.0
        %v4992 = vand.u32 %v4817, 4294901760
        %v4993 = vsub.f32 %v4817, %v4992
        %v4994 = vand.u32 %v4993, 4294901760
        %v4995 = vsub.f32 %v4993, %v4994
        %v4996 = vand.u32 %v4995, 4294901760
        %4997 = vmatpush1.msra.mxu0 %v4996
        %4998 = vmatprep.subr.mxu0 0.0
        %v4999 = vand.u32 %v4816, 4294901760
        %v5000 = vsub.f32 %v4816, %v4999
        %v5001 = vand.u32 %v5000, 4294901760
        %v5002 = vsub.f32 %v5000, %v5001
        %v5003 = vand.u32 %v5002, 4294901760
        %5004 = vmatpush1.msra.mxu0 %v5003
        %5005 = vmatprep.subr.mxu0 0.0
        %v5006 = vand.u32 %v4815, 4294901760
        %v5007 = vsub.f32 %v4815, %v5006
        %v5008 = vand.u32 %v5007, 4294901760
        %v5009 = vsub.f32 %v5007, %v5008
        %v5010 = vand.u32 %v5009, 4294901760
        %5011 = vmatpush1.msra.mxu0 %v5010
        %5012 = vmatprep.subr.mxu0 0.0
        %v5013 = vand.u32 %v4814, 4294901760
        %v5014 = vsub.f32 %v4814, %v5013
        %v5015 = vand.u32 %v5014, 4294901760
        %v5016 = vsub.f32 %v5014, %v5015
        %v5017 = vand.u32 %v5016, 4294901760
        %5018 = vmatpush1.msra.mxu0 %v5017
        %5019 = vmatprep.subr.mxu0 0.0
        %v5020 = vand.u32 %v4813, 4294901760
        %v5021 = vsub.f32 %v4813, %v5020
        %v5022 = vand.u32 %v5021, 4294901760
        %v5023 = vsub.f32 %v5021, %v5022
        %v5024 = vand.u32 %v5023, 4294901760
        %5025 = vmatpush1.msra.mxu0 %v5024
        %5026 = vmatprep.subr.mxu0 0.0
        %v5027 = vand.u32 %v4812, 4294901760
        %v5028 = vsub.f32 %v4812, %v5027
        %v5029 = vand.u32 %v5028, 4294901760
        %v5030 = vsub.f32 %v5028, %v5029
        %v5031 = vand.u32 %v5030, 4294901760
        %5032 = vmatpush1.msra.mxu0 %v5031
        %5033 = vmatprep.subr.mxu0 0.0
        %v5034 = vand.u32 %v4811, 4294901760
        %v5035 = vsub.f32 %v4811, %v5034
        %v5036 = vand.u32 %v5035, 4294901760
        %v5037 = vsub.f32 %v5035, %v5036
        %v5038 = vand.u32 %v5037, 4294901760
        %5039 = vmatpush1.msra.mxu0 %v5038
        %5040 = vmatprep.subr.mxu0 0.0
        %v5041 = vand.u32 %v4810, 4294901760
        %v5042 = vsub.f32 %v4810, %v5041
        %v5043 = vand.u32 %v5042, 4294901760
        %v5044 = vsub.f32 %v5042, %v5043
        %v5045 = vand.u32 %v5044, 4294901760
        %5046 = vmatpush1.msra.mxu0 %v5045
        %5047 = vmatprep.subr.mxu0 0.0
        %v5048 = vand.u32 %v4809, 4294901760
        %v5049 = vsub.f32 %v4809, %v5048
        %v5050 = vand.u32 %v5049, 4294901760
        %v5051 = vsub.f32 %v5049, %v5050
        %v5052 = vand.u32 %v5051, 4294901760
        %5053 = vmatpush1.msra.mxu0 %v5052
        %5054 = vmatprep.subr.mxu0 0.0
        %v5055 = vand.u32 %v4808, 4294901760
        %v5056 = vsub.f32 %v4808, %v5055
        %v5057 = vand.u32 %v5056, 4294901760
        %v5058 = vsub.f32 %v5056, %v5057
        %v5059 = vand.u32 %v5058, 4294901760
        %5060 = vmatpush1.msra.mxu0 %v5059
        %5061 = vmatprep.subr.mxu0 0.0
        %5062 = vmatpush2.msra.mxu0 0.0
        %5063 = vmatprep.subr.mxu0 0.0
        %5064 = vmatpush2.msra.mxu0 0.0
        %5065 = vmatprep.subr.mxu0 0.0
        %5066 = vmatpush2.msra.mxu0 0.0
        %5067 = vmatprep.subr.mxu0 0.0
        %5068 = vmatpush2.msra.mxu0 0.0
        %5069 = vmatprep.subr.mxu0 0.0
        %5070 = vmatpush2.msra.mxu0 0.0
        %5071 = vmatprep.subr.mxu0 0.0
        %5072 = vmatpush2.msra.mxu0 0.0
        %5073 = vmatprep.subr.mxu0 0.0
        %5074 = vmatpush2.msra.mxu0 0.0
        %5075 = vmatprep.subr.mxu0 0.0
        %5076 = vmatpush2.msra.mxu0 0.0
        %5077 = vmatprep.subr.mxu0 0.0
        %5078 = vmatpush2.msra.mxu0 0.0
        %5079 = vmatprep.subr.mxu0 0.0
        %5080 = vmatpush2.msra.mxu0 0.0
        %5081 = vmatprep.subr.mxu0 0.0
        %5082 = vmatpush2.msra.mxu0 0.0
        %5083 = vmatprep.subr.mxu0 0.0
        %5084 = vmatpush2.msra.mxu0 0.0
        %5085 = vmatprep.subr.mxu0 0.0
        %5086 = vmatpush2.msra.mxu0 0.0
        %5087 = vmatprep.subr.mxu0 0.0
        %5088 = vmatpush2.msra.mxu0 0.0
        %5089 = vmatprep.subr.mxu0 0.0
        %5090 = vmatpush2.msra.mxu0 0.0
        %5091 = vmatprep.subr.mxu0 0.0
        %5092 = vmatpush2.msra.mxu0 0.0
        %5093 = vmatprep.mubr.f32.mxu0 0.0
        %v5094 = vand.u32 %v4801, 4294901760
        %5095 = vmatmul.mubr.f32.gmra.mxu0 %v5094
        %v5096 = vpop.f32.mrf.mxu0
        %v5097 = vadd.f32 %v4916, %v5096
        %v5098 = vpop.f32.mrf.mxu0
        %5099 = vmatprep.mubr.f32.mxu0 0.0
        %v5100 = vand.u32 %v4802, 4294901760
        %5101 = vmatmul.mubr.f32.gmra.mxu0 %v5100
        %v5102 = vpop.f32.mrf.mxu0
        %v5103 = vadd.f32 %v4926, %v5102
        %v5104 = vpop.f32.mrf.mxu0
        %5105 = vmatprep.mubr.f32.mxu0 0.0
        %v5106 = vand.u32 %v4803, 4294901760
        %5107 = vmatmul.mubr.f32.gmra.mxu0 %v5106
        %v5108 = vpop.f32.mrf.mxu0
        %v5109 = vadd.f32 %v4936, %v5108
        %v5110 = vpop.f32.mrf.mxu0
        %5111 = vmatprep.mubr.f32.mxu0 0.0
        %v5112 = vand.u32 %v4804, 4294901760
        %5113 = vmatmul.mubr.f32.gmra.mxu0 %v5112
        %v5114 = vpop.f32.mrf.mxu0
        %v5115 = vadd.f32 %v4946, %v5114
        %v5116 = vpop.f32.mrf.mxu0
        %5117 = vdwg.mxu0
        %5118 = vmatprep.subr.mxu0 0.0
        %v5119 = vand.u32 %v4823, 4294901760
        %v5120 = vsub.f32 %v4823, %v5119
        %5121 = vmatpush1.msra.mxu0 %v5120
        %5122 = vmatprep.subr.mxu0 0.0
        %v5123 = vand.u32 %v4822, 4294901760
        %v5124 = vsub.f32 %v4822, %v5123
        %5125 = vmatpush1.msra.mxu0 %v5124
        %5126 = vmatprep.subr.mxu0 0.0
        %v5127 = vand.u32 %v4821, 4294901760
        %v5128 = vsub.f32 %v4821, %v5127
        %5129 = vmatpush1.msra.mxu0 %v5128
        %5130 = vmatprep.subr.mxu0 0.0
        %v5131 = vand.u32 %v4820, 4294901760
        %v5132 = vsub.f32 %v4820, %v5131
        %5133 = vmatpush1.msra.mxu0 %v5132
        %5134 = vmatprep.subr.mxu0 0.0
        %v5135 = vand.u32 %v4819, 4294901760
        %v5136 = vsub.f32 %v4819, %v5135
        %5137 = vmatpush1.msra.mxu0 %v5136
        %5138 = vmatprep.subr.mxu0 0.0
        %v5139 = vand.u32 %v4818, 4294901760
        %v5140 = vsub.f32 %v4818, %v5139
        %5141 = vmatpush1.msra.mxu0 %v5140
        %5142 = vmatprep.subr.mxu0 0.0
        %v5143 = vand.u32 %v4817, 4294901760
        %v5144 = vsub.f32 %v4817, %v5143
        %5145 = vmatpush1.msra.mxu0 %v5144
        %5146 = vmatprep.subr.mxu0 0.0
        %v5147 = vand.u32 %v4816, 4294901760
        %v5148 = vsub.f32 %v4816, %v5147
        %5149 = vmatpush1.msra.mxu0 %v5148
        %5150 = vmatprep.subr.mxu0 0.0
        %v5151 = vand.u32 %v4815, 4294901760
        %v5152 = vsub.f32 %v4815, %v5151
        %5153 = vmatpush1.msra.mxu0 %v5152
        %5154 = vmatprep.subr.mxu0 0.0
        %v5155 = vand.u32 %v4814, 4294901760
        %v5156 = vsub.f32 %v4814, %v5155
        %5157 = vmatpush1.msra.mxu0 %v5156
        %5158 = vmatprep.subr.mxu0 0.0
        %v5159 = vand.u32 %v4813, 4294901760
        %v5160 = vsub.f32 %v4813, %v5159
        %5161 = vmatpush1.msra.mxu0 %v5160
        %5162 = vmatprep.subr.mxu0 0.0
        %v5163 = vand.u32 %v4812, 4294901760
        %v5164 = vsub.f32 %v4812, %v5163
        %5165 = vmatpush1.msra.mxu0 %v5164
        %5166 = vmatprep.subr.mxu0 0.0
        %v5167 = vand.u32 %v4811, 4294901760
        %v5168 = vsub.f32 %v4811, %v5167
        %5169 = vmatpush1.msra.mxu0 %v5168
        %5170 = vmatprep.subr.mxu0 0.0
        %v5171 = vand.u32 %v4810, 4294901760
        %v5172 = vsub.f32 %v4810, %v5171
        %5173 = vmatpush1.msra.mxu0 %v5172
        %5174 = vmatprep.subr.mxu0 0.0
        %v5175 = vand.u32 %v4809, 4294901760
        %v5176 = vsub.f32 %v4809, %v5175
        %5177 = vmatpush1.msra.mxu0 %v5176
        %5178 = vmatprep.subr.mxu0 0.0
        %v5179 = vand.u32 %v4808, 4294901760
        %v5180 = vsub.f32 %v4808, %v5179
        %5181 = vmatpush1.msra.mxu0 %v5180
        %5182 = vmatprep.subr.mxu0 0.0
        %5183 = vmatpush2.msra.mxu0 0.0
        %5184 = vmatprep.subr.mxu0 0.0
        %5185 = vmatpush2.msra.mxu0 0.0
        %5186 = vmatprep.subr.mxu0 0.0
        %5187 = vmatpush2.msra.mxu0 0.0
        %5188 = vmatprep.subr.mxu0 0.0
        %5189 = vmatpush2.msra.mxu0 0.0
        %5190 = vmatprep.subr.mxu0 0.0
        %5191 = vmatpush2.msra.mxu0 0.0
        %5192 = vmatprep.subr.mxu0 0.0
        %5193 = vmatpush2.msra.mxu0 0.0
        %5194 = vmatprep.subr.mxu0 0.0
        %5195 = vmatpush2.msra.mxu0 0.0
        %5196 = vmatprep.subr.mxu0 0.0
        %5197 = vmatpush2.msra.mxu0 0.0
        %5198 = vmatprep.subr.mxu0 0.0
        %5199 = vmatpush2.msra.mxu0 0.0
        %5200 = vmatprep.subr.mxu0 0.0
        %5201 = vmatpush2.msra.mxu0 0.0
        %5202 = vmatprep.subr.mxu0 0.0
        %5203 = vmatpush2.msra.mxu0 0.0
        %5204 = vmatprep.subr.mxu0 0.0
        %5205 = vmatpush2.msra.mxu0 0.0
        %5206 = vmatprep.subr.mxu0 0.0
        %5207 = vmatpush2.msra.mxu0 0.0
        %5208 = vmatprep.subr.mxu0 0.0
        %5209 = vmatpush2.msra.mxu0 0.0
        %5210 = vmatprep.subr.mxu0 0.0
        %5211 = vmatpush2.msra.mxu0 0.0
        %5212 = vmatprep.subr.mxu0 0.0
        %5213 = vmatpush2.msra.mxu0 0.0
        %5214 = vmatprep.mubr.f32.mxu0 0.0
        %v5215 = vand.u32 %v4801, 4294901760
        %v5216 = vsub.f32 %v4801, %v5215
        %5217 = vmatmul.mubr.f32.gmra.mxu0 %v5216
        %v5218 = vpop.f32.mrf.mxu0
        %v5219 = vadd.f32 %v5097, %v5218
        %v5220 = vpop.f32.mrf.mxu0
        %5221 = vmatprep.mubr.f32.mxu0 0.0
        %v5222 = vand.u32 %v4802, 4294901760
        %v5223 = vsub.f32 %v4802, %v5222
        %5224 = vmatmul.mubr.f32.gmra.mxu0 %v5223
        %v5225 = vpop.f32.mrf.mxu0
        %v5226 = vadd.f32 %v5103, %v5225
        %v5227 = vpop.f32.mrf.mxu0
        %5228 = vmatprep.mubr.f32.mxu0 0.0
        %v5229 = vand.u32 %v4803, 4294901760
        %v5230 = vsub.f32 %v4803, %v5229
        %5231 = vmatmul.mubr.f32.gmra.mxu0 %v5230
        %v5232 = vpop.f32.mrf.mxu0
        %v5233 = vadd.f32 %v5109, %v5232
        %v5234 = vpop.f32.mrf.mxu0
        %5235 = vmatprep.mubr.f32.mxu0 0.0
        %v5236 = vand.u32 %v4804, 4294901760
        %v5237 = vsub.f32 %v4804, %v5236
        %5238 = vmatmul.mubr.f32.gmra.mxu0 %v5237
        %v5239 = vpop.f32.mrf.mxu0
        %v5240 = vadd.f32 %v5115, %v5239
        %v5241 = vpop.f32.mrf.mxu0
        %5242 = vdwg.mxu0
        %5243 = vmatprep.subr.mxu0 0.0
        %v5244 = vand.u32 %v4823, 4294901760
        %5245 = vmatpush1.msra.mxu0 %v5244
        %5246 = vmatprep.subr.mxu0 0.0
        %v5247 = vand.u32 %v4822, 4294901760
        %5248 = vmatpush1.msra.mxu0 %v5247
        %5249 = vmatprep.subr.mxu0 0.0
        %v5250 = vand.u32 %v4821, 4294901760
        %5251 = vmatpush1.msra.mxu0 %v5250
        %5252 = vmatprep.subr.mxu0 0.0
        %v5253 = vand.u32 %v4820, 4294901760
        %5254 = vmatpush1.msra.mxu0 %v5253
        %5255 = vmatprep.subr.mxu0 0.0
        %v5256 = vand.u32 %v4819, 4294901760
        %5257 = vmatpush1.msra.mxu0 %v5256
        %5258 = vmatprep.subr.mxu0 0.0
        %v5259 = vand.u32 %v4818, 4294901760
        %5260 = vmatpush1.msra.mxu0 %v5259
        %5261 = vmatprep.subr.mxu0 0.0
        %v5262 = vand.u32 %v4817, 4294901760
        %5263 = vmatpush1.msra.mxu0 %v5262
        %5264 = vmatprep.subr.mxu0 0.0
        %v5265 = vand.u32 %v4816, 4294901760
        %5266 = vmatpush1.msra.mxu0 %v5265
        %5267 = vmatprep.subr.mxu0 0.0
        %v5268 = vand.u32 %v4815, 4294901760
        %5269 = vmatpush1.msra.mxu0 %v5268
        %5270 = vmatprep.subr.mxu0 0.0
        %v5271 = vand.u32 %v4814, 4294901760
        %5272 = vmatpush1.msra.mxu0 %v5271
        %5273 = vmatprep.subr.mxu0 0.0
        %v5274 = vand.u32 %v4813, 4294901760
        %5275 = vmatpush1.msra.mxu0 %v5274
        %5276 = vmatprep.subr.mxu0 0.0
        %v5277 = vand.u32 %v4812, 4294901760
        %5278 = vmatpush1.msra.mxu0 %v5277
        %5279 = vmatprep.subr.mxu0 0.0
        %v5280 = vand.u32 %v4811, 4294901760
        %5281 = vmatpush1.msra.mxu0 %v5280
        %5282 = vmatprep.subr.mxu0 0.0
        %v5283 = vand.u32 %v4810, 4294901760
        %5284 = vmatpush1.msra.mxu0 %v5283
        %5285 = vmatprep.subr.mxu0 0.0
        %v5286 = vand.u32 %v4809, 4294901760
        %5287 = vmatpush1.msra.mxu0 %v5286
        %5288 = vmatprep.subr.mxu0 0.0
        %v5289 = vand.u32 %v4808, 4294901760
        %5290 = vmatpush1.msra.mxu0 %v5289
        %5291 = vmatprep.subr.mxu0 0.0
        %5292 = vmatpush2.msra.mxu0 0.0
        %5293 = vmatprep.subr.mxu0 0.0
        %5294 = vmatpush2.msra.mxu0 0.0
        %5295 = vmatprep.subr.mxu0 0.0
        %5296 = vmatpush2.msra.mxu0 0.0
        %5297 = vmatprep.subr.mxu0 0.0
        %5298 = vmatpush2.msra.mxu0 0.0
        %5299 = vmatprep.subr.mxu0 0.0
        %5300 = vmatpush2.msra.mxu0 0.0
        %5301 = vmatprep.subr.mxu0 0.0
        %5302 = vmatpush2.msra.mxu0 0.0
        %5303 = vmatprep.subr.mxu0 0.0
        %5304 = vmatpush2.msra.mxu0 0.0
        %5305 = vmatprep.subr.mxu0 0.0
        %5306 = vmatpush2.msra.mxu0 0.0
        %5307 = vmatprep.subr.mxu0 0.0
        %5308 = vmatpush2.msra.mxu0 0.0
        %5309 = vmatprep.subr.mxu0 0.0
        %5310 = vmatpush2.msra.mxu0 0.0
        %5311 = vmatprep.subr.mxu0 0.0
        %5312 = vmatpush2.msra.mxu0 0.0
        %5313 = vmatprep.subr.mxu0 0.0
        %5314 = vmatpush2.msra.mxu0 0.0
        %5315 = vmatprep.subr.mxu0 0.0
        %5316 = vmatpush2.msra.mxu0 0.0
        %5317 = vmatprep.subr.mxu0 0.0
        %5318 = vmatpush2.msra.mxu0 0.0
        %5319 = vmatprep.subr.mxu0 0.0
        %5320 = vmatpush2.msra.mxu0 0.0
        %5321 = vmatprep.subr.mxu0 0.0
        %5322 = vmatpush2.msra.mxu0 0.0
        %5323 = vmatprep.mubr.f32.mxu0 0.0
        %v5324 = vand.u32 %v4801, 4294901760
        %v5325 = vsub.f32 %v4801, %v5324
        %v5326 = vand.u32 %v5325, 4294901760
        %5327 = vmatmul.mubr.f32.gmra.mxu0 %v5326
        %v5328 = vpop.f32.mrf.mxu0
        %v5329 = vadd.f32 %v5219, %v5328
        %v5330 = vpop.f32.mrf.mxu0
        %5331 = vmatprep.mubr.f32.mxu0 0.0
        %v5332 = vand.u32 %v4802, 4294901760
        %v5333 = vsub.f32 %v4802, %v5332
        %v5334 = vand.u32 %v5333, 4294901760
        %5335 = vmatmul.mubr.f32.gmra.mxu0 %v5334
        %v5336 = vpop.f32.mrf.mxu0
        %v5337 = vadd.f32 %v5226, %v5336
        %v5338 = vpop.f32.mrf.mxu0
        %5339 = vmatprep.mubr.f32.mxu0 0.0
        %v5340 = vand.u32 %v4803, 4294901760
        %v5341 = vsub.f32 %v4803, %v5340
        %v5342 = vand.u32 %v5341, 4294901760
        %5343 = vmatmul.mubr.f32.gmra.mxu0 %v5342
        %v5344 = vpop.f32.mrf.mxu0
        %v5345 = vadd.f32 %v5233, %v5344
        %v5346 = vpop.f32.mrf.mxu0
        %5347 = vmatprep.mubr.f32.mxu0 0.0
        %v5348 = vand.u32 %v4804, 4294901760
        %v5349 = vsub.f32 %v4804, %v5348
        %v5350 = vand.u32 %v5349, 4294901760
        %5351 = vmatmul.mubr.f32.gmra.mxu0 %v5350
        %v5352 = vpop.f32.mrf.mxu0
        %v5353 = vadd.f32 %v5240, %v5352
        %v5354 = vpop.f32.mrf.mxu0
        %5355 = vdwg.mxu0
        %5356 = vmatprep.subr.mxu0 0.0
        %v5357 = vand.u32 %v4823, 4294901760
        %v5358 = vsub.f32 %v4823, %v5357
        %v5359 = vand.u32 %v5358, 4294901760
        %5360 = vmatpush1.msra.mxu0 %v5359
        %5361 = vmatprep.subr.mxu0 0.0
        %v5362 = vand.u32 %v4822, 4294901760
        %v5363 = vsub.f32 %v4822, %v5362
        %v5364 = vand.u32 %v5363, 4294901760
        %5365 = vmatpush1.msra.mxu0 %v5364
        %5366 = vmatprep.subr.mxu0 0.0
        %v5367 = vand.u32 %v4821, 4294901760
        %v5368 = vsub.f32 %v4821, %v5367
        %v5369 = vand.u32 %v5368, 4294901760
        %5370 = vmatpush1.msra.mxu0 %v5369
        %5371 = vmatprep.subr.mxu0 0.0
        %v5372 = vand.u32 %v4820, 4294901760
        %v5373 = vsub.f32 %v4820, %v5372
        %v5374 = vand.u32 %v5373, 4294901760
        %5375 = vmatpush1.msra.mxu0 %v5374
        %5376 = vmatprep.subr.mxu0 0.0
        %v5377 = vand.u32 %v4819, 4294901760
        %v5378 = vsub.f32 %v4819, %v5377
        %v5379 = vand.u32 %v5378, 4294901760
        %5380 = vmatpush1.msra.mxu0 %v5379
        %5381 = vmatprep.subr.mxu0 0.0
        %v5382 = vand.u32 %v4818, 4294901760
        %v5383 = vsub.f32 %v4818, %v5382
        %v5384 = vand.u32 %v5383, 4294901760
        %5385 = vmatpush1.msra.mxu0 %v5384
        %5386 = vmatprep.subr.mxu0 0.0
        %v5387 = vand.u32 %v4817, 4294901760
        %v5388 = vsub.f32 %v4817, %v5387
        %v5389 = vand.u32 %v5388, 4294901760
        %5390 = vmatpush1.msra.mxu0 %v5389
        %5391 = vmatprep.subr.mxu0 0.0
        %v5392 = vand.u32 %v4816, 4294901760
        %v5393 = vsub.f32 %v4816, %v5392
        %v5394 = vand.u32 %v5393, 4294901760
        %5395 = vmatpush1.msra.mxu0 %v5394
        %5396 = vmatprep.subr.mxu0 0.0
        %v5397 = vand.u32 %v4815, 4294901760
        %v5398 = vsub.f32 %v4815, %v5397
        %v5399 = vand.u32 %v5398, 4294901760
        %5400 = vmatpush1.msra.mxu0 %v5399
        %5401 = vmatprep.subr.mxu0 0.0
        %v5402 = vand.u32 %v4814, 4294901760
        %v5403 = vsub.f32 %v4814, %v5402
        %v5404 = vand.u32 %v5403, 4294901760
        %5405 = vmatpush1.msra.mxu0 %v5404
        %5406 = vmatprep.subr.mxu0 0.0
        %v5407 = vand.u32 %v4813, 4294901760
        %v5408 = vsub.f32 %v4813, %v5407
        %v5409 = vand.u32 %v5408, 4294901760
        %5410 = vmatpush1.msra.mxu0 %v5409
        %5411 = vmatprep.subr.mxu0 0.0
        %v5412 = vand.u32 %v4812, 4294901760
        %v5413 = vsub.f32 %v4812, %v5412
        %v5414 = vand.u32 %v5413, 4294901760
        %5415 = vmatpush1.msra.mxu0 %v5414
        %5416 = vmatprep.subr.mxu0 0.0
        %v5417 = vand.u32 %v4811, 4294901760
        %v5418 = vsub.f32 %v4811, %v5417
        %v5419 = vand.u32 %v5418, 4294901760
        %5420 = vmatpush1.msra.mxu0 %v5419
        %5421 = vmatprep.subr.mxu0 0.0
        %v5422 = vand.u32 %v4810, 4294901760
        %v5423 = vsub.f32 %v4810, %v5422
        %v5424 = vand.u32 %v5423, 4294901760
        %5425 = vmatpush1.msra.mxu0 %v5424
        %5426 = vmatprep.subr.mxu0 0.0
        %v5427 = vand.u32 %v4809, 4294901760
        %v5428 = vsub.f32 %v4809, %v5427
        %v5429 = vand.u32 %v5428, 4294901760
        %5430 = vmatpush1.msra.mxu0 %v5429
        %5431 = vmatprep.subr.mxu0 0.0
        %v5432 = vand.u32 %v4808, 4294901760
        %v5433 = vsub.f32 %v4808, %v5432
        %v5434 = vand.u32 %v5433, 4294901760
        %5435 = vmatpush1.msra.mxu0 %v5434
        %5436 = vmatprep.subr.mxu0 0.0
        %5437 = vmatpush2.msra.mxu0 0.0
        %5438 = vmatprep.subr.mxu0 0.0
        %5439 = vmatpush2.msra.mxu0 0.0
        %5440 = vmatprep.subr.mxu0 0.0
        %5441 = vmatpush2.msra.mxu0 0.0
        %5442 = vmatprep.subr.mxu0 0.0
        %5443 = vmatpush2.msra.mxu0 0.0
        %5444 = vmatprep.subr.mxu0 0.0
        %5445 = vmatpush2.msra.mxu0 0.0
        %5446 = vmatprep.subr.mxu0 0.0
        %5447 = vmatpush2.msra.mxu0 0.0
        %5448 = vmatprep.subr.mxu0 0.0
        %5449 = vmatpush2.msra.mxu0 0.0
        %5450 = vmatprep.subr.mxu0 0.0
        %5451 = vmatpush2.msra.mxu0 0.0
        %5452 = vmatprep.subr.mxu0 0.0
        %5453 = vmatpush2.msra.mxu0 0.0
        %5454 = vmatprep.subr.mxu0 0.0
        %5455 = vmatpush2.msra.mxu0 0.0
        %5456 = vmatprep.subr.mxu0 0.0
        %5457 = vmatpush2.msra.mxu0 0.0
        %5458 = vmatprep.subr.mxu0 0.0
        %5459 = vmatpush2.msra.mxu0 0.0
        %5460 = vmatprep.subr.mxu0 0.0
        %5461 = vmatpush2.msra.mxu0 0.0
        %5462 = vmatprep.subr.mxu0 0.0
        %5463 = vmatpush2.msra.mxu0 0.0
        %5464 = vmatprep.subr.mxu0 0.0
        %5465 = vmatpush2.msra.mxu0 0.0
        %5466 = vmatprep.subr.mxu0 0.0
        %5467 = vmatpush2.msra.mxu0 0.0
        %5468 = vmatprep.mubr.f32.mxu0 0.0
        %v5469 = vand.u32 %v4801, 4294901760
        %5470 = vmatmul.mubr.f32.gmra.mxu0 %v5469
        %v5471 = vpop.f32.mrf.mxu0
        %v5472 = vadd.f32 %v5329, %v5471
        %v5473 = vpop.f32.mrf.mxu0
        %5474 = vmatprep.mubr.f32.mxu0 0.0
        %v5475 = vand.u32 %v4802, 4294901760
        %5476 = vmatmul.mubr.f32.gmra.mxu0 %v5475
        %v5477 = vpop.f32.mrf.mxu0
        %v5478 = vadd.f32 %v5337, %v5477
        %v5479 = vpop.f32.mrf.mxu0
        %5480 = vmatprep.mubr.f32.mxu0 0.0
        %v5481 = vand.u32 %v4803, 4294901760
        %5482 = vmatmul.mubr.f32.gmra.mxu0 %v5481
        %v5483 = vpop.f32.mrf.mxu0
        %v5484 = vadd.f32 %v5345, %v5483
        %v5485 = vpop.f32.mrf.mxu0
        %5486 = vmatprep.mubr.f32.mxu0 0.0
        %v5487 = vand.u32 %v4804, 4294901760
        %5488 = vmatmul.mubr.f32.gmra.mxu0 %v5487
        %v5489 = vpop.f32.mrf.mxu0
        %v5490 = vadd.f32 %v5353, %v5489
        %v5491 = vpop.f32.mrf.mxu0
        %5492 = vdwg.mxu0
        %5493 = vmatprep.subr.mxu0 0.0
        %v5494 = vand.u32 %v4823, 4294901760
        %5495 = vmatpush1.msra.mxu0 %v5494
        %5496 = vmatprep.subr.mxu0 0.0
        %v5497 = vand.u32 %v4822, 4294901760
        %5498 = vmatpush1.msra.mxu0 %v5497
        %5499 = vmatprep.subr.mxu0 0.0
        %v5500 = vand.u32 %v4821, 4294901760
        %5501 = vmatpush1.msra.mxu0 %v5500
        %5502 = vmatprep.subr.mxu0 0.0
        %v5503 = vand.u32 %v4820, 4294901760
        %5504 = vmatpush1.msra.mxu0 %v5503
        %5505 = vmatprep.subr.mxu0 0.0
        %v5506 = vand.u32 %v4819, 4294901760
        %5507 = vmatpush1.msra.mxu0 %v5506
        %5508 = vmatprep.subr.mxu0 0.0
        %v5509 = vand.u32 %v4818, 4294901760
        %5510 = vmatpush1.msra.mxu0 %v5509
        %5511 = vmatprep.subr.mxu0 0.0
        %v5512 = vand.u32 %v4817, 4294901760
        %5513 = vmatpush1.msra.mxu0 %v5512
        %5514 = vmatprep.subr.mxu0 0.0
        %v5515 = vand.u32 %v4816, 4294901760
        %5516 = vmatpush1.msra.mxu0 %v5515
        %5517 = vmatprep.subr.mxu0 0.0
        %v5518 = vand.u32 %v4815, 4294901760
        %5519 = vmatpush1.msra.mxu0 %v5518
        %5520 = vmatprep.subr.mxu0 0.0
        %v5521 = vand.u32 %v4814, 4294901760
        %5522 = vmatpush1.msra.mxu0 %v5521
        %5523 = vmatprep.subr.mxu0 0.0
        %v5524 = vand.u32 %v4813, 4294901760
        %5525 = vmatpush1.msra.mxu0 %v5524
        %5526 = vmatprep.subr.mxu0 0.0
        %v5527 = vand.u32 %v4812, 4294901760
        %5528 = vmatpush1.msra.mxu0 %v5527
        %5529 = vmatprep.subr.mxu0 0.0
        %v5530 = vand.u32 %v4811, 4294901760
        %5531 = vmatpush1.msra.mxu0 %v5530
        %5532 = vmatprep.subr.mxu0 0.0
        %v5533 = vand.u32 %v4810, 4294901760
        %5534 = vmatpush1.msra.mxu0 %v5533
        %5535 = vmatprep.subr.mxu0 0.0
        %v5536 = vand.u32 %v4809, 4294901760
        %5537 = vmatpush1.msra.mxu0 %v5536
        %5538 = vmatprep.subr.mxu0 0.0
        %v5539 = vand.u32 %v4808, 4294901760
        %5540 = vmatpush1.msra.mxu0 %v5539
        %5541 = vmatprep.subr.mxu0 0.0
        %5542 = vmatpush2.msra.mxu0 0.0
        %5543 = vmatprep.subr.mxu0 0.0
        %5544 = vmatpush2.msra.mxu0 0.0
        %5545 = vmatprep.subr.mxu0 0.0
        %5546 = vmatpush2.msra.mxu0 0.0
        %5547 = vmatprep.subr.mxu0 0.0
        %5548 = vmatpush2.msra.mxu0 0.0
        %5549 = vmatprep.subr.mxu0 0.0
        %5550 = vmatpush2.msra.mxu0 0.0
        %5551 = vmatprep.subr.mxu0 0.0
        %5552 = vmatpush2.msra.mxu0 0.0
        %5553 = vmatprep.subr.mxu0 0.0
        %5554 = vmatpush2.msra.mxu0 0.0
        %5555 = vmatprep.subr.mxu0 0.0
        %5556 = vmatpush2.msra.mxu0 0.0
        %5557 = vmatprep.subr.mxu0 0.0
        %5558 = vmatpush2.msra.mxu0 0.0
        %5559 = vmatprep.subr.mxu0 0.0
        %5560 = vmatpush2.msra.mxu0 0.0
        %5561 = vmatprep.subr.mxu0 0.0
        %5562 = vmatpush2.msra.mxu0 0.0
        %5563 = vmatprep.subr.mxu0 0.0
        %5564 = vmatpush2.msra.mxu0 0.0
        %5565 = vmatprep.subr.mxu0 0.0
        %5566 = vmatpush2.msra.mxu0 0.0
        %5567 = vmatprep.subr.mxu0 0.0
        %5568 = vmatpush2.msra.mxu0 0.0
        %5569 = vmatprep.subr.mxu0 0.0
        %5570 = vmatpush2.msra.mxu0 0.0
        %5571 = vmatprep.subr.mxu0 0.0
        %5572 = vmatpush2.msra.mxu0 0.0
        %5573 = vmatprep.mubr.f32.mxu0 0.0
        %v5574 = vand.u32 %v4801, 4294901760
        %5575 = vmatmul.mubr.f32.gmra.mxu0 %v5574
        %v5576 = vpop.f32.mrf.mxu0
        %v5577 = vadd.f32 %v5472, %v5576
        %v5578 = vpop.f32.mrf.mxu0
        %5579 = vmatprep.mubr.f32.mxu0 0.0
        %v5580 = vand.u32 %v4802, 4294901760
        %5581 = vmatmul.mubr.f32.gmra.mxu0 %v5580
        %v5582 = vpop.f32.mrf.mxu0
        %v5583 = vadd.f32 %v5478, %v5582
        %v5584 = vpop.f32.mrf.mxu0
        %5585 = vmatprep.mubr.f32.mxu0 0.0
        %v5586 = vand.u32 %v4803, 4294901760
        %5587 = vmatmul.mubr.f32.gmra.mxu0 %v5586
        %v5588 = vpop.f32.mrf.mxu0
        %v5589 = vadd.f32 %v5484, %v5588
        %v5590 = vpop.f32.mrf.mxu0
        %5591 = vmatprep.mubr.f32.mxu0 0.0
        %v5592 = vand.u32 %v4804, 4294901760
        %5593 = vmatmul.mubr.f32.gmra.mxu0 %v5592
        %v5594 = vpop.f32.mrf.mxu0
        %v5595 = vadd.f32 %v5490, %v5594
        %v5596 = vpop.f32.mrf.mxu0
        %5597 = vdwg.mxu0
        %5598 = vadd.xlane.f32.xlu0 %v5577
        %v5599 = vpop.xlane.xlu0 %5598
        %5600 = vadd.xlane.f32.xlu0 %v5583
        %v5601 = vpop.xlane.xlu0 %5600
        %5602 = vadd.xlane.f32.xlu0 %v5589
        %v5603 = vpop.xlane.xlu0 %5602
        %5604 = vadd.xlane.f32.xlu0 %v5595
        %v5605 = vpop.xlane.xlu0 %5604
        %v5606 = vmul.f32 %v5599, %v1104
        %v5607 = vmul.f32 %v5601, %v1104
        %v5608 = vmul.f32 %v5603, %v1104
        %v5609 = vmul.f32 %v5605, %v1104
        %v5610 = vmul.f32 %v5577, %v5577
        %v5611 = vmul.f32 %v5583, %v5583
        %v5612 = vmul.f32 %v5589, %v5589
        %v5613 = vmul.f32 %v5595, %v5595
        %5614 = vadd.xlane.f32.xlu0 %v5610
        %v5615 = vpop.xlane.xlu0 %5614
        %5616 = vadd.xlane.f32.xlu0 %v5611
        %v5617 = vpop.xlane.xlu0 %5616
        %5618 = vadd.xlane.f32.xlu0 %v5612
        %v5619 = vpop.xlane.xlu0 %5618
        %5620 = vadd.xlane.f32.xlu0 %v5613
        %v5621 = vpop.xlane.xlu0 %5620
        %v5622 = vmul.f32 %v5615, %v1104
        %v5623 = vmul.f32 %v5617, %v1104
        %v5624 = vmul.f32 %v5619, %v1104
        %v5625 = vmul.f32 %v5621, %v1104
        %v5626 = vmul.f32 %v5606, %v5606
        %v5627 = vmul.f32 %v5607, %v5607
        %v5628 = vmul.f32 %v5608, %v5608
        %v5629 = vmul.f32 %v5609, %v5609
        %v5630 = vsub.f32 %v5622, %v5626
        %v5631 = vsub.f32 %v5623, %v5627
        %v5632 = vsub.f32 %v5624, %v5628
        %v5633 = vsub.f32 %v5625, %v5629
        %v5634 = vsub.f32 %v5577, %v5606
        %v5635 = vsub.f32 %v5583, %v5607
        %v5636 = vsub.f32 %v5589, %v5608
        %v5637 = vsub.f32 %v5595, %v5609
        %v5638 = vadd.f32 %v5630, 1e-05
        %v5639 = vadd.f32 %v5631, 1e-05
        %v5640 = vadd.f32 %v5632, 1e-05
        %v5641 = vadd.f32 %v5633, 1e-05
        %v5642 = vrsqrt.pop %v5638
        %v5643 = vrsqrt.pop %v5639
        %v5644 = vrsqrt.pop %v5640
        %v5645 = vrsqrt.pop %v5641
        %v5646 = vmul.f32 %v5634, %v5642
        %v5647 = vmul.f32 %v5635, %v5643
        %v5648 = vmul.f32 %v5636, %v5644
        %v5649 = vmul.f32 %v5637, %v5645
        %v5650 = vlaneseq
        %v5651 = vshrl.u32 %v5650, 7
        %v5652 = vsub.s32 0, %v5651
        %v5653 = vrot.slane %v4806, %v5652
        %v5654 = vmul.f32 %v5646, %v5653
        %v5655 = vmul.f32 %v5647, %v5653
        %v5656 = vmul.f32 %v5648, %v5653
        %v5657 = vmul.f32 %v5649, %v5653
        %v5658 = vlaneseq
        %v5659 = vshrl.u32 %v5658, 7
        %v5660 = vsub.s32 0, %v5659
        %v5661 = vrot.slane %v4807, %v5660
        %v5662 = vadd.f32 %v5654, %v5661
        %v5663 = vadd.f32 %v5655, %v5661
        %v5664 = vadd.f32 %v5656, %v5661
        %v5665 = vadd.f32 %v5657, %v5661
        %vm5666 = vcmp.gt.f32.partialorder %v5662, 0.0
        %vm5667 = vcmp.gt.f32.partialorder %v5663, 0.0
        %vm5668 = vcmp.gt.f32.partialorder %v5664, 0.0
        %vm5669 = vcmp.gt.f32.partialorder %v5665, 0.0
        %v5670 = vmin.f32 %v5662, 0.0
        %v5671 = vmin.f32 %v5663, 0.0
        %v5672 = vmin.f32 %v5664, 0.0
        %v5673 = vmin.f32 %v5665, 0.0
        %v5674 = vmul.f32 %v5670, 1.442695
        %v5675 = vpow.pop %v5674
        %v5676 = vmul.f32 %v5671, 1.442695
        %v5677 = vpow.pop %v5676
        %v5678 = vmul.f32 %v5672, 1.442695
        %v5679 = vpow.pop %v5678
        %v5680 = vmul.f32 %v5673, 1.442695
        %v5681 = vpow.pop %v5680
        %v5682 = vsub.f32 %v5675, 1.0
        %v5683 = vsub.f32 %v5677, 1.0
        %v5684 = vsub.f32 %v5679, 1.0
        %v5685 = vsub.f32 %v5681, 1.0
        %v5686 = vsel %vm5666, %v5662, %v5682
        %v5687 = vsel %vm5667, %v5663, %v5683
        %v5688 = vsel %vm5668, %v5664, %v5684
        %v5689 = vsel %vm5669, %v5665, %v5685
        %v5690 = vld [vmem:[%s2 + $0x11] sm:$0x1]
        %v5691 = vld [vmem:[%s2 + $0x12] sm:$0x1]
        %v5692 = vld [vmem:[%s2 + $0x13] sm:$0x1]
        %v5693 = vld [vmem:[%s10] sm:$0xff]
        %v5694 = vld [vmem:[%s10 + $0x8] sm:$0xff]
        %v5695 = vld [vmem:[%s10 + $0x10] sm:$0xff]
        %v5696 = vld [vmem:[%s10 + $0x18] sm:$0xff]
        %v5697 = vld [vmem:[%s10 + $0x20] sm:$0xff]
        %v5698 = vld [vmem:[%s10 + $0x28] sm:$0xff]
        %v5699 = vld [vmem:[%s10 + $0x30] sm:$0xff]
        %v5700 = vld [vmem:[%s10 + $0x38] sm:$0xff]
        %v5701 = vld [vmem:[%s10 + $0x40] sm:$0xff]
        %v5702 = vld [vmem:[%s10 + $0x48] sm:$0xff]
        %v5703 = vld [vmem:[%s10 + $0x50] sm:$0xff]
        %v5704 = vld [vmem:[%s10 + $0x58] sm:$0xff]
        %v5705 = vld [vmem:[%s10 + $0x60] sm:$0xff]
        %v5706 = vld [vmem:[%s10 + $0x68] sm:$0xff]
        %v5707 = vld [vmem:[%s10 + $0x70] sm:$0xff]
        %v5708 = vld [vmem:[%s10 + $0x78] sm:$0xff]
        %v5709 = vlaneseq
        %v5710 = vshrl.u32 %v5709, 7
        %v5711 = vsub.s32 0, %v5710
        %v5712 = vrot.slane %v5690, %v5711
        %5713 = vmatprep.subr.mxu0 0.0
        %v5714 = vand.u32 %v5708, 4294901760
        %5715 = vmatpush1.msra.mxu0 %v5714
        %5716 = vmatprep.subr.mxu0 0.0
        %v5717 = vand.u32 %v5707, 4294901760
        %5718 = vmatpush1.msra.mxu0 %v5717
        %5719 = vmatprep.subr.mxu0 0.0
        %v5720 = vand.u32 %v5706, 4294901760
        %5721 = vmatpush1.msra.mxu0 %v5720
        %5722 = vmatprep.subr.mxu0 0.0
        %v5723 = vand.u32 %v5705, 4294901760
        %5724 = vmatpush1.msra.mxu0 %v5723
        %5725 = vmatprep.subr.mxu0 0.0
        %v5726 = vand.u32 %v5704, 4294901760
        %5727 = vmatpush1.msra.mxu0 %v5726
        %5728 = vmatprep.subr.mxu0 0.0
        %v5729 = vand.u32 %v5703, 4294901760
        %5730 = vmatpush1.msra.mxu0 %v5729
        %5731 = vmatprep.subr.mxu0 0.0
        %v5732 = vand.u32 %v5702, 4294901760
        %5733 = vmatpush1.msra.mxu0 %v5732
        %5734 = vmatprep.subr.mxu0 0.0
        %v5735 = vand.u32 %v5701, 4294901760
        %5736 = vmatpush1.msra.mxu0 %v5735
        %5737 = vmatprep.subr.mxu0 0.0
        %v5738 = vand.u32 %v5700, 4294901760
        %5739 = vmatpush1.msra.mxu0 %v5738
        %5740 = vmatprep.subr.mxu0 0.0
        %v5741 = vand.u32 %v5699, 4294901760
        %5742 = vmatpush1.msra.mxu0 %v5741
        %5743 = vmatprep.subr.mxu0 0.0
        %v5744 = vand.u32 %v5698, 4294901760
        %5745 = vmatpush1.msra.mxu0 %v5744
        %5746 = vmatprep.subr.mxu0 0.0
        %v5747 = vand.u32 %v5697, 4294901760
        %5748 = vmatpush1.msra.mxu0 %v5747
        %5749 = vmatprep.subr.mxu0 0.0
        %v5750 = vand.u32 %v5696, 4294901760
        %5751 = vmatpush1.msra.mxu0 %v5750
        %5752 = vmatprep.subr.mxu0 0.0
        %v5753 = vand.u32 %v5695, 4294901760
        %5754 = vmatpush1.msra.mxu0 %v5753
        %5755 = vmatprep.subr.mxu0 0.0
        %v5756 = vand.u32 %v5694, 4294901760
        %5757 = vmatpush1.msra.mxu0 %v5756
        %5758 = vmatprep.subr.mxu0 0.0
        %v5759 = vand.u32 %v5693, 4294901760
        %5760 = vmatpush1.msra.mxu0 %v5759
        %5761 = vmatprep.subr.mxu0 0.0
        %5762 = vmatpush2.msra.mxu0 0.0
        %5763 = vmatprep.subr.mxu0 0.0
        %5764 = vmatpush2.msra.mxu0 0.0
        %5765 = vmatprep.subr.mxu0 0.0
        %5766 = vmatpush2.msra.mxu0 0.0
        %5767 = vmatprep.subr.mxu0 0.0
        %5768 = vmatpush2.msra.mxu0 0.0
        %5769 = vmatprep.subr.mxu0 0.0
        %5770 = vmatpush2.msra.mxu0 0.0
        %5771 = vmatprep.subr.mxu0 0.0
        %5772 = vmatpush2.msra.mxu0 0.0
        %5773 = vmatprep.subr.mxu0 0.0
        %5774 = vmatpush2.msra.mxu0 0.0
        %5775 = vmatprep.subr.mxu0 0.0
        %5776 = vmatpush2.msra.mxu0 0.0
        %5777 = vmatprep.subr.mxu0 0.0
        %5778 = vmatpush2.msra.mxu0 0.0
        %5779 = vmatprep.subr.mxu0 0.0
        %5780 = vmatpush2.msra.mxu0 0.0
        %5781 = vmatprep.subr.mxu0 0.0
        %5782 = vmatpush2.msra.mxu0 0.0
        %5783 = vmatprep.subr.mxu0 0.0
        %5784 = vmatpush2.msra.mxu0 0.0
        %5785 = vmatprep.subr.mxu0 0.0
        %5786 = vmatpush2.msra.mxu0 0.0
        %5787 = vmatprep.subr.mxu0 0.0
        %5788 = vmatpush2.msra.mxu0 0.0
        %5789 = vmatprep.subr.mxu0 0.0
        %5790 = vmatpush2.msra.mxu0 0.0
        %5791 = vmatprep.subr.mxu0 0.0
        %5792 = vmatpush2.msra.mxu0 0.0
        %5793 = vmatprep.mubr.f32.mxu0 0.0
        %v5794 = vand.u32 %v5686, 4294901760
        %v5795 = vsub.f32 %v5686, %v5794
        %v5796 = vand.u32 %v5795, 4294901760
        %v5797 = vsub.f32 %v5795, %v5796
        %v5798 = vand.u32 %v5797, 4294901760
        %5799 = vmatmul.mubr.f32.gmra.mxu0 %v5798
        %v5800 = vpop.f32.mrf.mxu0
        %v5801 = vadd.f32 %v5712, %v5800
        %v5802 = vpop.f32.mrf.mxu0
        %5803 = vmatprep.mubr.f32.mxu0 0.0
        %v5804 = vand.u32 %v5687, 4294901760
        %v5805 = vsub.f32 %v5687, %v5804
        %v5806 = vand.u32 %v5805, 4294901760
        %v5807 = vsub.f32 %v5805, %v5806
        %v5808 = vand.u32 %v5807, 4294901760
        %5809 = vmatmul.mubr.f32.gmra.mxu0 %v5808
        %v5810 = vpop.f32.mrf.mxu0
        %v5811 = vadd.f32 %v5712, %v5810
        %v5812 = vpop.f32.mrf.mxu0
        %5813 = vmatprep.mubr.f32.mxu0 0.0
        %v5814 = vand.u32 %v5688, 4294901760
        %v5815 = vsub.f32 %v5688, %v5814
        %v5816 = vand.u32 %v5815, 4294901760
        %v5817 = vsub.f32 %v5815, %v5816
        %v5818 = vand.u32 %v5817, 4294901760
        %5819 = vmatmul.mubr.f32.gmra.mxu0 %v5818
        %v5820 = vpop.f32.mrf.mxu0
        %v5821 = vadd.f32 %v5712, %v5820
        %v5822 = vpop.f32.mrf.mxu0
        %5823 = vmatprep.mubr.f32.mxu0 0.0
        %v5824 = vand.u32 %v5689, 4294901760
        %v5825 = vsub.f32 %v5689, %v5824
        %v5826 = vand.u32 %v5825, 4294901760
        %v5827 = vsub.f32 %v5825, %v5826
        %v5828 = vand.u32 %v5827, 4294901760
        %5829 = vmatmul.mubr.f32.gmra.mxu0 %v5828
        %v5830 = vpop.f32.mrf.mxu0
        %v5831 = vadd.f32 %v5712, %v5830
        %v5832 = vpop.f32.mrf.mxu0
        %5833 = vdwg.mxu0
        %5834 = vmatprep.subr.mxu0 0.0
        %v5835 = vand.u32 %v5708, 4294901760
        %v5836 = vsub.f32 %v5708, %v5835
        %v5837 = vand.u32 %v5836, 4294901760
        %v5838 = vsub.f32 %v5836, %v5837
        %v5839 = vand.u32 %v5838, 4294901760
        %5840 = vmatpush1.msra.mxu0 %v5839
        %5841 = vmatprep.subr.mxu0 0.0
        %v5842 = vand.u32 %v5707, 4294901760
        %v5843 = vsub.f32 %v5707, %v5842
        %v5844 = vand.u32 %v5843, 4294901760
        %v5845 = vsub.f32 %v5843, %v5844
        %v5846 = vand.u32 %v5845, 4294901760
        %5847 = vmatpush1.msra.mxu0 %v5846
        %5848 = vmatprep.subr.mxu0 0.0
        %v5849 = vand.u32 %v5706, 4294901760
        %v5850 = vsub.f32 %v5706, %v5849
        %v5851 = vand.u32 %v5850, 4294901760
        %v5852 = vsub.f32 %v5850, %v5851
        %v5853 = vand.u32 %v5852, 4294901760
        %5854 = vmatpush1.msra.mxu0 %v5853
        %5855 = vmatprep.subr.mxu0 0.0
        %v5856 = vand.u32 %v5705, 4294901760
        %v5857 = vsub.f32 %v5705, %v5856
        %v5858 = vand.u32 %v5857, 4294901760
        %v5859 = vsub.f32 %v5857, %v5858
        %v5860 = vand.u32 %v5859, 4294901760
        %5861 = vmatpush1.msra.mxu0 %v5860
        %5862 = vmatprep.subr.mxu0 0.0
        %v5863 = vand.u32 %v5704, 4294901760
        %v5864 = vsub.f32 %v5704, %v5863
        %v5865 = vand.u32 %v5864, 4294901760
        %v5866 = vsub.f32 %v5864, %v5865
        %v5867 = vand.u32 %v5866, 4294901760
        %5868 = vmatpush1.msra.mxu0 %v5867
        %5869 = vmatprep.subr.mxu0 0.0
        %v5870 = vand.u32 %v5703, 4294901760
        %v5871 = vsub.f32 %v5703, %v5870
        %v5872 = vand.u32 %v5871, 4294901760
        %v5873 = vsub.f32 %v5871, %v5872
        %v5874 = vand.u32 %v5873, 4294901760
        %5875 = vmatpush1.msra.mxu0 %v5874
        %5876 = vmatprep.subr.mxu0 0.0
        %v5877 = vand.u32 %v5702, 4294901760
        %v5878 = vsub.f32 %v5702, %v5877
        %v5879 = vand.u32 %v5878, 4294901760
        %v5880 = vsub.f32 %v5878, %v5879
        %v5881 = vand.u32 %v5880, 4294901760
        %5882 = vmatpush1.msra.mxu0 %v5881
        %5883 = vmatprep.subr.mxu0 0.0
        %v5884 = vand.u32 %v5701, 4294901760
        %v5885 = vsub.f32 %v5701, %v5884
        %v5886 = vand.u32 %v5885, 4294901760
        %v5887 = vsub.f32 %v5885, %v5886
        %v5888 = vand.u32 %v5887, 4294901760
        %5889 = vmatpush1.msra.mxu0 %v5888
        %5890 = vmatprep.subr.mxu0 0.0
        %v5891 = vand.u32 %v5700, 4294901760
        %v5892 = vsub.f32 %v5700, %v5891
        %v5893 = vand.u32 %v5892, 4294901760
        %v5894 = vsub.f32 %v5892, %v5893
        %v5895 = vand.u32 %v5894, 4294901760
        %5896 = vmatpush1.msra.mxu0 %v5895
        %5897 = vmatprep.subr.mxu0 0.0
        %v5898 = vand.u32 %v5699, 4294901760
        %v5899 = vsub.f32 %v5699, %v5898
        %v5900 = vand.u32 %v5899, 4294901760
        %v5901 = vsub.f32 %v5899, %v5900
        %v5902 = vand.u32 %v5901, 4294901760
        %5903 = vmatpush1.msra.mxu0 %v5902
        %5904 = vmatprep.subr.mxu0 0.0
        %v5905 = vand.u32 %v5698, 4294901760
        %v5906 = vsub.f32 %v5698, %v5905
        %v5907 = vand.u32 %v5906, 4294901760
        %v5908 = vsub.f32 %v5906, %v5907
        %v5909 = vand.u32 %v5908, 4294901760
        %5910 = vmatpush1.msra.mxu0 %v5909
        %5911 = vmatprep.subr.mxu0 0.0
        %v5912 = vand.u32 %v5697, 4294901760
        %v5913 = vsub.f32 %v5697, %v5912
        %v5914 = vand.u32 %v5913, 4294901760
        %v5915 = vsub.f32 %v5913, %v5914
        %v5916 = vand.u32 %v5915, 4294901760
        %5917 = vmatpush1.msra.mxu0 %v5916
        %5918 = vmatprep.subr.mxu0 0.0
        %v5919 = vand.u32 %v5696, 4294901760
        %v5920 = vsub.f32 %v5696, %v5919
        %v5921 = vand.u32 %v5920, 4294901760
        %v5922 = vsub.f32 %v5920, %v5921
        %v5923 = vand.u32 %v5922, 4294901760
        %5924 = vmatpush1.msra.mxu0 %v5923
        %5925 = vmatprep.subr.mxu0 0.0
        %v5926 = vand.u32 %v5695, 4294901760
        %v5927 = vsub.f32 %v5695, %v5926
        %v5928 = vand.u32 %v5927, 4294901760
        %v5929 = vsub.f32 %v5927, %v5928
        %v5930 = vand.u32 %v5929, 4294901760
        %5931 = vmatpush1.msra.mxu0 %v5930
        %5932 = vmatprep.subr.mxu0 0.0
        %v5933 = vand.u32 %v5694, 4294901760
        %v5934 = vsub.f32 %v5694, %v5933
        %v5935 = vand.u32 %v5934, 4294901760
        %v5936 = vsub.f32 %v5934, %v5935
        %v5937 = vand.u32 %v5936, 4294901760
        %5938 = vmatpush1.msra.mxu0 %v5937
        %5939 = vmatprep.subr.mxu0 0.0
        %v5940 = vand.u32 %v5693, 4294901760
        %v5941 = vsub.f32 %v5693, %v5940
        %v5942 = vand.u32 %v5941, 4294901760
        %v5943 = vsub.f32 %v5941, %v5942
        %v5944 = vand.u32 %v5943, 4294901760
        %5945 = vmatpush1.msra.mxu0 %v5944
        %5946 = vmatprep.subr.mxu0 0.0
        %5947 = vmatpush2.msra.mxu0 0.0
        %5948 = vmatprep.subr.mxu0 0.0
        %5949 = vmatpush2.msra.mxu0 0.0
        %5950 = vmatprep.subr.mxu0 0.0
        %5951 = vmatpush2.msra.mxu0 0.0
        %5952 = vmatprep.subr.mxu0 0.0
        %5953 = vmatpush2.msra.mxu0 0.0
        %5954 = vmatprep.subr.mxu0 0.0
        %5955 = vmatpush2.msra.mxu0 0.0
        %5956 = vmatprep.subr.mxu0 0.0
        %5957 = vmatpush2.msra.mxu0 0.0
        %5958 = vmatprep.subr.mxu0 0.0
        %5959 = vmatpush2.msra.mxu0 0.0
        %5960 = vmatprep.subr.mxu0 0.0
        %5961 = vmatpush2.msra.mxu0 0.0
        %5962 = vmatprep.subr.mxu0 0.0
        %5963 = vmatpush2.msra.mxu0 0.0
        %5964 = vmatprep.subr.mxu0 0.0
        %5965 = vmatpush2.msra.mxu0 0.0
        %5966 = vmatprep.subr.mxu0 0.0
        %5967 = vmatpush2.msra.mxu0 0.0
        %5968 = vmatprep.subr.mxu0 0.0
        %5969 = vmatpush2.msra.mxu0 0.0
        %5970 = vmatprep.subr.mxu0 0.0
        %5971 = vmatpush2.msra.mxu0 0.0
        %5972 = vmatprep.subr.mxu0 0.0
        %5973 = vmatpush2.msra.mxu0 0.0
        %5974 = vmatprep.subr.mxu0 0.0
        %5975 = vmatpush2.msra.mxu0 0.0
        %5976 = vmatprep.subr.mxu0 0.0
        %5977 = vmatpush2.msra.mxu0 0.0
        %5978 = vmatprep.mubr.f32.mxu0 0.0
        %v5979 = vand.u32 %v5686, 4294901760
        %5980 = vmatmul.mubr.f32.gmra.mxu0 %v5979
        %v5981 = vpop.f32.mrf.mxu0
        %v5982 = vadd.f32 %v5801, %v5981
        %v5983 = vpop.f32.mrf.mxu0
        %5984 = vmatprep.mubr.f32.mxu0 0.0
        %v5985 = vand.u32 %v5687, 4294901760
        %5986 = vmatmul.mubr.f32.gmra.mxu0 %v5985
        %v5987 = vpop.f32.mrf.mxu0
        %v5988 = vadd.f32 %v5811, %v5987
        %v5989 = vpop.f32.mrf.mxu0
        %5990 = vmatprep.mubr.f32.mxu0 0.0
        %v5991 = vand.u32 %v5688, 4294901760
        %5992 = vmatmul.mubr.f32.gmra.mxu0 %v5991
        %v5993 = vpop.f32.mrf.mxu0
        %v5994 = vadd.f32 %v5821, %v5993
        %v5995 = vpop.f32.mrf.mxu0
        %5996 = vmatprep.mubr.f32.mxu0 0.0
        %v5997 = vand.u32 %v5689, 4294901760
        %5998 = vmatmul.mubr.f32.gmra.mxu0 %v5997
        %v5999 = vpop.f32.mrf.mxu0
        %v6000 = vadd.f32 %v5831, %v5999
        %v6001 = vpop.f32.mrf.mxu0
        %6002 = vdwg.mxu0
        %6003 = vmatprep.subr.mxu0 0.0
        %v6004 = vand.u32 %v5708, 4294901760
        %v6005 = vsub.f32 %v5708, %v6004
        %6006 = vmatpush1.msra.mxu0 %v6005
        %6007 = vmatprep.subr.mxu0 0.0
        %v6008 = vand.u32 %v5707, 4294901760
        %v6009 = vsub.f32 %v5707, %v6008
        %6010 = vmatpush1.msra.mxu0 %v6009
        %6011 = vmatprep.subr.mxu0 0.0
        %v6012 = vand.u32 %v5706, 4294901760
        %v6013 = vsub.f32 %v5706, %v6012
        %6014 = vmatpush1.msra.mxu0 %v6013
        %6015 = vmatprep.subr.mxu0 0.0
        %v6016 = vand.u32 %v5705, 4294901760
        %v6017 = vsub.f32 %v5705, %v6016
        %6018 = vmatpush1.msra.mxu0 %v6017
        %6019 = vmatprep.subr.mxu0 0.0
        %v6020 = vand.u32 %v5704, 4294901760
        %v6021 = vsub.f32 %v5704, %v6020
        %6022 = vmatpush1.msra.mxu0 %v6021
        %6023 = vmatprep.subr.mxu0 0.0
        %v6024 = vand.u32 %v5703, 4294901760
        %v6025 = vsub.f32 %v5703, %v6024
        %6026 = vmatpush1.msra.mxu0 %v6025
        %6027 = vmatprep.subr.mxu0 0.0
        %v6028 = vand.u32 %v5702, 4294901760
        %v6029 = vsub.f32 %v5702, %v6028
        %6030 = vmatpush1.msra.mxu0 %v6029
        %6031 = vmatprep.subr.mxu0 0.0
        %v6032 = vand.u32 %v5701, 4294901760
        %v6033 = vsub.f32 %v5701, %v6032
        %6034 = vmatpush1.msra.mxu0 %v6033
        %6035 = vmatprep.subr.mxu0 0.0
        %v6036 = vand.u32 %v5700, 4294901760
        %v6037 = vsub.f32 %v5700, %v6036
        %6038 = vmatpush1.msra.mxu0 %v6037
        %6039 = vmatprep.subr.mxu0 0.0
        %v6040 = vand.u32 %v5699, 4294901760
        %v6041 = vsub.f32 %v5699, %v6040
        %6042 = vmatpush1.msra.mxu0 %v6041
        %6043 = vmatprep.subr.mxu0 0.0
        %v6044 = vand.u32 %v5698, 4294901760
        %v6045 = vsub.f32 %v5698, %v6044
        %6046 = vmatpush1.msra.mxu0 %v6045
        %6047 = vmatprep.subr.mxu0 0.0
        %v6048 = vand.u32 %v5697, 4294901760
        %v6049 = vsub.f32 %v5697, %v6048
        %6050 = vmatpush1.msra.mxu0 %v6049
        %6051 = vmatprep.subr.mxu0 0.0
        %v6052 = vand.u32 %v5696, 4294901760
        %v6053 = vsub.f32 %v5696, %v6052
        %6054 = vmatpush1.msra.mxu0 %v6053
        %6055 = vmatprep.subr.mxu0 0.0
        %v6056 = vand.u32 %v5695, 4294901760
        %v6057 = vsub.f32 %v5695, %v6056
        %6058 = vmatpush1.msra.mxu0 %v6057
        %6059 = vmatprep.subr.mxu0 0.0
        %v6060 = vand.u32 %v5694, 4294901760
        %v6061 = vsub.f32 %v5694, %v6060
        %6062 = vmatpush1.msra.mxu0 %v6061
        %6063 = vmatprep.subr.mxu0 0.0
        %v6064 = vand.u32 %v5693, 4294901760
        %v6065 = vsub.f32 %v5693, %v6064
        %6066 = vmatpush1.msra.mxu0 %v6065
        %6067 = vmatprep.subr.mxu0 0.0
        %6068 = vmatpush2.msra.mxu0 0.0
        %6069 = vmatprep.subr.mxu0 0.0
        %6070 = vmatpush2.msra.mxu0 0.0
        %6071 = vmatprep.subr.mxu0 0.0
        %6072 = vmatpush2.msra.mxu0 0.0
        %6073 = vmatprep.subr.mxu0 0.0
        %6074 = vmatpush2.msra.mxu0 0.0
        %6075 = vmatprep.subr.mxu0 0.0
        %6076 = vmatpush2.msra.mxu0 0.0
        %6077 = vmatprep.subr.mxu0 0.0
        %6078 = vmatpush2.msra.mxu0 0.0
        %6079 = vmatprep.subr.mxu0 0.0
        %6080 = vmatpush2.msra.mxu0 0.0
        %6081 = vmatprep.subr.mxu0 0.0
        %6082 = vmatpush2.msra.mxu0 0.0
        %6083 = vmatprep.subr.mxu0 0.0
        %6084 = vmatpush2.msra.mxu0 0.0
        %6085 = vmatprep.subr.mxu0 0.0
        %6086 = vmatpush2.msra.mxu0 0.0
        %6087 = vmatprep.subr.mxu0 0.0
        %6088 = vmatpush2.msra.mxu0 0.0
        %6089 = vmatprep.subr.mxu0 0.0
        %6090 = vmatpush2.msra.mxu0 0.0
        %6091 = vmatprep.subr.mxu0 0.0
        %6092 = vmatpush2.msra.mxu0 0.0
        %6093 = vmatprep.subr.mxu0 0.0
        %6094 = vmatpush2.msra.mxu0 0.0
        %6095 = vmatprep.subr.mxu0 0.0
        %6096 = vmatpush2.msra.mxu0 0.0
        %6097 = vmatprep.subr.mxu0 0.0
        %6098 = vmatpush2.msra.mxu0 0.0
        %6099 = vmatprep.mubr.f32.mxu0 0.0
        %v6100 = vand.u32 %v5686, 4294901760
        %v6101 = vsub.f32 %v5686, %v6100
        %6102 = vmatmul.mubr.f32.gmra.mxu0 %v6101
        %v6103 = vpop.f32.mrf.mxu0
        %v6104 = vadd.f32 %v5982, %v6103
        %v6105 = vpop.f32.mrf.mxu0
        %6106 = vmatprep.mubr.f32.mxu0 0.0
        %v6107 = vand.u32 %v5687, 4294901760
        %v6108 = vsub.f32 %v5687, %v6107
        %6109 = vmatmul.mubr.f32.gmra.mxu0 %v6108
        %v6110 = vpop.f32.mrf.mxu0
        %v6111 = vadd.f32 %v5988, %v6110
        %v6112 = vpop.f32.mrf.mxu0
        %6113 = vmatprep.mubr.f32.mxu0 0.0
        %v6114 = vand.u32 %v5688, 4294901760
        %v6115 = vsub.f32 %v5688, %v6114
        %6116 = vmatmul.mubr.f32.gmra.mxu0 %v6115
        %v6117 = vpop.f32.mrf.mxu0
        %v6118 = vadd.f32 %v5994, %v6117
        %v6119 = vpop.f32.mrf.mxu0
        %6120 = vmatprep.mubr.f32.mxu0 0.0
        %v6121 = vand.u32 %v5689, 4294901760
        %v6122 = vsub.f32 %v5689, %v6121
        %6123 = vmatmul.mubr.f32.gmra.mxu0 %v6122
        %v6124 = vpop.f32.mrf.mxu0
        %v6125 = vadd.f32 %v6000, %v6124
        %v6126 = vpop.f32.mrf.mxu0
        %6127 = vdwg.mxu0
        %6128 = vmatprep.subr.mxu0 0.0
        %v6129 = vand.u32 %v5708, 4294901760
        %6130 = vmatpush1.msra.mxu0 %v6129
        %6131 = vmatprep.subr.mxu0 0.0
        %v6132 = vand.u32 %v5707, 4294901760
        %6133 = vmatpush1.msra.mxu0 %v6132
        %6134 = vmatprep.subr.mxu0 0.0
        %v6135 = vand.u32 %v5706, 4294901760
        %6136 = vmatpush1.msra.mxu0 %v6135
        %6137 = vmatprep.subr.mxu0 0.0
        %v6138 = vand.u32 %v5705, 4294901760
        %6139 = vmatpush1.msra.mxu0 %v6138
        %6140 = vmatprep.subr.mxu0 0.0
        %v6141 = vand.u32 %v5704, 4294901760
        %6142 = vmatpush1.msra.mxu0 %v6141
        %6143 = vmatprep.subr.mxu0 0.0
        %v6144 = vand.u32 %v5703, 4294901760
        %6145 = vmatpush1.msra.mxu0 %v6144
        %6146 = vmatprep.subr.mxu0 0.0
        %v6147 = vand.u32 %v5702, 4294901760
        %6148 = vmatpush1.msra.mxu0 %v6147
        %6149 = vmatprep.subr.mxu0 0.0
        %v6150 = vand.u32 %v5701, 4294901760
        %6151 = vmatpush1.msra.mxu0 %v6150
        %6152 = vmatprep.subr.mxu0 0.0
        %v6153 = vand.u32 %v5700, 4294901760
        %6154 = vmatpush1.msra.mxu0 %v6153
        %6155 = vmatprep.subr.mxu0 0.0
        %v6156 = vand.u32 %v5699, 4294901760
        %6157 = vmatpush1.msra.mxu0 %v6156
        %6158 = vmatprep.subr.mxu0 0.0
        %v6159 = vand.u32 %v5698, 4294901760
        %6160 = vmatpush1.msra.mxu0 %v6159
        %6161 = vmatprep.subr.mxu0 0.0
        %v6162 = vand.u32 %v5697, 4294901760
        %6163 = vmatpush1.msra.mxu0 %v6162
        %6164 = vmatprep.subr.mxu0 0.0
        %v6165 = vand.u32 %v5696, 4294901760
        %6166 = vmatpush1.msra.mxu0 %v6165
        %6167 = vmatprep.subr.mxu0 0.0
        %v6168 = vand.u32 %v5695, 4294901760
        %6169 = vmatpush1.msra.mxu0 %v6168
        %6170 = vmatprep.subr.mxu0 0.0
        %v6171 = vand.u32 %v5694, 4294901760
        %6172 = vmatpush1.msra.mxu0 %v6171
        %6173 = vmatprep.subr.mxu0 0.0
        %v6174 = vand.u32 %v5693, 4294901760
        %6175 = vmatpush1.msra.mxu0 %v6174
        %6176 = vmatprep.subr.mxu0 0.0
        %6177 = vmatpush2.msra.mxu0 0.0
        %6178 = vmatprep.subr.mxu0 0.0
        %6179 = vmatpush2.msra.mxu0 0.0
        %6180 = vmatprep.subr.mxu0 0.0
        %6181 = vmatpush2.msra.mxu0 0.0
        %6182 = vmatprep.subr.mxu0 0.0
        %6183 = vmatpush2.msra.mxu0 0.0
        %6184 = vmatprep.subr.mxu0 0.0
        %6185 = vmatpush2.msra.mxu0 0.0
        %6186 = vmatprep.subr.mxu0 0.0
        %6187 = vmatpush2.msra.mxu0 0.0
        %6188 = vmatprep.subr.mxu0 0.0
        %6189 = vmatpush2.msra.mxu0 0.0
        %6190 = vmatprep.subr.mxu0 0.0
        %6191 = vmatpush2.msra.mxu0 0.0
        %6192 = vmatprep.subr.mxu0 0.0
        %6193 = vmatpush2.msra.mxu0 0.0
        %6194 = vmatprep.subr.mxu0 0.0
        %6195 = vmatpush2.msra.mxu0 0.0
        %6196 = vmatprep.subr.mxu0 0.0
        %6197 = vmatpush2.msra.mxu0 0.0
        %6198 = vmatprep.subr.mxu0 0.0
        %6199 = vmatpush2.msra.mxu0 0.0
        %6200 = vmatprep.subr.mxu0 0.0
        %6201 = vmatpush2.msra.mxu0 0.0
        %6202 = vmatprep.subr.mxu0 0.0
        %6203 = vmatpush2.msra.mxu0 0.0
        %6204 = vmatprep.subr.mxu0 0.0
        %6205 = vmatpush2.msra.mxu0 0.0
        %6206 = vmatprep.subr.mxu0 0.0
        %6207 = vmatpush2.msra.mxu0 0.0
        %6208 = vmatprep.mubr.f32.mxu0 0.0
        %v6209 = vand.u32 %v5686, 4294901760
        %v6210 = vsub.f32 %v5686, %v6209
        %v6211 = vand.u32 %v6210, 4294901760
        %6212 = vmatmul.mubr.f32.gmra.mxu0 %v6211
        %v6213 = vpop.f32.mrf.mxu0
        %v6214 = vadd.f32 %v6104, %v6213
        %v6215 = vpop.f32.mrf.mxu0
        %6216 = vmatprep.mubr.f32.mxu0 0.0
        %v6217 = vand.u32 %v5687, 4294901760
        %v6218 = vsub.f32 %v5687, %v6217
        %v6219 = vand.u32 %v6218, 4294901760
        %6220 = vmatmul.mubr.f32.gmra.mxu0 %v6219
        %v6221 = vpop.f32.mrf.mxu0
        %v6222 = vadd.f32 %v6111, %v6221
        %v6223 = vpop.f32.mrf.mxu0
        %6224 = vmatprep.mubr.f32.mxu0 0.0
        %v6225 = vand.u32 %v5688, 4294901760
        %v6226 = vsub.f32 %v5688, %v6225
        %v6227 = vand.u32 %v6226, 4294901760
        %6228 = vmatmul.mubr.f32.gmra.mxu0 %v6227
        %v6229 = vpop.f32.mrf.mxu0
        %v6230 = vadd.f32 %v6118, %v6229
        %v6231 = vpop.f32.mrf.mxu0
        %6232 = vmatprep.mubr.f32.mxu0 0.0
        %v6233 = vand.u32 %v5689, 4294901760
        %v6234 = vsub.f32 %v5689, %v6233
        %v6235 = vand.u32 %v6234, 4294901760
        %6236 = vmatmul.mubr.f32.gmra.mxu0 %v6235
        %v6237 = vpop.f32.mrf.mxu0
        %v6238 = vadd.f32 %v6125, %v6237
        %v6239 = vpop.f32.mrf.mxu0
        %6240 = vdwg.mxu0
        %6241 = vmatprep.subr.mxu0 0.0
        %v6242 = vand.u32 %v5708, 4294901760
        %v6243 = vsub.f32 %v5708, %v6242
        %v6244 = vand.u32 %v6243, 4294901760
        %6245 = vmatpush1.msra.mxu0 %v6244
        %6246 = vmatprep.subr.mxu0 0.0
        %v6247 = vand.u32 %v5707, 4294901760
        %v6248 = vsub.f32 %v5707, %v6247
        %v6249 = vand.u32 %v6248, 4294901760
        %6250 = vmatpush1.msra.mxu0 %v6249
        %6251 = vmatprep.subr.mxu0 0.0
        %v6252 = vand.u32 %v5706, 4294901760
        %v6253 = vsub.f32 %v5706, %v6252
        %v6254 = vand.u32 %v6253, 4294901760
        %6255 = vmatpush1.msra.mxu0 %v6254
        %6256 = vmatprep.subr.mxu0 0.0
        %v6257 = vand.u32 %v5705, 4294901760
        %v6258 = vsub.f32 %v5705, %v6257
        %v6259 = vand.u32 %v6258, 4294901760
        %6260 = vmatpush1.msra.mxu0 %v6259
        %6261 = vmatprep.subr.mxu0 0.0
        %v6262 = vand.u32 %v5704, 4294901760
        %v6263 = vsub.f32 %v5704, %v6262
        %v6264 = vand.u32 %v6263, 4294901760
        %6265 = vmatpush1.msra.mxu0 %v6264
        %6266 = vmatprep.subr.mxu0 0.0
        %v6267 = vand.u32 %v5703, 4294901760
        %v6268 = vsub.f32 %v5703, %v6267
        %v6269 = vand.u32 %v6268, 4294901760
        %6270 = vmatpush1.msra.mxu0 %v6269
        %6271 = vmatprep.subr.mxu0 0.0
        %v6272 = vand.u32 %v5702, 4294901760
        %v6273 = vsub.f32 %v5702, %v6272
        %v6274 = vand.u32 %v6273, 4294901760
        %6275 = vmatpush1.msra.mxu0 %v6274
        %6276 = vmatprep.subr.mxu0 0.0
        %v6277 = vand.u32 %v5701, 4294901760
        %v6278 = vsub.f32 %v5701, %v6277
        %v6279 = vand.u32 %v6278, 4294901760
        %6280 = vmatpush1.msra.mxu0 %v6279
        %6281 = vmatprep.subr.mxu0 0.0
        %v6282 = vand.u32 %v5700, 4294901760
        %v6283 = vsub.f32 %v5700, %v6282
        %v6284 = vand.u32 %v6283, 4294901760
        %6285 = vmatpush1.msra.mxu0 %v6284
        %6286 = vmatprep.subr.mxu0 0.0
        %v6287 = vand.u32 %v5699, 4294901760
        %v6288 = vsub.f32 %v5699, %v6287
        %v6289 = vand.u32 %v6288, 4294901760
        %6290 = vmatpush1.msra.mxu0 %v6289
        %6291 = vmatprep.subr.mxu0 0.0
        %v6292 = vand.u32 %v5698, 4294901760
        %v6293 = vsub.f32 %v5698, %v6292
        %v6294 = vand.u32 %v6293, 4294901760
        %6295 = vmatpush1.msra.mxu0 %v6294
        %6296 = vmatprep.subr.mxu0 0.0
        %v6297 = vand.u32 %v5697, 4294901760
        %v6298 = vsub.f32 %v5697, %v6297
        %v6299 = vand.u32 %v6298, 4294901760
        %6300 = vmatpush1.msra.mxu0 %v6299
        %6301 = vmatprep.subr.mxu0 0.0
        %v6302 = vand.u32 %v5696, 4294901760
        %v6303 = vsub.f32 %v5696, %v6302
        %v6304 = vand.u32 %v6303, 4294901760
        %6305 = vmatpush1.msra.mxu0 %v6304
        %6306 = vmatprep.subr.mxu0 0.0
        %v6307 = vand.u32 %v5695, 4294901760
        %v6308 = vsub.f32 %v5695, %v6307
        %v6309 = vand.u32 %v6308, 4294901760
        %6310 = vmatpush1.msra.mxu0 %v6309
        %6311 = vmatprep.subr.mxu0 0.0
        %v6312 = vand.u32 %v5694, 4294901760
        %v6313 = vsub.f32 %v5694, %v6312
        %v6314 = vand.u32 %v6313, 4294901760
        %6315 = vmatpush1.msra.mxu0 %v6314
        %6316 = vmatprep.subr.mxu0 0.0
        %v6317 = vand.u32 %v5693, 4294901760
        %v6318 = vsub.f32 %v5693, %v6317
        %v6319 = vand.u32 %v6318, 4294901760
        %6320 = vmatpush1.msra.mxu0 %v6319
        %6321 = vmatprep.subr.mxu0 0.0
        %6322 = vmatpush2.msra.mxu0 0.0
        %6323 = vmatprep.subr.mxu0 0.0
        %6324 = vmatpush2.msra.mxu0 0.0
        %6325 = vmatprep.subr.mxu0 0.0
        %6326 = vmatpush2.msra.mxu0 0.0
        %6327 = vmatprep.subr.mxu0 0.0
        %6328 = vmatpush2.msra.mxu0 0.0
        %6329 = vmatprep.subr.mxu0 0.0
        %6330 = vmatpush2.msra.mxu0 0.0
        %6331 = vmatprep.subr.mxu0 0.0
        %6332 = vmatpush2.msra.mxu0 0.0
        %6333 = vmatprep.subr.mxu0 0.0
        %6334 = vmatpush2.msra.mxu0 0.0
        %6335 = vmatprep.subr.mxu0 0.0
        %6336 = vmatpush2.msra.mxu0 0.0
        %6337 = vmatprep.subr.mxu0 0.0
        %6338 = vmatpush2.msra.mxu0 0.0
        %6339 = vmatprep.subr.mxu0 0.0
        %6340 = vmatpush2.msra.mxu0 0.0
        %6341 = vmatprep.subr.mxu0 0.0
        %6342 = vmatpush2.msra.mxu0 0.0
        %6343 = vmatprep.subr.mxu0 0.0
        %6344 = vmatpush2.msra.mxu0 0.0
        %6345 = vmatprep.subr.mxu0 0.0
        %6346 = vmatpush2.msra.mxu0 0.0
        %6347 = vmatprep.subr.mxu0 0.0
        %6348 = vmatpush2.msra.mxu0 0.0
        %6349 = vmatprep.subr.mxu0 0.0
        %6350 = vmatpush2.msra.mxu0 0.0
        %6351 = vmatprep.subr.mxu0 0.0
        %6352 = vmatpush2.msra.mxu0 0.0
        %6353 = vmatprep.mubr.f32.mxu0 0.0
        %v6354 = vand.u32 %v5686, 4294901760
        %6355 = vmatmul.mubr.f32.gmra.mxu0 %v6354
        %v6356 = vpop.f32.mrf.mxu0
        %v6357 = vadd.f32 %v6214, %v6356
        %v6358 = vpop.f32.mrf.mxu0
        %6359 = vmatprep.mubr.f32.mxu0 0.0
        %v6360 = vand.u32 %v5687, 4294901760
        %6361 = vmatmul.mubr.f32.gmra.mxu0 %v6360
        %v6362 = vpop.f32.mrf.mxu0
        %v6363 = vadd.f32 %v6222, %v6362
        %v6364 = vpop.f32.mrf.mxu0
        %6365 = vmatprep.mubr.f32.mxu0 0.0
        %v6366 = vand.u32 %v5688, 4294901760
        %6367 = vmatmul.mubr.f32.gmra.mxu0 %v6366
        %v6368 = vpop.f32.mrf.mxu0
        %v6369 = vadd.f32 %v6230, %v6368
        %v6370 = vpop.f32.mrf.mxu0
        %6371 = vmatprep.mubr.f32.mxu0 0.0
        %v6372 = vand.u32 %v5689, 4294901760
        %6373 = vmatmul.mubr.f32.gmra.mxu0 %v6372
        %v6374 = vpop.f32.mrf.mxu0
        %v6375 = vadd.f32 %v6238, %v6374
        %v6376 = vpop.f32.mrf.mxu0
        %6377 = vdwg.mxu0
        %6378 = vmatprep.subr.mxu0 0.0
        %v6379 = vand.u32 %v5708, 4294901760
        %6380 = vmatpush1.msra.mxu0 %v6379
        %6381 = vmatprep.subr.mxu0 0.0
        %v6382 = vand.u32 %v5707, 4294901760
        %6383 = vmatpush1.msra.mxu0 %v6382
        %6384 = vmatprep.subr.mxu0 0.0
        %v6385 = vand.u32 %v5706, 4294901760
        %6386 = vmatpush1.msra.mxu0 %v6385
        %6387 = vmatprep.subr.mxu0 0.0
        %v6388 = vand.u32 %v5705, 4294901760
        %6389 = vmatpush1.msra.mxu0 %v6388
        %6390 = vmatprep.subr.mxu0 0.0
        %v6391 = vand.u32 %v5704, 4294901760
        %6392 = vmatpush1.msra.mxu0 %v6391
        %6393 = vmatprep.subr.mxu0 0.0
        %v6394 = vand.u32 %v5703, 4294901760
        %6395 = vmatpush1.msra.mxu0 %v6394
        %6396 = vmatprep.subr.mxu0 0.0
        %v6397 = vand.u32 %v5702, 4294901760
        %6398 = vmatpush1.msra.mxu0 %v6397
        %6399 = vmatprep.subr.mxu0 0.0
        %v6400 = vand.u32 %v5701, 4294901760
        %6401 = vmatpush1.msra.mxu0 %v6400
        %6402 = vmatprep.subr.mxu0 0.0
        %v6403 = vand.u32 %v5700, 4294901760
        %6404 = vmatpush1.msra.mxu0 %v6403
        %6405 = vmatprep.subr.mxu0 0.0
        %v6406 = vand.u32 %v5699, 4294901760
        %6407 = vmatpush1.msra.mxu0 %v6406
        %6408 = vmatprep.subr.mxu0 0.0
        %v6409 = vand.u32 %v5698, 4294901760
        %6410 = vmatpush1.msra.mxu0 %v6409
        %6411 = vmatprep.subr.mxu0 0.0
        %v6412 = vand.u32 %v5697, 4294901760
        %6413 = vmatpush1.msra.mxu0 %v6412
        %6414 = vmatprep.subr.mxu0 0.0
        %v6415 = vand.u32 %v5696, 4294901760
        %6416 = vmatpush1.msra.mxu0 %v6415
        %6417 = vmatprep.subr.mxu0 0.0
        %v6418 = vand.u32 %v5695, 4294901760
        %6419 = vmatpush1.msra.mxu0 %v6418
        %6420 = vmatprep.subr.mxu0 0.0
        %v6421 = vand.u32 %v5694, 4294901760
        %6422 = vmatpush1.msra.mxu0 %v6421
        %6423 = vmatprep.subr.mxu0 0.0
        %v6424 = vand.u32 %v5693, 4294901760
        %6425 = vmatpush1.msra.mxu0 %v6424
        %6426 = vmatprep.subr.mxu0 0.0
        %6427 = vmatpush2.msra.mxu0 0.0
        %6428 = vmatprep.subr.mxu0 0.0
        %6429 = vmatpush2.msra.mxu0 0.0
        %6430 = vmatprep.subr.mxu0 0.0
        %6431 = vmatpush2.msra.mxu0 0.0
        %6432 = vmatprep.subr.mxu0 0.0
        %6433 = vmatpush2.msra.mxu0 0.0
        %6434 = vmatprep.subr.mxu0 0.0
        %6435 = vmatpush2.msra.mxu0 0.0
        %6436 = vmatprep.subr.mxu0 0.0
        %6437 = vmatpush2.msra.mxu0 0.0
        %6438 = vmatprep.subr.mxu0 0.0
        %6439 = vmatpush2.msra.mxu0 0.0
        %6440 = vmatprep.subr.mxu0 0.0
        %6441 = vmatpush2.msra.mxu0 0.0
        %6442 = vmatprep.subr.mxu0 0.0
        %6443 = vmatpush2.msra.mxu0 0.0
        %6444 = vmatprep.subr.mxu0 0.0
        %6445 = vmatpush2.msra.mxu0 0.0
        %6446 = vmatprep.subr.mxu0 0.0
        %6447 = vmatpush2.msra.mxu0 0.0
        %6448 = vmatprep.subr.mxu0 0.0
        %6449 = vmatpush2.msra.mxu0 0.0
        %6450 = vmatprep.subr.mxu0 0.0
        %6451 = vmatpush2.msra.mxu0 0.0
        %6452 = vmatprep.subr.mxu0 0.0
        %6453 = vmatpush2.msra.mxu0 0.0
        %6454 = vmatprep.subr.mxu0 0.0
        %6455 = vmatpush2.msra.mxu0 0.0
        %6456 = vmatprep.subr.mxu0 0.0
        %6457 = vmatpush2.msra.mxu0 0.0
        %6458 = vmatprep.mubr.f32.mxu0 0.0
        %v6459 = vand.u32 %v5686, 4294901760
        %6460 = vmatmul.mubr.f32.gmra.mxu0 %v6459
        %v6461 = vpop.f32.mrf.mxu0
        %v6462 = vadd.f32 %v6357, %v6461
        %v6463 = vpop.f32.mrf.mxu0
        %6464 = vmatprep.mubr.f32.mxu0 0.0
        %v6465 = vand.u32 %v5687, 4294901760
        %6466 = vmatmul.mubr.f32.gmra.mxu0 %v6465
        %v6467 = vpop.f32.mrf.mxu0
        %v6468 = vadd.f32 %v6363, %v6467
        %v6469 = vpop.f32.mrf.mxu0
        %6470 = vmatprep.mubr.f32.mxu0 0.0
        %v6471 = vand.u32 %v5688, 4294901760
        %6472 = vmatmul.mubr.f32.gmra.mxu0 %v6471
        %v6473 = vpop.f32.mrf.mxu0
        %v6474 = vadd.f32 %v6369, %v6473
        %v6475 = vpop.f32.mrf.mxu0
        %6476 = vmatprep.mubr.f32.mxu0 0.0
        %v6477 = vand.u32 %v5689, 4294901760
        %6478 = vmatmul.mubr.f32.gmra.mxu0 %v6477
        %v6479 = vpop.f32.mrf.mxu0
        %v6480 = vadd.f32 %v6375, %v6479
        %v6481 = vpop.f32.mrf.mxu0
        %6482 = vdwg.mxu0
        %6483 = vadd.xlane.f32.xlu0 %v6462
        %v6484 = vpop.xlane.xlu0 %6483
        %6485 = vadd.xlane.f32.xlu0 %v6468
        %v6486 = vpop.xlane.xlu0 %6485
        %6487 = vadd.xlane.f32.xlu0 %v6474
        %v6488 = vpop.xlane.xlu0 %6487
        %6489 = vadd.xlane.f32.xlu0 %v6480
        %v6490 = vpop.xlane.xlu0 %6489
        %v6491 = vmul.f32 %v6484, %v1104
        %v6492 = vmul.f32 %v6486, %v1104
        %v6493 = vmul.f32 %v6488, %v1104
        %v6494 = vmul.f32 %v6490, %v1104
        %v6495 = vmul.f32 %v6462, %v6462
        %v6496 = vmul.f32 %v6468, %v6468
        %v6497 = vmul.f32 %v6474, %v6474
        %v6498 = vmul.f32 %v6480, %v6480
        %6499 = vadd.xlane.f32.xlu0 %v6495
        %v6500 = vpop.xlane.xlu0 %6499
        %6501 = vadd.xlane.f32.xlu0 %v6496
        %v6502 = vpop.xlane.xlu0 %6501
        %6503 = vadd.xlane.f32.xlu0 %v6497
        %v6504 = vpop.xlane.xlu0 %6503
        %6505 = vadd.xlane.f32.xlu0 %v6498
        %v6506 = vpop.xlane.xlu0 %6505
        %v6507 = vmul.f32 %v6500, %v1104
        %v6508 = vmul.f32 %v6502, %v1104
        %v6509 = vmul.f32 %v6504, %v1104
        %v6510 = vmul.f32 %v6506, %v1104
        %v6511 = vmul.f32 %v6491, %v6491
        %v6512 = vmul.f32 %v6492, %v6492
        %v6513 = vmul.f32 %v6493, %v6493
        %v6514 = vmul.f32 %v6494, %v6494
        %v6515 = vsub.f32 %v6507, %v6511
        %v6516 = vsub.f32 %v6508, %v6512
        %v6517 = vsub.f32 %v6509, %v6513
        %v6518 = vsub.f32 %v6510, %v6514
        %v6519 = vsub.f32 %v6462, %v6491
        %v6520 = vsub.f32 %v6468, %v6492
        %v6521 = vsub.f32 %v6474, %v6493
        %v6522 = vsub.f32 %v6480, %v6494
        %v6523 = vadd.f32 %v6515, 1e-05
        %v6524 = vadd.f32 %v6516, 1e-05
        %v6525 = vadd.f32 %v6517, 1e-05
        %v6526 = vadd.f32 %v6518, 1e-05
        %v6527 = vrsqrt.pop %v6523
        %v6528 = vrsqrt.pop %v6524
        %v6529 = vrsqrt.pop %v6525
        %v6530 = vrsqrt.pop %v6526
        %v6531 = vmul.f32 %v6519, %v6527
        %v6532 = vmul.f32 %v6520, %v6528
        %v6533 = vmul.f32 %v6521, %v6529
        %v6534 = vmul.f32 %v6522, %v6530
        %v6535 = vlaneseq
        %v6536 = vshrl.u32 %v6535, 7
        %v6537 = vsub.s32 0, %v6536
        %v6538 = vrot.slane %v5691, %v6537
        %v6539 = vmul.f32 %v6531, %v6538
        %v6540 = vmul.f32 %v6532, %v6538
        %v6541 = vmul.f32 %v6533, %v6538
        %v6542 = vmul.f32 %v6534, %v6538
        %v6543 = vlaneseq
        %v6544 = vshrl.u32 %v6543, 7
        %v6545 = vsub.s32 0, %v6544
        %v6546 = vrot.slane %v5692, %v6545
        %v6547 = vadd.f32 %v6539, %v6546
        %v6548 = vadd.f32 %v6540, %v6546
        %v6549 = vadd.f32 %v6541, %v6546
        %v6550 = vadd.f32 %v6542, %v6546
        %vm6551 = vcmp.gt.f32.partialorder %v6547, 0.0
        %vm6552 = vcmp.gt.f32.partialorder %v6548, 0.0
        %vm6553 = vcmp.gt.f32.partialorder %v6549, 0.0
        %vm6554 = vcmp.gt.f32.partialorder %v6550, 0.0
        %v6555 = vmin.f32 %v6547, 0.0
        %v6556 = vmin.f32 %v6548, 0.0
        %v6557 = vmin.f32 %v6549, 0.0
        %v6558 = vmin.f32 %v6550, 0.0
        %v6559 = vmul.f32 %v6555, 1.442695
        %v6560 = vpow.pop %v6559
        %v6561 = vmul.f32 %v6556, 1.442695
        %v6562 = vpow.pop %v6561
        %v6563 = vmul.f32 %v6557, 1.442695
        %v6564 = vpow.pop %v6563
        %v6565 = vmul.f32 %v6558, 1.442695
        %v6566 = vpow.pop %v6565
        %v6567 = vsub.f32 %v6560, 1.0
        %v6568 = vsub.f32 %v6562, 1.0
        %v6569 = vsub.f32 %v6564, 1.0
        %v6570 = vsub.f32 %v6566, 1.0
        %v6571 = vsel %vm6551, %v6547, %v6567
        %v6572 = vsel %vm6552, %v6548, %v6568
        %v6573 = vsel %vm6553, %v6549, %v6569
        %v6574 = vsel %vm6554, %v6550, %v6570
        %v6575 = vld [vmem:[%s11] sm:$0xff]
        %v6576 = vld [vmem:[%s11 + $0x8] sm:$0xff]
        %v6577 = vld [vmem:[%s11 + $0x10] sm:$0xff]
        %v6578 = vld [vmem:[%s11 + $0x18] sm:$0xff]
        %v6579 = vld [vmem:[%s11 + $0x20] sm:$0xff]
        %v6580 = vld [vmem:[%s11 + $0x28] sm:$0xff]
        %v6581 = vld [vmem:[%s11 + $0x30] sm:$0xff]
        %v6582 = vld [vmem:[%s11 + $0x38] sm:$0xff]
        %v6583 = vld [vmem:[%s11 + $0x40] sm:$0xff]
        %v6584 = vld [vmem:[%s11 + $0x48] sm:$0xff]
        %v6585 = vld [vmem:[%s11 + $0x50] sm:$0xff]
        %v6586 = vld [vmem:[%s11 + $0x58] sm:$0xff]
        %v6587 = vld [vmem:[%s11 + $0x60] sm:$0xff]
        %v6588 = vld [vmem:[%s11 + $0x68] sm:$0xff]
        %v6589 = vld [vmem:[%s11 + $0x70] sm:$0xff]
        %v6590 = vld [vmem:[%s11 + $0x78] sm:$0xff]
        %v6591 = vld [vmem:[%s2 + $0x14] sm:$0x1]
        %v6592 = vlaneseq
        %v6593 = vshrl.u32 %v6592, 7
        %v6594 = vsub.s32 0, %v6593
        %v6595 = vrot.slane %v6591, %v6594
        %6596 = vmatprep.subr.mxu0 0.0
        %v6597 = vand.u32 %v6590, 4294901760
        %6598 = vmatpush1.msra.mxu0 %v6597
        %6599 = vmatprep.subr.mxu0 0.0
        %v6600 = vand.u32 %v6589, 4294901760
        %6601 = vmatpush1.msra.mxu0 %v6600
        %6602 = vmatprep.subr.mxu0 0.0
        %v6603 = vand.u32 %v6588, 4294901760
        %6604 = vmatpush1.msra.mxu0 %v6603
        %6605 = vmatprep.subr.mxu0 0.0
        %v6606 = vand.u32 %v6587, 4294901760
        %6607 = vmatpush1.msra.mxu0 %v6606
        %6608 = vmatprep.subr.mxu0 0.0
        %v6609 = vand.u32 %v6586, 4294901760
        %6610 = vmatpush1.msra.mxu0 %v6609
        %6611 = vmatprep.subr.mxu0 0.0
        %v6612 = vand.u32 %v6585, 4294901760
        %6613 = vmatpush1.msra.mxu0 %v6612
        %6614 = vmatprep.subr.mxu0 0.0
        %v6615 = vand.u32 %v6584, 4294901760
        %6616 = vmatpush1.msra.mxu0 %v6615
        %6617 = vmatprep.subr.mxu0 0.0
        %v6618 = vand.u32 %v6583, 4294901760
        %6619 = vmatpush1.msra.mxu0 %v6618
        %6620 = vmatprep.subr.mxu0 0.0
        %v6621 = vand.u32 %v6582, 4294901760
        %6622 = vmatpush1.msra.mxu0 %v6621
        %6623 = vmatprep.subr.mxu0 0.0
        %v6624 = vand.u32 %v6581, 4294901760
        %6625 = vmatpush1.msra.mxu0 %v6624
        %6626 = vmatprep.subr.mxu0 0.0
        %v6627 = vand.u32 %v6580, 4294901760
        %6628 = vmatpush1.msra.mxu0 %v6627
        %6629 = vmatprep.subr.mxu0 0.0
        %v6630 = vand.u32 %v6579, 4294901760
        %6631 = vmatpush1.msra.mxu0 %v6630
        %6632 = vmatprep.subr.mxu0 0.0
        %v6633 = vand.u32 %v6578, 4294901760
        %6634 = vmatpush1.msra.mxu0 %v6633
        %6635 = vmatprep.subr.mxu0 0.0
        %v6636 = vand.u32 %v6577, 4294901760
        %6637 = vmatpush1.msra.mxu0 %v6636
        %6638 = vmatprep.subr.mxu0 0.0
        %v6639 = vand.u32 %v6576, 4294901760
        %6640 = vmatpush1.msra.mxu0 %v6639
        %6641 = vmatprep.subr.mxu0 0.0
        %v6642 = vand.u32 %v6575, 4294901760
        %6643 = vmatpush1.msra.mxu0 %v6642
        %6644 = vmatprep.subr.mxu0 0.0
        %6645 = vmatpush2.msra.mxu0 0.0
        %6646 = vmatprep.subr.mxu0 0.0
        %6647 = vmatpush2.msra.mxu0 0.0
        %6648 = vmatprep.subr.mxu0 0.0
        %6649 = vmatpush2.msra.mxu0 0.0
        %6650 = vmatprep.subr.mxu0 0.0
        %6651 = vmatpush2.msra.mxu0 0.0
        %6652 = vmatprep.subr.mxu0 0.0
        %6653 = vmatpush2.msra.mxu0 0.0
        %6654 = vmatprep.subr.mxu0 0.0
        %6655 = vmatpush2.msra.mxu0 0.0
        %6656 = vmatprep.subr.mxu0 0.0
        %6657 = vmatpush2.msra.mxu0 0.0
        %6658 = vmatprep.subr.mxu0 0.0
        %6659 = vmatpush2.msra.mxu0 0.0
        %6660 = vmatprep.subr.mxu0 0.0
        %6661 = vmatpush2.msra.mxu0 0.0
        %6662 = vmatprep.subr.mxu0 0.0
        %6663 = vmatpush2.msra.mxu0 0.0
        %6664 = vmatprep.subr.mxu0 0.0
        %6665 = vmatpush2.msra.mxu0 0.0
        %6666 = vmatprep.subr.mxu0 0.0
        %6667 = vmatpush2.msra.mxu0 0.0
        %6668 = vmatprep.subr.mxu0 0.0
        %6669 = vmatpush2.msra.mxu0 0.0
        %6670 = vmatprep.subr.mxu0 0.0
        %6671 = vmatpush2.msra.mxu0 0.0
        %6672 = vmatprep.subr.mxu0 0.0
        %6673 = vmatpush2.msra.mxu0 0.0
        %6674 = vmatprep.subr.mxu0 0.0
        %6675 = vmatpush2.msra.mxu0 0.0
        %6676 = vmatprep.mubr.f32.mxu0 0.0
        %v6677 = vand.u32 %v6571, 4294901760
        %v6678 = vsub.f32 %v6571, %v6677
        %v6679 = vand.u32 %v6678, 4294901760
        %v6680 = vsub.f32 %v6678, %v6679
        %v6681 = vand.u32 %v6680, 4294901760
        %6682 = vmatmul.mubr.f32.gmra.mxu0 %v6681
        %v6683 = vpop.f32.mrf.mxu0
        %v6684 = vadd.f32 %v6595, %v6683
        %v6685 = vpop.f32.mrf.mxu0
        %6686 = vmatprep.mubr.f32.mxu0 0.0
        %v6687 = vand.u32 %v6572, 4294901760
        %v6688 = vsub.f32 %v6572, %v6687
        %v6689 = vand.u32 %v6688, 4294901760
        %v6690 = vsub.f32 %v6688, %v6689
        %v6691 = vand.u32 %v6690, 4294901760
        %6692 = vmatmul.mubr.f32.gmra.mxu0 %v6691
        %v6693 = vpop.f32.mrf.mxu0
        %v6694 = vadd.f32 %v6595, %v6693
        %v6695 = vpop.f32.mrf.mxu0
        %6696 = vmatprep.mubr.f32.mxu0 0.0
        %v6697 = vand.u32 %v6573, 4294901760
        %v6698 = vsub.f32 %v6573, %v6697
        %v6699 = vand.u32 %v6698, 4294901760
        %v6700 = vsub.f32 %v6698, %v6699
        %v6701 = vand.u32 %v6700, 4294901760
        %6702 = vmatmul.mubr.f32.gmra.mxu0 %v6701
        %v6703 = vpop.f32.mrf.mxu0
        %v6704 = vadd.f32 %v6595, %v6703
        %v6705 = vpop.f32.mrf.mxu0
        %6706 = vmatprep.mubr.f32.mxu0 0.0
        %v6707 = vand.u32 %v6574, 4294901760
        %v6708 = vsub.f32 %v6574, %v6707
        %v6709 = vand.u32 %v6708, 4294901760
        %v6710 = vsub.f32 %v6708, %v6709
        %v6711 = vand.u32 %v6710, 4294901760
        %6712 = vmatmul.mubr.f32.gmra.mxu0 %v6711
        %v6713 = vpop.f32.mrf.mxu0
        %v6714 = vadd.f32 %v6595, %v6713
        %v6715 = vpop.f32.mrf.mxu0
        %6716 = vdwg.mxu0
        %6717 = vmatprep.subr.mxu0 0.0
        %v6718 = vand.u32 %v6590, 4294901760
        %v6719 = vsub.f32 %v6590, %v6718
        %v6720 = vand.u32 %v6719, 4294901760
        %v6721 = vsub.f32 %v6719, %v6720
        %v6722 = vand.u32 %v6721, 4294901760
        %6723 = vmatpush1.msra.mxu0 %v6722
        %6724 = vmatprep.subr.mxu0 0.0
        %v6725 = vand.u32 %v6589, 4294901760
        %v6726 = vsub.f32 %v6589, %v6725
        %v6727 = vand.u32 %v6726, 4294901760
        %v6728 = vsub.f32 %v6726, %v6727
        %v6729 = vand.u32 %v6728, 4294901760
        %6730 = vmatpush1.msra.mxu0 %v6729
        %6731 = vmatprep.subr.mxu0 0.0
        %v6732 = vand.u32 %v6588, 4294901760
        %v6733 = vsub.f32 %v6588, %v6732
        %v6734 = vand.u32 %v6733, 4294901760
        %v6735 = vsub.f32 %v6733, %v6734
        %v6736 = vand.u32 %v6735, 4294901760
        %6737 = vmatpush1.msra.mxu0 %v6736
        %6738 = vmatprep.subr.mxu0 0.0
        %v6739 = vand.u32 %v6587, 4294901760
        %v6740 = vsub.f32 %v6587, %v6739
        %v6741 = vand.u32 %v6740, 4294901760
        %v6742 = vsub.f32 %v6740, %v6741
        %v6743 = vand.u32 %v6742, 4294901760
        %6744 = vmatpush1.msra.mxu0 %v6743
        %6745 = vmatprep.subr.mxu0 0.0
        %v6746 = vand.u32 %v6586, 4294901760
        %v6747 = vsub.f32 %v6586, %v6746
        %v6748 = vand.u32 %v6747, 4294901760
        %v6749 = vsub.f32 %v6747, %v6748
        %v6750 = vand.u32 %v6749, 4294901760
        %6751 = vmatpush1.msra.mxu0 %v6750
        %6752 = vmatprep.subr.mxu0 0.0
        %v6753 = vand.u32 %v6585, 4294901760
        %v6754 = vsub.f32 %v6585, %v6753
        %v6755 = vand.u32 %v6754, 4294901760
        %v6756 = vsub.f32 %v6754, %v6755
        %v6757 = vand.u32 %v6756, 4294901760
        %6758 = vmatpush1.msra.mxu0 %v6757
        %6759 = vmatprep.subr.mxu0 0.0
        %v6760 = vand.u32 %v6584, 4294901760
        %v6761 = vsub.f32 %v6584, %v6760
        %v6762 = vand.u32 %v6761, 4294901760
        %v6763 = vsub.f32 %v6761, %v6762
        %v6764 = vand.u32 %v6763, 4294901760
        %6765 = vmatpush1.msra.mxu0 %v6764
        %6766 = vmatprep.subr.mxu0 0.0
        %v6767 = vand.u32 %v6583, 4294901760
        %v6768 = vsub.f32 %v6583, %v6767
        %v6769 = vand.u32 %v6768, 4294901760
        %v6770 = vsub.f32 %v6768, %v6769
        %v6771 = vand.u32 %v6770, 4294901760
        %6772 = vmatpush1.msra.mxu0 %v6771
        %6773 = vmatprep.subr.mxu0 0.0
        %v6774 = vand.u32 %v6582, 4294901760
        %v6775 = vsub.f32 %v6582, %v6774
        %v6776 = vand.u32 %v6775, 4294901760
        %v6777 = vsub.f32 %v6775, %v6776
        %v6778 = vand.u32 %v6777, 4294901760
        %6779 = vmatpush1.msra.mxu0 %v6778
        %6780 = vmatprep.subr.mxu0 0.0
        %v6781 = vand.u32 %v6581, 4294901760
        %v6782 = vsub.f32 %v6581, %v6781
        %v6783 = vand.u32 %v6782, 4294901760
        %v6784 = vsub.f32 %v6782, %v6783
        %v6785 = vand.u32 %v6784, 4294901760
        %6786 = vmatpush1.msra.mxu0 %v6785
        %6787 = vmatprep.subr.mxu0 0.0
        %v6788 = vand.u32 %v6580, 4294901760
        %v6789 = vsub.f32 %v6580, %v6788
        %v6790 = vand.u32 %v6789, 4294901760
        %v6791 = vsub.f32 %v6789, %v6790
        %v6792 = vand.u32 %v6791, 4294901760
        %6793 = vmatpush1.msra.mxu0 %v6792
        %6794 = vmatprep.subr.mxu0 0.0
        %v6795 = vand.u32 %v6579, 4294901760
        %v6796 = vsub.f32 %v6579, %v6795
        %v6797 = vand.u32 %v6796, 4294901760
        %v6798 = vsub.f32 %v6796, %v6797
        %v6799 = vand.u32 %v6798, 4294901760
        %6800 = vmatpush1.msra.mxu0 %v6799
        %6801 = vmatprep.subr.mxu0 0.0
        %v6802 = vand.u32 %v6578, 4294901760
        %v6803 = vsub.f32 %v6578, %v6802
        %v6804 = vand.u32 %v6803, 4294901760
        %v6805 = vsub.f32 %v6803, %v6804
        %v6806 = vand.u32 %v6805, 4294901760
        %6807 = vmatpush1.msra.mxu0 %v6806
        %6808 = vmatprep.subr.mxu0 0.0
        %v6809 = vand.u32 %v6577, 4294901760
        %v6810 = vsub.f32 %v6577, %v6809
        %v6811 = vand.u32 %v6810, 4294901760
        %v6812 = vsub.f32 %v6810, %v6811
        %v6813 = vand.u32 %v6812, 4294901760
        %6814 = vmatpush1.msra.mxu0 %v6813
        %6815 = vmatprep.subr.mxu0 0.0
        %v6816 = vand.u32 %v6576, 4294901760
        %v6817 = vsub.f32 %v6576, %v6816
        %v6818 = vand.u32 %v6817, 4294901760
        %v6819 = vsub.f32 %v6817, %v6818
        %v6820 = vand.u32 %v6819, 4294901760
        %6821 = vmatpush1.msra.mxu0 %v6820
        %6822 = vmatprep.subr.mxu0 0.0
        %v6823 = vand.u32 %v6575, 4294901760
        %v6824 = vsub.f32 %v6575, %v6823
        %v6825 = vand.u32 %v6824, 4294901760
        %v6826 = vsub.f32 %v6824, %v6825
        %v6827 = vand.u32 %v6826, 4294901760
        %6828 = vmatpush1.msra.mxu0 %v6827
        %6829 = vmatprep.subr.mxu0 0.0
        %6830 = vmatpush2.msra.mxu0 0.0
        %6831 = vmatprep.subr.mxu0 0.0
        %6832 = vmatpush2.msra.mxu0 0.0
        %6833 = vmatprep.subr.mxu0 0.0
        %6834 = vmatpush2.msra.mxu0 0.0
        %6835 = vmatprep.subr.mxu0 0.0
        %6836 = vmatpush2.msra.mxu0 0.0
        %6837 = vmatprep.subr.mxu0 0.0
        %6838 = vmatpush2.msra.mxu0 0.0
        %6839 = vmatprep.subr.mxu0 0.0
        %6840 = vmatpush2.msra.mxu0 0.0
        %6841 = vmatprep.subr.mxu0 0.0
        %6842 = vmatpush2.msra.mxu0 0.0
        %6843 = vmatprep.subr.mxu0 0.0
        %6844 = vmatpush2.msra.mxu0 0.0
        %6845 = vmatprep.subr.mxu0 0.0
        %6846 = vmatpush2.msra.mxu0 0.0
        %6847 = vmatprep.subr.mxu0 0.0
        %6848 = vmatpush2.msra.mxu0 0.0
        %6849 = vmatprep.subr.mxu0 0.0
        %6850 = vmatpush2.msra.mxu0 0.0
        %6851 = vmatprep.subr.mxu0 0.0
        %6852 = vmatpush2.msra.mxu0 0.0
        %6853 = vmatprep.subr.mxu0 0.0
        %6854 = vmatpush2.msra.mxu0 0.0
        %6855 = vmatprep.subr.mxu0 0.0
        %6856 = vmatpush2.msra.mxu0 0.0
        %6857 = vmatprep.subr.mxu0 0.0
        %6858 = vmatpush2.msra.mxu0 0.0
        %6859 = vmatprep.subr.mxu0 0.0
        %6860 = vmatpush2.msra.mxu0 0.0
        %6861 = vmatprep.mubr.f32.mxu0 0.0
        %v6862 = vand.u32 %v6571, 4294901760
        %6863 = vmatmul.mubr.f32.gmra.mxu0 %v6862
        %v6864 = vpop.f32.mrf.mxu0
        %v6865 = vadd.f32 %v6684, %v6864
        %v6866 = vpop.f32.mrf.mxu0
        %6867 = vmatprep.mubr.f32.mxu0 0.0
        %v6868 = vand.u32 %v6572, 4294901760
        %6869 = vmatmul.mubr.f32.gmra.mxu0 %v6868
        %v6870 = vpop.f32.mrf.mxu0
        %v6871 = vadd.f32 %v6694, %v6870
        %v6872 = vpop.f32.mrf.mxu0
        %6873 = vmatprep.mubr.f32.mxu0 0.0
        %v6874 = vand.u32 %v6573, 4294901760
        %6875 = vmatmul.mubr.f32.gmra.mxu0 %v6874
        %v6876 = vpop.f32.mrf.mxu0
        %v6877 = vadd.f32 %v6704, %v6876
        %v6878 = vpop.f32.mrf.mxu0
        %6879 = vmatprep.mubr.f32.mxu0 0.0
        %v6880 = vand.u32 %v6574, 4294901760
        %6881 = vmatmul.mubr.f32.gmra.mxu0 %v6880
        %v6882 = vpop.f32.mrf.mxu0
        %v6883 = vadd.f32 %v6714, %v6882
        %v6884 = vpop.f32.mrf.mxu0
        %6885 = vdwg.mxu0
        %6886 = vmatprep.subr.mxu0 0.0
        %v6887 = vand.u32 %v6590, 4294901760
        %v6888 = vsub.f32 %v6590, %v6887
        %6889 = vmatpush1.msra.mxu0 %v6888
        %6890 = vmatprep.subr.mxu0 0.0
        %v6891 = vand.u32 %v6589, 4294901760
        %v6892 = vsub.f32 %v6589, %v6891
        %6893 = vmatpush1.msra.mxu0 %v6892
        %6894 = vmatprep.subr.mxu0 0.0
        %v6895 = vand.u32 %v6588, 4294901760
        %v6896 = vsub.f32 %v6588, %v6895
        %6897 = vmatpush1.msra.mxu0 %v6896
        %6898 = vmatprep.subr.mxu0 0.0
        %v6899 = vand.u32 %v6587, 4294901760
        %v6900 = vsub.f32 %v6587, %v6899
        %6901 = vmatpush1.msra.mxu0 %v6900
        %6902 = vmatprep.subr.mxu0 0.0
        %v6903 = vand.u32 %v6586, 4294901760
        %v6904 = vsub.f32 %v6586, %v6903
        %6905 = vmatpush1.msra.mxu0 %v6904
        %6906 = vmatprep.subr.mxu0 0.0
        %v6907 = vand.u32 %v6585, 4294901760
        %v6908 = vsub.f32 %v6585, %v6907
        %6909 = vmatpush1.msra.mxu0 %v6908
        %6910 = vmatprep.subr.mxu0 0.0
        %v6911 = vand.u32 %v6584, 4294901760
        %v6912 = vsub.f32 %v6584, %v6911
        %6913 = vmatpush1.msra.mxu0 %v6912
        %6914 = vmatprep.subr.mxu0 0.0
        %v6915 = vand.u32 %v6583, 4294901760
        %v6916 = vsub.f32 %v6583, %v6915
        %6917 = vmatpush1.msra.mxu0 %v6916
        %6918 = vmatprep.subr.mxu0 0.0
        %v6919 = vand.u32 %v6582, 4294901760
        %v6920 = vsub.f32 %v6582, %v6919
        %6921 = vmatpush1.msra.mxu0 %v6920
        %6922 = vmatprep.subr.mxu0 0.0
        %v6923 = vand.u32 %v6581, 4294901760
        %v6924 = vsub.f32 %v6581, %v6923
        %6925 = vmatpush1.msra.mxu0 %v6924
        %6926 = vmatprep.subr.mxu0 0.0
        %v6927 = vand.u32 %v6580, 4294901760
        %v6928 = vsub.f32 %v6580, %v6927
        %6929 = vmatpush1.msra.mxu0 %v6928
        %6930 = vmatprep.subr.mxu0 0.0
        %v6931 = vand.u32 %v6579, 4294901760
        %v6932 = vsub.f32 %v6579, %v6931
        %6933 = vmatpush1.msra.mxu0 %v6932
        %6934 = vmatprep.subr.mxu0 0.0
        %v6935 = vand.u32 %v6578, 4294901760
        %v6936 = vsub.f32 %v6578, %v6935
        %6937 = vmatpush1.msra.mxu0 %v6936
        %6938 = vmatprep.subr.mxu0 0.0
        %v6939 = vand.u32 %v6577, 4294901760
        %v6940 = vsub.f32 %v6577, %v6939
        %6941 = vmatpush1.msra.mxu0 %v6940
        %6942 = vmatprep.subr.mxu0 0.0
        %v6943 = vand.u32 %v6576, 4294901760
        %v6944 = vsub.f32 %v6576, %v6943
        %6945 = vmatpush1.msra.mxu0 %v6944
        %6946 = vmatprep.subr.mxu0 0.0
        %v6947 = vand.u32 %v6575, 4294901760
        %v6948 = vsub.f32 %v6575, %v6947
        %6949 = vmatpush1.msra.mxu0 %v6948
        %6950 = vmatprep.subr.mxu0 0.0
        %6951 = vmatpush2.msra.mxu0 0.0
        %6952 = vmatprep.subr.mxu0 0.0
        %6953 = vmatpush2.msra.mxu0 0.0
        %6954 = vmatprep.subr.mxu0 0.0
        %6955 = vmatpush2.msra.mxu0 0.0
        %6956 = vmatprep.subr.mxu0 0.0
        %6957 = vmatpush2.msra.mxu0 0.0
        %6958 = vmatprep.subr.mxu0 0.0
        %6959 = vmatpush2.msra.mxu0 0.0
        %6960 = vmatprep.subr.mxu0 0.0
        %6961 = vmatpush2.msra.mxu0 0.0
        %6962 = vmatprep.subr.mxu0 0.0
        %6963 = vmatpush2.msra.mxu0 0.0
        %6964 = vmatprep.subr.mxu0 0.0
        %6965 = vmatpush2.msra.mxu0 0.0
        %6966 = vmatprep.subr.mxu0 0.0
        %6967 = vmatpush2.msra.mxu0 0.0
        %6968 = vmatprep.subr.mxu0 0.0
        %6969 = vmatpush2.msra.mxu0 0.0
        %6970 = vmatprep.subr.mxu0 0.0
        %6971 = vmatpush2.msra.mxu0 0.0
        %6972 = vmatprep.subr.mxu0 0.0
        %6973 = vmatpush2.msra.mxu0 0.0
        %6974 = vmatprep.subr.mxu0 0.0
        %6975 = vmatpush2.msra.mxu0 0.0
        %6976 = vmatprep.subr.mxu0 0.0
        %6977 = vmatpush2.msra.mxu0 0.0
        %6978 = vmatprep.subr.mxu0 0.0
        %6979 = vmatpush2.msra.mxu0 0.0
        %6980 = vmatprep.subr.mxu0 0.0
        %6981 = vmatpush2.msra.mxu0 0.0
        %6982 = vmatprep.mubr.f32.mxu0 0.0
        %v6983 = vand.u32 %v6571, 4294901760
        %v6984 = vsub.f32 %v6571, %v6983
        %6985 = vmatmul.mubr.f32.gmra.mxu0 %v6984
        %v6986 = vpop.f32.mrf.mxu0
        %v6987 = vadd.f32 %v6865, %v6986
        %v6988 = vpop.f32.mrf.mxu0
        %6989 = vmatprep.mubr.f32.mxu0 0.0
        %v6990 = vand.u32 %v6572, 4294901760
        %v6991 = vsub.f32 %v6572, %v6990
        %6992 = vmatmul.mubr.f32.gmra.mxu0 %v6991
        %v6993 = vpop.f32.mrf.mxu0
        %v6994 = vadd.f32 %v6871, %v6993
        %v6995 = vpop.f32.mrf.mxu0
        %6996 = vmatprep.mubr.f32.mxu0 0.0
        %v6997 = vand.u32 %v6573, 4294901760
        %v6998 = vsub.f32 %v6573, %v6997
        %6999 = vmatmul.mubr.f32.gmra.mxu0 %v6998
        %v7000 = vpop.f32.mrf.mxu0
        %v7001 = vadd.f32 %v6877, %v7000
        %v7002 = vpop.f32.mrf.mxu0
        %7003 = vmatprep.mubr.f32.mxu0 0.0
        %v7004 = vand.u32 %v6574, 4294901760
        %v7005 = vsub.f32 %v6574, %v7004
        %7006 = vmatmul.mubr.f32.gmra.mxu0 %v7005
        %v7007 = vpop.f32.mrf.mxu0
        %v7008 = vadd.f32 %v6883, %v7007
        %v7009 = vpop.f32.mrf.mxu0
        %7010 = vdwg.mxu0
        %7011 = vmatprep.subr.mxu0 0.0
        %v7012 = vand.u32 %v6590, 4294901760
        %7013 = vmatpush1.msra.mxu0 %v7012
        %7014 = vmatprep.subr.mxu0 0.0
        %v7015 = vand.u32 %v6589, 4294901760
        %7016 = vmatpush1.msra.mxu0 %v7015
        %7017 = vmatprep.subr.mxu0 0.0
        %v7018 = vand.u32 %v6588, 4294901760
        %7019 = vmatpush1.msra.mxu0 %v7018
        %7020 = vmatprep.subr.mxu0 0.0
        %v7021 = vand.u32 %v6587, 4294901760
        %7022 = vmatpush1.msra.mxu0 %v7021
        %7023 = vmatprep.subr.mxu0 0.0
        %v7024 = vand.u32 %v6586, 4294901760
        %7025 = vmatpush1.msra.mxu0 %v7024
        %7026 = vmatprep.subr.mxu0 0.0
        %v7027 = vand.u32 %v6585, 4294901760
        %7028 = vmatpush1.msra.mxu0 %v7027
        %7029 = vmatprep.subr.mxu0 0.0
        %v7030 = vand.u32 %v6584, 4294901760
        %7031 = vmatpush1.msra.mxu0 %v7030
        %7032 = vmatprep.subr.mxu0 0.0
        %v7033 = vand.u32 %v6583, 4294901760
        %7034 = vmatpush1.msra.mxu0 %v7033
        %7035 = vmatprep.subr.mxu0 0.0
        %v7036 = vand.u32 %v6582, 4294901760
        %7037 = vmatpush1.msra.mxu0 %v7036
        %7038 = vmatprep.subr.mxu0 0.0
        %v7039 = vand.u32 %v6581, 4294901760
        %7040 = vmatpush1.msra.mxu0 %v7039
        %7041 = vmatprep.subr.mxu0 0.0
        %v7042 = vand.u32 %v6580, 4294901760
        %7043 = vmatpush1.msra.mxu0 %v7042
        %7044 = vmatprep.subr.mxu0 0.0
        %v7045 = vand.u32 %v6579, 4294901760
        %7046 = vmatpush1.msra.mxu0 %v7045
        %7047 = vmatprep.subr.mxu0 0.0
        %v7048 = vand.u32 %v6578, 4294901760
        %7049 = vmatpush1.msra.mxu0 %v7048
        %7050 = vmatprep.subr.mxu0 0.0
        %v7051 = vand.u32 %v6577, 4294901760
        %7052 = vmatpush1.msra.mxu0 %v7051
        %7053 = vmatprep.subr.mxu0 0.0
        %v7054 = vand.u32 %v6576, 4294901760
        %7055 = vmatpush1.msra.mxu0 %v7054
        %7056 = vmatprep.subr.mxu0 0.0
        %v7057 = vand.u32 %v6575, 4294901760
        %7058 = vmatpush1.msra.mxu0 %v7057
        %7059 = vmatprep.subr.mxu0 0.0
        %7060 = vmatpush2.msra.mxu0 0.0
        %7061 = vmatprep.subr.mxu0 0.0
        %7062 = vmatpush2.msra.mxu0 0.0
        %7063 = vmatprep.subr.mxu0 0.0
        %7064 = vmatpush2.msra.mxu0 0.0
        %7065 = vmatprep.subr.mxu0 0.0
        %7066 = vmatpush2.msra.mxu0 0.0
        %7067 = vmatprep.subr.mxu0 0.0
        %7068 = vmatpush2.msra.mxu0 0.0
        %7069 = vmatprep.subr.mxu0 0.0
        %7070 = vmatpush2.msra.mxu0 0.0
        %7071 = vmatprep.subr.mxu0 0.0
        %7072 = vmatpush2.msra.mxu0 0.0
        %7073 = vmatprep.subr.mxu0 0.0
        %7074 = vmatpush2.msra.mxu0 0.0
        %7075 = vmatprep.subr.mxu0 0.0
        %7076 = vmatpush2.msra.mxu0 0.0
        %7077 = vmatprep.subr.mxu0 0.0
        %7078 = vmatpush2.msra.mxu0 0.0
        %7079 = vmatprep.subr.mxu0 0.0
        %7080 = vmatpush2.msra.mxu0 0.0
        %7081 = vmatprep.subr.mxu0 0.0
        %7082 = vmatpush2.msra.mxu0 0.0
        %7083 = vmatprep.subr.mxu0 0.0
        %7084 = vmatpush2.msra.mxu0 0.0
        %7085 = vmatprep.subr.mxu0 0.0
        %7086 = vmatpush2.msra.mxu0 0.0
        %7087 = vmatprep.subr.mxu0 0.0
        %7088 = vmatpush2.msra.mxu0 0.0
        %7089 = vmatprep.subr.mxu0 0.0
        %7090 = vmatpush2.msra.mxu0 0.0
        %7091 = vmatprep.mubr.f32.mxu0 0.0
        %v7092 = vand.u32 %v6571, 4294901760
        %v7093 = vsub.f32 %v6571, %v7092
        %v7094 = vand.u32 %v7093, 4294901760
        %7095 = vmatmul.mubr.f32.gmra.mxu0 %v7094
        %v7096 = vpop.f32.mrf.mxu0
        %v7097 = vadd.f32 %v6987, %v7096
        %v7098 = vpop.f32.mrf.mxu0
        %7099 = vmatprep.mubr.f32.mxu0 0.0
        %v7100 = vand.u32 %v6572, 4294901760
        %v7101 = vsub.f32 %v6572, %v7100
        %v7102 = vand.u32 %v7101, 4294901760
        %7103 = vmatmul.mubr.f32.gmra.mxu0 %v7102
        %v7104 = vpop.f32.mrf.mxu0
        %v7105 = vadd.f32 %v6994, %v7104
        %v7106 = vpop.f32.mrf.mxu0
        %7107 = vmatprep.mubr.f32.mxu0 0.0
        %v7108 = vand.u32 %v6573, 4294901760
        %v7109 = vsub.f32 %v6573, %v7108
        %v7110 = vand.u32 %v7109, 4294901760
        %7111 = vmatmul.mubr.f32.gmra.mxu0 %v7110
        %v7112 = vpop.f32.mrf.mxu0
        %v7113 = vadd.f32 %v7001, %v7112
        %v7114 = vpop.f32.mrf.mxu0
        %7115 = vmatprep.mubr.f32.mxu0 0.0
        %v7116 = vand.u32 %v6574, 4294901760
        %v7117 = vsub.f32 %v6574, %v7116
        %v7118 = vand.u32 %v7117, 4294901760
        %7119 = vmatmul.mubr.f32.gmra.mxu0 %v7118
        %v7120 = vpop.f32.mrf.mxu0
        %v7121 = vadd.f32 %v7008, %v7120
        %v7122 = vpop.f32.mrf.mxu0
        %7123 = vdwg.mxu0
        %7124 = vmatprep.subr.mxu0 0.0
        %v7125 = vand.u32 %v6590, 4294901760
        %v7126 = vsub.f32 %v6590, %v7125
        %v7127 = vand.u32 %v7126, 4294901760
        %7128 = vmatpush1.msra.mxu0 %v7127
        %7129 = vmatprep.subr.mxu0 0.0
        %v7130 = vand.u32 %v6589, 4294901760
        %v7131 = vsub.f32 %v6589, %v7130
        %v7132 = vand.u32 %v7131, 4294901760
        %7133 = vmatpush1.msra.mxu0 %v7132
        %7134 = vmatprep.subr.mxu0 0.0
        %v7135 = vand.u32 %v6588, 4294901760
        %v7136 = vsub.f32 %v6588, %v7135
        %v7137 = vand.u32 %v7136, 4294901760
        %7138 = vmatpush1.msra.mxu0 %v7137
        %7139 = vmatprep.subr.mxu0 0.0
        %v7140 = vand.u32 %v6587, 4294901760
        %v7141 = vsub.f32 %v6587, %v7140
        %v7142 = vand.u32 %v7141, 4294901760
        %7143 = vmatpush1.msra.mxu0 %v7142
        %7144 = vmatprep.subr.mxu0 0.0
        %v7145 = vand.u32 %v6586, 4294901760
        %v7146 = vsub.f32 %v6586, %v7145
        %v7147 = vand.u32 %v7146, 4294901760
        %7148 = vmatpush1.msra.mxu0 %v7147
        %7149 = vmatprep.subr.mxu0 0.0
        %v7150 = vand.u32 %v6585, 4294901760
        %v7151 = vsub.f32 %v6585, %v7150
        %v7152 = vand.u32 %v7151, 4294901760
        %7153 = vmatpush1.msra.mxu0 %v7152
        %7154 = vmatprep.subr.mxu0 0.0
        %v7155 = vand.u32 %v6584, 4294901760
        %v7156 = vsub.f32 %v6584, %v7155
        %v7157 = vand.u32 %v7156, 4294901760
        %7158 = vmatpush1.msra.mxu0 %v7157
        %7159 = vmatprep.subr.mxu0 0.0
        %v7160 = vand.u32 %v6583, 4294901760
        %v7161 = vsub.f32 %v6583, %v7160
        %v7162 = vand.u32 %v7161, 4294901760
        %7163 = vmatpush1.msra.mxu0 %v7162
        %7164 = vmatprep.subr.mxu0 0.0
        %v7165 = vand.u32 %v6582, 4294901760
        %v7166 = vsub.f32 %v6582, %v7165
        %v7167 = vand.u32 %v7166, 4294901760
        %7168 = vmatpush1.msra.mxu0 %v7167
        %7169 = vmatprep.subr.mxu0 0.0
        %v7170 = vand.u32 %v6581, 4294901760
        %v7171 = vsub.f32 %v6581, %v7170
        %v7172 = vand.u32 %v7171, 4294901760
        %7173 = vmatpush1.msra.mxu0 %v7172
        %7174 = vmatprep.subr.mxu0 0.0
        %v7175 = vand.u32 %v6580, 4294901760
        %v7176 = vsub.f32 %v6580, %v7175
        %v7177 = vand.u32 %v7176, 4294901760
        %7178 = vmatpush1.msra.mxu0 %v7177
        %7179 = vmatprep.subr.mxu0 0.0
        %v7180 = vand.u32 %v6579, 4294901760
        %v7181 = vsub.f32 %v6579, %v7180
        %v7182 = vand.u32 %v7181, 4294901760
        %7183 = vmatpush1.msra.mxu0 %v7182
        %7184 = vmatprep.subr.mxu0 0.0
        %v7185 = vand.u32 %v6578, 4294901760
        %v7186 = vsub.f32 %v6578, %v7185
        %v7187 = vand.u32 %v7186, 4294901760
        %7188 = vmatpush1.msra.mxu0 %v7187
        %7189 = vmatprep.subr.mxu0 0.0
        %v7190 = vand.u32 %v6577, 4294901760
        %v7191 = vsub.f32 %v6577, %v7190
        %v7192 = vand.u32 %v7191, 4294901760
        %7193 = vmatpush1.msra.mxu0 %v7192
        %7194 = vmatprep.subr.mxu0 0.0
        %v7195 = vand.u32 %v6576, 4294901760
        %v7196 = vsub.f32 %v6576, %v7195
        %v7197 = vand.u32 %v7196, 4294901760
        %7198 = vmatpush1.msra.mxu0 %v7197
        %7199 = vmatprep.subr.mxu0 0.0
        %v7200 = vand.u32 %v6575, 4294901760
        %v7201 = vsub.f32 %v6575, %v7200
        %v7202 = vand.u32 %v7201, 4294901760
        %7203 = vmatpush1.msra.mxu0 %v7202
        %7204 = vmatprep.subr.mxu0 0.0
        %7205 = vmatpush2.msra.mxu0 0.0
        %7206 = vmatprep.subr.mxu0 0.0
        %7207 = vmatpush2.msra.mxu0 0.0
        %7208 = vmatprep.subr.mxu0 0.0
        %7209 = vmatpush2.msra.mxu0 0.0
        %7210 = vmatprep.subr.mxu0 0.0
        %7211 = vmatpush2.msra.mxu0 0.0
        %7212 = vmatprep.subr.mxu0 0.0
        %7213 = vmatpush2.msra.mxu0 0.0
        %7214 = vmatprep.subr.mxu0 0.0
        %7215 = vmatpush2.msra.mxu0 0.0
        %7216 = vmatprep.subr.mxu0 0.0
        %7217 = vmatpush2.msra.mxu0 0.0
        %7218 = vmatprep.subr.mxu0 0.0
        %7219 = vmatpush2.msra.mxu0 0.0
        %7220 = vmatprep.subr.mxu0 0.0
        %7221 = vmatpush2.msra.mxu0 0.0
        %7222 = vmatprep.subr.mxu0 0.0
        %7223 = vmatpush2.msra.mxu0 0.0
        %7224 = vmatprep.subr.mxu0 0.0
        %7225 = vmatpush2.msra.mxu0 0.0
        %7226 = vmatprep.subr.mxu0 0.0
        %7227 = vmatpush2.msra.mxu0 0.0
        %7228 = vmatprep.subr.mxu0 0.0
        %7229 = vmatpush2.msra.mxu0 0.0
        %7230 = vmatprep.subr.mxu0 0.0
        %7231 = vmatpush2.msra.mxu0 0.0
        %7232 = vmatprep.subr.mxu0 0.0
        %7233 = vmatpush2.msra.mxu0 0.0
        %7234 = vmatprep.subr.mxu0 0.0
        %7235 = vmatpush2.msra.mxu0 0.0
        %7236 = vmatprep.mubr.f32.mxu0 0.0
        %v7237 = vand.u32 %v6571, 4294901760
        %7238 = vmatmul.mubr.f32.gmra.mxu0 %v7237
        %v7239 = vpop.f32.mrf.mxu0
        %v7240 = vadd.f32 %v7097, %v7239
        %v7241 = vpop.f32.mrf.mxu0
        %7242 = vmatprep.mubr.f32.mxu0 0.0
        %v7243 = vand.u32 %v6572, 4294901760
        %7244 = vmatmul.mubr.f32.gmra.mxu0 %v7243
        %v7245 = vpop.f32.mrf.mxu0
        %v7246 = vadd.f32 %v7105, %v7245
        %v7247 = vpop.f32.mrf.mxu0
        %7248 = vmatprep.mubr.f32.mxu0 0.0
        %v7249 = vand.u32 %v6573, 4294901760
        %7250 = vmatmul.mubr.f32.gmra.mxu0 %v7249
        %v7251 = vpop.f32.mrf.mxu0
        %v7252 = vadd.f32 %v7113, %v7251
        %v7253 = vpop.f32.mrf.mxu0
        %7254 = vmatprep.mubr.f32.mxu0 0.0
        %v7255 = vand.u32 %v6574, 4294901760
        %7256 = vmatmul.mubr.f32.gmra.mxu0 %v7255
        %v7257 = vpop.f32.mrf.mxu0
        %v7258 = vadd.f32 %v7121, %v7257
        %v7259 = vpop.f32.mrf.mxu0
        %7260 = vdwg.mxu0
        %7261 = vmatprep.subr.mxu0 0.0
        %v7262 = vand.u32 %v6590, 4294901760
        %7263 = vmatpush1.msra.mxu0 %v7262
        %7264 = vmatprep.subr.mxu0 0.0
        %v7265 = vand.u32 %v6589, 4294901760
        %7266 = vmatpush1.msra.mxu0 %v7265
        %7267 = vmatprep.subr.mxu0 0.0
        %v7268 = vand.u32 %v6588, 4294901760
        %7269 = vmatpush1.msra.mxu0 %v7268
        %7270 = vmatprep.subr.mxu0 0.0
        %v7271 = vand.u32 %v6587, 4294901760
        %7272 = vmatpush1.msra.mxu0 %v7271
        %7273 = vmatprep.subr.mxu0 0.0
        %v7274 = vand.u32 %v6586, 4294901760
        %7275 = vmatpush1.msra.mxu0 %v7274
        %7276 = vmatprep.subr.mxu0 0.0
        %v7277 = vand.u32 %v6585, 4294901760
        %7278 = vmatpush1.msra.mxu0 %v7277
        %7279 = vmatprep.subr.mxu0 0.0
        %v7280 = vand.u32 %v6584, 4294901760
        %7281 = vmatpush1.msra.mxu0 %v7280
        %7282 = vmatprep.subr.mxu0 0.0
        %v7283 = vand.u32 %v6583, 4294901760
        %7284 = vmatpush1.msra.mxu0 %v7283
        %7285 = vmatprep.subr.mxu0 0.0
        %v7286 = vand.u32 %v6582, 4294901760
        %7287 = vmatpush1.msra.mxu0 %v7286
        %7288 = vmatprep.subr.mxu0 0.0
        %v7289 = vand.u32 %v6581, 4294901760
        %7290 = vmatpush1.msra.mxu0 %v7289
        %7291 = vmatprep.subr.mxu0 0.0
        %v7292 = vand.u32 %v6580, 4294901760
        %7293 = vmatpush1.msra.mxu0 %v7292
        %7294 = vmatprep.subr.mxu0 0.0
        %v7295 = vand.u32 %v6579, 4294901760
        %7296 = vmatpush1.msra.mxu0 %v7295
        %7297 = vmatprep.subr.mxu0 0.0
        %v7298 = vand.u32 %v6578, 4294901760
        %7299 = vmatpush1.msra.mxu0 %v7298
        %7300 = vmatprep.subr.mxu0 0.0
        %v7301 = vand.u32 %v6577, 4294901760
        %7302 = vmatpush1.msra.mxu0 %v7301
        %7303 = vmatprep.subr.mxu0 0.0
        %v7304 = vand.u32 %v6576, 4294901760
        %7305 = vmatpush1.msra.mxu0 %v7304
        %7306 = vmatprep.subr.mxu0 0.0
        %v7307 = vand.u32 %v6575, 4294901760
        %7308 = vmatpush1.msra.mxu0 %v7307
        %7309 = vmatprep.subr.mxu0 0.0
        %7310 = vmatpush2.msra.mxu0 0.0
        %7311 = vmatprep.subr.mxu0 0.0
        %7312 = vmatpush2.msra.mxu0 0.0
        %7313 = vmatprep.subr.mxu0 0.0
        %7314 = vmatpush2.msra.mxu0 0.0
        %7315 = vmatprep.subr.mxu0 0.0
        %7316 = vmatpush2.msra.mxu0 0.0
        %7317 = vmatprep.subr.mxu0 0.0
        %7318 = vmatpush2.msra.mxu0 0.0
        %7319 = vmatprep.subr.mxu0 0.0
        %7320 = vmatpush2.msra.mxu0 0.0
        %7321 = vmatprep.subr.mxu0 0.0
        %7322 = vmatpush2.msra.mxu0 0.0
        %7323 = vmatprep.subr.mxu0 0.0
        %7324 = vmatpush2.msra.mxu0 0.0
        %7325 = vmatprep.subr.mxu0 0.0
        %7326 = vmatpush2.msra.mxu0 0.0
        %7327 = vmatprep.subr.mxu0 0.0
        %7328 = vmatpush2.msra.mxu0 0.0
        %7329 = vmatprep.subr.mxu0 0.0
        %7330 = vmatpush2.msra.mxu0 0.0
        %7331 = vmatprep.subr.mxu0 0.0
        %7332 = vmatpush2.msra.mxu0 0.0
        %7333 = vmatprep.subr.mxu0 0.0
        %7334 = vmatpush2.msra.mxu0 0.0
        %7335 = vmatprep.subr.mxu0 0.0
        %7336 = vmatpush2.msra.mxu0 0.0
        %7337 = vmatprep.subr.mxu0 0.0
        %7338 = vmatpush2.msra.mxu0 0.0
        %7339 = vmatprep.subr.mxu0 0.0
        %7340 = vmatpush2.msra.mxu0 0.0
        %7341 = vmatprep.mubr.f32.mxu0 0.0
        %v7342 = vand.u32 %v6571, 4294901760
        %7343 = vmatmul.mubr.f32.gmra.mxu0 %v7342
        %v7344 = vpop.f32.mrf.mxu0
        %v7345 = vadd.f32 %v7240, %v7344
        %v7346 = vpop.f32.mrf.mxu0
        %7347 = vmatprep.mubr.f32.mxu0 0.0
        %v7348 = vand.u32 %v6572, 4294901760
        %7349 = vmatmul.mubr.f32.gmra.mxu0 %v7348
        %v7350 = vpop.f32.mrf.mxu0
        %v7351 = vadd.f32 %v7246, %v7350
        %v7352 = vpop.f32.mrf.mxu0
        %7353 = vmatprep.mubr.f32.mxu0 0.0
        %v7354 = vand.u32 %v6573, 4294901760
        %7355 = vmatmul.mubr.f32.gmra.mxu0 %v7354
        %v7356 = vpop.f32.mrf.mxu0
        %v7357 = vadd.f32 %v7252, %v7356
        %v7358 = vpop.f32.mrf.mxu0
        %7359 = vmatprep.mubr.f32.mxu0 0.0
        %v7360 = vand.u32 %v6574, 4294901760
        %7361 = vmatmul.mubr.f32.gmra.mxu0 %v7360
        %v7362 = vpop.f32.mrf.mxu0
        %v7363 = vadd.f32 %v7258, %v7362
        %v7364 = vpop.f32.mrf.mxu0
        %7365 = vdwg.mxu0
        %v7366 = vsub.f32 %v7345, %v450
        %v7367 = vsub.f32 %v7351, %v451
        %v7368 = vsub.f32 %v7357, %v452
        %v7369 = vsub.f32 %v7363, %v453
        %v7370 = vmul.f32 %v7366, %v7366
        %v7371 = vmul.f32 %v7367, %v7367
        %v7372 = vmul.f32 %v7368, %v7368
        %v7373 = vmul.f32 %v7369, %v7369
        %v7374 = vsel %vm469, %v7370, 0.0
        %7375 = vadd.xlane.f32.xlu0 %v7374
        %v7376 = vpop.xlane.xlu0 %7375
        %v7377 = vsel %vm469, %v7371, 0.0
        %7378 = vadd.xlane.f32.xlu0 %v7377
        %v7379 = vpop.xlane.xlu0 %7378
        %v7380 = vsel %vm469, %v7372, 0.0
        %7381 = vadd.xlane.f32.xlu0 %v7380
        %v7382 = vpop.xlane.xlu0 %7381
        %v7383 = vsel %vm469, %v7373, 0.0
        %7384 = vadd.xlane.f32.xlu0 %v7383
        %v7385 = vpop.xlane.xlu0 %7384
        %v7386 = vrsqrt.pop %v7376
        %v7387 = vmul.f32 %v7376, %v7386
        %vm7388 = vcmp.eq.f32.partialorder %v7376, inf
        %v7389 = vsel %vm7388, %v7376, %v7387
        %vm7390 = vcmp.eq.f32.partialorder %v7376, 0.0
        %v7391 = vand.u32 %v7376, 2147483648
        %v7392 = vsel %vm7390, %v7391, %v7389
        %v7393 = vrsqrt.pop %v7379
        %v7394 = vmul.f32 %v7379, %v7393
        %vm7395 = vcmp.eq.f32.partialorder %v7379, inf
        %v7396 = vsel %vm7395, %v7379, %v7394
        %vm7397 = vcmp.eq.f32.partialorder %v7379, 0.0
        %v7398 = vand.u32 %v7379, 2147483648
        %v7399 = vsel %vm7397, %v7398, %v7396
        %v7400 = vrsqrt.pop %v7382
        %v7401 = vmul.f32 %v7382, %v7400
        %vm7402 = vcmp.eq.f32.partialorder %v7382, inf
        %v7403 = vsel %vm7402, %v7382, %v7401
        %vm7404 = vcmp.eq.f32.partialorder %v7382, 0.0
        %v7405 = vand.u32 %v7382, 2147483648
        %v7406 = vsel %vm7404, %v7405, %v7403
        %v7407 = vrsqrt.pop %v7385
        %v7408 = vmul.f32 %v7385, %v7407
        %vm7409 = vcmp.eq.f32.partialorder %v7385, inf
        %v7410 = vsel %vm7409, %v7385, %v7408
        %vm7411 = vcmp.eq.f32.partialorder %v7385, 0.0
        %v7412 = vand.u32 %v7385, 2147483648
        %v7413 = vsel %vm7411, %v7412, %v7410
        %v7414 = vadd.f32 %v4520, 1.0
        %v7415 = vadd.f32 %v4526, 1.0
        %v7416 = vadd.f32 %v4532, 1.0
        %v7417 = vadd.f32 %v4538, 1.0
        %v7418 = vmul.f32 %v3729, %v3729
        %v7419 = vmul.f32 %v3735, %v3735
        %v7420 = vmul.f32 %v3741, %v3741
        %v7421 = vmul.f32 %v3747, %v3747
        %v7422 = vsub.f32 %v7414, %v7418
        %v7423 = vsub.f32 %v7415, %v7419
        %v7424 = vsub.f32 %v7416, %v7420
        %v7425 = vsub.f32 %v7417, %v7421
        %v7426 = vmul.f32 %v4546, %v4546
        %v7427 = vmul.f32 %v4548, %v4548
        %v7428 = vmul.f32 %v4550, %v4550
        %v7429 = vmul.f32 %v4552, %v4552
        %v7430 = vsub.f32 %v7422, %v7426
        %v7431 = vsub.f32 %v7423, %v7427
        %v7432 = vsub.f32 %v7424, %v7428
        %v7433 = vsub.f32 %v7425, %v7429
        %v7434 = vmul.f32 %v7430, -5.0
        %v7435 = vmul.f32 %v7431, -5.0
        %v7436 = vmul.f32 %v7432, -5.0
        %v7437 = vmul.f32 %v7433, -5.0
        %7442 = vrot.lane.b32.xlu0 %v7434, 33
        %v7443 = vpop.permute.xlu0 %7442
        %7444 = vrot.lane.b32.xlu0 %v7435, 33
        %v7445 = vpop.permute.xlu0 %7444
        %7446 = vrot.lane.b32.xlu0 %v7436, 33
        %v7447 = vpop.permute.xlu0 %7446
        %7448 = vrot.lane.b32.xlu0 %v7437, 33
        %v7449 = vpop.permute.xlu0 %7448
        %v7454 = vsel %vm469, %v7345, %v7392
        %v7455 = vsel %vm469, %v7351, %v7399
        %v7456 = vsel %vm469, %v7357, %v7406
        %v7457 = vsel %vm469, %v7363, %v7413
        %vm7458 = vcmask 269312
        %v7459 = vsel %vm7458, %v7454, %v7443
        %v7460 = vsel %vm7458, %v7455, %v7445
        %v7461 = vsel %vm7458, %v7456, %v7447
        %v7462 = vsel %vm7458, %v7457, %v7449
        %vm7463 = vcmask 310272
        %v7464 = vsel %vm7463, %v7459, 0.0
        %v7465 = vsel %vm7463, %v7460, 0.0
        %v7466 = vsel %vm7463, %v7461, 0.0
        %v7467 = vsel %vm7463, %v7462, 0.0
        %7468 = vst [vmem:[%s436] sm:$0xff] %v7464
        %7469 = vst [vmem:[%s436 + $0x8] sm:$0xff] %v7465
        %7470 = vst [vmem:[%s436 + $0x10] sm:$0xff] %v7466
        %7471 = vst [vmem:[%s436 + $0x18] sm:$0xff] %v7467
        %s7472 = sand.u32 %s297, 1
        %s7473 = scalar_lea.sflag [#allocation4], %s7472
        %s7474 = sand.u32 %s297, 1
        %s7475 = smul.addr %s7474, 32
        %s7476 = scalar_lea.vmem [#allocation5], %s7475
        // Predicated region
        $region73: #{tpu_custom_call.1} parent=67 // pred_check
          %p7477 = pneg %p307
        $region74: #{tpu_custom_call.1} parent=67 // pred_check_branch
          %7479 = sbr.rel (%p7477) target = $region76
        $region75: #{tpu_custom_call.1} parent=67 // pred_region
          %s7480 = smul.u32 4, %s27
          %s7482 = ssub.s32 512, 512
          %7483 = vsyncadd %s7473, %s7482
          %s7484 = smul.addr %s7480, 128
          %s7485 = scalar_lea.hbm %s12, %s7484
          %s7486 = sshll.u32 %s7476, 4
          %s7487 = int_to_ptr.vmem [resolvable:$true] %s7486
          %7492 = dma.vmem_to_hbm [thread:$0]  %s7487, 512, %s7485, %s7473, 128, 128, 8
        $region76: #{tpu_custom_call.1} parent=67 // pred_fallthru
          _
      $region68: #{tpu_custom_call.1} parent=5 // pred_fallthru
        _
      %p7493 = scmp.le.s32.totalorder 2, %s22
      // Predicated region
      $region77: #{tpu_custom_call.1} parent=5 // pred_check
        %p7494 = pneg %p7493
      $region78: #{tpu_custom_call.1} parent=5 // pred_check_branch
        %7496 = sbr.rel (%p7494) target = $region80
      $region79: #{tpu_custom_call.1} parent=5 // pred_region
        %s7497 = ssub.s32 %s22, 2
        // Predicated region
        $region81: #{tpu_custom_call.1} parent=79 // pred_check
          %p7498 = pneg %p313
        $region82: #{tpu_custom_call.1} parent=79 // pred_check_branch
          %7500 = sbr.rel (%p7498) target = $region84
        $region83: #{tpu_custom_call.1} parent=79 // pred_region
          %s7501 = sand.u32 %s298, 1
          %s7502 = scalar_lea.sflag [#allocation4], %s7501
          %s7503 = sand.u32 %s298, 1
          %s7504 = smul.addr %s7503, 32
          %s7505 = scalar_lea.vmem [#allocation5], %s7504
          %7506 = dma.done %s7502, 512
        $region84: #{tpu_custom_call.1} parent=79 // pred_fallthru
          _
      $region80: #{tpu_custom_call.1} parent=5 // pred_fallthru
        _
    $region6: #{tpu_custom_call.1} parent=1 // loop_footer
      %s26 = sadd.s32 1, %s22
    $region7: #{tpu_custom_call.1} parent=1 // loop_footer_branch
      %21 = sbr.rel target = $region3
    $region8: #{tpu_custom_call.1} parent=1 // loop_exit
      _
    %7507 = vsyncpa [#allocation3], 1
    %s7508 = scalar_lea.sflag [#allocation3], 1
    %7509 = vsyncpa %s7508, 1
    %7510 = vsyncpa [#allocation4], 1
    %s7511 = scalar_lea.sflag [#allocation4], 1
    %7512 = vsyncpa %s7511, 1

</llo_original>
